<compile_context>
chip_gen: v7x
topology: tpu7x:2x2x1
jax: 0.10.0
libtpu: 0.0.40
codegen_flags: <defaults>
</compile_context>

<pallas_src>
import functools

import numpy as np

import jax
import jax.numpy as jnp
from jax.experimental import pallas as pl
from jax.experimental.pallas import tpu as pltpu

CP = 128        # padded channel width  (TPU lane count -> lane-dense layout)
NCP = 128       # padded num_classes width (lane-dense output store)
B_TILE = 8      # samples processed per grid step

_BLOCK_STRIDES = (1, 2, 1, 2, 1, 2, 1, 1, 1, 1, 1, 2, 1)   # the 13 DSConv blocks


# ----------------------------------------------------------------------------
# Host-side constant builders (selectors, pooling matrix, im2col patches)
# ----------------------------------------------------------------------------
def _conv_out_len(lin, stride):
    return (lin + 2 - 3) // stride + 1


def _fused_tap_selector(lin, lout, stride, b):
    """0/1 block-diagonal selection matrix for k=3 / pad=1 conv taps.

    Shape (3*b*lout, b*lin).  Row t*b*lout + bb*lout + j has a single 1 at
    column bb*lin + i with i = stride*j + t - 1 (taps falling on the zero
    padding simply have an all-zero row).  Result rows are therefore three
    contiguous (b*lout, CP) chunks, one per tap, each in sample-major order.
    """
    s = np.zeros((3 * b * lout, b * lin), np.float32)
    for t in range(3):
        base_t = t * b * lout
        for bb in range(b):
            for j in range(lout):
                i = stride * j + t - 1
                if 0 <= i < lin:
                    s[base_t + bb * lout + j, bb * lin + i] = 1.0
    return jnp.asarray(s, dtype=jnp.bfloat16)     # 0/1 -> exact in bf16


def _pool_matrix(b, l):
    """0/1 per-sample row-sum matrix, shape (b, b*l)."""
    p = np.zeros((b, b * l), np.float32)
    for bb in range(b):
        p[bb, bb * l:(bb + 1) * l] = 1.0
    return jnp.asarray(p, dtype=jnp.bfloat16)


# ----------------------------------------------------------------------------
# Fused kernel: whole network for B_TILE samples, entirely resident on-chip
# ----------------------------------------------------------------------------
def mobilenet_fused_kernel(*refs, block_dims, b_tile, l_fin):
    """Inputs (all grid-invariant except the patches block):

    xp_ref : (B*Lconv, CP)   bf16  im2col'd first-conv patches for B samples
    wf_ref : (CP, CP)        bf16  first-conv weight (BN scale folded)
    bf_ref : (1, CP)         f32   first-conv BN bias
    dw_ref : (NB, 8, CP)     f32   depthwise taps in rows 0..2 (BN1 folded)
    db_ref : (NB, 1, CP)     f32   BN1 bias
    pw_ref : (NB, CP, CP)    bf16  pointwise weights (BN2 folded)
    pb_ref : (NB, 1, CP)     f32   BN2 bias
    pool_ref:(B, B*Lfin)     bf16  per-sample 0/1 row-sum matrix
    wh_ref : (CP, NCP)       bf16  head linear weight (transposed, padded)
    bh_ref : (1, NCP)        f32   head linear bias
    sel_i  : (3*B*Lout_i, B*Lin_i) bf16   fused 3-tap selectors, one per block
    o_ref  : (B, NCP)        f32   padded logits for the B samples of this step
    """
    nb = len(block_dims)
    (xp_ref, wf_ref, bf_ref, dw_ref, db_ref, pw_ref, pb_ref,
     pool_ref, wh_ref, bh_ref) = refs[:10]
    sel_refs = refs[10:10 + nb]
    o_ref = refs[10 + nb]

    f32 = jnp.float32
    bf16 = jnp.bfloat16

    # ---- first conv: one (B*Lconv, CP) x (CP, CP) matmul + bias + ReLU ------
    h = jnp.dot(xp_ref[...], wf_ref[...], preferred_element_type=f32)
    h = jnp.maximum(h + bf_ref[...], 0.0)                  # (B*Lconv, CP) f32

    # ---- 13 depthwise-separable blocks --------------------------------------
    for li, (lin, lout, stride) in enumerate(block_dims):
        del lin, stride                                     # baked into selector
        blr = b_tile * lout
        # One fused selector matmul produces all 3 shifted/strided tap copies.
        r = jnp.dot(sel_refs[li][...], h.astype(bf16),
                    preferred_element_type=f32)             # (3*blr, CP)
        dwv = dw_ref[li]                                    # (8, CP), rows 0..2
        acc = (dwv[0:1] * r[0:blr]
               + dwv[1:2] * r[blr:2 * blr]
               + dwv[2:3] * r[2 * blr:3 * blr])             # depthwise (VPU)
        h1 = jnp.maximum(acc + db_ref[li], 0.0)             # BN1 bias + ReLU
        h = jnp.dot(h1.astype(bf16), pw_ref[li],
                    preferred_element_type=f32)             # pointwise (MXU)
        h = jnp.maximum(h + pb_ref[li], 0.0)                # BN2 bias + ReLU

    # ---- head: per-sample avg-pool (matmul) + linear, one batched store -----
    pooled = jnp.dot(pool_ref[...], h.astype(bf16),
                     preferred_element_type=f32) * (1.0 / l_fin)   # (B, CP)
    y = jnp.dot(pooled.astype(bf16), wh_ref[...],
                preferred_element_type=f32) + bh_ref[...]          # (B, NCP)
    o_ref[...] = y.astype(o_ref.dtype)


# ----------------------------------------------------------------------------
# Wrapper: BN folding, padding, weight packing, pallas_call plumbing
# ----------------------------------------------------------------------------
def _bn_fuse(gamma, beta, mean, var, eps=1e-5):
    scale = gamma / jnp.sqrt(var + eps)
    bias = beta - mean * scale
    return scale, bias


def _pad2(a, rows, cols):
    r, c = a.shape
    return jnp.pad(a, ((0, rows - r), (0, cols - c)))


def pack_params(params):
    """Fold BN into weights, pad channel dims to CP, cast matmul operands bf16."""
    s0, b0 = _bn_fuse(*params["conv_bn"])
    cw = params["conv_w"]                                   # (C0, cin, 3)
    c0, cin, _ = cw.shape
    assert cin * 3 <= CP and c0 <= CP
    wf = (cw * s0[:, None, None]).reshape(c0, cin * 3).T    # (cin*3, C0)
    wf = _pad2(wf, CP, CP).astype(jnp.bfloat16)
    bf_ = _pad2(b0[None, :], 1, CP)

    dw_l, db_l, pw_l, pb_l = [], [], [], []
    for blk in params["blocks"]:
        s1, b1 = _bn_fuse(*blk["bn1"])
        s2, b2 = _bn_fuse(*blk["bn2"])
        dwt = blk["dw"][:, 0, :].T * s1[None, :]            # (3, cin) scaled
        dw_l.append(_pad2(dwt, 8, CP))
        db_l.append(_pad2(b1[None, :], 1, CP))
        pwt = blk["pw"][:, :, 0].T * s2[None, :]            # (cin, cout) scaled
        pw_l.append(_pad2(pwt, CP, CP))
        pb_l.append(_pad2(b2[None, :], 1, CP))

    wh = _pad2(params["lin_w"].T, CP, NCP).astype(jnp.bfloat16)
    bh = _pad2(params["lin_b"][None, :], 1, NCP)
    return dict(wf=wf, bf=bf_,
                dw=jnp.stack(dw_l).astype(jnp.float32),
                db=jnp.stack(db_l).astype(jnp.float32),
                pw=jnp.stack(pw_l).astype(jnp.bfloat16),
                pb=jnp.stack(pb_l).astype(jnp.float32),
                wh=wh, bh=bh)


def mobilenet_forward(x_ncl, params, b_tile=B_TILE):
    """x_ncl: (N, 6, L) exactly like the PyTorch module's input."""
    n, cin, l0 = x_ncl.shape
    num_classes = params["lin_b"].shape[0]
    nb = len(_BLOCK_STRIDES)
    assert num_classes <= NCP

    packed = pack_params(params)

    # Static per-block (Lin, Lout, stride).
    l_conv = _conv_out_len(l0, 2)
    dims, lin = [], l_conv
    for s in _BLOCK_STRIDES:
        lout = _conv_out_len(lin, s)
        dims.append((lin, lout, s))
        lin = lout
    dims = tuple(dims)
    l_fin = dims[-1][1]

    # Pad batch to a multiple of b_tile (extra samples are zeros, sliced away).
    n_pad = ((n + b_tile - 1) // b_tile) * b_tile
    x = jnp.pad(x_ncl.astype(jnp.float32), ((0, n_pad - n), (0, 0), (0, 0)))

    # Host-side im2col of the first conv (k=3, s=2, p=1) -> lane-dense patches.
    xp = jnp.pad(x, ((0, 0), (0, 0), (1, 1)))
    patches = jnp.stack([xp[:, :, 2 * j:2 * j + 3] for j in range(l_conv)],
                        axis=1)                              # (Np, Lconv, cin, 3)
    patches = patches.reshape(n_pad, l_conv, cin * 3)
    patches = jnp.pad(patches, ((0, 0), (0, 0), (0, CP - cin * 3)))
    patches = patches.reshape(n_pad * l_conv, CP).astype(jnp.bfloat16)

    # Grid-invariant selector / pooling constants (0/1 -> exact in bf16).
    sels = [_fused_tap_selector(li_, lo_, s_, b_tile) for (li_, lo_, s_) in dims]
    pool = _pool_matrix(b_tile, l_fin)

    grid_n = n_pad // b_tile

    # Advisory cost estimate.
    flops_step = 2 * (b_tile * l_conv) * CP * CP
    for (li_, lo_, _s) in dims:
        flops_step += 2 * (3 * b_tile * lo_) * (b_tile * li_) * CP   # selector
        flops_step += 2 * (b_tile * lo_) * CP * CP                   # pointwise
    flops_step += 2 * b_tile * (b_tile * l_fin) * CP + 2 * b_tile * CP * NCP
    operands = [patches, packed["wf"], packed["bf"], packed["dw"], packed["db"],
                packed["pw"], packed["pb"], pool, packed["wh"], packed["bh"],
                *sels]
    bytes_total = sum(int(a.size) * a.dtype.itemsize for a in operands)
    bytes_total += n_pad * NCP * 4

    kern = functools.partial(mobilenet_fused_kernel,
                             block_dims=dims, b_tile=b_tile, l_fin=l_fin)
    out = pl.pallas_call(
        kern,
        out_shape=jax.ShapeDtypeStruct((n_pad, NCP), jnp.float32),
        grid=(grid_n,),
        in_specs=[
            pl.BlockSpec((b_tile * l_conv, CP), lambda i: (i, 0)),   # patches
            pl.BlockSpec((CP, CP), lambda i: (0, 0)),                # wf
            pl.BlockSpec((1, CP), lambda i: (0, 0)),                 # bf
            pl.BlockSpec((nb, 8, CP), lambda i: (0, 0, 0)),          # dw
            pl.BlockSpec((nb, 1, CP), lambda i: (0, 0, 0)),          # db
            pl.BlockSpec((nb, CP, CP), lambda i: (0, 0, 0)),         # pw
            pl.BlockSpec((nb, 1, CP), lambda i: (0, 0, 0)),          # pb
            pl.BlockSpec((b_tile, b_tile * l_fin), lambda i: (0, 0)),# pool
            pl.BlockSpec((CP, NCP), lambda i: (0, 0)),               # wh
            pl.BlockSpec((1, NCP), lambda i: (0, 0)),                # bh
        ] + [pl.BlockSpec(s.shape, lambda i: (0, 0)) for s in sels],  # selectors
        out_specs=pl.BlockSpec((b_tile, NCP), lambda i: (i, 0)),
        compiler_params=pltpu.CompilerParams(
            dimension_semantics=("parallel",)),              # 2 TCs on v7x
        cost_estimate=pl.CostEstimate(flops=int(flops_step * grid_n),
                                      transcendentals=0,
                                      bytes_accessed=int(bytes_total)),
    )(patches, packed["wf"], packed["bf"], packed["dw"], packed["db"],
      packed["pw"], packed["pb"], pool, packed["wh"], packed["bh"], *sels)

    return out[:n, :num_classes]


# ----------------------------------------------------------------------------
# Deterministic parameter initialization (PyTorch shapes)
# ----------------------------------------------------------------------------
def init_params(key, channels, num_classes=2, in_ch=6, width_multiplier=1.0):
    channels = [int(c * width_multiplier) for c in channels]
    keys = iter(jax.random.split(key, 256))

    def nrm(shape, scale=0.1):
        return scale * jax.random.normal(next(keys), shape, jnp.float32)

    def bn(c):
        gamma = 1.0 + 0.1 * jax.random.normal(next(keys), (c,), jnp.float32)
        beta = 0.1 * jax.random.normal(next(keys), (c,), jnp.float32)
        mean = 0.1 * jax.random.normal(next(keys), (c,), jnp.float32)
        var = jax.random.uniform(next(keys), (c,), jnp.float32, 0.5, 1.5)
        return (gamma, beta, mean, var)

    params = {
        "conv_w": nrm((channels[0], in_ch, 3)),    # Conv1d(6, C0, k=3)
        "conv_bn": bn(channels[0]),
    }
    specs = [
        (channels[0], channels[1], 1), (channels[1], channels[2], 2),
        (channels[2], channels[2], 1), (channels[2], channels[3], 2),
        (channels[3], channels[3], 1), (channels[3], channels[4], 2),
        (channels[4], channels[4], 1), (channels[4], channels[4], 1),
        (channels[4], channels[4], 1), (channels[4], channels[4], 1),
        (channels[4], channels[4], 1),
        (channels[4], channels[5], 2), (channels[5], channels[5], 1),
    ]
    blocks = []
    for cin, cout, s in specs:
        blocks.append(dict(
            stride=s,
            dw=nrm((cin, 1, 3)),       # depthwise Conv1d(cin, cin, 3, groups=cin)
            bn1=bn(cin),
            pw=nrm((cout, cin, 1)),    # pointwise Conv1d(cin, cout, 1)
            bn2=bn(cout),
        ))
    params["blocks"] = blocks
    params["lin_w"] = nrm((num_classes, channels[5]))
    params["lin_b"] = nrm((num_classes,))
    return params


if __name__ == "__main__":
    key = jax.random.PRNGKey(0)
    kp, kx = jax.random.split(key)

    channels = [8, 16, 16, 32, 32, 64]             # small synthetic widths
    num_classes = 2
    params = init_params(kp, channels, num_classes=num_classes)

    # PyTorch-style input: (batch=2, in_channels=6, length=64)
    x = jax.random.normal(kx, (2, 6, 64), jnp.float32)

    out = mobilenet_forward(x, params)
    out = jax.block_until_ready(out)
    assert out.shape == (2, num_classes), out.shape
    assert bool(jnp.all(jnp.isfinite(out)))
    print("KERNEL_OK")
</pallas_src>

<mosaic_0001>
module attributes {stable_mosaic.version = 11 : i64} {
  func.func @mobilenet_fused_kernel(%arg0: i32, %arg1: memref<256x128xbf16, #tpu.memory_space<vmem>>, %arg2: memref<128x128xbf16, #tpu.memory_space<vmem>>, %arg3: memref<1x128xf32, #tpu.memory_space<vmem>>, %arg4: memref<13x8x128xf32, #tpu.memory_space<vmem>>, %arg5: memref<13x1x128xf32, #tpu.memory_space<vmem>>, %arg6: memref<13x128x128xbf16, #tpu.memory_space<vmem>>, %arg7: memref<13x1x128xf32, #tpu.memory_space<vmem>>, %arg8: memref<8x16xbf16, #tpu.memory_space<vmem>>, %arg9: memref<128x128xbf16, #tpu.memory_space<vmem>>, %arg10: memref<1x128xf32, #tpu.memory_space<vmem>>, %arg11: memref<768x256xbf16, #tpu.memory_space<vmem>>, %arg12: memref<384x256xbf16, #tpu.memory_space<vmem>>, %arg13: memref<384x128xbf16, #tpu.memory_space<vmem>>, %arg14: memref<192x128xbf16, #tpu.memory_space<vmem>>, %arg15: memref<192x64xbf16, #tpu.memory_space<vmem>>, %arg16: memref<96x64xbf16, #tpu.memory_space<vmem>>, %arg17: memref<96x32xbf16, #tpu.memory_space<vmem>>, %arg18: memref<96x32xbf16, #tpu.memory_space<vmem>>, %arg19: memref<96x32xbf16, #tpu.memory_space<vmem>>, %arg20: memref<96x32xbf16, #tpu.memory_space<vmem>>, %arg21: memref<96x32xbf16, #tpu.memory_space<vmem>>, %arg22: memref<48x32xbf16, #tpu.memory_space<vmem>>, %arg23: memref<48x16xbf16, #tpu.memory_space<vmem>>, %arg24: memref<8x128xf32, #tpu.memory_space<vmem>>) attributes {dimension_semantics = [#tpu.dimension_semantics<parallel>], iteration_bounds = array<i64: 1>, scalar_prefetch = 0 : i64, scratch_operands = 0 : i64, tpu.core_type = #tpu.core_type<tc>, window_params = [{transform_indices = @transform_0, window_bounds = array<i64: 256, 128>}, {pipeline_mode = #tpu.pipeline_mode<synchronous>, transform_indices = @transform_1, window_bounds = array<i64: 128, 128>}, {pipeline_mode = #tpu.pipeline_mode<synchronous>, transform_indices = @transform_2, window_bounds = array<i64: 1, 128>}, {pipeline_mode = #tpu.pipeline_mode<synchronous>, transform_indices = @transform_3, window_bounds = array<i64: 13, 8, 128>}, {pipeline_mode = #tpu.pipeline_mode<synchronous>, transform_indices = @transform_4, window_bounds = array<i64: 13, 1, 128>}, {pipeline_mode = #tpu.pipeline_mode<synchronous>, transform_indices = @transform_5, window_bounds = array<i64: 13, 128, 128>}, {pipeline_mode = #tpu.pipeline_mode<synchronous>, transform_indices = @transform_6, window_bounds = array<i64: 13, 1, 128>}, {pipeline_mode = #tpu.pipeline_mode<synchronous>, transform_indices = @transform_7, window_bounds = array<i64: 8, 16>}, {pipeline_mode = #tpu.pipeline_mode<synchronous>, transform_indices = @transform_8, window_bounds = array<i64: 128, 128>}, {pipeline_mode = #tpu.pipeline_mode<synchronous>, transform_indices = @transform_9, window_bounds = array<i64: 1, 128>}, {pipeline_mode = #tpu.pipeline_mode<synchronous>, transform_indices = @transform_10, window_bounds = array<i64: 768, 256>}, {pipeline_mode = #tpu.pipeline_mode<synchronous>, transform_indices = @transform_11, window_bounds = array<i64: 384, 256>}, {pipeline_mode = #tpu.pipeline_mode<synchronous>, transform_indices = @transform_12, window_bounds = array<i64: 384, 128>}, {pipeline_mode = #tpu.pipeline_mode<synchronous>, transform_indices = @transform_13, window_bounds = array<i64: 192, 128>}, {pipeline_mode = #tpu.pipeline_mode<synchronous>, transform_indices = @transform_14, window_bounds = array<i64: 192, 64>}, {pipeline_mode = #tpu.pipeline_mode<synchronous>, transform_indices = @transform_15, window_bounds = array<i64: 96, 64>}, {pipeline_mode = #tpu.pipeline_mode<synchronous>, transform_indices = @transform_16, window_bounds = array<i64: 96, 32>}, {pipeline_mode = #tpu.pipeline_mode<synchronous>, transform_indices = @transform_17, window_bounds = array<i64: 96, 32>}, {pipeline_mode = #tpu.pipeline_mode<synchronous>, transform_indices = @transform_18, window_bounds = array<i64: 96, 32>}, {pipeline_mode = #tpu.pipeline_mode<synchronous>, transform_indices = @transform_19, window_bounds = array<i64: 96, 32>}, {pipeline_mode = #tpu.pipeline_mode<synchronous>, transform_indices = @transform_20, window_bounds = array<i64: 96, 32>}, {pipeline_mode = #tpu.pipeline_mode<synchronous>, transform_indices = @transform_21, window_bounds = array<i64: 48, 32>}, {pipeline_mode = #tpu.pipeline_mode<synchronous>, transform_indices = @transform_22, window_bounds = array<i64: 48, 16>}, {transform_indices = @transform_23, window_bounds = array<i64: 8, 128>}]} {
    %c0 = arith.constant 0 : index
    %c0_0 = arith.constant 0 : index
    %0 = vector.load %arg1[%c0, %c0_0] : memref<256x128xbf16, #tpu.memory_space<vmem>>, vector<256x128xbf16>
    %c0_1 = arith.constant 0 : index
    %c0_2 = arith.constant 0 : index
    %1 = vector.load %arg2[%c0_1, %c0_2] : memref<128x128xbf16, #tpu.memory_space<vmem>>, vector<128x128xbf16>
    %cst = arith.constant dense<0.000000e+00> : vector<256x128xf32>
    %2 = tpu.matmul %0, %1, %cst {dimension_numbers = #tpu.dot_dimension_numbers<[1], [0], [0], [1], [0, 0, 1, 1], [], []>} : vector<256x128xbf16>, vector<128x128xbf16>, vector<256x128xf32> -> vector<256x128xf32>
    %c0_3 = arith.constant 0 : index
    %c0_4 = arith.constant 0 : index
    %3 = vector.load %arg3[%c0_3, %c0_4] : memref<1x128xf32, #tpu.memory_space<vmem>>, vector<1x128xf32>
    %4 = vector.broadcast %3 : vector<1x128xf32> to vector<256x128xf32>
    %5 = arith.addf %2, %4 : vector<256x128xf32>
    %cst_5 = arith.constant 0.000000e+00 : f32
    %6 = vector.broadcast %cst_5 : f32 to vector<256x128xf32>
    %7 = arith.maximumf %5, %6 : vector<256x128xf32>
    %c0_6 = arith.constant 0 : index
    %c0_7 = arith.constant 0 : index
    %8 = vector.load %arg11[%c0_6, %c0_7] : memref<768x256xbf16, #tpu.memory_space<vmem>>, vector<768x256xbf16>
    %9 = arith.truncf %7 : vector<256x128xf32> to vector<256x128xbf16>
    %cst_8 = arith.constant dense<0.000000e+00> : vector<768x128xf32>
    %10 = tpu.matmul %8, %9, %cst_8 {dimension_numbers = #tpu.dot_dimension_numbers<[1], [0], [0], [1], [0, 0, 1, 1], [], []>} : vector<768x256xbf16>, vector<256x128xbf16>, vector<768x128xf32> -> vector<768x128xf32>
    %c0_9 = arith.constant 0 : index
    %c0_10 = arith.constant 0 : index
    %c0_11 = arith.constant 0 : index
    %11 = vector.load %arg4[%c0_9, %c0_10, %c0_11] : memref<13x8x128xf32, #tpu.memory_space<vmem>>, vector<1x8x128xf32>
    %12 = vector.shape_cast %11 : vector<1x8x128xf32> to vector<8x128xf32>
    %13 = vector.extract_strided_slice %12 {offsets = [0, 0], sizes = [1, 128], strides = [1, 1]} : vector<8x128xf32> to vector<1x128xf32>
    %14 = vector.extract_strided_slice %10 {offsets = [0, 0], sizes = [256, 128], strides = [1, 1]} : vector<768x128xf32> to vector<256x128xf32>
    %15 = vector.broadcast %13 : vector<1x128xf32> to vector<256x128xf32>
    %16 = arith.mulf %15, %14 : vector<256x128xf32>
    %17 = vector.extract_strided_slice %12 {offsets = [1, 0], sizes = [1, 128], strides = [1, 1]} : vector<8x128xf32> to vector<1x128xf32>
    %18 = vector.extract_strided_slice %10 {offsets = [256, 0], sizes = [256, 128], strides = [1, 1]} : vector<768x128xf32> to vector<256x128xf32>
    %19 = vector.broadcast %17 : vector<1x128xf32> to vector<256x128xf32>
    %20 = arith.mulf %19, %18 : vector<256x128xf32>
    %21 = arith.addf %16, %20 : vector<256x128xf32>
    %22 = vector.extract_strided_slice %12 {offsets = [2, 0], sizes = [1, 128], strides = [1, 1]} : vector<8x128xf32> to vector<1x128xf32>
    %23 = vector.extract_strided_slice %10 {offsets = [512, 0], sizes = [256, 128], strides = [1, 1]} : vector<768x128xf32> to vector<256x128xf32>
    %24 = vector.broadcast %22 : vector<1x128xf32> to vector<256x128xf32>
    %25 = arith.mulf %24, %23 : vector<256x128xf32>
    %26 = arith.addf %21, %25 : vector<256x128xf32>
    %c0_12 = arith.constant 0 : index
    %c0_13 = arith.constant 0 : index
    %c0_14 = arith.constant 0 : index
    %27 = vector.load %arg5[%c0_12, %c0_13, %c0_14] : memref<13x1x128xf32, #tpu.memory_space<vmem>>, vector<1x1x128xf32>
    %28 = vector.shape_cast %27 : vector<1x1x128xf32> to vector<1x128xf32>
    %29 = vector.broadcast %28 : vector<1x128xf32> to vector<256x128xf32>
    %30 = arith.addf %26, %29 : vector<256x128xf32>
    %cst_15 = arith.constant 0.000000e+00 : f32
    %31 = vector.broadcast %cst_15 : f32 to vector<256x128xf32>
    %32 = arith.maximumf %30, %31 : vector<256x128xf32>
    %33 = arith.truncf %32 : vector<256x128xf32> to vector<256x128xbf16>
    %c0_16 = arith.constant 0 : index
    %c0_17 = arith.constant 0 : index
    %c0_18 = arith.constant 0 : index
    %34 = vector.load %arg6[%c0_16, %c0_17, %c0_18] : memref<13x128x128xbf16, #tpu.memory_space<vmem>>, vector<1x128x128xbf16>
    %35 = vector.shape_cast %34 : vector<1x128x128xbf16> to vector<128x128xbf16>
    %cst_19 = arith.constant dense<0.000000e+00> : vector<256x128xf32>
    %36 = tpu.matmul %33, %35, %cst_19 {dimension_numbers = #tpu.dot_dimension_numbers<[1], [0], [0], [1], [0, 0, 1, 1], [], []>} : vector<256x128xbf16>, vector<128x128xbf16>, vector<256x128xf32> -> vector<256x128xf32>
    %c0_20 = arith.constant 0 : index
    %c0_21 = arith.constant 0 : index
    %c0_22 = arith.constant 0 : index
    %37 = vector.load %arg7[%c0_20, %c0_21, %c0_22] : memref<13x1x128xf32, #tpu.memory_space<vmem>>, vector<1x1x128xf32>
    %38 = vector.shape_cast %37 : vector<1x1x128xf32> to vector<1x128xf32>
    %39 = vector.broadcast %38 : vector<1x128xf32> to vector<256x128xf32>
    %40 = arith.addf %36, %39 : vector<256x128xf32>
    %cst_23 = arith.constant 0.000000e+00 : f32
    %41 = vector.broadcast %cst_23 : f32 to vector<256x128xf32>
    %42 = arith.maximumf %40, %41 : vector<256x128xf32>
    %c0_24 = arith.constant 0 : index
    %c0_25 = arith.constant 0 : index
    %43 = vector.load %arg12[%c0_24, %c0_25] : memref<384x256xbf16, #tpu.memory_space<vmem>>, vector<384x256xbf16>
    %44 = arith.truncf %42 : vector<256x128xf32> to vector<256x128xbf16>
    %cst_26 = arith.constant dense<0.000000e+00> : vector<384x128xf32>
    %45 = tpu.matmul %43, %44, %cst_26 {dimension_numbers = #tpu.dot_dimension_numbers<[1], [0], [0], [1], [0, 0, 1, 1], [], []>} : vector<384x256xbf16>, vector<256x128xbf16>, vector<384x128xf32> -> vector<384x128xf32>
    %c1 = arith.constant 1 : index
    %c0_27 = arith.constant 0 : index
    %c0_28 = arith.constant 0 : index
    %46 = vector.load %arg4[%c1, %c0_27, %c0_28] : memref<13x8x128xf32, #tpu.memory_space<vmem>>, vector<1x8x128xf32>
    %47 = vector.shape_cast %46 : vector<1x8x128xf32> to vector<8x128xf32>
    %48 = vector.extract_strided_slice %47 {offsets = [0, 0], sizes = [1, 128], strides = [1, 1]} : vector<8x128xf32> to vector<1x128xf32>
    %49 = vector.extract_strided_slice %45 {offsets = [0, 0], sizes = [128, 128], strides = [1, 1]} : vector<384x128xf32> to vector<128x128xf32>
    %50 = vector.broadcast %48 : vector<1x128xf32> to vector<128x128xf32>
    %51 = arith.mulf %50, %49 : vector<128x128xf32>
    %52 = vector.extract_strided_slice %47 {offsets = [1, 0], sizes = [1, 128], strides = [1, 1]} : vector<8x128xf32> to vector<1x128xf32>
    %53 = vector.extract_strided_slice %45 {offsets = [128, 0], sizes = [128, 128], strides = [1, 1]} : vector<384x128xf32> to vector<128x128xf32>
    %54 = vector.broadcast %52 : vector<1x128xf32> to vector<128x128xf32>
    %55 = arith.mulf %54, %53 : vector<128x128xf32>
    %56 = arith.addf %51, %55 : vector<128x128xf32>
    %57 = vector.extract_strided_slice %47 {offsets = [2, 0], sizes = [1, 128], strides = [1, 1]} : vector<8x128xf32> to vector<1x128xf32>
    %58 = vector.extract_strided_slice %45 {offsets = [256, 0], sizes = [128, 128], strides = [1, 1]} : vector<384x128xf32> to vector<128x128xf32>
    %59 = vector.broadcast %57 : vector<1x128xf32> to vector<128x128xf32>
    %60 = arith.mulf %59, %58 : vector<128x128xf32>
    %61 = arith.addf %56, %60 : vector<128x128xf32>
    %c1_29 = arith.constant 1 : index
    %c0_30 = arith.constant 0 : index
    %c0_31 = arith.constant 0 : index
    %62 = vector.load %arg5[%c1_29, %c0_30, %c0_31] : memref<13x1x128xf32, #tpu.memory_space<vmem>>, vector<1x1x128xf32>
    %63 = vector.shape_cast %62 : vector<1x1x128xf32> to vector<1x128xf32>
    %64 = vector.broadcast %63 : vector<1x128xf32> to vector<128x128xf32>
    %65 = arith.addf %61, %64 : vector<128x128xf32>
    %cst_32 = arith.constant 0.000000e+00 : f32
    %66 = vector.broadcast %cst_32 : f32 to vector<128x128xf32>
    %67 = arith.maximumf %65, %66 : vector<128x128xf32>
    %68 = arith.truncf %67 : vector<128x128xf32> to vector<128x128xbf16>
    %c1_33 = arith.constant 1 : index
    %c0_34 = arith.constant 0 : index
    %c0_35 = arith.constant 0 : index
    %69 = vector.load %arg6[%c1_33, %c0_34, %c0_35] : memref<13x128x128xbf16, #tpu.memory_space<vmem>>, vector<1x128x128xbf16>
    %70 = vector.shape_cast %69 : vector<1x128x128xbf16> to vector<128x128xbf16>
    %cst_36 = arith.constant dense<0.000000e+00> : vector<128x128xf32>
    %71 = tpu.matmul %68, %70, %cst_36 {dimension_numbers = #tpu.dot_dimension_numbers<[1], [0], [0], [1], [0, 0, 1, 1], [], []>} : vector<128x128xbf16>, vector<128x128xbf16>, vector<128x128xf32> -> vector<128x128xf32>
    %c1_37 = arith.constant 1 : index
    %c0_38 = arith.constant 0 : index
    %c0_39 = arith.constant 0 : index
    %72 = vector.load %arg7[%c1_37, %c0_38, %c0_39] : memref<13x1x128xf32, #tpu.memory_space<vmem>>, vector<1x1x128xf32>
    %73 = vector.shape_cast %72 : vector<1x1x128xf32> to vector<1x128xf32>
    %74 = vector.broadcast %73 : vector<1x128xf32> to vector<128x128xf32>
    %75 = arith.addf %71, %74 : vector<128x128xf32>
    %cst_40 = arith.constant 0.000000e+00 : f32
    %76 = vector.broadcast %cst_40 : f32 to vector<128x128xf32>
    %77 = arith.maximumf %75, %76 : vector<128x128xf32>
    %c0_41 = arith.constant 0 : index
    %c0_42 = arith.constant 0 : index
    %78 = vector.load %arg13[%c0_41, %c0_42] : memref<384x128xbf16, #tpu.memory_space<vmem>>, vector<384x128xbf16>
    %79 = arith.truncf %77 : vector<128x128xf32> to vector<128x128xbf16>
    %cst_43 = arith.constant dense<0.000000e+00> : vector<384x128xf32>
    %80 = tpu.matmul %78, %79, %cst_43 {dimension_numbers = #tpu.dot_dimension_numbers<[1], [0], [0], [1], [0, 0, 1, 1], [], []>} : vector<384x128xbf16>, vector<128x128xbf16>, vector<384x128xf32> -> vector<384x128xf32>
    %c2 = arith.constant 2 : index
    %c0_44 = arith.constant 0 : index
    %c0_45 = arith.constant 0 : index
    %81 = vector.load %arg4[%c2, %c0_44, %c0_45] : memref<13x8x128xf32, #tpu.memory_space<vmem>>, vector<1x8x128xf32>
    %82 = vector.shape_cast %81 : vector<1x8x128xf32> to vector<8x128xf32>
    %83 = vector.extract_strided_slice %82 {offsets = [0, 0], sizes = [1, 128], strides = [1, 1]} : vector<8x128xf32> to vector<1x128xf32>
    %84 = vector.extract_strided_slice %80 {offsets = [0, 0], sizes = [128, 128], strides = [1, 1]} : vector<384x128xf32> to vector<128x128xf32>
    %85 = vector.broadcast %83 : vector<1x128xf32> to vector<128x128xf32>
    %86 = arith.mulf %85, %84 : vector<128x128xf32>
    %87 = vector.extract_strided_slice %82 {offsets = [1, 0], sizes = [1, 128], strides = [1, 1]} : vector<8x128xf32> to vector<1x128xf32>
    %88 = vector.extract_strided_slice %80 {offsets = [128, 0], sizes = [128, 128], strides = [1, 1]} : vector<384x128xf32> to vector<128x128xf32>
    %89 = vector.broadcast %87 : vector<1x128xf32> to vector<128x128xf32>
    %90 = arith.mulf %89, %88 : vector<128x128xf32>
    %91 = arith.addf %86, %90 : vector<128x128xf32>
    %92 = vector.extract_strided_slice %82 {offsets = [2, 0], sizes = [1, 128], strides = [1, 1]} : vector<8x128xf32> to vector<1x128xf32>
    %93 = vector.extract_strided_slice %80 {offsets = [256, 0], sizes = [128, 128], strides = [1, 1]} : vector<384x128xf32> to vector<128x128xf32>
    %94 = vector.broadcast %92 : vector<1x128xf32> to vector<128x128xf32>
    %95 = arith.mulf %94, %93 : vector<128x128xf32>
    %96 = arith.addf %91, %95 : vector<128x128xf32>
    %c2_46 = arith.constant 2 : index
    %c0_47 = arith.constant 0 : index
    %c0_48 = arith.constant 0 : index
    %97 = vector.load %arg5[%c2_46, %c0_47, %c0_48] : memref<13x1x128xf32, #tpu.memory_space<vmem>>, vector<1x1x128xf32>
    %98 = vector.shape_cast %97 : vector<1x1x128xf32> to vector<1x128xf32>
    %99 = vector.broadcast %98 : vector<1x128xf32> to vector<128x128xf32>
    %100 = arith.addf %96, %99 : vector<128x128xf32>
    %cst_49 = arith.constant 0.000000e+00 : f32
    %101 = vector.broadcast %cst_49 : f32 to vector<128x128xf32>
    %102 = arith.maximumf %100, %101 : vector<128x128xf32>
    %103 = arith.truncf %102 : vector<128x128xf32> to vector<128x128xbf16>
    %c2_50 = arith.constant 2 : index
    %c0_51 = arith.constant 0 : index
    %c0_52 = arith.constant 0 : index
    %104 = vector.load %arg6[%c2_50, %c0_51, %c0_52] : memref<13x128x128xbf16, #tpu.memory_space<vmem>>, vector<1x128x128xbf16>
    %105 = vector.shape_cast %104 : vector<1x128x128xbf16> to vector<128x128xbf16>
    %cst_53 = arith.constant dense<0.000000e+00> : vector<128x128xf32>
    %106 = tpu.matmul %103, %105, %cst_53 {dimension_numbers = #tpu.dot_dimension_numbers<[1], [0], [0], [1], [0, 0, 1, 1], [], []>} : vector<128x128xbf16>, vector<128x128xbf16>, vector<128x128xf32> -> vector<128x128xf32>
    %c2_54 = arith.constant 2 : index
    %c0_55 = arith.constant 0 : index
    %c0_56 = arith.constant 0 : index
    %107 = vector.load %arg7[%c2_54, %c0_55, %c0_56] : memref<13x1x128xf32, #tpu.memory_space<vmem>>, vector<1x1x128xf32>
    %108 = vector.shape_cast %107 : vector<1x1x128xf32> to vector<1x128xf32>
    %109 = vector.broadcast %108 : vector<1x128xf32> to vector<128x128xf32>
    %110 = arith.addf %106, %109 : vector<128x128xf32>
    %cst_57 = arith.constant 0.000000e+00 : f32
    %111 = vector.broadcast %cst_57 : f32 to vector<128x128xf32>
    %112 = arith.maximumf %110, %111 : vector<128x128xf32>
    %c0_58 = arith.constant 0 : index
    %c0_59 = arith.constant 0 : index
    %113 = vector.load %arg14[%c0_58, %c0_59] : memref<192x128xbf16, #tpu.memory_space<vmem>>, vector<192x128xbf16>
    %114 = arith.truncf %112 : vector<128x128xf32> to vector<128x128xbf16>
    %cst_60 = arith.constant dense<0.000000e+00> : vector<192x128xf32>
    %115 = tpu.matmul %113, %114, %cst_60 {dimension_numbers = #tpu.dot_dimension_numbers<[1], [0], [0], [1], [0, 0, 1, 1], [], []>} : vector<192x128xbf16>, vector<128x128xbf16>, vector<192x128xf32> -> vector<192x128xf32>
    %c3 = arith.constant 3 : index
    %c0_61 = arith.constant 0 : index
    %c0_62 = arith.constant 0 : index
    %116 = vector.load %arg4[%c3, %c0_61, %c0_62] : memref<13x8x128xf32, #tpu.memory_space<vmem>>, vector<1x8x128xf32>
    %117 = vector.shape_cast %116 : vector<1x8x128xf32> to vector<8x128xf32>
    %118 = vector.extract_strided_slice %117 {offsets = [0, 0], sizes = [1, 128], strides = [1, 1]} : vector<8x128xf32> to vector<1x128xf32>
    %119 = vector.extract_strided_slice %115 {offsets = [0, 0], sizes = [64, 128], strides = [1, 1]} : vector<192x128xf32> to vector<64x128xf32>
    %120 = vector.broadcast %118 : vector<1x128xf32> to vector<64x128xf32>
    %121 = arith.mulf %120, %119 : vector<64x128xf32>
    %122 = vector.extract_strided_slice %117 {offsets = [1, 0], sizes = [1, 128], strides = [1, 1]} : vector<8x128xf32> to vector<1x128xf32>
    %123 = vector.extract_strided_slice %115 {offsets = [64, 0], sizes = [64, 128], strides = [1, 1]} : vector<192x128xf32> to vector<64x128xf32>
    %124 = vector.broadcast %122 : vector<1x128xf32> to vector<64x128xf32>
    %125 = arith.mulf %124, %123 : vector<64x128xf32>
    %126 = arith.addf %121, %125 : vector<64x128xf32>
    %127 = vector.extract_strided_slice %117 {offsets = [2, 0], sizes = [1, 128], strides = [1, 1]} : vector<8x128xf32> to vector<1x128xf32>
    %128 = vector.extract_strided_slice %115 {offsets = [128, 0], sizes = [64, 128], strides = [1, 1]} : vector<192x128xf32> to vector<64x128xf32>
    %129 = vector.broadcast %127 : vector<1x128xf32> to vector<64x128xf32>
    %130 = arith.mulf %129, %128 : vector<64x128xf32>
    %131 = arith.addf %126, %130 : vector<64x128xf32>
    %c3_63 = arith.constant 3 : index
    %c0_64 = arith.constant 0 : index
    %c0_65 = arith.constant 0 : index
    %132 = vector.load %arg5[%c3_63, %c0_64, %c0_65] : memref<13x1x128xf32, #tpu.memory_space<vmem>>, vector<1x1x128xf32>
    %133 = vector.shape_cast %132 : vector<1x1x128xf32> to vector<1x128xf32>
    %134 = vector.broadcast %133 : vector<1x128xf32> to vector<64x128xf32>
    %135 = arith.addf %131, %134 : vector<64x128xf32>
    %cst_66 = arith.constant 0.000000e+00 : f32
    %136 = vector.broadcast %cst_66 : f32 to vector<64x128xf32>
    %137 = arith.maximumf %135, %136 : vector<64x128xf32>
    %138 = arith.truncf %137 : vector<64x128xf32> to vector<64x128xbf16>
    %c3_67 = arith.constant 3 : index
    %c0_68 = arith.constant 0 : index
    %c0_69 = arith.constant 0 : index
    %139 = vector.load %arg6[%c3_67, %c0_68, %c0_69] : memref<13x128x128xbf16, #tpu.memory_space<vmem>>, vector<1x128x128xbf16>
    %140 = vector.shape_cast %139 : vector<1x128x128xbf16> to vector<128x128xbf16>
    %cst_70 = arith.constant dense<0.000000e+00> : vector<64x128xf32>
    %141 = tpu.matmul %138, %140, %cst_70 {dimension_numbers = #tpu.dot_dimension_numbers<[1], [0], [0], [1], [0, 0, 1, 1], [], []>} : vector<64x128xbf16>, vector<128x128xbf16>, vector<64x128xf32> -> vector<64x128xf32>
    %c3_71 = arith.constant 3 : index
    %c0_72 = arith.constant 0 : index
    %c0_73 = arith.constant 0 : index
    %142 = vector.load %arg7[%c3_71, %c0_72, %c0_73] : memref<13x1x128xf32, #tpu.memory_space<vmem>>, vector<1x1x128xf32>
    %143 = vector.shape_cast %142 : vector<1x1x128xf32> to vector<1x128xf32>
    %144 = vector.broadcast %143 : vector<1x128xf32> to vector<64x128xf32>
    %145 = arith.addf %141, %144 : vector<64x128xf32>
    %cst_74 = arith.constant 0.000000e+00 : f32
    %146 = vector.broadcast %cst_74 : f32 to vector<64x128xf32>
    %147 = arith.maximumf %145, %146 : vector<64x128xf32>
    %c0_75 = arith.constant 0 : index
    %c0_76 = arith.constant 0 : index
    %148 = vector.load %arg15[%c0_75, %c0_76] : memref<192x64xbf16, #tpu.memory_space<vmem>>, vector<192x64xbf16>
    %149 = arith.truncf %147 : vector<64x128xf32> to vector<64x128xbf16>
    %cst_77 = arith.constant dense<0.000000e+00> : vector<192x128xf32>
    %150 = tpu.matmul %148, %149, %cst_77 {dimension_numbers = #tpu.dot_dimension_numbers<[1], [0], [0], [1], [0, 0, 1, 1], [], []>} : vector<192x64xbf16>, vector<64x128xbf16>, vector<192x128xf32> -> vector<192x128xf32>
    %c4 = arith.constant 4 : index
    %c0_78 = arith.constant 0 : index
    %c0_79 = arith.constant 0 : index
    %151 = vector.load %arg4[%c4, %c0_78, %c0_79] : memref<13x8x128xf32, #tpu.memory_space<vmem>>, vector<1x8x128xf32>
    %152 = vector.shape_cast %151 : vector<1x8x128xf32> to vector<8x128xf32>
    %153 = vector.extract_strided_slice %152 {offsets = [0, 0], sizes = [1, 128], strides = [1, 1]} : vector<8x128xf32> to vector<1x128xf32>
    %154 = vector.extract_strided_slice %150 {offsets = [0, 0], sizes = [64, 128], strides = [1, 1]} : vector<192x128xf32> to vector<64x128xf32>
    %155 = vector.broadcast %153 : vector<1x128xf32> to vector<64x128xf32>
    %156 = arith.mulf %155, %154 : vector<64x128xf32>
    %157 = vector.extract_strided_slice %152 {offsets = [1, 0], sizes = [1, 128], strides = [1, 1]} : vector<8x128xf32> to vector<1x128xf32>
    %158 = vector.extract_strided_slice %150 {offsets = [64, 0], sizes = [64, 128], strides = [1, 1]} : vector<192x128xf32> to vector<64x128xf32>
    %159 = vector.broadcast %157 : vector<1x128xf32> to vector<64x128xf32>
    %160 = arith.mulf %159, %158 : vector<64x128xf32>
    %161 = arith.addf %156, %160 : vector<64x128xf32>
    %162 = vector.extract_strided_slice %152 {offsets = [2, 0], sizes = [1, 128], strides = [1, 1]} : vector<8x128xf32> to vector<1x128xf32>
    %163 = vector.extract_strided_slice %150 {offsets = [128, 0], sizes = [64, 128], strides = [1, 1]} : vector<192x128xf32> to vector<64x128xf32>
    %164 = vector.broadcast %162 : vector<1x128xf32> to vector<64x128xf32>
    %165 = arith.mulf %164, %163 : vector<64x128xf32>
    %166 = arith.addf %161, %165 : vector<64x128xf32>
    %c4_80 = arith.constant 4 : index
    %c0_81 = arith.constant 0 : index
    %c0_82 = arith.constant 0 : index
    %167 = vector.load %arg5[%c4_80, %c0_81, %c0_82] : memref<13x1x128xf32, #tpu.memory_space<vmem>>, vector<1x1x128xf32>
    %168 = vector.shape_cast %167 : vector<1x1x128xf32> to vector<1x128xf32>
    %169 = vector.broadcast %168 : vector<1x128xf32> to vector<64x128xf32>
    %170 = arith.addf %166, %169 : vector<64x128xf32>
    %cst_83 = arith.constant 0.000000e+00 : f32
    %171 = vector.broadcast %cst_83 : f32 to vector<64x128xf32>
    %172 = arith.maximumf %170, %171 : vector<64x128xf32>
    %173 = arith.truncf %172 : vector<64x128xf32> to vector<64x128xbf16>
    %c4_84 = arith.constant 4 : index
    %c0_85 = arith.constant 0 : index
    %c0_86 = arith.constant 0 : index
    %174 = vector.load %arg6[%c4_84, %c0_85, %c0_86] : memref<13x128x128xbf16, #tpu.memory_space<vmem>>, vector<1x128x128xbf16>
    %175 = vector.shape_cast %174 : vector<1x128x128xbf16> to vector<128x128xbf16>
    %cst_87 = arith.constant dense<0.000000e+00> : vector<64x128xf32>
    %176 = tpu.matmul %173, %175, %cst_87 {dimension_numbers = #tpu.dot_dimension_numbers<[1], [0], [0], [1], [0, 0, 1, 1], [], []>} : vector<64x128xbf16>, vector<128x128xbf16>, vector<64x128xf32> -> vector<64x128xf32>
    %c4_88 = arith.constant 4 : index
    %c0_89 = arith.constant 0 : index
    %c0_90 = arith.constant 0 : index
    %177 = vector.load %arg7[%c4_88, %c0_89, %c0_90] : memref<13x1x128xf32, #tpu.memory_space<vmem>>, vector<1x1x128xf32>
    %178 = vector.shape_cast %177 : vector<1x1x128xf32> to vector<1x128xf32>
    %179 = vector.broadcast %178 : vector<1x128xf32> to vector<64x128xf32>
    %180 = arith.addf %176, %179 : vector<64x128xf32>
    %cst_91 = arith.constant 0.000000e+00 : f32
    %181 = vector.broadcast %cst_91 : f32 to vector<64x128xf32>
    %182 = arith.maximumf %180, %181 : vector<64x128xf32>
    %c0_92 = arith.constant 0 : index
    %c0_93 = arith.constant 0 : index
    %183 = vector.load %arg16[%c0_92, %c0_93] : memref<96x64xbf16, #tpu.memory_space<vmem>>, vector<96x64xbf16>
    %184 = arith.truncf %182 : vector<64x128xf32> to vector<64x128xbf16>
    %cst_94 = arith.constant dense<0.000000e+00> : vector<96x128xf32>
    %185 = tpu.matmul %183, %184, %cst_94 {dimension_numbers = #tpu.dot_dimension_numbers<[1], [0], [0], [1], [0, 0, 1, 1], [], []>} : vector<96x64xbf16>, vector<64x128xbf16>, vector<96x128xf32> -> vector<96x128xf32>
    %c5 = arith.constant 5 : index
    %c0_95 = arith.constant 0 : index
    %c0_96 = arith.constant 0 : index
    %186 = vector.load %arg4[%c5, %c0_95, %c0_96] : memref<13x8x128xf32, #tpu.memory_space<vmem>>, vector<1x8x128xf32>
    %187 = vector.shape_cast %186 : vector<1x8x128xf32> to vector<8x128xf32>
    %188 = vector.extract_strided_slice %187 {offsets = [0, 0], sizes = [1, 128], strides = [1, 1]} : vector<8x128xf32> to vector<1x128xf32>
    %189 = vector.extract_strided_slice %185 {offsets = [0, 0], sizes = [32, 128], strides = [1, 1]} : vector<96x128xf32> to vector<32x128xf32>
    %190 = vector.broadcast %188 : vector<1x128xf32> to vector<32x128xf32>
    %191 = arith.mulf %190, %189 : vector<32x128xf32>
    %192 = vector.extract_strided_slice %187 {offsets = [1, 0], sizes = [1, 128], strides = [1, 1]} : vector<8x128xf32> to vector<1x128xf32>
    %193 = vector.extract_strided_slice %185 {offsets = [32, 0], sizes = [32, 128], strides = [1, 1]} : vector<96x128xf32> to vector<32x128xf32>
    %194 = vector.broadcast %192 : vector<1x128xf32> to vector<32x128xf32>
    %195 = arith.mulf %194, %193 : vector<32x128xf32>
    %196 = arith.addf %191, %195 : vector<32x128xf32>
    %197 = vector.extract_strided_slice %187 {offsets = [2, 0], sizes = [1, 128], strides = [1, 1]} : vector<8x128xf32> to vector<1x128xf32>
    %198 = vector.extract_strided_slice %185 {offsets = [64, 0], sizes = [32, 128], strides = [1, 1]} : vector<96x128xf32> to vector<32x128xf32>
    %199 = vector.broadcast %197 : vector<1x128xf32> to vector<32x128xf32>
    %200 = arith.mulf %199, %198 : vector<32x128xf32>
    %201 = arith.addf %196, %200 : vector<32x128xf32>
    %c5_97 = arith.constant 5 : index
    %c0_98 = arith.constant 0 : index
    %c0_99 = arith.constant 0 : index
    %202 = vector.load %arg5[%c5_97, %c0_98, %c0_99] : memref<13x1x128xf32, #tpu.memory_space<vmem>>, vector<1x1x128xf32>
    %203 = vector.shape_cast %202 : vector<1x1x128xf32> to vector<1x128xf32>
    %204 = vector.broadcast %203 : vector<1x128xf32> to vector<32x128xf32>
    %205 = arith.addf %201, %204 : vector<32x128xf32>
    %cst_100 = arith.constant 0.000000e+00 : f32
    %206 = vector.broadcast %cst_100 : f32 to vector<32x128xf32>
    %207 = arith.maximumf %205, %206 : vector<32x128xf32>
    %208 = arith.truncf %207 : vector<32x128xf32> to vector<32x128xbf16>
    %c5_101 = arith.constant 5 : index
    %c0_102 = arith.constant 0 : index
    %c0_103 = arith.constant 0 : index
    %209 = vector.load %arg6[%c5_101, %c0_102, %c0_103] : memref<13x128x128xbf16, #tpu.memory_space<vmem>>, vector<1x128x128xbf16>
    %210 = vector.shape_cast %209 : vector<1x128x128xbf16> to vector<128x128xbf16>
    %cst_104 = arith.constant dense<0.000000e+00> : vector<32x128xf32>
    %211 = tpu.matmul %208, %210, %cst_104 {dimension_numbers = #tpu.dot_dimension_numbers<[1], [0], [0], [1], [0, 0, 1, 1], [], []>} : vector<32x128xbf16>, vector<128x128xbf16>, vector<32x128xf32> -> vector<32x128xf32>
    %c5_105 = arith.constant 5 : index
    %c0_106 = arith.constant 0 : index
    %c0_107 = arith.constant 0 : index
    %212 = vector.load %arg7[%c5_105, %c0_106, %c0_107] : memref<13x1x128xf32, #tpu.memory_space<vmem>>, vector<1x1x128xf32>
    %213 = vector.shape_cast %212 : vector<1x1x128xf32> to vector<1x128xf32>
    %214 = vector.broadcast %213 : vector<1x128xf32> to vector<32x128xf32>
    %215 = arith.addf %211, %214 : vector<32x128xf32>
    %cst_108 = arith.constant 0.000000e+00 : f32
    %216 = vector.broadcast %cst_108 : f32 to vector<32x128xf32>
    %217 = arith.maximumf %215, %216 : vector<32x128xf32>
    %c0_109 = arith.constant 0 : index
    %c0_110 = arith.constant 0 : index
    %218 = vector.load %arg17[%c0_109, %c0_110] : memref<96x32xbf16, #tpu.memory_space<vmem>>, vector<96x32xbf16>
    %219 = arith.truncf %217 : vector<32x128xf32> to vector<32x128xbf16>
    %cst_111 = arith.constant dense<0.000000e+00> : vector<96x128xf32>
    %220 = tpu.matmul %218, %219, %cst_111 {dimension_numbers = #tpu.dot_dimension_numbers<[1], [0], [0], [1], [0, 0, 1, 1], [], []>} : vector<96x32xbf16>, vector<32x128xbf16>, vector<96x128xf32> -> vector<96x128xf32>
    %c6 = arith.constant 6 : index
    %c0_112 = arith.constant 0 : index
    %c0_113 = arith.constant 0 : index
    %221 = vector.load %arg4[%c6, %c0_112, %c0_113] : memref<13x8x128xf32, #tpu.memory_space<vmem>>, vector<1x8x128xf32>
    %222 = vector.shape_cast %221 : vector<1x8x128xf32> to vector<8x128xf32>
    %223 = vector.extract_strided_slice %222 {offsets = [0, 0], sizes = [1, 128], strides = [1, 1]} : vector<8x128xf32> to vector<1x128xf32>
    %224 = vector.extract_strided_slice %220 {offsets = [0, 0], sizes = [32, 128], strides = [1, 1]} : vector<96x128xf32> to vector<32x128xf32>
    %225 = vector.broadcast %223 : vector<1x128xf32> to vector<32x128xf32>
    %226 = arith.mulf %225, %224 : vector<32x128xf32>
    %227 = vector.extract_strided_slice %222 {offsets = [1, 0], sizes = [1, 128], strides = [1, 1]} : vector<8x128xf32> to vector<1x128xf32>
    %228 = vector.extract_strided_slice %220 {offsets = [32, 0], sizes = [32, 128], strides = [1, 1]} : vector<96x128xf32> to vector<32x128xf32>
    %229 = vector.broadcast %227 : vector<1x128xf32> to vector<32x128xf32>
    %230 = arith.mulf %229, %228 : vector<32x128xf32>
    %231 = arith.addf %226, %230 : vector<32x128xf32>
    %232 = vector.extract_strided_slice %222 {offsets = [2, 0], sizes = [1, 128], strides = [1, 1]} : vector<8x128xf32> to vector<1x128xf32>
    %233 = vector.extract_strided_slice %220 {offsets = [64, 0], sizes = [32, 128], strides = [1, 1]} : vector<96x128xf32> to vector<32x128xf32>
    %234 = vector.broadcast %232 : vector<1x128xf32> to vector<32x128xf32>
    %235 = arith.mulf %234, %233 : vector<32x128xf32>
    %236 = arith.addf %231, %235 : vector<32x128xf32>
    %c6_114 = arith.constant 6 : index
    %c0_115 = arith.constant 0 : index
    %c0_116 = arith.constant 0 : index
    %237 = vector.load %arg5[%c6_114, %c0_115, %c0_116] : memref<13x1x128xf32, #tpu.memory_space<vmem>>, vector<1x1x128xf32>
    %238 = vector.shape_cast %237 : vector<1x1x128xf32> to vector<1x128xf32>
    %239 = vector.broadcast %238 : vector<1x128xf32> to vector<32x128xf32>
    %240 = arith.addf %236, %239 : vector<32x128xf32>
    %cst_117 = arith.constant 0.000000e+00 : f32
    %241 = vector.broadcast %cst_117 : f32 to vector<32x128xf32>
    %242 = arith.maximumf %240, %241 : vector<32x128xf32>
    %243 = arith.truncf %242 : vector<32x128xf32> to vector<32x128xbf16>
    %c6_118 = arith.constant 6 : index
    %c0_119 = arith.constant 0 : index
    %c0_120 = arith.constant 0 : index
    %244 = vector.load %arg6[%c6_118, %c0_119, %c0_120] : memref<13x128x128xbf16, #tpu.memory_space<vmem>>, vector<1x128x128xbf16>
    %245 = vector.shape_cast %244 : vector<1x128x128xbf16> to vector<128x128xbf16>
    %cst_121 = arith.constant dense<0.000000e+00> : vector<32x128xf32>
    %246 = tpu.matmul %243, %245, %cst_121 {dimension_numbers = #tpu.dot_dimension_numbers<[1], [0], [0], [1], [0, 0, 1, 1], [], []>} : vector<32x128xbf16>, vector<128x128xbf16>, vector<32x128xf32> -> vector<32x128xf32>
    %c6_122 = arith.constant 6 : index
    %c0_123 = arith.constant 0 : index
    %c0_124 = arith.constant 0 : index
    %247 = vector.load %arg7[%c6_122, %c0_123, %c0_124] : memref<13x1x128xf32, #tpu.memory_space<vmem>>, vector<1x1x128xf32>
    %248 = vector.shape_cast %247 : vector<1x1x128xf32> to vector<1x128xf32>
    %249 = vector.broadcast %248 : vector<1x128xf32> to vector<32x128xf32>
    %250 = arith.addf %246, %249 : vector<32x128xf32>
    %cst_125 = arith.constant 0.000000e+00 : f32
    %251 = vector.broadcast %cst_125 : f32 to vector<32x128xf32>
    %252 = arith.maximumf %250, %251 : vector<32x128xf32>
    %c0_126 = arith.constant 0 : index
    %c0_127 = arith.constant 0 : index
    %253 = vector.load %arg18[%c0_126, %c0_127] : memref<96x32xbf16, #tpu.memory_space<vmem>>, vector<96x32xbf16>
    %254 = arith.truncf %252 : vector<32x128xf32> to vector<32x128xbf16>
    %cst_128 = arith.constant dense<0.000000e+00> : vector<96x128xf32>
    %255 = tpu.matmul %253, %254, %cst_128 {dimension_numbers = #tpu.dot_dimension_numbers<[1], [0], [0], [1], [0, 0, 1, 1], [], []>} : vector<96x32xbf16>, vector<32x128xbf16>, vector<96x128xf32> -> vector<96x128xf32>
    %c7 = arith.constant 7 : index
    %c0_129 = arith.constant 0 : index
    %c0_130 = arith.constant 0 : index
    %256 = vector.load %arg4[%c7, %c0_129, %c0_130] : memref<13x8x128xf32, #tpu.memory_space<vmem>>, vector<1x8x128xf32>
    %257 = vector.shape_cast %256 : vector<1x8x128xf32> to vector<8x128xf32>
    %258 = vector.extract_strided_slice %257 {offsets = [0, 0], sizes = [1, 128], strides = [1, 1]} : vector<8x128xf32> to vector<1x128xf32>
    %259 = vector.extract_strided_slice %255 {offsets = [0, 0], sizes = [32, 128], strides = [1, 1]} : vector<96x128xf32> to vector<32x128xf32>
    %260 = vector.broadcast %258 : vector<1x128xf32> to vector<32x128xf32>
    %261 = arith.mulf %260, %259 : vector<32x128xf32>
    %262 = vector.extract_strided_slice %257 {offsets = [1, 0], sizes = [1, 128], strides = [1, 1]} : vector<8x128xf32> to vector<1x128xf32>
    %263 = vector.extract_strided_slice %255 {offsets = [32, 0], sizes = [32, 128], strides = [1, 1]} : vector<96x128xf32> to vector<32x128xf32>
    %264 = vector.broadcast %262 : vector<1x128xf32> to vector<32x128xf32>
    %265 = arith.mulf %264, %263 : vector<32x128xf32>
    %266 = arith.addf %261, %265 : vector<32x128xf32>
    %267 = vector.extract_strided_slice %257 {offsets = [2, 0], sizes = [1, 128], strides = [1, 1]} : vector<8x128xf32> to vector<1x128xf32>
    %268 = vector.extract_strided_slice %255 {offsets = [64, 0], sizes = [32, 128], strides = [1, 1]} : vector<96x128xf32> to vector<32x128xf32>
    %269 = vector.broadcast %267 : vector<1x128xf32> to vector<32x128xf32>
    %270 = arith.mulf %269, %268 : vector<32x128xf32>
    %271 = arith.addf %266, %270 : vector<32x128xf32>
    %c7_131 = arith.constant 7 : index
    %c0_132 = arith.constant 0 : index
    %c0_133 = arith.constant 0 : index
    %272 = vector.load %arg5[%c7_131, %c0_132, %c0_133] : memref<13x1x128xf32, #tpu.memory_space<vmem>>, vector<1x1x128xf32>
    %273 = vector.shape_cast %272 : vector<1x1x128xf32> to vector<1x128xf32>
    %274 = vector.broadcast %273 : vector<1x128xf32> to vector<32x128xf32>
    %275 = arith.addf %271, %274 : vector<32x128xf32>
    %cst_134 = arith.constant 0.000000e+00 : f32
    %276 = vector.broadcast %cst_134 : f32 to vector<32x128xf32>
    %277 = arith.maximumf %275, %276 : vector<32x128xf32>
    %278 = arith.truncf %277 : vector<32x128xf32> to vector<32x128xbf16>
    %c7_135 = arith.constant 7 : index
    %c0_136 = arith.constant 0 : index
    %c0_137 = arith.constant 0 : index
    %279 = vector.load %arg6[%c7_135, %c0_136, %c0_137] : memref<13x128x128xbf16, #tpu.memory_space<vmem>>, vector<1x128x128xbf16>
    %280 = vector.shape_cast %279 : vector<1x128x128xbf16> to vector<128x128xbf16>
    %cst_138 = arith.constant dense<0.000000e+00> : vector<32x128xf32>
    %281 = tpu.matmul %278, %280, %cst_138 {dimension_numbers = #tpu.dot_dimension_numbers<[1], [0], [0], [1], [0, 0, 1, 1], [], []>} : vector<32x128xbf16>, vector<128x128xbf16>, vector<32x128xf32> -> vector<32x128xf32>
    %c7_139 = arith.constant 7 : index
    %c0_140 = arith.constant 0 : index
    %c0_141 = arith.constant 0 : index
    %282 = vector.load %arg7[%c7_139, %c0_140, %c0_141] : memref<13x1x128xf32, #tpu.memory_space<vmem>>, vector<1x1x128xf32>
    %283 = vector.shape_cast %282 : vector<1x1x128xf32> to vector<1x128xf32>
    %284 = vector.broadcast %283 : vector<1x128xf32> to vector<32x128xf32>
    %285 = arith.addf %281, %284 : vector<32x128xf32>
    %cst_142 = arith.constant 0.000000e+00 : f32
    %286 = vector.broadcast %cst_142 : f32 to vector<32x128xf32>
    %287 = arith.maximumf %285, %286 : vector<32x128xf32>
    %c0_143 = arith.constant 0 : index
    %c0_144 = arith.constant 0 : index
    %288 = vector.load %arg19[%c0_143, %c0_144] : memref<96x32xbf16, #tpu.memory_space<vmem>>, vector<96x32xbf16>
    %289 = arith.truncf %287 : vector<32x128xf32> to vector<32x128xbf16>
    %cst_145 = arith.constant dense<0.000000e+00> : vector<96x128xf32>
    %290 = tpu.matmul %288, %289, %cst_145 {dimension_numbers = #tpu.dot_dimension_numbers<[1], [0], [0], [1], [0, 0, 1, 1], [], []>} : vector<96x32xbf16>, vector<32x128xbf16>, vector<96x128xf32> -> vector<96x128xf32>
    %c8 = arith.constant 8 : index
    %c0_146 = arith.constant 0 : index
    %c0_147 = arith.constant 0 : index
    %291 = vector.load %arg4[%c8, %c0_146, %c0_147] : memref<13x8x128xf32, #tpu.memory_space<vmem>>, vector<1x8x128xf32>
    %292 = vector.shape_cast %291 : vector<1x8x128xf32> to vector<8x128xf32>
    %293 = vector.extract_strided_slice %292 {offsets = [0, 0], sizes = [1, 128], strides = [1, 1]} : vector<8x128xf32> to vector<1x128xf32>
    %294 = vector.extract_strided_slice %290 {offsets = [0, 0], sizes = [32, 128], strides = [1, 1]} : vector<96x128xf32> to vector<32x128xf32>
    %295 = vector.broadcast %293 : vector<1x128xf32> to vector<32x128xf32>
    %296 = arith.mulf %295, %294 : vector<32x128xf32>
    %297 = vector.extract_strided_slice %292 {offsets = [1, 0], sizes = [1, 128], strides = [1, 1]} : vector<8x128xf32> to vector<1x128xf32>
    %298 = vector.extract_strided_slice %290 {offsets = [32, 0], sizes = [32, 128], strides = [1, 1]} : vector<96x128xf32> to vector<32x128xf32>
    %299 = vector.broadcast %297 : vector<1x128xf32> to vector<32x128xf32>
    %300 = arith.mulf %299, %298 : vector<32x128xf32>
    %301 = arith.addf %296, %300 : vector<32x128xf32>
    %302 = vector.extract_strided_slice %292 {offsets = [2, 0], sizes = [1, 128], strides = [1, 1]} : vector<8x128xf32> to vector<1x128xf32>
    %303 = vector.extract_strided_slice %290 {offsets = [64, 0], sizes = [32, 128], strides = [1, 1]} : vector<96x128xf32> to vector<32x128xf32>
    %304 = vector.broadcast %302 : vector<1x128xf32> to vector<32x128xf32>
    %305 = arith.mulf %304, %303 : vector<32x128xf32>
    %306 = arith.addf %301, %305 : vector<32x128xf32>
    %c8_148 = arith.constant 8 : index
    %c0_149 = arith.constant 0 : index
    %c0_150 = arith.constant 0 : index
    %307 = vector.load %arg5[%c8_148, %c0_149, %c0_150] : memref<13x1x128xf32, #tpu.memory_space<vmem>>, vector<1x1x128xf32>
    %308 = vector.shape_cast %307 : vector<1x1x128xf32> to vector<1x128xf32>
    %309 = vector.broadcast %308 : vector<1x128xf32> to vector<32x128xf32>
    %310 = arith.addf %306, %309 : vector<32x128xf32>
    %cst_151 = arith.constant 0.000000e+00 : f32
    %311 = vector.broadcast %cst_151 : f32 to vector<32x128xf32>
    %312 = arith.maximumf %310, %311 : vector<32x128xf32>
    %313 = arith.truncf %312 : vector<32x128xf32> to vector<32x128xbf16>
    %c8_152 = arith.constant 8 : index
    %c0_153 = arith.constant 0 : index
    %c0_154 = arith.constant 0 : index
    %314 = vector.load %arg6[%c8_152, %c0_153, %c0_154] : memref<13x128x128xbf16, #tpu.memory_space<vmem>>, vector<1x128x128xbf16>
    %315 = vector.shape_cast %314 : vector<1x128x128xbf16> to vector<128x128xbf16>
    %cst_155 = arith.constant dense<0.000000e+00> : vector<32x128xf32>
    %316 = tpu.matmul %313, %315, %cst_155 {dimension_numbers = #tpu.dot_dimension_numbers<[1], [0], [0], [1], [0, 0, 1, 1], [], []>} : vector<32x128xbf16>, vector<128x128xbf16>, vector<32x128xf32> -> vector<32x128xf32>
    %c8_156 = arith.constant 8 : index
    %c0_157 = arith.constant 0 : index
    %c0_158 = arith.constant 0 : index
    %317 = vector.load %arg7[%c8_156, %c0_157, %c0_158] : memref<13x1x128xf32, #tpu.memory_space<vmem>>, vector<1x1x128xf32>
    %318 = vector.shape_cast %317 : vector<1x1x128xf32> to vector<1x128xf32>
    %319 = vector.broadcast %318 : vector<1x128xf32> to vector<32x128xf32>
    %320 = arith.addf %316, %319 : vector<32x128xf32>
    %cst_159 = arith.constant 0.000000e+00 : f32
    %321 = vector.broadcast %cst_159 : f32 to vector<32x128xf32>
    %322 = arith.maximumf %320, %321 : vector<32x128xf32>
    %c0_160 = arith.constant 0 : index
    %c0_161 = arith.constant 0 : index
    %323 = vector.load %arg20[%c0_160, %c0_161] : memref<96x32xbf16, #tpu.memory_space<vmem>>, vector<96x32xbf16>
    %324 = arith.truncf %322 : vector<32x128xf32> to vector<32x128xbf16>
    %cst_162 = arith.constant dense<0.000000e+00> : vector<96x128xf32>
    %325 = tpu.matmul %323, %324, %cst_162 {dimension_numbers = #tpu.dot_dimension_numbers<[1], [0], [0], [1], [0, 0, 1, 1], [], []>} : vector<96x32xbf16>, vector<32x128xbf16>, vector<96x128xf32> -> vector<96x128xf32>
    %c9 = arith.constant 9 : index
    %c0_163 = arith.constant 0 : index
    %c0_164 = arith.constant 0 : index
    %326 = vector.load %arg4[%c9, %c0_163, %c0_164] : memref<13x8x128xf32, #tpu.memory_space<vmem>>, vector<1x8x128xf32>
    %327 = vector.shape_cast %326 : vector<1x8x128xf32> to vector<8x128xf32>
    %328 = vector.extract_strided_slice %327 {offsets = [0, 0], sizes = [1, 128], strides = [1, 1]} : vector<8x128xf32> to vector<1x128xf32>
    %329 = vector.extract_strided_slice %325 {offsets = [0, 0], sizes = [32, 128], strides = [1, 1]} : vector<96x128xf32> to vector<32x128xf32>
    %330 = vector.broadcast %328 : vector<1x128xf32> to vector<32x128xf32>
    %331 = arith.mulf %330, %329 : vector<32x128xf32>
    %332 = vector.extract_strided_slice %327 {offsets = [1, 0], sizes = [1, 128], strides = [1, 1]} : vector<8x128xf32> to vector<1x128xf32>
    %333 = vector.extract_strided_slice %325 {offsets = [32, 0], sizes = [32, 128], strides = [1, 1]} : vector<96x128xf32> to vector<32x128xf32>
    %334 = vector.broadcast %332 : vector<1x128xf32> to vector<32x128xf32>
    %335 = arith.mulf %334, %333 : vector<32x128xf32>
    %336 = arith.addf %331, %335 : vector<32x128xf32>
    %337 = vector.extract_strided_slice %327 {offsets = [2, 0], sizes = [1, 128], strides = [1, 1]} : vector<8x128xf32> to vector<1x128xf32>
    %338 = vector.extract_strided_slice %325 {offsets = [64, 0], sizes = [32, 128], strides = [1, 1]} : vector<96x128xf32> to vector<32x128xf32>
    %339 = vector.broadcast %337 : vector<1x128xf32> to vector<32x128xf32>
    %340 = arith.mulf %339, %338 : vector<32x128xf32>
    %341 = arith.addf %336, %340 : vector<32x128xf32>
    %c9_165 = arith.constant 9 : index
    %c0_166 = arith.constant 0 : index
    %c0_167 = arith.constant 0 : index
    %342 = vector.load %arg5[%c9_165, %c0_166, %c0_167] : memref<13x1x128xf32, #tpu.memory_space<vmem>>, vector<1x1x128xf32>
    %343 = vector.shape_cast %342 : vector<1x1x128xf32> to vector<1x128xf32>
    %344 = vector.broadcast %343 : vector<1x128xf32> to vector<32x128xf32>
    %345 = arith.addf %341, %344 : vector<32x128xf32>
    %cst_168 = arith.constant 0.000000e+00 : f32
    %346 = vector.broadcast %cst_168 : f32 to vector<32x128xf32>
    %347 = arith.maximumf %345, %346 : vector<32x128xf32>
    %348 = arith.truncf %347 : vector<32x128xf32> to vector<32x128xbf16>
    %c9_169 = arith.constant 9 : index
    %c0_170 = arith.constant 0 : index
    %c0_171 = arith.constant 0 : index
    %349 = vector.load %arg6[%c9_169, %c0_170, %c0_171] : memref<13x128x128xbf16, #tpu.memory_space<vmem>>, vector<1x128x128xbf16>
    %350 = vector.shape_cast %349 : vector<1x128x128xbf16> to vector<128x128xbf16>
    %cst_172 = arith.constant dense<0.000000e+00> : vector<32x128xf32>
    %351 = tpu.matmul %348, %350, %cst_172 {dimension_numbers = #tpu.dot_dimension_numbers<[1], [0], [0], [1], [0, 0, 1, 1], [], []>} : vector<32x128xbf16>, vector<128x128xbf16>, vector<32x128xf32> -> vector<32x128xf32>
    %c9_173 = arith.constant 9 : index
    %c0_174 = arith.constant 0 : index
    %c0_175 = arith.constant 0 : index
    %352 = vector.load %arg7[%c9_173, %c0_174, %c0_175] : memref<13x1x128xf32, #tpu.memory_space<vmem>>, vector<1x1x128xf32>
    %353 = vector.shape_cast %352 : vector<1x1x128xf32> to vector<1x128xf32>
    %354 = vector.broadcast %353 : vector<1x128xf32> to vector<32x128xf32>
    %355 = arith.addf %351, %354 : vector<32x128xf32>
    %cst_176 = arith.constant 0.000000e+00 : f32
    %356 = vector.broadcast %cst_176 : f32 to vector<32x128xf32>
    %357 = arith.maximumf %355, %356 : vector<32x128xf32>
    %c0_177 = arith.constant 0 : index
    %c0_178 = arith.constant 0 : index
    %358 = vector.load %arg21[%c0_177, %c0_178] : memref<96x32xbf16, #tpu.memory_space<vmem>>, vector<96x32xbf16>
    %359 = arith.truncf %357 : vector<32x128xf32> to vector<32x128xbf16>
    %cst_179 = arith.constant dense<0.000000e+00> : vector<96x128xf32>
    %360 = tpu.matmul %358, %359, %cst_179 {dimension_numbers = #tpu.dot_dimension_numbers<[1], [0], [0], [1], [0, 0, 1, 1], [], []>} : vector<96x32xbf16>, vector<32x128xbf16>, vector<96x128xf32> -> vector<96x128xf32>
    %c10 = arith.constant 10 : index
    %c0_180 = arith.constant 0 : index
    %c0_181 = arith.constant 0 : index
    %361 = vector.load %arg4[%c10, %c0_180, %c0_181] : memref<13x8x128xf32, #tpu.memory_space<vmem>>, vector<1x8x128xf32>
    %362 = vector.shape_cast %361 : vector<1x8x128xf32> to vector<8x128xf32>
    %363 = vector.extract_strided_slice %362 {offsets = [0, 0], sizes = [1, 128], strides = [1, 1]} : vector<8x128xf32> to vector<1x128xf32>
    %364 = vector.extract_strided_slice %360 {offsets = [0, 0], sizes = [32, 128], strides = [1, 1]} : vector<96x128xf32> to vector<32x128xf32>
    %365 = vector.broadcast %363 : vector<1x128xf32> to vector<32x128xf32>
    %366 = arith.mulf %365, %364 : vector<32x128xf32>
    %367 = vector.extract_strided_slice %362 {offsets = [1, 0], sizes = [1, 128], strides = [1, 1]} : vector<8x128xf32> to vector<1x128xf32>
    %368 = vector.extract_strided_slice %360 {offsets = [32, 0], sizes = [32, 128], strides = [1, 1]} : vector<96x128xf32> to vector<32x128xf32>
    %369 = vector.broadcast %367 : vector<1x128xf32> to vector<32x128xf32>
    %370 = arith.mulf %369, %368 : vector<32x128xf32>
    %371 = arith.addf %366, %370 : vector<32x128xf32>
    %372 = vector.extract_strided_slice %362 {offsets = [2, 0], sizes = [1, 128], strides = [1, 1]} : vector<8x128xf32> to vector<1x128xf32>
    %373 = vector.extract_strided_slice %360 {offsets = [64, 0], sizes = [32, 128], strides = [1, 1]} : vector<96x128xf32> to vector<32x128xf32>
    %374 = vector.broadcast %372 : vector<1x128xf32> to vector<32x128xf32>
    %375 = arith.mulf %374, %373 : vector<32x128xf32>
    %376 = arith.addf %371, %375 : vector<32x128xf32>
    %c10_182 = arith.constant 10 : index
    %c0_183 = arith.constant 0 : index
    %c0_184 = arith.constant 0 : index
    %377 = vector.load %arg5[%c10_182, %c0_183, %c0_184] : memref<13x1x128xf32, #tpu.memory_space<vmem>>, vector<1x1x128xf32>
    %378 = vector.shape_cast %377 : vector<1x1x128xf32> to vector<1x128xf32>
    %379 = vector.broadcast %378 : vector<1x128xf32> to vector<32x128xf32>
    %380 = arith.addf %376, %379 : vector<32x128xf32>
    %cst_185 = arith.constant 0.000000e+00 : f32
    %381 = vector.broadcast %cst_185 : f32 to vector<32x128xf32>
    %382 = arith.maximumf %380, %381 : vector<32x128xf32>
    %383 = arith.truncf %382 : vector<32x128xf32> to vector<32x128xbf16>
    %c10_186 = arith.constant 10 : index
    %c0_187 = arith.constant 0 : index
    %c0_188 = arith.constant 0 : index
    %384 = vector.load %arg6[%c10_186, %c0_187, %c0_188] : memref<13x128x128xbf16, #tpu.memory_space<vmem>>, vector<1x128x128xbf16>
    %385 = vector.shape_cast %384 : vector<1x128x128xbf16> to vector<128x128xbf16>
    %cst_189 = arith.constant dense<0.000000e+00> : vector<32x128xf32>
    %386 = tpu.matmul %383, %385, %cst_189 {dimension_numbers = #tpu.dot_dimension_numbers<[1], [0], [0], [1], [0, 0, 1, 1], [], []>} : vector<32x128xbf16>, vector<128x128xbf16>, vector<32x128xf32> -> vector<32x128xf32>
    %c10_190 = arith.constant 10 : index
    %c0_191 = arith.constant 0 : index
    %c0_192 = arith.constant 0 : index
    %387 = vector.load %arg7[%c10_190, %c0_191, %c0_192] : memref<13x1x128xf32, #tpu.memory_space<vmem>>, vector<1x1x128xf32>
    %388 = vector.shape_cast %387 : vector<1x1x128xf32> to vector<1x128xf32>
    %389 = vector.broadcast %388 : vector<1x128xf32> to vector<32x128xf32>
    %390 = arith.addf %386, %389 : vector<32x128xf32>
    %cst_193 = arith.constant 0.000000e+00 : f32
    %391 = vector.broadcast %cst_193 : f32 to vector<32x128xf32>
    %392 = arith.maximumf %390, %391 : vector<32x128xf32>
    %c0_194 = arith.constant 0 : index
    %c0_195 = arith.constant 0 : index
    %393 = vector.load %arg22[%c0_194, %c0_195] : memref<48x32xbf16, #tpu.memory_space<vmem>>, vector<48x32xbf16>
    %394 = arith.truncf %392 : vector<32x128xf32> to vector<32x128xbf16>
    %cst_196 = arith.constant dense<0.000000e+00> : vector<48x128xf32>
    %395 = tpu.matmul %393, %394, %cst_196 {dimension_numbers = #tpu.dot_dimension_numbers<[1], [0], [0], [1], [0, 0, 1, 1], [], []>} : vector<48x32xbf16>, vector<32x128xbf16>, vector<48x128xf32> -> vector<48x128xf32>
    %c11 = arith.constant 11 : index
    %c0_197 = arith.constant 0 : index
    %c0_198 = arith.constant 0 : index
    %396 = vector.load %arg4[%c11, %c0_197, %c0_198] : memref<13x8x128xf32, #tpu.memory_space<vmem>>, vector<1x8x128xf32>
    %397 = vector.shape_cast %396 : vector<1x8x128xf32> to vector<8x128xf32>
    %398 = vector.extract_strided_slice %397 {offsets = [0, 0], sizes = [1, 128], strides = [1, 1]} : vector<8x128xf32> to vector<1x128xf32>
    %399 = vector.extract_strided_slice %395 {offsets = [0, 0], sizes = [16, 128], strides = [1, 1]} : vector<48x128xf32> to vector<16x128xf32>
    %400 = vector.broadcast %398 : vector<1x128xf32> to vector<16x128xf32>
    %401 = arith.mulf %400, %399 : vector<16x128xf32>
    %402 = vector.extract_strided_slice %397 {offsets = [1, 0], sizes = [1, 128], strides = [1, 1]} : vector<8x128xf32> to vector<1x128xf32>
    %403 = vector.extract_strided_slice %395 {offsets = [16, 0], sizes = [16, 128], strides = [1, 1]} : vector<48x128xf32> to vector<16x128xf32>
    %404 = vector.broadcast %402 : vector<1x128xf32> to vector<16x128xf32>
    %405 = arith.mulf %404, %403 : vector<16x128xf32>
    %406 = arith.addf %401, %405 : vector<16x128xf32>
    %407 = vector.extract_strided_slice %397 {offsets = [2, 0], sizes = [1, 128], strides = [1, 1]} : vector<8x128xf32> to vector<1x128xf32>
    %408 = vector.extract_strided_slice %395 {offsets = [32, 0], sizes = [16, 128], strides = [1, 1]} : vector<48x128xf32> to vector<16x128xf32>
    %409 = vector.broadcast %407 : vector<1x128xf32> to vector<16x128xf32>
    %410 = arith.mulf %409, %408 : vector<16x128xf32>
    %411 = arith.addf %406, %410 : vector<16x128xf32>
    %c11_199 = arith.constant 11 : index
    %c0_200 = arith.constant 0 : index
    %c0_201 = arith.constant 0 : index
    %412 = vector.load %arg5[%c11_199, %c0_200, %c0_201] : memref<13x1x128xf32, #tpu.memory_space<vmem>>, vector<1x1x128xf32>
    %413 = vector.shape_cast %412 : vector<1x1x128xf32> to vector<1x128xf32>
    %414 = vector.broadcast %413 : vector<1x128xf32> to vector<16x128xf32>
    %415 = arith.addf %411, %414 : vector<16x128xf32>
    %cst_202 = arith.constant 0.000000e+00 : f32
    %416 = vector.broadcast %cst_202 : f32 to vector<16x128xf32>
    %417 = arith.maximumf %415, %416 : vector<16x128xf32>
    %418 = arith.truncf %417 : vector<16x128xf32> to vector<16x128xbf16>
    %c11_203 = arith.constant 11 : index
    %c0_204 = arith.constant 0 : index
    %c0_205 = arith.constant 0 : index
    %419 = vector.load %arg6[%c11_203, %c0_204, %c0_205] : memref<13x128x128xbf16, #tpu.memory_space<vmem>>, vector<1x128x128xbf16>
    %420 = vector.shape_cast %419 : vector<1x128x128xbf16> to vector<128x128xbf16>
    %cst_206 = arith.constant dense<0.000000e+00> : vector<16x128xf32>
    %421 = tpu.matmul %418, %420, %cst_206 {dimension_numbers = #tpu.dot_dimension_numbers<[1], [0], [0], [1], [0, 0, 1, 1], [], []>} : vector<16x128xbf16>, vector<128x128xbf16>, vector<16x128xf32> -> vector<16x128xf32>
    %c11_207 = arith.constant 11 : index
    %c0_208 = arith.constant 0 : index
    %c0_209 = arith.constant 0 : index
    %422 = vector.load %arg7[%c11_207, %c0_208, %c0_209] : memref<13x1x128xf32, #tpu.memory_space<vmem>>, vector<1x1x128xf32>
    %423 = vector.shape_cast %422 : vector<1x1x128xf32> to vector<1x128xf32>
    %424 = vector.broadcast %423 : vector<1x128xf32> to vector<16x128xf32>
    %425 = arith.addf %421, %424 : vector<16x128xf32>
    %cst_210 = arith.constant 0.000000e+00 : f32
    %426 = vector.broadcast %cst_210 : f32 to vector<16x128xf32>
    %427 = arith.maximumf %425, %426 : vector<16x128xf32>
    %c0_211 = arith.constant 0 : index
    %c0_212 = arith.constant 0 : index
    %428 = vector.load %arg23[%c0_211, %c0_212] : memref<48x16xbf16, #tpu.memory_space<vmem>>, vector<48x16xbf16>
    %429 = arith.truncf %427 : vector<16x128xf32> to vector<16x128xbf16>
    %cst_213 = arith.constant dense<0.000000e+00> : vector<48x128xf32>
    %430 = tpu.matmul %428, %429, %cst_213 {dimension_numbers = #tpu.dot_dimension_numbers<[1], [0], [0], [1], [0, 0, 1, 1], [], []>} : vector<48x16xbf16>, vector<16x128xbf16>, vector<48x128xf32> -> vector<48x128xf32>
    %c12 = arith.constant 12 : index
    %c0_214 = arith.constant 0 : index
    %c0_215 = arith.constant 0 : index
    %431 = vector.load %arg4[%c12, %c0_214, %c0_215] : memref<13x8x128xf32, #tpu.memory_space<vmem>>, vector<1x8x128xf32>
    %432 = vector.shape_cast %431 : vector<1x8x128xf32> to vector<8x128xf32>
    %433 = vector.extract_strided_slice %432 {offsets = [0, 0], sizes = [1, 128], strides = [1, 1]} : vector<8x128xf32> to vector<1x128xf32>
    %434 = vector.extract_strided_slice %430 {offsets = [0, 0], sizes = [16, 128], strides = [1, 1]} : vector<48x128xf32> to vector<16x128xf32>
    %435 = vector.broadcast %433 : vector<1x128xf32> to vector<16x128xf32>
    %436 = arith.mulf %435, %434 : vector<16x128xf32>
    %437 = vector.extract_strided_slice %432 {offsets = [1, 0], sizes = [1, 128], strides = [1, 1]} : vector<8x128xf32> to vector<1x128xf32>
    %438 = vector.extract_strided_slice %430 {offsets = [16, 0], sizes = [16, 128], strides = [1, 1]} : vector<48x128xf32> to vector<16x128xf32>
    %439 = vector.broadcast %437 : vector<1x128xf32> to vector<16x128xf32>
    %440 = arith.mulf %439, %438 : vector<16x128xf32>
    %441 = arith.addf %436, %440 : vector<16x128xf32>
    %442 = vector.extract_strided_slice %432 {offsets = [2, 0], sizes = [1, 128], strides = [1, 1]} : vector<8x128xf32> to vector<1x128xf32>
    %443 = vector.extract_strided_slice %430 {offsets = [32, 0], sizes = [16, 128], strides = [1, 1]} : vector<48x128xf32> to vector<16x128xf32>
    %444 = vector.broadcast %442 : vector<1x128xf32> to vector<16x128xf32>
    %445 = arith.mulf %444, %443 : vector<16x128xf32>
    %446 = arith.addf %441, %445 : vector<16x128xf32>
    %c12_216 = arith.constant 12 : index
    %c0_217 = arith.constant 0 : index
    %c0_218 = arith.constant 0 : index
    %447 = vector.load %arg5[%c12_216, %c0_217, %c0_218] : memref<13x1x128xf32, #tpu.memory_space<vmem>>, vector<1x1x128xf32>
    %448 = vector.shape_cast %447 : vector<1x1x128xf32> to vector<1x128xf32>
    %449 = vector.broadcast %448 : vector<1x128xf32> to vector<16x128xf32>
    %450 = arith.addf %446, %449 : vector<16x128xf32>
    %cst_219 = arith.constant 0.000000e+00 : f32
    %451 = vector.broadcast %cst_219 : f32 to vector<16x128xf32>
    %452 = arith.maximumf %450, %451 : vector<16x128xf32>
    %453 = arith.truncf %452 : vector<16x128xf32> to vector<16x128xbf16>
    %c12_220 = arith.constant 12 : index
    %c0_221 = arith.constant 0 : index
    %c0_222 = arith.constant 0 : index
    %454 = vector.load %arg6[%c12_220, %c0_221, %c0_222] : memref<13x128x128xbf16, #tpu.memory_space<vmem>>, vector<1x128x128xbf16>
    %455 = vector.shape_cast %454 : vector<1x128x128xbf16> to vector<128x128xbf16>
    %cst_223 = arith.constant dense<0.000000e+00> : vector<16x128xf32>
    %456 = tpu.matmul %453, %455, %cst_223 {dimension_numbers = #tpu.dot_dimension_numbers<[1], [0], [0], [1], [0, 0, 1, 1], [], []>} : vector<16x128xbf16>, vector<128x128xbf16>, vector<16x128xf32> -> vector<16x128xf32>
    %c12_224 = arith.constant 12 : index
    %c0_225 = arith.constant 0 : index
    %c0_226 = arith.constant 0 : index
    %457 = vector.load %arg7[%c12_224, %c0_225, %c0_226] : memref<13x1x128xf32, #tpu.memory_space<vmem>>, vector<1x1x128xf32>
    %458 = vector.shape_cast %457 : vector<1x1x128xf32> to vector<1x128xf32>
    %459 = vector.broadcast %458 : vector<1x128xf32> to vector<16x128xf32>
    %460 = arith.addf %456, %459 : vector<16x128xf32>
    %cst_227 = arith.constant 0.000000e+00 : f32
    %461 = vector.broadcast %cst_227 : f32 to vector<16x128xf32>
    %462 = arith.maximumf %460, %461 : vector<16x128xf32>
    %c0_228 = arith.constant 0 : index
    %c0_229 = arith.constant 0 : index
    %463 = vector.load %arg8[%c0_228, %c0_229] : memref<8x16xbf16, #tpu.memory_space<vmem>>, vector<8x16xbf16>
    %464 = arith.truncf %462 : vector<16x128xf32> to vector<16x128xbf16>
    %cst_230 = arith.constant dense<0.000000e+00> : vector<8x128xf32>
    %465 = tpu.matmul %463, %464, %cst_230 {dimension_numbers = #tpu.dot_dimension_numbers<[1], [0], [0], [1], [0, 0, 1, 1], [], []>} : vector<8x16xbf16>, vector<16x128xbf16>, vector<8x128xf32> -> vector<8x128xf32>
    %cst_231 = arith.constant 5.000000e-01 : f32
    %466 = vector.broadcast %cst_231 : f32 to vector<8x128xf32>
    %467 = arith.mulf %465, %466 : vector<8x128xf32>
    %468 = arith.truncf %467 : vector<8x128xf32> to vector<8x128xbf16>
    %c0_232 = arith.constant 0 : index
    %c0_233 = arith.constant 0 : index
    %469 = vector.load %arg9[%c0_232, %c0_233] : memref<128x128xbf16, #tpu.memory_space<vmem>>, vector<128x128xbf16>
    %cst_234 = arith.constant dense<0.000000e+00> : vector<8x128xf32>
    %470 = tpu.matmul %468, %469, %cst_234 {dimension_numbers = #tpu.dot_dimension_numbers<[1], [0], [0], [1], [0, 0, 1, 1], [], []>} : vector<8x128xbf16>, vector<128x128xbf16>, vector<8x128xf32> -> vector<8x128xf32>
    %c0_235 = arith.constant 0 : index
    %c0_236 = arith.constant 0 : index
    %471 = vector.load %arg10[%c0_235, %c0_236] : memref<1x128xf32, #tpu.memory_space<vmem>>, vector<1x128xf32>
    %472 = vector.broadcast %471 : vector<1x128xf32> to vector<8x128xf32>
    %473 = arith.addf %470, %472 : vector<8x128xf32>
    %c0_237 = arith.constant 0 : index
    %c0_238 = arith.constant 0 : index
    %474 = vector.load %arg24[%c0_237, %c0_238] : memref<8x128xf32, #tpu.memory_space<vmem>>, vector<8x128xf32>
    tpu.vector_store %arg24[%c0_237, %c0_238], %473 {strides = array<i32>} : memref<8x128xf32, #tpu.memory_space<vmem>>, vector<8x128xf32>,
    return
  }
  func.func @transform_0(%arg0: i32) -> (i32, i32) {
    %c0_i32 = arith.constant 0 : i32
    %c0_i32_0 = arith.constant 0 : i32
    return %arg0, %c0_i32 : i32, i32
  }
  func.func @transform_1(%arg0: i32) -> (i32, i32) {
    %c0_i32 = arith.constant 0 : i32
    %c0_i32_0 = arith.constant 0 : i32
    %c0_i32_1 = arith.constant 0 : i32
    return %c0_i32, %c0_i32_0 : i32, i32
  }
  func.func @transform_2(%arg0: i32) -> (i32, i32) {
    %c0_i32 = arith.constant 0 : i32
    %c0_i32_0 = arith.constant 0 : i32
    %c0_i32_1 = arith.constant 0 : i32
    return %c0_i32, %c0_i32_0 : i32, i32
  }
  func.func @transform_3(%arg0: i32) -> (i32, i32, i32) {
    %c0_i32 = arith.constant 0 : i32
    %c0_i32_0 = arith.constant 0 : i32
    %c0_i32_1 = arith.constant 0 : i32
    %c0_i32_2 = arith.constant 0 : i32
    return %c0_i32, %c0_i32_0, %c0_i32_1 : i32, i32, i32
  }
  func.func @transform_4(%arg0: i32) -> (i32, i32, i32) {
    %c0_i32 = arith.constant 0 : i32
    %c0_i32_0 = arith.constant 0 : i32
    %c0_i32_1 = arith.constant 0 : i32
    %c0_i32_2 = arith.constant 0 : i32
    return %c0_i32, %c0_i32_0, %c0_i32_1 : i32, i32, i32
  }
  func.func @transform_5(%arg0: i32) -> (i32, i32, i32) {
    %c0_i32 = arith.constant 0 : i32
    %c0_i32_0 = arith.constant 0 : i32
    %c0_i32_1 = arith.constant 0 : i32
    %c0_i32_2 = arith.constant 0 : i32
    return %c0_i32, %c0_i32_0, %c0_i32_1 : i32, i32, i32
  }
  func.func @transform_6(%arg0: i32) -> (i32, i32, i32) {
    %c0_i32 = arith.constant 0 : i32
    %c0_i32_0 = arith.constant 0 : i32
    %c0_i32_1 = arith.constant 0 : i32
    %c0_i32_2 = arith.constant 0 : i32
    return %c0_i32, %c0_i32_0, %c0_i32_1 : i32, i32, i32
  }
  func.func @transform_7(%arg0: i32) -> (i32, i32) {
    %c0_i32 = arith.constant 0 : i32
    %c0_i32_0 = arith.constant 0 : i32
    %c0_i32_1 = arith.constant 0 : i32
    return %c0_i32, %c0_i32_0 : i32, i32
  }
  func.func @transform_8(%arg0: i32) -> (i32, i32) {
    %c0_i32 = arith.constant 0 : i32
    %c0_i32_0 = arith.constant 0 : i32
    %c0_i32_1 = arith.constant 0 : i32
    return %c0_i32, %c0_i32_0 : i32, i32
  }
  func.func @transform_9(%arg0: i32) -> (i32, i32) {
    %c0_i32 = arith.constant 0 : i32
    %c0_i32_0 = arith.constant 0 : i32
    %c0_i32_1 = arith.constant 0 : i32
    return %c0_i32, %c0_i32_0 : i32, i32
  }
  func.func @transform_10(%arg0: i32) -> (i32, i32) {
    %c0_i32 = arith.constant 0 : i32
    %c0_i32_0 = arith.constant 0 : i32
    %c0_i32_1 = arith.constant 0 : i32
    return %c0_i32, %c0_i32_0 : i32, i32
  }
  func.func @transform_11(%arg0: i32) -> (i32, i32) {
    %c0_i32 = arith.constant 0 : i32
    %c0_i32_0 = arith.constant 0 : i32
    %c0_i32_1 = arith.constant 0 : i32
    return %c0_i32, %c0_i32_0 : i32, i32
  }
  func.func @transform_12(%arg0: i32) -> (i32, i32) {
    %c0_i32 = arith.constant 0 : i32
    %c0_i32_0 = arith.constant 0 : i32
    %c0_i32_1 = arith.constant 0 : i32
    return %c0_i32, %c0_i32_0 : i32, i32
  }
  func.func @transform_13(%arg0: i32) -> (i32, i32) {
    %c0_i32 = arith.constant 0 : i32
    %c0_i32_0 = arith.constant 0 : i32
    %c0_i32_1 = arith.constant 0 : i32
    return %c0_i32, %c0_i32_0 : i32, i32
  }
  func.func @transform_14(%arg0: i32) -> (i32, i32) {
    %c0_i32 = arith.constant 0 : i32
    %c0_i32_0 = arith.constant 0 : i32
    %c0_i32_1 = arith.constant 0 : i32
    return %c0_i32, %c0_i32_0 : i32, i32
  }
  func.func @transform_15(%arg0: i32) -> (i32, i32) {
    %c0_i32 = arith.constant 0 : i32
    %c0_i32_0 = arith.constant 0 : i32
    %c0_i32_1 = arith.constant 0 : i32
    return %c0_i32, %c0_i32_0 : i32, i32
  }
  func.func @transform_16(%arg0: i32) -> (i32, i32) {
    %c0_i32 = arith.constant 0 : i32
    %c0_i32_0 = arith.constant 0 : i32
    %c0_i32_1 = arith.constant 0 : i32
    return %c0_i32, %c0_i32_0 : i32, i32
  }
  func.func @transform_17(%arg0: i32) -> (i32, i32) {
    %c0_i32 = arith.constant 0 : i32
    %c0_i32_0 = arith.constant 0 : i32
    %c0_i32_1 = arith.constant 0 : i32
    return %c0_i32, %c0_i32_0 : i32, i32
  }
  func.func @transform_18(%arg0: i32) -> (i32, i32) {
    %c0_i32 = arith.constant 0 : i32
    %c0_i32_0 = arith.constant 0 : i32
    %c0_i32_1 = arith.constant 0 : i32
    return %c0_i32, %c0_i32_0 : i32, i32
  }
  func.func @transform_19(%arg0: i32) -> (i32, i32) {
    %c0_i32 = arith.constant 0 : i32
    %c0_i32_0 = arith.constant 0 : i32
    %c0_i32_1 = arith.constant 0 : i32
    return %c0_i32, %c0_i32_0 : i32, i32
  }
  func.func @transform_20(%arg0: i32) -> (i32, i32) {
    %c0_i32 = arith.constant 0 : i32
    %c0_i32_0 = arith.constant 0 : i32
    %c0_i32_1 = arith.constant 0 : i32
    return %c0_i32, %c0_i32_0 : i32, i32
  }
  func.func @transform_21(%arg0: i32) -> (i32, i32) {
    %c0_i32 = arith.constant 0 : i32
    %c0_i32_0 = arith.constant 0 : i32
    %c0_i32_1 = arith.constant 0 : i32
    return %c0_i32, %c0_i32_0 : i32, i32
  }
  func.func @transform_22(%arg0: i32) -> (i32, i32) {
    %c0_i32 = arith.constant 0 : i32
    %c0_i32_0 = arith.constant 0 : i32
    %c0_i32_1 = arith.constant 0 : i32
    return %c0_i32, %c0_i32_0 : i32, i32
  }
  func.func @transform_23(%arg0: i32) -> (i32, i32) {
    %c0_i32 = arith.constant 0 : i32
    %c0_i32_0 = arith.constant 0 : i32
    return %arg0, %c0_i32 : i32, i32
  }
}

</mosaic_0001>

<llo_original>
// kernel: tpu_custom_call.1
$region0: #{tpu_custom_call.1}
  #allocation0 [shape = 'u32[]', space=smem, size = 0x4, offset = 0x4, fixed_abs, tag = 'smem constant byte address 0x4 - core index']
  #allocation1 [shape = 'u32[144,128]{1,0:T(1,128)}', space=vmem, size = 0x12000, scoped, tag = 'internal scratch']
  %s0 = inlined_call_operand.hbm [shape: bf16[256,128], index: 0, kind: input, shape index: {}]
  %s1 = inlined_call_operand.hbm [shape: bf16[128,128], index: 1, kind: input, shape index: {}]
  %s2 = inlined_call_operand.hbm [shape: f32[1,128], index: 2, kind: input, shape index: {}]
  %s3 = inlined_call_operand.hbm [shape: f32[13,8,128], index: 3, kind: input, shape index: {}]
  %s4 = inlined_call_operand.hbm [shape: f32[13,1,128], index: 4, kind: input, shape index: {}]
  %s5 = inlined_call_operand.hbm [shape: bf16[13,128,128], index: 5, kind: input, shape index: {}]
  %s6 = inlined_call_operand.hbm [shape: f32[13,1,128], index: 6, kind: input, shape index: {}]
  %s7 = inlined_call_operand.hbm [shape: bf16[8,16], index: 7, kind: input, shape index: {}]
  %s8 = inlined_call_operand.hbm [shape: bf16[128,128], index: 8, kind: input, shape index: {}]
  %s9 = inlined_call_operand.hbm [shape: f32[1,128], index: 9, kind: input, shape index: {}]
  %s10 = inlined_call_operand.hbm [shape: bf16[768,256], index: 10, kind: input, shape index: {}]
  %s11 = inlined_call_operand.vmem [shape: bf16[384,256], index: 11, kind: input, shape index: {}]
  %s12 = inlined_call_operand.vmem [shape: bf16[384,128], index: 12, kind: input, shape index: {}]
  %s13 = inlined_call_operand.vmem [shape: bf16[192,128], index: 13, kind: input, shape index: {}]
  %s14 = inlined_call_operand.vmem [shape: bf16[192,64], index: 14, kind: input, shape index: {}]
  %s15 = inlined_call_operand.vmem [shape: bf16[96,64], index: 15, kind: input, shape index: {}]
  %s16 = inlined_call_operand.vmem [shape: bf16[96,32], index: 16, kind: input, shape index: {}]
  %s17 = inlined_call_operand.vmem [shape: bf16[96,32], index: 17, kind: input, shape index: {}]
  %s18 = inlined_call_operand.vmem [shape: bf16[96,32], index: 18, kind: input, shape index: {}]
  %s19 = inlined_call_operand.vmem [shape: bf16[96,32], index: 19, kind: input, shape index: {}]
  %s20 = inlined_call_operand.vmem [shape: bf16[96,32], index: 20, kind: input, shape index: {}]
  %s21 = inlined_call_operand.vmem [shape: bf16[48,32], index: 21, kind: input, shape index: {}]
  %s22 = inlined_call_operand.vmem [shape: bf16[48,16], index: 22, kind: input, shape index: {}]
  %s23 = inlined_call_operand.hbm [shape: f32[8,128], index: 23, kind: output, shape index: {}]
  %s24 = sld [smem:[#allocation0]]
  $region146: #{tpu_custom_call.1} parent=0
    _
  %s26 = ssub.s32 1, %s24
  %s27 = scalar_select 0, %s26, %s24
  $region1: #{tpu_custom_call.1} parent=0
    #allocation2 [shape = 'u8[65536]{0}', space=vmem, size = 0x10000, scoped, tag = 'input window, operand 0, single buffered']
    #allocation3 [shape = 's32[1]{0}', space=sflag, size = 0x4, scoped, tag = 'scoped memory for tpu_custom_call.1']
    #allocation4 [shape = 's32[1]{0}', space=sflag, size = 0x4, scoped, tag = 'scoped memory for tpu_custom_call.1']
    #allocation5 [shape = 'u8[32768]{0}', space=vmem, size = 0x8000, scoped, tag = 'input window, operand 1, single buffered']
    #allocation6 [shape = 's32[1]{0}', space=sflag, size = 0x4, scoped, tag = 'scoped memory for tpu_custom_call.1']
    #allocation7 [shape = 'u8[512]{0}', space=vmem, size = 0x400, scoped, tag = 'input window, operand 2, single buffered']
    #allocation8 [shape = 'u8[53248]{0}', space=vmem, size = 0xd000, scoped, tag = 'input window, operand 3, single buffered']
    #allocation9 [shape = 's32[1]{0}', space=sflag, size = 0x4, scoped, tag = 'scoped memory for tpu_custom_call.1']
    #allocation10 [shape = 'u8[6656]{0}', space=vmem, size = 0x1c00, scoped, tag = 'input window, operand 4, single buffered']
    #allocation11 [shape = 'u8[425984]{0}', space=vmem, size = 0x68000, scoped, tag = 'input window, operand 5, single buffered']
    #allocation12 [shape = 's32[1]{0}', space=sflag, size = 0x4, scoped, tag = 'scoped memory for tpu_custom_call.1']
    #allocation13 [shape = 'u8[6656]{0}', space=vmem, size = 0x1c00, scoped, tag = 'input window, operand 6, single buffered']
    #allocation14 [shape = 'u8[2048]{0}', space=vmem, size = 0x800, scoped, tag = 'input window, operand 7, single buffered']
    #allocation15 [shape = 's32[1]{0}', space=sflag, size = 0x4, scoped, tag = 'scoped memory for tpu_custom_call.1']
    #allocation16 [shape = 'u8[32768]{0}', space=vmem, size = 0x8000, scoped, tag = 'input window, operand 8, single buffered']
    #allocation17 [shape = 'u8[512]{0}', space=vmem, size = 0x400, scoped, tag = 'input window, operand 9, single buffered']
    #allocation18 [shape = 's32[1]{0}', space=sflag, size = 0x4, scoped, tag = 'scoped memory for tpu_custom_call.1']
    #allocation19 [shape = 'u8[393216]{0}', space=vmem, size = 0x60000, scoped, tag = 'input window, operand 10, single buffered']
    #allocation20 [shape = 'u8[4096]{0}', space=vmem, size = 0x1000, scoped, tag = 'output window, operand 0, single buffered']
    %28 = vsyncpa [#allocation3], 0
    %29 = vsyncpa [#allocation6], 0
    %30 = vsyncpa [#allocation9], 0
    %31 = vsyncpa [#allocation12], 0
    %32 = vsyncpa [#allocation15], 0
    %33 = vsyncpa [#allocation18], 0
    %34 = vsyncpa [#allocation4], 0
    // Predicated region
    $region2: #{tpu_custom_call.1} parent=1 // pred_check
      _
    $region3: #{tpu_custom_call.1} parent=1 // pred_check_branch
      %36 = sbr.rel (0) target = $region5
    $region4: #{tpu_custom_call.1} parent=1 // pred_region
      %s38 = ssub.s32 2048, 2048
      %39 = vsyncadd [#allocation3], %s38
      %s40 = sshll.u32 [#allocation2], 4
      %s41 = int_to_ptr.vmem [resolvable:$true] %s40
      %46 = dma.hbm_to_vmem [thread:$0]  %s0, 2048, %s41, [#allocation3], 64, 64, 4
    $region5: #{tpu_custom_call.1} parent=1 // pred_fallthru
      _
    // Predicated region
    $region6: #{tpu_custom_call.1} parent=1 // pred_check
      _
    $region7: #{tpu_custom_call.1} parent=1 // pred_check_branch
      %48 = sbr.rel (0) target = $region9
    $region8: #{tpu_custom_call.1} parent=1 // pred_region
      %s50 = ssub.s32 1024, 1024
      %51 = vsyncadd [#allocation6], %s50
      %s52 = sshll.u32 [#allocation5], 4
      %s53 = int_to_ptr.vmem [resolvable:$true] %s52
      %58 = dma.hbm_to_vmem [thread:$0]  %s1, 1024, %s53, [#allocation6], 64, 64, 4
    $region9: #{tpu_custom_call.1} parent=1 // pred_fallthru
      _
    // Predicated region
    $region10: #{tpu_custom_call.1} parent=1 // pred_check
      _
    $region11: #{tpu_custom_call.1} parent=1 // pred_check_branch
      %60 = sbr.rel (0) target = $region13
    $region12: #{tpu_custom_call.1} parent=1 // pred_region
      %s62 = ssub.s32 16, 16
      %63 = vsyncadd [#allocation6], %s62
      %s65 = sshll.u32 [#allocation7], 4
      %s66 = int_to_ptr.vmem [resolvable:$true] %s65
      %68 = dma.hbm_to_vmem [thread:$0]  %s2, 16, %s66, [#allocation6]
    $region13: #{tpu_custom_call.1} parent=1 // pred_fallthru
      _
    // Predicated region
    $region14: #{tpu_custom_call.1} parent=1 // pred_check
      _
    $region15: #{tpu_custom_call.1} parent=1 // pred_check_branch
      %70 = sbr.rel (0) target = $region17
    $region16: #{tpu_custom_call.1} parent=1 // pred_region
      %s72 = ssub.s32 1664, 1664
      %73 = vsyncadd [#allocation9], %s72
      %s74 = sshll.u32 [#allocation8], 4
      %s75 = int_to_ptr.vmem [resolvable:$true] %s74
      %80 = dma.hbm_to_vmem [thread:$0]  %s3, 1664, %s75, [#allocation9], 128, 128, 8
    $region17: #{tpu_custom_call.1} parent=1 // pred_fallthru
      _
    // Predicated region
    $region18: #{tpu_custom_call.1} parent=1 // pred_check
      _
    $region19: #{tpu_custom_call.1} parent=1 // pred_check_branch
      %82 = sbr.rel (0) target = $region21
    $region20: #{tpu_custom_call.1} parent=1 // pred_region
      %s84 = ssub.s32 208, 208
      %85 = vsyncadd [#allocation9], %s84
      %s86 = sshll.u32 [#allocation10], 4
      %s87 = int_to_ptr.vmem [resolvable:$true] %s86
      %92 = dma.hbm_to_vmem [thread:$0]  %s4, 208, %s87, [#allocation9], 16, 16, 1
    $region21: #{tpu_custom_call.1} parent=1 // pred_fallthru
      _
    // Predicated region
    $region22: #{tpu_custom_call.1} parent=1 // pred_check
      _
    $region23: #{tpu_custom_call.1} parent=1 // pred_check_branch
      %94 = sbr.rel (0) target = $region25
    $region24: #{tpu_custom_call.1} parent=1 // pred_region
      %s96 = ssub.s32 13312, 13312
      %97 = vsyncadd [#allocation12], %s96
      %s98 = sshll.u32 [#allocation11], 4
      %s99 = int_to_ptr.vmem [resolvable:$true] %s98
      %104 = dma.hbm_to_vmem [thread:$0]  %s5, 13312, %s99, [#allocation12], 64, 64, 4
    $region25: #{tpu_custom_call.1} parent=1 // pred_fallthru
      _
    // Predicated region
    $region26: #{tpu_custom_call.1} parent=1 // pred_check
      _
    $region27: #{tpu_custom_call.1} parent=1 // pred_check_branch
      %106 = sbr.rel (0) target = $region29
    $region28: #{tpu_custom_call.1} parent=1 // pred_region
      %s108 = ssub.s32 208, 208
      %109 = vsyncadd [#allocation12], %s108
      %s110 = sshll.u32 [#allocation13], 4
      %s111 = int_to_ptr.vmem [resolvable:$true] %s110
      %116 = dma.hbm_to_vmem [thread:$0]  %s6, 208, %s111, [#allocation12], 16, 16, 1
    $region29: #{tpu_custom_call.1} parent=1 // pred_fallthru
      _
    // Predicated region
    $region30: #{tpu_custom_call.1} parent=1 // pred_check
      _
    $region31: #{tpu_custom_call.1} parent=1 // pred_check_branch
      %118 = sbr.rel (0) target = $region33
    $region32: #{tpu_custom_call.1} parent=1 // pred_region
      %s120 = ssub.s32 64, 64
      %121 = vsyncadd [#allocation15], %s120
      %s123 = sshll.u32 [#allocation14], 4
      %s124 = int_to_ptr.vmem [resolvable:$true] %s123
      %126 = dma.hbm_to_vmem [thread:$0]  %s7, 64, %s124, [#allocation15]
    $region33: #{tpu_custom_call.1} parent=1 // pred_fallthru
      _
    // Predicated region
    $region34: #{tpu_custom_call.1} parent=1 // pred_check
      _
    $region35: #{tpu_custom_call.1} parent=1 // pred_check_branch
      %128 = sbr.rel (0) target = $region37
    $region36: #{tpu_custom_call.1} parent=1 // pred_region
      %s130 = ssub.s32 1024, 1024
      %131 = vsyncadd [#allocation15], %s130
      %s132 = sshll.u32 [#allocation16], 4
      %s133 = int_to_ptr.vmem [resolvable:$true] %s132
      %138 = dma.hbm_to_vmem [thread:$0]  %s8, 1024, %s133, [#allocation15], 64, 64, 4
    $region37: #{tpu_custom_call.1} parent=1 // pred_fallthru
      _
    // Predicated region
    $region38: #{tpu_custom_call.1} parent=1 // pred_check
      _
    $region39: #{tpu_custom_call.1} parent=1 // pred_check_branch
      %140 = sbr.rel (0) target = $region41
    $region40: #{tpu_custom_call.1} parent=1 // pred_region
      %s142 = ssub.s32 16, 16
      %143 = vsyncadd [#allocation18], %s142
      %s145 = sshll.u32 [#allocation17], 4
      %s146 = int_to_ptr.vmem [resolvable:$true] %s145
      %148 = dma.hbm_to_vmem [thread:$0]  %s9, 16, %s146, [#allocation18]
    $region41: #{tpu_custom_call.1} parent=1 // pred_fallthru
      _
    // Predicated region
    $region42: #{tpu_custom_call.1} parent=1 // pred_check
      _
    $region43: #{tpu_custom_call.1} parent=1 // pred_check_branch
      %150 = sbr.rel (0) target = $region45
    $region44: #{tpu_custom_call.1} parent=1 // pred_region
      %s152 = ssub.s32 12288, 12288
      %153 = vsyncadd [#allocation18], %s152
      %s154 = sshll.u32 [#allocation19], 4
      %s155 = int_to_ptr.vmem [resolvable:$true] %s154
      %160 = dma.hbm_to_vmem [thread:$0]  %s10, 12288, %s155, [#allocation18], 128, 128, 8
    $region45: #{tpu_custom_call.1} parent=1 // pred_fallthru
      _
    // Predicated region
    $region46: #{tpu_custom_call.1} parent=1 // pred_check
      _
    $region47: #{tpu_custom_call.1} parent=1 // pred_check_branch
      %162 = sbr.rel (0) target = $region49
    $region48: #{tpu_custom_call.1} parent=1 // pred_region
      _
    $region49: #{tpu_custom_call.1} parent=1 // pred_fallthru
      _
    // Predicated region
    $region50: #{tpu_custom_call.1} parent=1 // pred_check
      _
    $region51: #{tpu_custom_call.1} parent=1 // pred_check_branch
      %164 = sbr.rel (0) target = $region53
    $region52: #{tpu_custom_call.1} parent=1 // pred_region
      _
    $region53: #{tpu_custom_call.1} parent=1 // pred_fallthru
      _
    // Predicated region
    $region54: #{tpu_custom_call.1} parent=1 // pred_check
      _
    $region55: #{tpu_custom_call.1} parent=1 // pred_check_branch
      %166 = sbr.rel (0) target = $region57
    $region56: #{tpu_custom_call.1} parent=1 // pred_region
      _
    $region57: #{tpu_custom_call.1} parent=1 // pred_fallthru
      _
    // Predicated region
    $region58: #{tpu_custom_call.1} parent=1 // pred_check
      _
    $region59: #{tpu_custom_call.1} parent=1 // pred_check_branch
      %168 = sbr.rel (0) target = $region61
    $region60: #{tpu_custom_call.1} parent=1 // pred_region
      _
    $region61: #{tpu_custom_call.1} parent=1 // pred_fallthru
      _
    // Predicated region
    $region62: #{tpu_custom_call.1} parent=1 // pred_check
      _
    $region63: #{tpu_custom_call.1} parent=1 // pred_check_branch
      %170 = sbr.rel (0) target = $region65
    $region64: #{tpu_custom_call.1} parent=1 // pred_region
      _
    $region65: #{tpu_custom_call.1} parent=1 // pred_fallthru
      _
    // Predicated region
    $region66: #{tpu_custom_call.1} parent=1 // pred_check
      _
    $region67: #{tpu_custom_call.1} parent=1 // pred_check_branch
      %172 = sbr.rel (0) target = $region69
    $region68: #{tpu_custom_call.1} parent=1 // pred_region
      _
    $region69: #{tpu_custom_call.1} parent=1 // pred_fallthru
      _
    // Predicated region
    $region70: #{tpu_custom_call.1} parent=1 // pred_check
      _
    $region71: #{tpu_custom_call.1} parent=1 // pred_check_branch
      %174 = sbr.rel (0) target = $region73
    $region72: #{tpu_custom_call.1} parent=1 // pred_region
      _
    $region73: #{tpu_custom_call.1} parent=1 // pred_fallthru
      _
    // Predicated region
    $region74: #{tpu_custom_call.1} parent=1 // pred_check
      _
    $region75: #{tpu_custom_call.1} parent=1 // pred_check_branch
      %176 = sbr.rel (0) target = $region77
    $region76: #{tpu_custom_call.1} parent=1 // pred_region
      _
    $region77: #{tpu_custom_call.1} parent=1 // pred_fallthru
      _
    // Predicated region
    $region78: #{tpu_custom_call.1} parent=1 // pred_check
      _
    $region79: #{tpu_custom_call.1} parent=1 // pred_check_branch
      %178 = sbr.rel (0) target = $region81
    $region80: #{tpu_custom_call.1} parent=1 // pred_region
      _
    $region81: #{tpu_custom_call.1} parent=1 // pred_fallthru
      _
    // Predicated region
    $region82: #{tpu_custom_call.1} parent=1 // pred_check
      _
    $region83: #{tpu_custom_call.1} parent=1 // pred_check_branch
      %180 = sbr.rel (0) target = $region85
    $region84: #{tpu_custom_call.1} parent=1 // pred_region
      _
    $region85: #{tpu_custom_call.1} parent=1 // pred_fallthru
      _
    // Predicated region
    $region86: #{tpu_custom_call.1} parent=1 // pred_check
      _
    $region87: #{tpu_custom_call.1} parent=1 // pred_check_branch
      %182 = sbr.rel (0) target = $region89
    $region88: #{tpu_custom_call.1} parent=1 // pred_region
      _
    $region89: #{tpu_custom_call.1} parent=1 // pred_fallthru
      _
    // Predicated region
    $region90: #{tpu_custom_call.1} parent=1 // pred_check
      _
    $region91: #{tpu_custom_call.1} parent=1 // pred_check_branch
      %184 = sbr.rel (0) target = $region93
    $region92: #{tpu_custom_call.1} parent=1 // pred_region
      _
    $region93: #{tpu_custom_call.1} parent=1 // pred_fallthru
      _
    // Predicated region
    $region94: #{tpu_custom_call.1} parent=1 // pred_check
      _
    $region95: #{tpu_custom_call.1} parent=1 // pred_check_branch
      %186 = sbr.rel (0) target = $region97
    $region96: #{tpu_custom_call.1} parent=1 // pred_region
      %187 = dma.done [#allocation3], 2048
    $region97: #{tpu_custom_call.1} parent=1 // pred_fallthru
      _
    // Predicated region
    $region98: #{tpu_custom_call.1} parent=1 // pred_check
      _
    $region99: #{tpu_custom_call.1} parent=1 // pred_check_branch
      %189 = sbr.rel (0) target = $region101
    $region100: #{tpu_custom_call.1} parent=1 // pred_region
      %190 = dma.done [#allocation6], 1024
    $region101: #{tpu_custom_call.1} parent=1 // pred_fallthru
      _
    // Predicated region
    $region102: #{tpu_custom_call.1} parent=1 // pred_check
      _
    $region103: #{tpu_custom_call.1} parent=1 // pred_check_branch
      %192 = sbr.rel (0) target = $region105
    $region104: #{tpu_custom_call.1} parent=1 // pred_region
      %193 = dma.done [#allocation6], 16
    $region105: #{tpu_custom_call.1} parent=1 // pred_fallthru
      _
    // Predicated region
    $region106: #{tpu_custom_call.1} parent=1 // pred_check
      _
    $region107: #{tpu_custom_call.1} parent=1 // pred_check_branch
      %195 = sbr.rel (0) target = $region109
    $region108: #{tpu_custom_call.1} parent=1 // pred_region
      %196 = dma.done [#allocation9], 1664
    $region109: #{tpu_custom_call.1} parent=1 // pred_fallthru
      _
    // Predicated region
    $region110: #{tpu_custom_call.1} parent=1 // pred_check
      _
    $region111: #{tpu_custom_call.1} parent=1 // pred_check_branch
      %198 = sbr.rel (0) target = $region113
    $region112: #{tpu_custom_call.1} parent=1 // pred_region
      %199 = dma.done [#allocation9], 208
    $region113: #{tpu_custom_call.1} parent=1 // pred_fallthru
      _
    // Predicated region
    $region114: #{tpu_custom_call.1} parent=1 // pred_check
      _
    $region115: #{tpu_custom_call.1} parent=1 // pred_check_branch
      %201 = sbr.rel (0) target = $region117
    $region116: #{tpu_custom_call.1} parent=1 // pred_region
      %202 = dma.done [#allocation12], 13312
    $region117: #{tpu_custom_call.1} parent=1 // pred_fallthru
      _
    // Predicated region
    $region118: #{tpu_custom_call.1} parent=1 // pred_check
      _
    $region119: #{tpu_custom_call.1} parent=1 // pred_check_branch
      %204 = sbr.rel (0) target = $region121
    $region120: #{tpu_custom_call.1} parent=1 // pred_region
      %205 = dma.done [#allocation12], 208
    $region121: #{tpu_custom_call.1} parent=1 // pred_fallthru
      _
    // Predicated region
    $region122: #{tpu_custom_call.1} parent=1 // pred_check
      _
    $region123: #{tpu_custom_call.1} parent=1 // pred_check_branch
      %207 = sbr.rel (0) target = $region125
    $region124: #{tpu_custom_call.1} parent=1 // pred_region
      %208 = dma.done [#allocation15], 64
    $region125: #{tpu_custom_call.1} parent=1 // pred_fallthru
      _
    // Predicated region
    $region126: #{tpu_custom_call.1} parent=1 // pred_check
      _
    $region127: #{tpu_custom_call.1} parent=1 // pred_check_branch
      %210 = sbr.rel (0) target = $region129
    $region128: #{tpu_custom_call.1} parent=1 // pred_region
      %211 = dma.done [#allocation15], 1024
    $region129: #{tpu_custom_call.1} parent=1 // pred_fallthru
      _
    // Predicated region
    $region130: #{tpu_custom_call.1} parent=1 // pred_check
      _
    $region131: #{tpu_custom_call.1} parent=1 // pred_check_branch
      %213 = sbr.rel (0) target = $region133
    $region132: #{tpu_custom_call.1} parent=1 // pred_region
      %214 = dma.done [#allocation18], 16
    $region133: #{tpu_custom_call.1} parent=1 // pred_fallthru
      _
    // Predicated region
    $region134: #{tpu_custom_call.1} parent=1 // pred_check
      _
    $region135: #{tpu_custom_call.1} parent=1 // pred_check_branch
      %216 = sbr.rel (0) target = $region137
    $region136: #{tpu_custom_call.1} parent=1 // pred_region
      %217 = dma.done [#allocation18], 12288
    $region137: #{tpu_custom_call.1} parent=1 // pred_fallthru
      _
    %v219 = vld [vmem:[#allocation2] sm:$0xf]
    %v220 = vld [vmem:[#allocation2 + $0x4] sm:$0xf]
    %v221 = vld [vmem:[#allocation2 + $0x8] sm:$0xf]
    %v222 = vld [vmem:[#allocation2 + $0xc] sm:$0xf]
    %v223 = vld [vmem:[#allocation2 + $0x10] sm:$0xf]
    %v224 = vld [vmem:[#allocation2 + $0x14] sm:$0xf]
    %v225 = vld [vmem:[#allocation2 + $0x18] sm:$0xf]
    %v226 = vld [vmem:[#allocation2 + $0x1c] sm:$0xf]
    %v227 = vld [vmem:[#allocation2 + $0x20] sm:$0xf]
    %v228 = vld [vmem:[#allocation2 + $0x24] sm:$0xf]
    %v229 = vld [vmem:[#allocation2 + $0x28] sm:$0xf]
    %v230 = vld [vmem:[#allocation2 + $0x2c] sm:$0xf]
    %v231 = vld [vmem:[#allocation2 + $0x30] sm:$0xf]
    %v232 = vld [vmem:[#allocation2 + $0x34] sm:$0xf]
    %v233 = vld [vmem:[#allocation2 + $0x38] sm:$0xf]
    %v234 = vld [vmem:[#allocation2 + $0x3c] sm:$0xf]
    %v235 = vld [vmem:[#allocation2 + $0x40] sm:$0xf]
    %v236 = vld [vmem:[#allocation2 + $0x44] sm:$0xf]
    %v237 = vld [vmem:[#allocation2 + $0x48] sm:$0xf]
    %v238 = vld [vmem:[#allocation2 + $0x4c] sm:$0xf]
    %v239 = vld [vmem:[#allocation2 + $0x50] sm:$0xf]
    %v240 = vld [vmem:[#allocation2 + $0x54] sm:$0xf]
    %v241 = vld [vmem:[#allocation2 + $0x58] sm:$0xf]
    %v242 = vld [vmem:[#allocation2 + $0x5c] sm:$0xf]
    %v243 = vld [vmem:[#allocation2 + $0x60] sm:$0xf]
    %v244 = vld [vmem:[#allocation2 + $0x64] sm:$0xf]
    %v245 = vld [vmem:[#allocation2 + $0x68] sm:$0xf]
    %v246 = vld [vmem:[#allocation2 + $0x6c] sm:$0xf]
    %v247 = vld [vmem:[#allocation2 + $0x70] sm:$0xf]
    %v248 = vld [vmem:[#allocation2 + $0x74] sm:$0xf]
    %v249 = vld [vmem:[#allocation2 + $0x78] sm:$0xf]
    %v250 = vld [vmem:[#allocation2 + $0x7c] sm:$0xf]
    %v251 = vld [vmem:[#allocation5] sm:$0xf]
    %v252 = vld [vmem:[#allocation5 + $0x4] sm:$0xf]
    %v253 = vld [vmem:[#allocation5 + $0x8] sm:$0xf]
    %v254 = vld [vmem:[#allocation5 + $0xc] sm:$0xf]
    %v255 = vld [vmem:[#allocation5 + $0x10] sm:$0xf]
    %v256 = vld [vmem:[#allocation5 + $0x14] sm:$0xf]
    %v257 = vld [vmem:[#allocation5 + $0x18] sm:$0xf]
    %v258 = vld [vmem:[#allocation5 + $0x1c] sm:$0xf]
    %v259 = vld [vmem:[#allocation5 + $0x20] sm:$0xf]
    %v260 = vld [vmem:[#allocation5 + $0x24] sm:$0xf]
    %v261 = vld [vmem:[#allocation5 + $0x28] sm:$0xf]
    %v262 = vld [vmem:[#allocation5 + $0x2c] sm:$0xf]
    %v263 = vld [vmem:[#allocation5 + $0x30] sm:$0xf]
    %v264 = vld [vmem:[#allocation5 + $0x34] sm:$0xf]
    %v265 = vld [vmem:[#allocation5 + $0x38] sm:$0xf]
    %v266 = vld [vmem:[#allocation5 + $0x3c] sm:$0xf]
    %v267 = vld [vmem:[#allocation7] sm:$0x1]
    %v269 = vlaneseq
    %v270 = vshrl.u32 %v269, 7
    %v271 = vsub.s32 0, %v270
    %v272 = vrot.slane %v267, %v271
    %v306 = vunpack.c.l.b16 %v219
    %v307 = vunpack.c.l.b16 %v220
    %v308 = vunpack.c.l.b16 %v221
    %v309 = vunpack.c.l.b16 %v222
    %v310 = vunpack.c.l.b16 %v223
    %v311 = vunpack.c.l.b16 %v224
    %v312 = vunpack.c.l.b16 %v225
    %v313 = vunpack.c.l.b16 %v226
    %v314 = vunpack.c.l.b16 %v227
    %v315 = vunpack.c.l.b16 %v228
    %v316 = vunpack.c.l.b16 %v229
    %v317 = vunpack.c.l.b16 %v230
    %v318 = vunpack.c.l.b16 %v231
    %v319 = vunpack.c.l.b16 %v232
    %v320 = vunpack.c.l.b16 %v233
    %v321 = vunpack.c.l.b16 %v234
    %v322 = vunpack.c.l.b16 %v235
    %v323 = vunpack.c.l.b16 %v236
    %v324 = vunpack.c.l.b16 %v237
    %v325 = vunpack.c.l.b16 %v238
    %v326 = vunpack.c.l.b16 %v239
    %v327 = vunpack.c.l.b16 %v240
    %v328 = vunpack.c.l.b16 %v241
    %v329 = vunpack.c.l.b16 %v242
    %v330 = vunpack.c.l.b16 %v243
    %v331 = vunpack.c.l.b16 %v244
    %v332 = vunpack.c.l.b16 %v245
    %v333 = vunpack.c.l.b16 %v246
    %v334 = vunpack.c.l.b16 %v247
    %v335 = vunpack.c.l.b16 %v248
    %v336 = vunpack.c.l.b16 %v249
    %v337 = vunpack.c.l.b16 %v250
    %v338 = vpack.c.b16 %v307, %v306
    %v339 = vpack.c.b16 %v309, %v308
    %v340 = vpack.c.b16 %v311, %v310
    %v341 = vpack.c.b16 %v313, %v312
    %v342 = vpack.c.b16 %v315, %v314
    %v343 = vpack.c.b16 %v317, %v316
    %v344 = vpack.c.b16 %v319, %v318
    %v345 = vpack.c.b16 %v321, %v320
    %v346 = vpack.c.b16 %v323, %v322
    %v347 = vpack.c.b16 %v325, %v324
    %v348 = vpack.c.b16 %v327, %v326
    %v349 = vpack.c.b16 %v329, %v328
    %v350 = vpack.c.b16 %v331, %v330
    %v351 = vpack.c.b16 %v333, %v332
    %v352 = vpack.c.b16 %v335, %v334
    %v353 = vpack.c.b16 %v337, %v336
    %v386 = vunpack.c.l.b16 %v251
    %v387 = vunpack.c.l.b16 %v252
    %v388 = vunpack.c.l.b16 %v253
    %v389 = vunpack.c.l.b16 %v254
    %v390 = vunpack.c.l.b16 %v255
    %v391 = vunpack.c.l.b16 %v256
    %v392 = vunpack.c.l.b16 %v257
    %v393 = vunpack.c.l.b16 %v258
    %v394 = vunpack.c.l.b16 %v259
    %v395 = vunpack.c.l.b16 %v260
    %v396 = vunpack.c.l.b16 %v261
    %v397 = vunpack.c.l.b16 %v262
    %v398 = vunpack.c.l.b16 %v263
    %v399 = vunpack.c.l.b16 %v264
    %v400 = vunpack.c.l.b16 %v265
    %v401 = vunpack.c.l.b16 %v266
    %v402 = vpack.c.b16 %v387, %v386
    %v403 = vpack.c.b16 %v389, %v388
    %v404 = vpack.c.b16 %v391, %v390
    %v405 = vpack.c.b16 %v393, %v392
    %v406 = vpack.c.b16 %v395, %v394
    %v407 = vpack.c.b16 %v397, %v396
    %v408 = vpack.c.b16 %v399, %v398
    %v409 = vpack.c.b16 %v401, %v400
    %418 = vmatprep.subr.bf16.mxu0 0
    %419 = vmatpush1.bf16.msra.mxu0 %v402
    %420 = vmatprep.subr.bf16.mxu0 0
    %421 = vmatpush1.bf16.msra.mxu0 %v403
    %422 = vmatprep.subr.bf16.mxu0 0
    %423 = vmatpush1.bf16.msra.mxu0 %v404
    %424 = vmatprep.subr.bf16.mxu0 0
    %425 = vmatpush1.bf16.msra.mxu0 %v405
    %426 = vmatprep.subr.bf16.mxu0 0
    %427 = vmatpush1.bf16.msra.mxu0 %v406
    %428 = vmatprep.subr.bf16.mxu0 0
    %429 = vmatpush1.bf16.msra.mxu0 %v407
    %430 = vmatprep.subr.bf16.mxu0 0
    %431 = vmatpush1.bf16.msra.mxu0 %v408
    %432 = vmatprep.subr.bf16.mxu0 0
    %433 = vmatpush1.bf16.msra.mxu0 %v409
    %434 = vmatprep.subr.bf16.mxu0 0
    %435 = vmatpush1.bf16.msra.mxu0 0
    %436 = vmatprep.subr.bf16.mxu0 0
    %437 = vmatpush1.bf16.msra.mxu0 0
    %438 = vmatprep.subr.bf16.mxu0 0
    %439 = vmatpush1.bf16.msra.mxu0 0
    %440 = vmatprep.subr.bf16.mxu0 0
    %441 = vmatpush1.bf16.msra.mxu0 0
    %442 = vmatprep.subr.bf16.mxu0 0
    %443 = vmatpush1.bf16.msra.mxu0 0
    %444 = vmatprep.subr.bf16.mxu0 0
    %445 = vmatpush1.bf16.msra.mxu0 0
    %446 = vmatprep.subr.bf16.mxu0 0
    %447 = vmatpush1.bf16.msra.mxu0 0
    %448 = vmatprep.subr.bf16.mxu0 0
    %449 = vmatpush1.bf16.msra.mxu0 0
    %450 = vmatprep.mubr.bf16.mxu0 0
    %451 = vmatmul.mubr.bf16.gmra.mrb[0].mxu0 %v338
    %v452 = vpop.f32.mrb[0].mxu0
    %v453 = vadd.f32 %v272, %v452
    %v454 = vpop.f32.mrb[0].mxu0
    %v455 = vpop.f32.mrb[0].mxu0
    %v456 = vadd.f32 %v272, %v455
    %v457 = vpop.f32.mrb[0].mxu0
    %458 = vmatprep.mubr.bf16.mxu0 0
    %459 = vmatmul.mubr.bf16.gmra.mrb[0].mxu0 %v339
    %v460 = vpop.f32.mrb[0].mxu0
    %v461 = vadd.f32 %v272, %v460
    %v462 = vpop.f32.mrb[0].mxu0
    %v463 = vpop.f32.mrb[0].mxu0
    %v464 = vadd.f32 %v272, %v463
    %v465 = vpop.f32.mrb[0].mxu0
    %466 = vmatprep.mubr.bf16.mxu0 0
    %467 = vmatmul.mubr.bf16.gmra.mrb[0].mxu0 %v340
    %v468 = vpop.f32.mrb[0].mxu0
    %v469 = vadd.f32 %v272, %v468
    %v470 = vpop.f32.mrb[0].mxu0
    %v471 = vpop.f32.mrb[0].mxu0
    %v472 = vadd.f32 %v272, %v471
    %v473 = vpop.f32.mrb[0].mxu0
    %474 = vmatprep.mubr.bf16.mxu0 0
    %475 = vmatmul.mubr.bf16.gmra.mrb[0].mxu0 %v341
    %v476 = vpop.f32.mrb[0].mxu0
    %v477 = vadd.f32 %v272, %v476
    %v478 = vpop.f32.mrb[0].mxu0
    %v479 = vpop.f32.mrb[0].mxu0
    %v480 = vadd.f32 %v272, %v479
    %v481 = vpop.f32.mrb[0].mxu0
    %482 = vmatprep.mubr.bf16.mxu0 0
    %483 = vmatmul.mubr.bf16.gmra.mrb[0].mxu0 %v342
    %v484 = vpop.f32.mrb[0].mxu0
    %v485 = vadd.f32 %v272, %v484
    %v486 = vpop.f32.mrb[0].mxu0
    %v487 = vpop.f32.mrb[0].mxu0
    %v488 = vadd.f32 %v272, %v487
    %v489 = vpop.f32.mrb[0].mxu0
    %490 = vmatprep.mubr.bf16.mxu0 0
    %491 = vmatmul.mubr.bf16.gmra.mrb[0].mxu0 %v343
    %v492 = vpop.f32.mrb[0].mxu0
    %v493 = vadd.f32 %v272, %v492
    %v494 = vpop.f32.mrb[0].mxu0
    %v495 = vpop.f32.mrb[0].mxu0
    %v496 = vadd.f32 %v272, %v495
    %v497 = vpop.f32.mrb[0].mxu0
    %498 = vmatprep.mubr.bf16.mxu0 0
    %499 = vmatmul.mubr.bf16.gmra.mrb[0].mxu0 %v344
    %v500 = vpop.f32.mrb[0].mxu0
    %v501 = vadd.f32 %v272, %v500
    %v502 = vpop.f32.mrb[0].mxu0
    %v503 = vpop.f32.mrb[0].mxu0
    %v504 = vadd.f32 %v272, %v503
    %v505 = vpop.f32.mrb[0].mxu0
    %506 = vmatprep.mubr.bf16.mxu0 0
    %507 = vmatmul.mubr.bf16.gmra.mrb[0].mxu0 %v345
    %v508 = vpop.f32.mrb[0].mxu0
    %v509 = vadd.f32 %v272, %v508
    %v510 = vpop.f32.mrb[0].mxu0
    %v511 = vpop.f32.mrb[0].mxu0
    %v512 = vadd.f32 %v272, %v511
    %v513 = vpop.f32.mrb[0].mxu0
    %514 = vmatprep.mubr.bf16.mxu0 0
    %515 = vmatmul.mubr.bf16.gmra.mrb[0].mxu0 %v346
    %v516 = vpop.f32.mrb[0].mxu0
    %v517 = vadd.f32 %v272, %v516
    %v518 = vpop.f32.mrb[0].mxu0
    %v519 = vpop.f32.mrb[0].mxu0
    %v520 = vadd.f32 %v272, %v519
    %v521 = vpop.f32.mrb[0].mxu0
    %522 = vmatprep.mubr.bf16.mxu0 0
    %523 = vmatmul.mubr.bf16.gmra.mrb[0].mxu0 %v347
    %v524 = vpop.f32.mrb[0].mxu0
    %v525 = vadd.f32 %v272, %v524
    %v526 = vpop.f32.mrb[0].mxu0
    %v527 = vpop.f32.mrb[0].mxu0
    %v528 = vadd.f32 %v272, %v527
    %v529 = vpop.f32.mrb[0].mxu0
    %530 = vmatprep.mubr.bf16.mxu0 0
    %531 = vmatmul.mubr.bf16.gmra.mrb[0].mxu0 %v348
    %v532 = vpop.f32.mrb[0].mxu0
    %v533 = vadd.f32 %v272, %v532
    %v534 = vpop.f32.mrb[0].mxu0
    %v535 = vpop.f32.mrb[0].mxu0
    %v536 = vadd.f32 %v272, %v535
    %v537 = vpop.f32.mrb[0].mxu0
    %538 = vmatprep.mubr.bf16.mxu0 0
    %539 = vmatmul.mubr.bf16.gmra.mrb[0].mxu0 %v349
    %v540 = vpop.f32.mrb[0].mxu0
    %v541 = vadd.f32 %v272, %v540
    %v542 = vpop.f32.mrb[0].mxu0
    %v543 = vpop.f32.mrb[0].mxu0
    %v544 = vadd.f32 %v272, %v543
    %v545 = vpop.f32.mrb[0].mxu0
    %546 = vmatprep.mubr.bf16.mxu0 0
    %547 = vmatmul.mubr.bf16.gmra.mrb[0].mxu0 %v350
    %v548 = vpop.f32.mrb[0].mxu0
    %v549 = vadd.f32 %v272, %v548
    %v550 = vpop.f32.mrb[0].mxu0
    %v551 = vpop.f32.mrb[0].mxu0
    %v552 = vadd.f32 %v272, %v551
    %v553 = vpop.f32.mrb[0].mxu0
    %554 = vmatprep.mubr.bf16.mxu0 0
    %555 = vmatmul.mubr.bf16.gmra.mrb[0].mxu0 %v351
    %v556 = vpop.f32.mrb[0].mxu0
    %v557 = vadd.f32 %v272, %v556
    %v558 = vpop.f32.mrb[0].mxu0
    %v559 = vpop.f32.mrb[0].mxu0
    %v560 = vadd.f32 %v272, %v559
    %v561 = vpop.f32.mrb[0].mxu0
    %562 = vmatprep.mubr.bf16.mxu0 0
    %563 = vmatmul.mubr.bf16.gmra.mrb[0].mxu0 %v352
    %v564 = vpop.f32.mrb[0].mxu0
    %v565 = vadd.f32 %v272, %v564
    %v566 = vpop.f32.mrb[0].mxu0
    %v567 = vpop.f32.mrb[0].mxu0
    %v568 = vadd.f32 %v272, %v567
    %v569 = vpop.f32.mrb[0].mxu0
    %570 = vmatprep.mubr.bf16.mxu0 0
    %571 = vmatmul.mubr.bf16.gmra.mrb[0].mxu0 %v353
    %v572 = vpop.f32.mrb[0].mxu0
    %v573 = vadd.f32 %v272, %v572
    %v574 = vpop.f32.mrb[0].mxu0
    %v575 = vpop.f32.mrb[0].mxu0
    %v576 = vadd.f32 %v272, %v575
    %v577 = vpop.f32.mrb[0].mxu0
    %578 = vdwg.mxu0
    %v579 = vmax.f32 %v453, 0.0
    %v580 = vmax.f32 %v456, 0.0
    %v581 = vmax.f32 %v461, 0.0
    %v582 = vmax.f32 %v464, 0.0
    %v583 = vmax.f32 %v469, 0.0
    %v584 = vmax.f32 %v472, 0.0
    %v585 = vmax.f32 %v477, 0.0
    %v586 = vmax.f32 %v480, 0.0
    %v587 = vmax.f32 %v485, 0.0
    %v588 = vmax.f32 %v488, 0.0
    %v589 = vmax.f32 %v493, 0.0
    %v590 = vmax.f32 %v496, 0.0
    %v591 = vmax.f32 %v501, 0.0
    %v592 = vmax.f32 %v504, 0.0
    %v593 = vmax.f32 %v509, 0.0
    %v594 = vmax.f32 %v512, 0.0
    %v595 = vmax.f32 %v517, 0.0
    %v596 = vmax.f32 %v520, 0.0
    %v597 = vmax.f32 %v525, 0.0
    %v598 = vmax.f32 %v528, 0.0
    %v599 = vmax.f32 %v533, 0.0
    %v600 = vmax.f32 %v536, 0.0
    %v601 = vmax.f32 %v541, 0.0
    %v602 = vmax.f32 %v544, 0.0
    %v603 = vmax.f32 %v549, 0.0
    %v604 = vmax.f32 %v552, 0.0
    %v605 = vmax.f32 %v557, 0.0
    %v606 = vmax.f32 %v560, 0.0
    %v607 = vmax.f32 %v565, 0.0
    %v608 = vmax.f32 %v568, 0.0
    %v609 = vmax.f32 %v573, 0.0
    %v610 = vmax.f32 %v576, 0.0
    %v611 = vld [vmem:[#allocation19] sm:$0xff]
    %v612 = vld [vmem:[#allocation19 + $0x8] sm:$0xff]
    %v613 = vld [vmem:[#allocation19 + $0x10] sm:$0xff]
    %v614 = vld [vmem:[#allocation19 + $0x18] sm:$0xff]
    %v615 = vld [vmem:[#allocation19 + $0x20] sm:$0xff]
    %v616 = vld [vmem:[#allocation19 + $0x28] sm:$0xff]
    %v617 = vld [vmem:[#allocation19 + $0x30] sm:$0xff]
    %v618 = vld [vmem:[#allocation19 + $0x38] sm:$0xff]
    %v619 = vld [vmem:[#allocation19 + $0x40] sm:$0xff]
    %v620 = vld [vmem:[#allocation19 + $0x48] sm:$0xff]
    %v621 = vld [vmem:[#allocation19 + $0x50] sm:$0xff]
    %v622 = vld [vmem:[#allocation19 + $0x58] sm:$0xff]
    %v623 = vld [vmem:[#allocation19 + $0x60] sm:$0xff]
    %v624 = vld [vmem:[#allocation19 + $0x68] sm:$0xff]
    %v625 = vld [vmem:[#allocation19 + $0x70] sm:$0xff]
    %v626 = vld [vmem:[#allocation19 + $0x78] sm:$0xff]
    %v627 = vld [vmem:[#allocation19 + $0x80] sm:$0xff]
    %v628 = vld [vmem:[#allocation19 + $0x88] sm:$0xff]
    %v629 = vld [vmem:[#allocation19 + $0x90] sm:$0xff]
    %v630 = vld [vmem:[#allocation19 + $0x98] sm:$0xff]
    %v631 = vld [vmem:[#allocation19 + $0xa0] sm:$0xff]
    %v632 = vld [vmem:[#allocation19 + $0xa8] sm:$0xff]
    %v633 = vld [vmem:[#allocation19 + $0xb0] sm:$0xff]
    %v634 = vld [vmem:[#allocation19 + $0xb8] sm:$0xff]
    %v635 = vld [vmem:[#allocation19 + $0xc0] sm:$0xff]
    %v636 = vld [vmem:[#allocation19 + $0xc8] sm:$0xff]
    %v637 = vld [vmem:[#allocation19 + $0xd0] sm:$0xff]
    %v638 = vld [vmem:[#allocation19 + $0xd8] sm:$0xff]
    %v639 = vld [vmem:[#allocation19 + $0xe0] sm:$0xff]
    %v640 = vld [vmem:[#allocation19 + $0xe8] sm:$0xff]
    %v641 = vld [vmem:[#allocation19 + $0xf0] sm:$0xff]
    %v642 = vld [vmem:[#allocation19 + $0xf8] sm:$0xff]
    %v643 = vld [vmem:[#allocation19 + $0x100] sm:$0xff]
    %v644 = vld [vmem:[#allocation19 + $0x108] sm:$0xff]
    %v645 = vld [vmem:[#allocation19 + $0x110] sm:$0xff]
    %v646 = vld [vmem:[#allocation19 + $0x118] sm:$0xff]
    %v647 = vld [vmem:[#allocation19 + $0x120] sm:$0xff]
    %v648 = vld [vmem:[#allocation19 + $0x128] sm:$0xff]
    %v649 = vld [vmem:[#allocation19 + $0x130] sm:$0xff]
    %v650 = vld [vmem:[#allocation19 + $0x138] sm:$0xff]
    %v651 = vld [vmem:[#allocation19 + $0x140] sm:$0xff]
    %v652 = vld [vmem:[#allocation19 + $0x148] sm:$0xff]
    %v653 = vld [vmem:[#allocation19 + $0x150] sm:$0xff]
    %v654 = vld [vmem:[#allocation19 + $0x158] sm:$0xff]
    %v655 = vld [vmem:[#allocation19 + $0x160] sm:$0xff]
    %v656 = vld [vmem:[#allocation19 + $0x168] sm:$0xff]
    %v657 = vld [vmem:[#allocation19 + $0x170] sm:$0xff]
    %v658 = vld [vmem:[#allocation19 + $0x178] sm:$0xff]
    %v659 = vld [vmem:[#allocation19 + $0x180] sm:$0xff]
    %v660 = vld [vmem:[#allocation19 + $0x188] sm:$0xff]
    %v661 = vld [vmem:[#allocation19 + $0x190] sm:$0xff]
    %v662 = vld [vmem:[#allocation19 + $0x198] sm:$0xff]
    %v663 = vld [vmem:[#allocation19 + $0x1a0] sm:$0xff]
    %v664 = vld [vmem:[#allocation19 + $0x1a8] sm:$0xff]
    %v665 = vld [vmem:[#allocation19 + $0x1b0] sm:$0xff]
    %v666 = vld [vmem:[#allocation19 + $0x1b8] sm:$0xff]
    %v667 = vld [vmem:[#allocation19 + $0x1c0] sm:$0xff]
    %v668 = vld [vmem:[#allocation19 + $0x1c8] sm:$0xff]
    %v669 = vld [vmem:[#allocation19 + $0x1d0] sm:$0xff]
    %v670 = vld [vmem:[#allocation19 + $0x1d8] sm:$0xff]
    %v671 = vld [vmem:[#allocation19 + $0x1e0] sm:$0xff]
    %v672 = vld [vmem:[#allocation19 + $0x1e8] sm:$0xff]
    %v673 = vld [vmem:[#allocation19 + $0x1f0] sm:$0xff]
    %v674 = vld [vmem:[#allocation19 + $0x1f8] sm:$0xff]
    %v675 = vld [vmem:[#allocation19 + $0x200] sm:$0xff]
    %v676 = vld [vmem:[#allocation19 + $0x208] sm:$0xff]
    %v677 = vld [vmem:[#allocation19 + $0x210] sm:$0xff]
    %v678 = vld [vmem:[#allocation19 + $0x218] sm:$0xff]
    %v679 = vld [vmem:[#allocation19 + $0x220] sm:$0xff]
    %v680 = vld [vmem:[#allocation19 + $0x228] sm:$0xff]
    %v681 = vld [vmem:[#allocation19 + $0x230] sm:$0xff]
    %v682 = vld [vmem:[#allocation19 + $0x238] sm:$0xff]
    %v683 = vld [vmem:[#allocation19 + $0x240] sm:$0xff]
    %v684 = vld [vmem:[#allocation19 + $0x248] sm:$0xff]
    %v685 = vld [vmem:[#allocation19 + $0x250] sm:$0xff]
    %v686 = vld [vmem:[#allocation19 + $0x258] sm:$0xff]
    %v687 = vld [vmem:[#allocation19 + $0x260] sm:$0xff]
    %v688 = vld [vmem:[#allocation19 + $0x268] sm:$0xff]
    %v689 = vld [vmem:[#allocation19 + $0x270] sm:$0xff]
    %v690 = vld [vmem:[#allocation19 + $0x278] sm:$0xff]
    %v691 = vld [vmem:[#allocation19 + $0x280] sm:$0xff]
    %v692 = vld [vmem:[#allocation19 + $0x288] sm:$0xff]
    %v693 = vld [vmem:[#allocation19 + $0x290] sm:$0xff]
    %v694 = vld [vmem:[#allocation19 + $0x298] sm:$0xff]
    %v695 = vld [vmem:[#allocation19 + $0x2a0] sm:$0xff]
    %v696 = vld [vmem:[#allocation19 + $0x2a8] sm:$0xff]
    %v697 = vld [vmem:[#allocation19 + $0x2b0] sm:$0xff]
    %v698 = vld [vmem:[#allocation19 + $0x2b8] sm:$0xff]
    %v699 = vld [vmem:[#allocation19 + $0x2c0] sm:$0xff]
    %v700 = vld [vmem:[#allocation19 + $0x2c8] sm:$0xff]
    %v701 = vld [vmem:[#allocation19 + $0x2d0] sm:$0xff]
    %v702 = vld [vmem:[#allocation19 + $0x2d8] sm:$0xff]
    %v703 = vld [vmem:[#allocation19 + $0x2e0] sm:$0xff]
    %v704 = vld [vmem:[#allocation19 + $0x2e8] sm:$0xff]
    %v705 = vld [vmem:[#allocation19 + $0x2f0] sm:$0xff]
    %v706 = vld [vmem:[#allocation19 + $0x2f8] sm:$0xff]
    %v707 = vpack.c.bf16 %v580, %v579
    %v708 = vpack.c.bf16 %v582, %v581
    %v709 = vpack.c.bf16 %v584, %v583
    %v710 = vpack.c.bf16 %v586, %v585
    %v711 = vpack.c.bf16 %v588, %v587
    %v712 = vpack.c.bf16 %v590, %v589
    %v713 = vpack.c.bf16 %v592, %v591
    %v714 = vpack.c.bf16 %v594, %v593
    %v715 = vpack.c.bf16 %v596, %v595
    %v716 = vpack.c.bf16 %v598, %v597
    %v717 = vpack.c.bf16 %v600, %v599
    %v718 = vpack.c.bf16 %v602, %v601
    %v719 = vpack.c.bf16 %v604, %v603
    %v720 = vpack.c.bf16 %v606, %v605
    %v721 = vpack.c.bf16 %v608, %v607
    %v722 = vpack.c.bf16 %v610, %v609
    %v819 = vunpack.c.l.b16 %v611
    %v820 = vunpack.c.h.b16 %v611
    %v821 = vunpack.c.l.b16 %v612
    %v822 = vunpack.c.h.b16 %v612
    %v823 = vunpack.c.l.b16 %v613
    %v824 = vunpack.c.h.b16 %v613
    %v825 = vunpack.c.l.b16 %v614
    %v826 = vunpack.c.h.b16 %v614
    %v827 = vunpack.c.l.b16 %v615
    %v828 = vunpack.c.h.b16 %v615
    %v829 = vunpack.c.l.b16 %v616
    %v830 = vunpack.c.h.b16 %v616
    %v831 = vunpack.c.l.b16 %v617
    %v832 = vunpack.c.h.b16 %v617
    %v833 = vunpack.c.l.b16 %v618
    %v834 = vunpack.c.h.b16 %v618
    %v835 = vunpack.c.l.b16 %v619
    %v836 = vunpack.c.h.b16 %v619
    %v837 = vunpack.c.l.b16 %v620
    %v838 = vunpack.c.h.b16 %v620
    %v839 = vunpack.c.l.b16 %v621
    %v840 = vunpack.c.h.b16 %v621
    %v841 = vunpack.c.l.b16 %v622
    %v842 = vunpack.c.h.b16 %v622
    %v843 = vunpack.c.l.b16 %v623
    %v844 = vunpack.c.h.b16 %v623
    %v845 = vunpack.c.l.b16 %v624
    %v846 = vunpack.c.h.b16 %v624
    %v847 = vunpack.c.l.b16 %v625
    %v848 = vunpack.c.h.b16 %v625
    %v849 = vunpack.c.l.b16 %v626
    %v850 = vunpack.c.h.b16 %v626
    %v851 = vunpack.c.l.b16 %v627
    %v852 = vunpack.c.h.b16 %v627
    %v853 = vunpack.c.l.b16 %v628
    %v854 = vunpack.c.h.b16 %v628
    %v855 = vunpack.c.l.b16 %v629
    %v856 = vunpack.c.h.b16 %v629
    %v857 = vunpack.c.l.b16 %v630
    %v858 = vunpack.c.h.b16 %v630
    %v859 = vunpack.c.l.b16 %v631
    %v860 = vunpack.c.h.b16 %v631
    %v861 = vunpack.c.l.b16 %v632
    %v862 = vunpack.c.h.b16 %v632
    %v863 = vunpack.c.l.b16 %v633
    %v864 = vunpack.c.h.b16 %v633
    %v865 = vunpack.c.l.b16 %v634
    %v866 = vunpack.c.h.b16 %v634
    %v867 = vunpack.c.l.b16 %v635
    %v868 = vunpack.c.h.b16 %v635
    %v869 = vunpack.c.l.b16 %v636
    %v870 = vunpack.c.h.b16 %v636
    %v871 = vunpack.c.l.b16 %v637
    %v872 = vunpack.c.h.b16 %v637
    %v873 = vunpack.c.l.b16 %v638
    %v874 = vunpack.c.h.b16 %v638
    %v875 = vunpack.c.l.b16 %v639
    %v876 = vunpack.c.h.b16 %v639
    %v877 = vunpack.c.l.b16 %v640
    %v878 = vunpack.c.h.b16 %v640
    %v879 = vunpack.c.l.b16 %v641
    %v880 = vunpack.c.h.b16 %v641
    %v881 = vunpack.c.l.b16 %v642
    %v882 = vunpack.c.h.b16 %v642
    %v883 = vunpack.c.l.b16 %v643
    %v884 = vunpack.c.h.b16 %v643
    %v885 = vunpack.c.l.b16 %v644
    %v886 = vunpack.c.h.b16 %v644
    %v887 = vunpack.c.l.b16 %v645
    %v888 = vunpack.c.h.b16 %v645
    %v889 = vunpack.c.l.b16 %v646
    %v890 = vunpack.c.h.b16 %v646
    %v891 = vunpack.c.l.b16 %v647
    %v892 = vunpack.c.h.b16 %v647
    %v893 = vunpack.c.l.b16 %v648
    %v894 = vunpack.c.h.b16 %v648
    %v895 = vunpack.c.l.b16 %v649
    %v896 = vunpack.c.h.b16 %v649
    %v897 = vunpack.c.l.b16 %v650
    %v898 = vunpack.c.h.b16 %v650
    %v899 = vunpack.c.l.b16 %v651
    %v900 = vunpack.c.h.b16 %v651
    %v901 = vunpack.c.l.b16 %v652
    %v902 = vunpack.c.h.b16 %v652
    %v903 = vunpack.c.l.b16 %v653
    %v904 = vunpack.c.h.b16 %v653
    %v905 = vunpack.c.l.b16 %v654
    %v906 = vunpack.c.h.b16 %v654
    %v907 = vunpack.c.l.b16 %v655
    %v908 = vunpack.c.h.b16 %v655
    %v909 = vunpack.c.l.b16 %v656
    %v910 = vunpack.c.h.b16 %v656
    %v911 = vunpack.c.l.b16 %v657
    %v912 = vunpack.c.h.b16 %v657
    %v913 = vunpack.c.l.b16 %v658
    %v914 = vunpack.c.h.b16 %v658
    %v915 = vunpack.c.l.b16 %v659
    %v916 = vunpack.c.h.b16 %v659
    %v917 = vunpack.c.l.b16 %v660
    %v918 = vunpack.c.h.b16 %v660
    %v919 = vunpack.c.l.b16 %v661
    %v920 = vunpack.c.h.b16 %v661
    %v921 = vunpack.c.l.b16 %v662
    %v922 = vunpack.c.h.b16 %v662
    %v923 = vunpack.c.l.b16 %v663
    %v924 = vunpack.c.h.b16 %v663
    %v925 = vunpack.c.l.b16 %v664
    %v926 = vunpack.c.h.b16 %v664
    %v927 = vunpack.c.l.b16 %v665
    %v928 = vunpack.c.h.b16 %v665
    %v929 = vunpack.c.l.b16 %v666
    %v930 = vunpack.c.h.b16 %v666
    %v931 = vunpack.c.l.b16 %v667
    %v932 = vunpack.c.h.b16 %v667
    %v933 = vunpack.c.l.b16 %v668
    %v934 = vunpack.c.h.b16 %v668
    %v935 = vunpack.c.l.b16 %v669
    %v936 = vunpack.c.h.b16 %v669
    %v937 = vunpack.c.l.b16 %v670
    %v938 = vunpack.c.h.b16 %v670
    %v939 = vunpack.c.l.b16 %v671
    %v940 = vunpack.c.h.b16 %v671
    %v941 = vunpack.c.l.b16 %v672
    %v942 = vunpack.c.h.b16 %v672
    %v943 = vunpack.c.l.b16 %v673
    %v944 = vunpack.c.h.b16 %v673
    %v945 = vunpack.c.l.b16 %v674
    %v946 = vunpack.c.h.b16 %v674
    %v947 = vunpack.c.l.b16 %v675
    %v948 = vunpack.c.h.b16 %v675
    %v949 = vunpack.c.l.b16 %v676
    %v950 = vunpack.c.h.b16 %v676
    %v951 = vunpack.c.l.b16 %v677
    %v952 = vunpack.c.h.b16 %v677
    %v953 = vunpack.c.l.b16 %v678
    %v954 = vunpack.c.h.b16 %v678
    %v955 = vunpack.c.l.b16 %v679
    %v956 = vunpack.c.h.b16 %v679
    %v957 = vunpack.c.l.b16 %v680
    %v958 = vunpack.c.h.b16 %v680
    %v959 = vunpack.c.l.b16 %v681
    %v960 = vunpack.c.h.b16 %v681
    %v961 = vunpack.c.l.b16 %v682
    %v962 = vunpack.c.h.b16 %v682
    %v963 = vunpack.c.l.b16 %v683
    %v964 = vunpack.c.h.b16 %v683
    %v965 = vunpack.c.l.b16 %v684
    %v966 = vunpack.c.h.b16 %v684
    %v967 = vunpack.c.l.b16 %v685
    %v968 = vunpack.c.h.b16 %v685
    %v969 = vunpack.c.l.b16 %v686
    %v970 = vunpack.c.h.b16 %v686
    %v971 = vunpack.c.l.b16 %v687
    %v972 = vunpack.c.h.b16 %v687
    %v973 = vunpack.c.l.b16 %v688
    %v974 = vunpack.c.h.b16 %v688
    %v975 = vunpack.c.l.b16 %v689
    %v976 = vunpack.c.h.b16 %v689
    %v977 = vunpack.c.l.b16 %v690
    %v978 = vunpack.c.h.b16 %v690
    %v979 = vunpack.c.l.b16 %v691
    %v980 = vunpack.c.h.b16 %v691
    %v981 = vunpack.c.l.b16 %v692
    %v982 = vunpack.c.h.b16 %v692
    %v983 = vunpack.c.l.b16 %v693
    %v984 = vunpack.c.h.b16 %v693
    %v985 = vunpack.c.l.b16 %v694
    %v986 = vunpack.c.h.b16 %v694
    %v987 = vunpack.c.l.b16 %v695
    %v988 = vunpack.c.h.b16 %v695
    %v989 = vunpack.c.l.b16 %v696
    %v990 = vunpack.c.h.b16 %v696
    %v991 = vunpack.c.l.b16 %v697
    %v992 = vunpack.c.h.b16 %v697
    %v993 = vunpack.c.l.b16 %v698
    %v994 = vunpack.c.h.b16 %v698
    %v995 = vunpack.c.l.b16 %v699
    %v996 = vunpack.c.h.b16 %v699
    %v997 = vunpack.c.l.b16 %v700
    %v998 = vunpack.c.h.b16 %v700
    %v999 = vunpack.c.l.b16 %v701
    %v1000 = vunpack.c.h.b16 %v701
    %v1001 = vunpack.c.l.b16 %v702
    %v1002 = vunpack.c.h.b16 %v702
    %v1003 = vunpack.c.l.b16 %v703
    %v1004 = vunpack.c.h.b16 %v703
    %v1005 = vunpack.c.l.b16 %v704
    %v1006 = vunpack.c.h.b16 %v704
    %v1007 = vunpack.c.l.b16 %v705
    %v1008 = vunpack.c.h.b16 %v705
    %v1009 = vunpack.c.l.b16 %v706
    %v1010 = vunpack.c.h.b16 %v706
    %v1011 = vpack.c.b16 %v821, %v819
    %v1012 = vpack.c.b16 %v822, %v820
    %v1013 = vpack.c.b16 %v825, %v823
    %v1014 = vpack.c.b16 %v826, %v824
    %v1015 = vpack.c.b16 %v829, %v827
    %v1016 = vpack.c.b16 %v830, %v828
    %v1017 = vpack.c.b16 %v833, %v831
    %v1018 = vpack.c.b16 %v834, %v832
    %v1019 = vpack.c.b16 %v837, %v835
    %v1020 = vpack.c.b16 %v838, %v836
    %v1021 = vpack.c.b16 %v841, %v839
    %v1022 = vpack.c.b16 %v842, %v840
    %v1023 = vpack.c.b16 %v845, %v843
    %v1024 = vpack.c.b16 %v846, %v844
    %v1025 = vpack.c.b16 %v849, %v847
    %v1026 = vpack.c.b16 %v850, %v848
    %v1027 = vpack.c.b16 %v853, %v851
    %v1028 = vpack.c.b16 %v854, %v852
    %v1029 = vpack.c.b16 %v857, %v855
    %v1030 = vpack.c.b16 %v858, %v856
    %v1031 = vpack.c.b16 %v861, %v859
    %v1032 = vpack.c.b16 %v862, %v860
    %v1033 = vpack.c.b16 %v865, %v863
    %v1034 = vpack.c.b16 %v866, %v864
    %v1035 = vpack.c.b16 %v869, %v867
    %v1036 = vpack.c.b16 %v870, %v868
    %v1037 = vpack.c.b16 %v873, %v871
    %v1038 = vpack.c.b16 %v874, %v872
    %v1039 = vpack.c.b16 %v877, %v875
    %v1040 = vpack.c.b16 %v878, %v876
    %v1041 = vpack.c.b16 %v881, %v879
    %v1042 = vpack.c.b16 %v882, %v880
    %v1043 = vpack.c.b16 %v885, %v883
    %v1044 = vpack.c.b16 %v886, %v884
    %v1045 = vpack.c.b16 %v889, %v887
    %v1046 = vpack.c.b16 %v890, %v888
    %v1047 = vpack.c.b16 %v893, %v891
    %v1048 = vpack.c.b16 %v894, %v892
    %v1049 = vpack.c.b16 %v897, %v895
    %v1050 = vpack.c.b16 %v898, %v896
    %v1051 = vpack.c.b16 %v901, %v899
    %v1052 = vpack.c.b16 %v902, %v900
    %v1053 = vpack.c.b16 %v905, %v903
    %v1054 = vpack.c.b16 %v906, %v904
    %v1055 = vpack.c.b16 %v909, %v907
    %v1056 = vpack.c.b16 %v910, %v908
    %v1057 = vpack.c.b16 %v913, %v911
    %v1058 = vpack.c.b16 %v914, %v912
    %v1059 = vpack.c.b16 %v917, %v915
    %v1060 = vpack.c.b16 %v918, %v916
    %v1061 = vpack.c.b16 %v921, %v919
    %v1062 = vpack.c.b16 %v922, %v920
    %v1063 = vpack.c.b16 %v925, %v923
    %v1064 = vpack.c.b16 %v926, %v924
    %v1065 = vpack.c.b16 %v929, %v927
    %v1066 = vpack.c.b16 %v930, %v928
    %v1067 = vpack.c.b16 %v933, %v931
    %v1068 = vpack.c.b16 %v934, %v932
    %v1069 = vpack.c.b16 %v937, %v935
    %v1070 = vpack.c.b16 %v938, %v936
    %v1071 = vpack.c.b16 %v941, %v939
    %v1072 = vpack.c.b16 %v942, %v940
    %v1073 = vpack.c.b16 %v945, %v943
    %v1074 = vpack.c.b16 %v946, %v944
    %v1075 = vpack.c.b16 %v949, %v947
    %v1076 = vpack.c.b16 %v950, %v948
    %v1077 = vpack.c.b16 %v953, %v951
    %v1078 = vpack.c.b16 %v954, %v952
    %v1079 = vpack.c.b16 %v957, %v955
    %v1080 = vpack.c.b16 %v958, %v956
    %v1081 = vpack.c.b16 %v961, %v959
    %v1082 = vpack.c.b16 %v962, %v960
    %v1083 = vpack.c.b16 %v965, %v963
    %v1084 = vpack.c.b16 %v966, %v964
    %v1085 = vpack.c.b16 %v969, %v967
    %v1086 = vpack.c.b16 %v970, %v968
    %v1087 = vpack.c.b16 %v973, %v971
    %v1088 = vpack.c.b16 %v974, %v972
    %v1089 = vpack.c.b16 %v977, %v975
    %v1090 = vpack.c.b16 %v978, %v976
    %v1091 = vpack.c.b16 %v981, %v979
    %v1092 = vpack.c.b16 %v982, %v980
    %v1093 = vpack.c.b16 %v985, %v983
    %v1094 = vpack.c.b16 %v986, %v984
    %v1095 = vpack.c.b16 %v989, %v987
    %v1096 = vpack.c.b16 %v990, %v988
    %v1097 = vpack.c.b16 %v993, %v991
    %v1098 = vpack.c.b16 %v994, %v992
    %v1099 = vpack.c.b16 %v997, %v995
    %v1100 = vpack.c.b16 %v998, %v996
    %v1101 = vpack.c.b16 %v1001, %v999
    %v1102 = vpack.c.b16 %v1002, %v1000
    %v1103 = vpack.c.b16 %v1005, %v1003
    %v1104 = vpack.c.b16 %v1006, %v1004
    %v1105 = vpack.c.b16 %v1009, %v1007
    %v1106 = vpack.c.b16 %v1010, %v1008
    %1203 = vmatprep.subr.bf16.mxu0 0
    %1204 = vmatpush1.bf16.msra.mxu0 %v707
    %1205 = vmatprep.subr.bf16.mxu0 0
    %1206 = vmatpush1.bf16.msra.mxu0 %v708
    %1207 = vmatprep.subr.bf16.mxu0 0
    %1208 = vmatpush1.bf16.msra.mxu0 %v709
    %1209 = vmatprep.subr.bf16.mxu0 0
    %1210 = vmatpush1.bf16.msra.mxu0 %v710
    %1211 = vmatprep.subr.bf16.mxu0 0
    %1212 = vmatpush1.bf16.msra.mxu0 %v711
    %1213 = vmatprep.subr.bf16.mxu0 0
    %1214 = vmatpush1.bf16.msra.mxu0 %v712
    %1215 = vmatprep.subr.bf16.mxu0 0
    %1216 = vmatpush1.bf16.msra.mxu0 %v713
    %1217 = vmatprep.subr.bf16.mxu0 0
    %1218 = vmatpush1.bf16.msra.mxu0 %v714
    %1219 = vmatprep.subr.bf16.mxu0 0
    %1220 = vmatpush1.bf16.msra.mxu0 %v715
    %1221 = vmatprep.subr.bf16.mxu0 0
    %1222 = vmatpush1.bf16.msra.mxu0 %v716
    %1223 = vmatprep.subr.bf16.mxu0 0
    %1224 = vmatpush1.bf16.msra.mxu0 %v717
    %1225 = vmatprep.subr.bf16.mxu0 0
    %1226 = vmatpush1.bf16.msra.mxu0 %v718
    %1227 = vmatprep.subr.bf16.mxu0 0
    %1228 = vmatpush1.bf16.msra.mxu0 %v719
    %1229 = vmatprep.subr.bf16.mxu0 0
    %1230 = vmatpush1.bf16.msra.mxu0 %v720
    %1231 = vmatprep.subr.bf16.mxu0 0
    %1232 = vmatpush1.bf16.msra.mxu0 %v721
    %1233 = vmatprep.subr.bf16.mxu0 0
    %1234 = vmatpush1.bf16.msra.mxu0 %v722
    %1235 = vmatprep.mubr.bf16.mxu0 %v1012
    %1236 = vmatmul.mubr.bf16.gmra.mrb[0].mxu0 %v1011
    %v1237 = vpop.f32.mrb[0].mxu0
    %v1238 = vadd.f32 0.0, %v1237
    %v1239 = vpop.f32.mrb[0].mxu0
    %v1240 = vpop.f32.mrb[0].mxu0
    %v1241 = vadd.f32 0.0, %v1240
    %v1242 = vpop.f32.mrb[0].mxu0
    %1243 = vmatprep.mubr.bf16.mxu0 %v1014
    %1244 = vmatmul.mubr.bf16.gmra.mrb[0].mxu0 %v1013
    %v1245 = vpop.f32.mrb[0].mxu0
    %v1246 = vadd.f32 0.0, %v1245
    %v1247 = vpop.f32.mrb[0].mxu0
    %v1248 = vpop.f32.mrb[0].mxu0
    %v1249 = vadd.f32 0.0, %v1248
    %v1250 = vpop.f32.mrb[0].mxu0
    %1251 = vmatprep.mubr.bf16.mxu0 %v1016
    %1252 = vmatmul.mubr.bf16.gmra.mrb[0].mxu0 %v1015
    %v1253 = vpop.f32.mrb[0].mxu0
    %v1254 = vadd.f32 0.0, %v1253
    %v1255 = vpop.f32.mrb[0].mxu0
    %v1256 = vpop.f32.mrb[0].mxu0
    %v1257 = vadd.f32 0.0, %v1256
    %v1258 = vpop.f32.mrb[0].mxu0
    %1259 = vmatprep.mubr.bf16.mxu0 %v1018
    %1260 = vmatmul.mubr.bf16.gmra.mrb[0].mxu0 %v1017
    %v1261 = vpop.f32.mrb[0].mxu0
    %v1262 = vadd.f32 0.0, %v1261
    %v1263 = vpop.f32.mrb[0].mxu0
    %v1264 = vpop.f32.mrb[0].mxu0
    %v1265 = vadd.f32 0.0, %v1264
    %v1266 = vpop.f32.mrb[0].mxu0
    %1267 = vmatprep.mubr.bf16.mxu0 %v1020
    %1268 = vmatmul.mubr.bf16.gmra.mrb[0].mxu0 %v1019
    %v1269 = vpop.f32.mrb[0].mxu0
    %v1270 = vadd.f32 0.0, %v1269
    %v1271 = vpop.f32.mrb[0].mxu0
    %v1272 = vpop.f32.mrb[0].mxu0
    %v1273 = vadd.f32 0.0, %v1272
    %v1274 = vpop.f32.mrb[0].mxu0
    %1275 = vmatprep.mubr.bf16.mxu0 %v1022
    %1276 = vmatmul.mubr.bf16.gmra.mrb[0].mxu0 %v1021
    %v1277 = vpop.f32.mrb[0].mxu0
    %v1278 = vadd.f32 0.0, %v1277
    %v1279 = vpop.f32.mrb[0].mxu0
    %v1280 = vpop.f32.mrb[0].mxu0
    %v1281 = vadd.f32 0.0, %v1280
    %v1282 = vpop.f32.mrb[0].mxu0
    %1283 = vmatprep.mubr.bf16.mxu0 %v1024
    %1284 = vmatmul.mubr.bf16.gmra.mrb[0].mxu0 %v1023
    %v1285 = vpop.f32.mrb[0].mxu0
    %v1286 = vadd.f32 0.0, %v1285
    %v1287 = vpop.f32.mrb[0].mxu0
    %v1288 = vpop.f32.mrb[0].mxu0
    %v1289 = vadd.f32 0.0, %v1288
    %v1290 = vpop.f32.mrb[0].mxu0
    %1291 = vmatprep.mubr.bf16.mxu0 %v1026
    %1292 = vmatmul.mubr.bf16.gmra.mrb[0].mxu0 %v1025
    %v1293 = vpop.f32.mrb[0].mxu0
    %v1294 = vadd.f32 0.0, %v1293
    %v1295 = vpop.f32.mrb[0].mxu0
    %v1296 = vpop.f32.mrb[0].mxu0
    %v1297 = vadd.f32 0.0, %v1296
    %v1298 = vpop.f32.mrb[0].mxu0
    %1299 = vmatprep.mubr.bf16.mxu0 %v1028
    %1300 = vmatmul.mubr.bf16.gmra.mrb[0].mxu0 %v1027
    %v1301 = vpop.f32.mrb[0].mxu0
    %v1302 = vadd.f32 0.0, %v1301
    %v1303 = vpop.f32.mrb[0].mxu0
    %v1304 = vpop.f32.mrb[0].mxu0
    %v1305 = vadd.f32 0.0, %v1304
    %v1306 = vpop.f32.mrb[0].mxu0
    %1307 = vmatprep.mubr.bf16.mxu0 %v1030
    %1308 = vmatmul.mubr.bf16.gmra.mrb[0].mxu0 %v1029
    %v1309 = vpop.f32.mrb[0].mxu0
    %v1310 = vadd.f32 0.0, %v1309
    %v1311 = vpop.f32.mrb[0].mxu0
    %v1312 = vpop.f32.mrb[0].mxu0
    %v1313 = vadd.f32 0.0, %v1312
    %v1314 = vpop.f32.mrb[0].mxu0
    %1315 = vmatprep.mubr.bf16.mxu0 %v1032
    %1316 = vmatmul.mubr.bf16.gmra.mrb[0].mxu0 %v1031
    %v1317 = vpop.f32.mrb[0].mxu0
    %v1318 = vadd.f32 0.0, %v1317
    %v1319 = vpop.f32.mrb[0].mxu0
    %v1320 = vpop.f32.mrb[0].mxu0
    %v1321 = vadd.f32 0.0, %v1320
    %v1322 = vpop.f32.mrb[0].mxu0
    %1323 = vmatprep.mubr.bf16.mxu0 %v1034
    %1324 = vmatmul.mubr.bf16.gmra.mrb[0].mxu0 %v1033
    %v1325 = vpop.f32.mrb[0].mxu0
    %v1326 = vadd.f32 0.0, %v1325
    %v1327 = vpop.f32.mrb[0].mxu0
    %v1328 = vpop.f32.mrb[0].mxu0
    %v1329 = vadd.f32 0.0, %v1328
    %v1330 = vpop.f32.mrb[0].mxu0
    %1331 = vmatprep.mubr.bf16.mxu0 %v1036
    %1332 = vmatmul.mubr.bf16.gmra.mrb[0].mxu0 %v1035
    %v1333 = vpop.f32.mrb[0].mxu0
    %v1334 = vadd.f32 0.0, %v1333
    %v1335 = vpop.f32.mrb[0].mxu0
    %v1336 = vpop.f32.mrb[0].mxu0
    %v1337 = vadd.f32 0.0, %v1336
    %v1338 = vpop.f32.mrb[0].mxu0
    %1339 = vmatprep.mubr.bf16.mxu0 %v1038
    %1340 = vmatmul.mubr.bf16.gmra.mrb[0].mxu0 %v1037
    %v1341 = vpop.f32.mrb[0].mxu0
    %v1342 = vadd.f32 0.0, %v1341
    %v1343 = vpop.f32.mrb[0].mxu0
    %v1344 = vpop.f32.mrb[0].mxu0
    %v1345 = vadd.f32 0.0, %v1344
    %v1346 = vpop.f32.mrb[0].mxu0
    %1347 = vmatprep.mubr.bf16.mxu0 %v1040
    %1348 = vmatmul.mubr.bf16.gmra.mrb[0].mxu0 %v1039
    %v1349 = vpop.f32.mrb[0].mxu0
    %v1350 = vadd.f32 0.0, %v1349
    %v1351 = vpop.f32.mrb[0].mxu0
    %v1352 = vpop.f32.mrb[0].mxu0
    %v1353 = vadd.f32 0.0, %v1352
    %v1354 = vpop.f32.mrb[0].mxu0
    %1355 = vmatprep.mubr.bf16.mxu0 %v1042
    %1356 = vmatmul.mubr.bf16.gmra.mrb[0].mxu0 %v1041
    %v1357 = vpop.f32.mrb[0].mxu0
    %v1358 = vadd.f32 0.0, %v1357
    %v1359 = vpop.f32.mrb[0].mxu0
    %v1360 = vpop.f32.mrb[0].mxu0
    %v1361 = vadd.f32 0.0, %v1360
    %v1362 = vpop.f32.mrb[0].mxu0
    %1363 = vmatprep.mubr.bf16.mxu0 %v1044
    %1364 = vmatmul.mubr.bf16.gmra.mrb[0].mxu0 %v1043
    %v1365 = vpop.f32.mrb[0].mxu0
    %v1366 = vadd.f32 0.0, %v1365
    %v1367 = vpop.f32.mrb[0].mxu0
    %v1368 = vpop.f32.mrb[0].mxu0
    %v1369 = vadd.f32 0.0, %v1368
    %v1370 = vpop.f32.mrb[0].mxu0
    %1371 = vmatprep.mubr.bf16.mxu0 %v1046
    %1372 = vmatmul.mubr.bf16.gmra.mrb[0].mxu0 %v1045
    %v1373 = vpop.f32.mrb[0].mxu0
    %v1374 = vadd.f32 0.0, %v1373
    %v1375 = vpop.f32.mrb[0].mxu0
    %v1376 = vpop.f32.mrb[0].mxu0
    %v1377 = vadd.f32 0.0, %v1376
    %v1378 = vpop.f32.mrb[0].mxu0
    %1379 = vmatprep.mubr.bf16.mxu0 %v1048
    %1380 = vmatmul.mubr.bf16.gmra.mrb[0].mxu0 %v1047
    %v1381 = vpop.f32.mrb[0].mxu0
    %v1382 = vadd.f32 0.0, %v1381
    %v1383 = vpop.f32.mrb[0].mxu0
    %v1384 = vpop.f32.mrb[0].mxu0
    %v1385 = vadd.f32 0.0, %v1384
    %v1386 = vpop.f32.mrb[0].mxu0
    %1387 = vmatprep.mubr.bf16.mxu0 %v1050
    %1388 = vmatmul.mubr.bf16.gmra.mrb[0].mxu0 %v1049
    %v1389 = vpop.f32.mrb[0].mxu0
    %v1390 = vadd.f32 0.0, %v1389
    %v1391 = vpop.f32.mrb[0].mxu0
    %v1392 = vpop.f32.mrb[0].mxu0
    %v1393 = vadd.f32 0.0, %v1392
    %v1394 = vpop.f32.mrb[0].mxu0
    %1395 = vmatprep.mubr.bf16.mxu0 %v1052
    %1396 = vmatmul.mubr.bf16.gmra.mrb[0].mxu0 %v1051
    %v1397 = vpop.f32.mrb[0].mxu0
    %v1398 = vadd.f32 0.0, %v1397
    %v1399 = vpop.f32.mrb[0].mxu0
    %v1400 = vpop.f32.mrb[0].mxu0
    %v1401 = vadd.f32 0.0, %v1400
    %v1402 = vpop.f32.mrb[0].mxu0
    %1403 = vmatprep.mubr.bf16.mxu0 %v1054
    %1404 = vmatmul.mubr.bf16.gmra.mrb[0].mxu0 %v1053
    %v1405 = vpop.f32.mrb[0].mxu0
    %v1406 = vadd.f32 0.0, %v1405
    %v1407 = vpop.f32.mrb[0].mxu0
    %v1408 = vpop.f32.mrb[0].mxu0
    %v1409 = vadd.f32 0.0, %v1408
    %v1410 = vpop.f32.mrb[0].mxu0
    %1411 = vmatprep.mubr.bf16.mxu0 %v1056
    %1412 = vmatmul.mubr.bf16.gmra.mrb[0].mxu0 %v1055
    %v1413 = vpop.f32.mrb[0].mxu0
    %v1414 = vadd.f32 0.0, %v1413
    %v1415 = vpop.f32.mrb[0].mxu0
    %v1416 = vpop.f32.mrb[0].mxu0
    %v1417 = vadd.f32 0.0, %v1416
    %v1418 = vpop.f32.mrb[0].mxu0
    %1419 = vmatprep.mubr.bf16.mxu0 %v1058
    %1420 = vmatmul.mubr.bf16.gmra.mrb[0].mxu0 %v1057
    %v1421 = vpop.f32.mrb[0].mxu0
    %v1422 = vadd.f32 0.0, %v1421
    %v1423 = vpop.f32.mrb[0].mxu0
    %v1424 = vpop.f32.mrb[0].mxu0
    %v1425 = vadd.f32 0.0, %v1424
    %v1426 = vpop.f32.mrb[0].mxu0
    %1427 = vmatprep.mubr.bf16.mxu0 %v1060
    %1428 = vmatmul.mubr.bf16.gmra.mrb[0].mxu0 %v1059
    %v1429 = vpop.f32.mrb[0].mxu0
    %v1430 = vadd.f32 0.0, %v1429
    %v1431 = vpop.f32.mrb[0].mxu0
    %v1432 = vpop.f32.mrb[0].mxu0
    %v1433 = vadd.f32 0.0, %v1432
    %v1434 = vpop.f32.mrb[0].mxu0
    %1435 = vmatprep.mubr.bf16.mxu0 %v1062
    %1436 = vmatmul.mubr.bf16.gmra.mrb[0].mxu0 %v1061
    %v1437 = vpop.f32.mrb[0].mxu0
    %v1438 = vadd.f32 0.0, %v1437
    %v1439 = vpop.f32.mrb[0].mxu0
    %v1440 = vpop.f32.mrb[0].mxu0
    %v1441 = vadd.f32 0.0, %v1440
    %v1442 = vpop.f32.mrb[0].mxu0
    %1443 = vmatprep.mubr.bf16.mxu0 %v1064
    %1444 = vmatmul.mubr.bf16.gmra.mrb[0].mxu0 %v1063
    %v1445 = vpop.f32.mrb[0].mxu0
    %v1446 = vadd.f32 0.0, %v1445
    %v1447 = vpop.f32.mrb[0].mxu0
    %v1448 = vpop.f32.mrb[0].mxu0
    %v1449 = vadd.f32 0.0, %v1448
    %v1450 = vpop.f32.mrb[0].mxu0
    %1451 = vmatprep.mubr.bf16.mxu0 %v1066
    %1452 = vmatmul.mubr.bf16.gmra.mrb[0].mxu0 %v1065
    %v1453 = vpop.f32.mrb[0].mxu0
    %v1454 = vadd.f32 0.0, %v1453
    %v1455 = vpop.f32.mrb[0].mxu0
    %v1456 = vpop.f32.mrb[0].mxu0
    %v1457 = vadd.f32 0.0, %v1456
    %v1458 = vpop.f32.mrb[0].mxu0
    %1459 = vmatprep.mubr.bf16.mxu0 %v1068
    %1460 = vmatmul.mubr.bf16.gmra.mrb[0].mxu0 %v1067
    %v1461 = vpop.f32.mrb[0].mxu0
    %v1462 = vadd.f32 0.0, %v1461
    %v1463 = vpop.f32.mrb[0].mxu0
    %v1464 = vpop.f32.mrb[0].mxu0
    %v1465 = vadd.f32 0.0, %v1464
    %v1466 = vpop.f32.mrb[0].mxu0
    %1467 = vmatprep.mubr.bf16.mxu0 %v1070
    %1468 = vmatmul.mubr.bf16.gmra.mrb[0].mxu0 %v1069
    %v1469 = vpop.f32.mrb[0].mxu0
    %v1470 = vadd.f32 0.0, %v1469
    %v1471 = vpop.f32.mrb[0].mxu0
    %v1472 = vpop.f32.mrb[0].mxu0
    %v1473 = vadd.f32 0.0, %v1472
    %v1474 = vpop.f32.mrb[0].mxu0
    %1475 = vmatprep.mubr.bf16.mxu0 %v1072
    %1476 = vmatmul.mubr.bf16.gmra.mrb[0].mxu0 %v1071
    %v1477 = vpop.f32.mrb[0].mxu0
    %v1478 = vadd.f32 0.0, %v1477
    %v1479 = vpop.f32.mrb[0].mxu0
    %v1480 = vpop.f32.mrb[0].mxu0
    %v1481 = vadd.f32 0.0, %v1480
    %v1482 = vpop.f32.mrb[0].mxu0
    %1483 = vmatprep.mubr.bf16.mxu0 %v1074
    %1484 = vmatmul.mubr.bf16.gmra.mrb[0].mxu0 %v1073
    %v1485 = vpop.f32.mrb[0].mxu0
    %v1486 = vadd.f32 0.0, %v1485
    %v1487 = vpop.f32.mrb[0].mxu0
    %v1488 = vpop.f32.mrb[0].mxu0
    %v1489 = vadd.f32 0.0, %v1488
    %v1490 = vpop.f32.mrb[0].mxu0
    %1491 = vmatprep.mubr.bf16.mxu0 %v1076
    %1492 = vmatmul.mubr.bf16.gmra.mrb[0].mxu0 %v1075
    %v1493 = vpop.f32.mrb[0].mxu0
    %v1494 = vadd.f32 0.0, %v1493
    %v1495 = vpop.f32.mrb[0].mxu0
    %v1496 = vpop.f32.mrb[0].mxu0
    %v1497 = vadd.f32 0.0, %v1496
    %v1498 = vpop.f32.mrb[0].mxu0
    %1499 = vmatprep.mubr.bf16.mxu0 %v1078
    %1500 = vmatmul.mubr.bf16.gmra.mrb[0].mxu0 %v1077
    %v1501 = vpop.f32.mrb[0].mxu0
    %v1502 = vadd.f32 0.0, %v1501
    %v1503 = vpop.f32.mrb[0].mxu0
    %v1504 = vpop.f32.mrb[0].mxu0
    %v1505 = vadd.f32 0.0, %v1504
    %v1506 = vpop.f32.mrb[0].mxu0
    %1507 = vmatprep.mubr.bf16.mxu0 %v1080
    %1508 = vmatmul.mubr.bf16.gmra.mrb[0].mxu0 %v1079
    %v1509 = vpop.f32.mrb[0].mxu0
    %v1510 = vadd.f32 0.0, %v1509
    %v1511 = vpop.f32.mrb[0].mxu0
    %v1512 = vpop.f32.mrb[0].mxu0
    %v1513 = vadd.f32 0.0, %v1512
    %v1514 = vpop.f32.mrb[0].mxu0
    %1515 = vmatprep.mubr.bf16.mxu0 %v1082
    %1516 = vmatmul.mubr.bf16.gmra.mrb[0].mxu0 %v1081
    %v1517 = vpop.f32.mrb[0].mxu0
    %v1518 = vadd.f32 0.0, %v1517
    %v1519 = vpop.f32.mrb[0].mxu0
    %v1520 = vpop.f32.mrb[0].mxu0
    %v1521 = vadd.f32 0.0, %v1520
    %v1522 = vpop.f32.mrb[0].mxu0
    %1523 = vmatprep.mubr.bf16.mxu0 %v1084
    %1524 = vmatmul.mubr.bf16.gmra.mrb[0].mxu0 %v1083
    %v1525 = vpop.f32.mrb[0].mxu0
    %v1526 = vadd.f32 0.0, %v1525
    %v1527 = vpop.f32.mrb[0].mxu0
    %v1528 = vpop.f32.mrb[0].mxu0
    %v1529 = vadd.f32 0.0, %v1528
    %v1530 = vpop.f32.mrb[0].mxu0
    %1531 = vmatprep.mubr.bf16.mxu0 %v1086
    %1532 = vmatmul.mubr.bf16.gmra.mrb[0].mxu0 %v1085
    %v1533 = vpop.f32.mrb[0].mxu0
    %v1534 = vadd.f32 0.0, %v1533
    %v1535 = vpop.f32.mrb[0].mxu0
    %v1536 = vpop.f32.mrb[0].mxu0
    %v1537 = vadd.f32 0.0, %v1536
    %v1538 = vpop.f32.mrb[0].mxu0
    %1539 = vmatprep.mubr.bf16.mxu0 %v1088
    %1540 = vmatmul.mubr.bf16.gmra.mrb[0].mxu0 %v1087
    %v1541 = vpop.f32.mrb[0].mxu0
    %v1542 = vadd.f32 0.0, %v1541
    %v1543 = vpop.f32.mrb[0].mxu0
    %v1544 = vpop.f32.mrb[0].mxu0
    %v1545 = vadd.f32 0.0, %v1544
    %v1546 = vpop.f32.mrb[0].mxu0
    %1547 = vmatprep.mubr.bf16.mxu0 %v1090
    %1548 = vmatmul.mubr.bf16.gmra.mrb[0].mxu0 %v1089
    %v1549 = vpop.f32.mrb[0].mxu0
    %v1550 = vadd.f32 0.0, %v1549
    %v1551 = vpop.f32.mrb[0].mxu0
    %v1552 = vpop.f32.mrb[0].mxu0
    %v1553 = vadd.f32 0.0, %v1552
    %v1554 = vpop.f32.mrb[0].mxu0
    %1555 = vmatprep.mubr.bf16.mxu0 %v1092
    %1556 = vmatmul.mubr.bf16.gmra.mrb[0].mxu0 %v1091
    %v1557 = vpop.f32.mrb[0].mxu0
    %v1558 = vadd.f32 0.0, %v1557
    %v1559 = vpop.f32.mrb[0].mxu0
    %v1560 = vpop.f32.mrb[0].mxu0
    %v1561 = vadd.f32 0.0, %v1560
    %v1562 = vpop.f32.mrb[0].mxu0
    %1563 = vmatprep.mubr.bf16.mxu0 %v1094
    %1564 = vmatmul.mubr.bf16.gmra.mrb[0].mxu0 %v1093
    %v1565 = vpop.f32.mrb[0].mxu0
    %v1566 = vadd.f32 0.0, %v1565
    %v1567 = vpop.f32.mrb[0].mxu0
    %v1568 = vpop.f32.mrb[0].mxu0
    %v1569 = vadd.f32 0.0, %v1568
    %v1570 = vpop.f32.mrb[0].mxu0
    %1571 = vmatprep.mubr.bf16.mxu0 %v1096
    %1572 = vmatmul.mubr.bf16.gmra.mrb[0].mxu0 %v1095
    %v1573 = vpop.f32.mrb[0].mxu0
    %v1574 = vadd.f32 0.0, %v1573
    %v1575 = vpop.f32.mrb[0].mxu0
    %v1576 = vpop.f32.mrb[0].mxu0
    %v1577 = vadd.f32 0.0, %v1576
    %v1578 = vpop.f32.mrb[0].mxu0
    %1579 = vmatprep.mubr.bf16.mxu0 %v1098
    %1580 = vmatmul.mubr.bf16.gmra.mrb[0].mxu0 %v1097
    %v1581 = vpop.f32.mrb[0].mxu0
    %v1582 = vadd.f32 0.0, %v1581
    %v1583 = vpop.f32.mrb[0].mxu0
    %v1584 = vpop.f32.mrb[0].mxu0
    %v1585 = vadd.f32 0.0, %v1584
    %v1586 = vpop.f32.mrb[0].mxu0
    %1587 = vmatprep.mubr.bf16.mxu0 %v1100
    %1588 = vmatmul.mubr.bf16.gmra.mrb[0].mxu0 %v1099
    %v1589 = vpop.f32.mrb[0].mxu0
    %v1590 = vadd.f32 0.0, %v1589
    %v1591 = vpop.f32.mrb[0].mxu0
    %v1592 = vpop.f32.mrb[0].mxu0
    %v1593 = vadd.f32 0.0, %v1592
    %v1594 = vpop.f32.mrb[0].mxu0
    %1595 = vmatprep.mubr.bf16.mxu0 %v1102
    %1596 = vmatmul.mubr.bf16.gmra.mrb[0].mxu0 %v1101
    %v1597 = vpop.f32.mrb[0].mxu0
    %v1598 = vadd.f32 0.0, %v1597
    %v1599 = vpop.f32.mrb[0].mxu0
    %v1600 = vpop.f32.mrb[0].mxu0
    %v1601 = vadd.f32 0.0, %v1600
    %v1602 = vpop.f32.mrb[0].mxu0
    %1603 = vmatprep.mubr.bf16.mxu0 %v1104
    %1604 = vmatmul.mubr.bf16.gmra.mrb[0].mxu0 %v1103
    %v1605 = vpop.f32.mrb[0].mxu0
    %v1606 = vadd.f32 0.0, %v1605
    %v1607 = vpop.f32.mrb[0].mxu0
    %v1608 = vpop.f32.mrb[0].mxu0
    %v1609 = vadd.f32 0.0, %v1608
    %v1610 = vpop.f32.mrb[0].mxu0
    %1611 = vmatprep.mubr.bf16.mxu0 %v1106
    %1612 = vmatmul.mubr.bf16.gmra.mrb[0].mxu0 %v1105
    %v1613 = vpop.f32.mrb[0].mxu0
    %v1614 = vadd.f32 0.0, %v1613
    %v1615 = vpop.f32.mrb[0].mxu0
    %v1616 = vpop.f32.mrb[0].mxu0
    %v1617 = vadd.f32 0.0, %v1616
    %v1618 = vpop.f32.mrb[0].mxu0
    %1619 = vdwg.mxu0
    %v1620 = vld [vmem:[#allocation8] sm:$0xff]
    %v1621 = vlaneseq
    %v1622 = vshrl.u32 %v1621, 7
    %v1623 = vsub.s32 0, %v1622
    %v1624 = vrot.slane %v1620, %v1623
    %v1625 = vmul.f32 %v1624, %v1238
    %v1626 = vmul.f32 %v1624, %v1241
    %v1627 = vmul.f32 %v1624, %v1246
    %v1628 = vmul.f32 %v1624, %v1249
    %v1629 = vmul.f32 %v1624, %v1254
    %v1630 = vmul.f32 %v1624, %v1257
    %v1631 = vmul.f32 %v1624, %v1262
    %v1632 = vmul.f32 %v1624, %v1265
    %v1633 = vmul.f32 %v1624, %v1270
    %v1634 = vmul.f32 %v1624, %v1273
    %v1635 = vmul.f32 %v1624, %v1278
    %v1636 = vmul.f32 %v1624, %v1281
    %v1637 = vmul.f32 %v1624, %v1286
    %v1638 = vmul.f32 %v1624, %v1289
    %v1639 = vmul.f32 %v1624, %v1294
    %v1640 = vmul.f32 %v1624, %v1297
    %v1641 = vmul.f32 %v1624, %v1302
    %v1642 = vmul.f32 %v1624, %v1305
    %v1643 = vmul.f32 %v1624, %v1310
    %v1644 = vmul.f32 %v1624, %v1313
    %v1645 = vmul.f32 %v1624, %v1318
    %v1646 = vmul.f32 %v1624, %v1321
    %v1647 = vmul.f32 %v1624, %v1326
    %v1648 = vmul.f32 %v1624, %v1329
    %v1649 = vmul.f32 %v1624, %v1334
    %v1650 = vmul.f32 %v1624, %v1337
    %v1651 = vmul.f32 %v1624, %v1342
    %v1652 = vmul.f32 %v1624, %v1345
    %v1653 = vmul.f32 %v1624, %v1350
    %v1654 = vmul.f32 %v1624, %v1353
    %v1655 = vmul.f32 %v1624, %v1358
    %v1656 = vmul.f32 %v1624, %v1361
    %v1657 = vlaneseq
    %v1658 = vshrl.u32 %v1657, 7
    %v1659 = vsub.s32 1, %v1658
    %v1660 = vrot.slane %v1620, %v1659
    %v1661 = vmul.f32 %v1660, %v1366
    %v1662 = vmul.f32 %v1660, %v1369
    %v1663 = vmul.f32 %v1660, %v1374
    %v1664 = vmul.f32 %v1660, %v1377
    %v1665 = vmul.f32 %v1660, %v1382
    %v1666 = vmul.f32 %v1660, %v1385
    %v1667 = vmul.f32 %v1660, %v1390
    %v1668 = vmul.f32 %v1660, %v1393
    %v1669 = vmul.f32 %v1660, %v1398
    %v1670 = vmul.f32 %v1660, %v1401
    %v1671 = vmul.f32 %v1660, %v1406
    %v1672 = vmul.f32 %v1660, %v1409
    %v1673 = vmul.f32 %v1660, %v1414
    %v1674 = vmul.f32 %v1660, %v1417
    %v1675 = vmul.f32 %v1660, %v1422
    %v1676 = vmul.f32 %v1660, %v1425
    %v1677 = vmul.f32 %v1660, %v1430
    %v1678 = vmul.f32 %v1660, %v1433
    %v1679 = vmul.f32 %v1660, %v1438
    %v1680 = vmul.f32 %v1660, %v1441
    %v1681 = vmul.f32 %v1660, %v1446
    %v1682 = vmul.f32 %v1660, %v1449
    %v1683 = vmul.f32 %v1660, %v1454
    %v1684 = vmul.f32 %v1660, %v1457
    %v1685 = vmul.f32 %v1660, %v1462
    %v1686 = vmul.f32 %v1660, %v1465
    %v1687 = vmul.f32 %v1660, %v1470
    %v1688 = vmul.f32 %v1660, %v1473
    %v1689 = vmul.f32 %v1660, %v1478
    %v1690 = vmul.f32 %v1660, %v1481
    %v1691 = vmul.f32 %v1660, %v1486
    %v1692 = vmul.f32 %v1660, %v1489
    %v1693 = vadd.f32 %v1625, %v1661
    %v1694 = vadd.f32 %v1626, %v1662
    %v1695 = vadd.f32 %v1627, %v1663
    %v1696 = vadd.f32 %v1628, %v1664
    %v1697 = vadd.f32 %v1629, %v1665
    %v1698 = vadd.f32 %v1630, %v1666
    %v1699 = vadd.f32 %v1631, %v1667
    %v1700 = vadd.f32 %v1632, %v1668
    %v1701 = vadd.f32 %v1633, %v1669
    %v1702 = vadd.f32 %v1634, %v1670
    %v1703 = vadd.f32 %v1635, %v1671
    %v1704 = vadd.f32 %v1636, %v1672
    %v1705 = vadd.f32 %v1637, %v1673
    %v1706 = vadd.f32 %v1638, %v1674
    %v1707 = vadd.f32 %v1639, %v1675
    %v1708 = vadd.f32 %v1640, %v1676
    %v1709 = vadd.f32 %v1641, %v1677
    %v1710 = vadd.f32 %v1642, %v1678
    %v1711 = vadd.f32 %v1643, %v1679
    %v1712 = vadd.f32 %v1644, %v1680
    %v1713 = vadd.f32 %v1645, %v1681
    %v1714 = vadd.f32 %v1646, %v1682
    %v1715 = vadd.f32 %v1647, %v1683
    %v1716 = vadd.f32 %v1648, %v1684
    %v1717 = vadd.f32 %v1649, %v1685
    %v1718 = vadd.f32 %v1650, %v1686
    %v1719 = vadd.f32 %v1651, %v1687
    %v1720 = vadd.f32 %v1652, %v1688
    %v1721 = vadd.f32 %v1653, %v1689
    %v1722 = vadd.f32 %v1654, %v1690
    %v1723 = vadd.f32 %v1655, %v1691
    %v1724 = vadd.f32 %v1656, %v1692
    %v1725 = vlaneseq
    %v1726 = vshrl.u32 %v1725, 7
    %v1727 = vsub.s32 2, %v1726
    %v1728 = vrot.slane %v1620, %v1727
    %v1729 = vmul.f32 %v1728, %v1494
    %v1730 = vmul.f32 %v1728, %v1497
    %v1731 = vmul.f32 %v1728, %v1502
    %v1732 = vmul.f32 %v1728, %v1505
    %v1733 = vmul.f32 %v1728, %v1510
    %v1734 = vmul.f32 %v1728, %v1513
    %v1735 = vmul.f32 %v1728, %v1518
    %v1736 = vmul.f32 %v1728, %v1521
    %v1737 = vmul.f32 %v1728, %v1526
    %v1738 = vmul.f32 %v1728, %v1529
    %v1739 = vmul.f32 %v1728, %v1534
    %v1740 = vmul.f32 %v1728, %v1537
    %v1741 = vmul.f32 %v1728, %v1542
    %v1742 = vmul.f32 %v1728, %v1545
    %v1743 = vmul.f32 %v1728, %v1550
    %v1744 = vmul.f32 %v1728, %v1553
    %v1745 = vmul.f32 %v1728, %v1558
    %v1746 = vmul.f32 %v1728, %v1561
    %v1747 = vmul.f32 %v1728, %v1566
    %v1748 = vmul.f32 %v1728, %v1569
    %v1749 = vmul.f32 %v1728, %v1574
    %v1750 = vmul.f32 %v1728, %v1577
    %v1751 = vmul.f32 %v1728, %v1582
    %v1752 = vmul.f32 %v1728, %v1585
    %v1753 = vmul.f32 %v1728, %v1590
    %v1754 = vmul.f32 %v1728, %v1593
    %v1755 = vmul.f32 %v1728, %v1598
    %v1756 = vmul.f32 %v1728, %v1601
    %v1757 = vmul.f32 %v1728, %v1606
    %v1758 = vmul.f32 %v1728, %v1609
    %v1759 = vmul.f32 %v1728, %v1614
    %v1760 = vmul.f32 %v1728, %v1617
    %v1761 = vadd.f32 %v1693, %v1729
    %v1762 = vadd.f32 %v1694, %v1730
    %v1763 = vadd.f32 %v1695, %v1731
    %v1764 = vadd.f32 %v1696, %v1732
    %v1765 = vadd.f32 %v1697, %v1733
    %v1766 = vadd.f32 %v1698, %v1734
    %v1767 = vadd.f32 %v1699, %v1735
    %v1768 = vadd.f32 %v1700, %v1736
    %v1769 = vadd.f32 %v1701, %v1737
    %v1770 = vadd.f32 %v1702, %v1738
    %v1771 = vadd.f32 %v1703, %v1739
    %v1772 = vadd.f32 %v1704, %v1740
    %v1773 = vadd.f32 %v1705, %v1741
    %v1774 = vadd.f32 %v1706, %v1742
    %v1775 = vadd.f32 %v1707, %v1743
    %v1776 = vadd.f32 %v1708, %v1744
    %v1777 = vadd.f32 %v1709, %v1745
    %v1778 = vadd.f32 %v1710, %v1746
    %v1779 = vadd.f32 %v1711, %v1747
    %v1780 = vadd.f32 %v1712, %v1748
    %v1781 = vadd.f32 %v1713, %v1749
    %v1782 = vadd.f32 %v1714, %v1750
    %v1783 = vadd.f32 %v1715, %v1751
    %v1784 = vadd.f32 %v1716, %v1752
    %v1785 = vadd.f32 %v1717, %v1753
    %v1786 = vadd.f32 %v1718, %v1754
    %v1787 = vadd.f32 %v1719, %v1755
    %v1788 = vadd.f32 %v1720, %v1756
    %v1789 = vadd.f32 %v1721, %v1757
    %v1790 = vadd.f32 %v1722, %v1758
    %v1791 = vadd.f32 %v1723, %v1759
    %v1792 = vadd.f32 %v1724, %v1760
    %v1793 = vld [vmem:[#allocation10] sm:$0x1]
    %v1795 = vlaneseq
    %v1796 = vshrl.u32 %v1795, 7
    %v1797 = vsub.s32 0, %v1796
    %v1798 = vrot.slane %v1793, %v1797
    %v1800 = vadd.f32 %v1761, %v1798
    %v1801 = vadd.f32 %v1762, %v1798
    %v1802 = vadd.f32 %v1763, %v1798
    %v1803 = vadd.f32 %v1764, %v1798
    %v1804 = vadd.f32 %v1765, %v1798
    %v1805 = vadd.f32 %v1766, %v1798
    %v1806 = vadd.f32 %v1767, %v1798
    %v1807 = vadd.f32 %v1768, %v1798
    %v1808 = vadd.f32 %v1769, %v1798
    %v1809 = vadd.f32 %v1770, %v1798
    %v1810 = vadd.f32 %v1771, %v1798
    %v1811 = vadd.f32 %v1772, %v1798
    %v1812 = vadd.f32 %v1773, %v1798
    %v1813 = vadd.f32 %v1774, %v1798
    %v1814 = vadd.f32 %v1775, %v1798
    %v1815 = vadd.f32 %v1776, %v1798
    %v1816 = vadd.f32 %v1777, %v1798
    %v1817 = vadd.f32 %v1778, %v1798
    %v1818 = vadd.f32 %v1779, %v1798
    %v1819 = vadd.f32 %v1780, %v1798
    %v1820 = vadd.f32 %v1781, %v1798
    %v1821 = vadd.f32 %v1782, %v1798
    %v1822 = vadd.f32 %v1783, %v1798
    %v1823 = vadd.f32 %v1784, %v1798
    %v1824 = vadd.f32 %v1785, %v1798
    %v1825 = vadd.f32 %v1786, %v1798
    %v1826 = vadd.f32 %v1787, %v1798
    %v1827 = vadd.f32 %v1788, %v1798
    %v1828 = vadd.f32 %v1789, %v1798
    %v1829 = vadd.f32 %v1790, %v1798
    %v1830 = vadd.f32 %v1791, %v1798
    %v1831 = vadd.f32 %v1792, %v1798
    %v1832 = vmax.f32 %v1800, 0.0
    %v1833 = vmax.f32 %v1801, 0.0
    %v1834 = vmax.f32 %v1802, 0.0
    %v1835 = vmax.f32 %v1803, 0.0
    %v1836 = vmax.f32 %v1804, 0.0
    %v1837 = vmax.f32 %v1805, 0.0
    %v1838 = vmax.f32 %v1806, 0.0
    %v1839 = vmax.f32 %v1807, 0.0
    %v1840 = vmax.f32 %v1808, 0.0
    %v1841 = vmax.f32 %v1809, 0.0
    %v1842 = vmax.f32 %v1810, 0.0
    %v1843 = vmax.f32 %v1811, 0.0
    %v1844 = vmax.f32 %v1812, 0.0
    %v1845 = vmax.f32 %v1813, 0.0
    %v1846 = vmax.f32 %v1814, 0.0
    %v1847 = vmax.f32 %v1815, 0.0
    %v1848 = vmax.f32 %v1816, 0.0
    %v1849 = vmax.f32 %v1817, 0.0
    %v1850 = vmax.f32 %v1818, 0.0
    %v1851 = vmax.f32 %v1819, 0.0
    %v1852 = vmax.f32 %v1820, 0.0
    %v1853 = vmax.f32 %v1821, 0.0
    %v1854 = vmax.f32 %v1822, 0.0
    %v1855 = vmax.f32 %v1823, 0.0
    %v1856 = vmax.f32 %v1824, 0.0
    %v1857 = vmax.f32 %v1825, 0.0
    %v1858 = vmax.f32 %v1826, 0.0
    %v1859 = vmax.f32 %v1827, 0.0
    %v1860 = vmax.f32 %v1828, 0.0
    %v1861 = vmax.f32 %v1829, 0.0
    %v1862 = vmax.f32 %v1830, 0.0
    %v1863 = vmax.f32 %v1831, 0.0
    %v1864 = vpack.c.bf16 %v1833, %v1832
    %v1865 = vpack.c.bf16 %v1835, %v1834
    %v1866 = vpack.c.bf16 %v1837, %v1836
    %v1867 = vpack.c.bf16 %v1839, %v1838
    %v1868 = vpack.c.bf16 %v1841, %v1840
    %v1869 = vpack.c.bf16 %v1843, %v1842
    %v1870 = vpack.c.bf16 %v1845, %v1844
    %v1871 = vpack.c.bf16 %v1847, %v1846
    %v1872 = vpack.c.bf16 %v1849, %v1848
    %v1873 = vpack.c.bf16 %v1851, %v1850
    %v1874 = vpack.c.bf16 %v1853, %v1852
    %v1875 = vpack.c.bf16 %v1855, %v1854
    %v1876 = vpack.c.bf16 %v1857, %v1856
    %v1877 = vpack.c.bf16 %v1859, %v1858
    %v1878 = vpack.c.bf16 %v1861, %v1860
    %v1879 = vpack.c.bf16 %v1863, %v1862
    %v1880 = vld [vmem:[#allocation11] sm:$0xf]
    %v1881 = vld [vmem:[#allocation11 + $0x4] sm:$0xf]
    %v1882 = vld [vmem:[#allocation11 + $0x8] sm:$0xf]
    %v1883 = vld [vmem:[#allocation11 + $0xc] sm:$0xf]
    %v1884 = vld [vmem:[#allocation11 + $0x10] sm:$0xf]
    %v1885 = vld [vmem:[#allocation11 + $0x14] sm:$0xf]
    %v1886 = vld [vmem:[#allocation11 + $0x18] sm:$0xf]
    %v1887 = vld [vmem:[#allocation11 + $0x1c] sm:$0xf]
    %v1888 = vld [vmem:[#allocation11 + $0x20] sm:$0xf]
    %v1889 = vld [vmem:[#allocation11 + $0x24] sm:$0xf]
    %v1890 = vld [vmem:[#allocation11 + $0x28] sm:$0xf]
    %v1891 = vld [vmem:[#allocation11 + $0x2c] sm:$0xf]
    %v1892 = vld [vmem:[#allocation11 + $0x30] sm:$0xf]
    %v1893 = vld [vmem:[#allocation11 + $0x34] sm:$0xf]
    %v1894 = vld [vmem:[#allocation11 + $0x38] sm:$0xf]
    %v1895 = vld [vmem:[#allocation11 + $0x3c] sm:$0xf]
    %v1896 = vld [vmem:[#allocation13] sm:$0x1]
    %v1898 = vlaneseq
    %v1899 = vshrl.u32 %v1898, 7
    %v1900 = vsub.s32 0, %v1899
    %v1901 = vrot.slane %v1896, %v1900
    %v1919 = vunpack.c.l.b16 %v1880
    %v1920 = vunpack.c.l.b16 %v1881
    %v1921 = vunpack.c.l.b16 %v1882
    %v1922 = vunpack.c.l.b16 %v1883
    %v1923 = vunpack.c.l.b16 %v1884
    %v1924 = vunpack.c.l.b16 %v1885
    %v1925 = vunpack.c.l.b16 %v1886
    %v1926 = vunpack.c.l.b16 %v1887
    %v1927 = vunpack.c.l.b16 %v1888
    %v1928 = vunpack.c.l.b16 %v1889
    %v1929 = vunpack.c.l.b16 %v1890
    %v1930 = vunpack.c.l.b16 %v1891
    %v1931 = vunpack.c.l.b16 %v1892
    %v1932 = vunpack.c.l.b16 %v1893
    %v1933 = vunpack.c.l.b16 %v1894
    %v1934 = vunpack.c.l.b16 %v1895
    %v1935 = vpack.c.b16 %v1920, %v1919
    %v1936 = vpack.c.b16 %v1922, %v1921
    %v1937 = vpack.c.b16 %v1924, %v1923
    %v1938 = vpack.c.b16 %v1926, %v1925
    %v1939 = vpack.c.b16 %v1928, %v1927
    %v1940 = vpack.c.b16 %v1930, %v1929
    %v1941 = vpack.c.b16 %v1932, %v1931
    %v1942 = vpack.c.b16 %v1934, %v1933
    %1951 = vmatprep.subr.bf16.mxu0 0
    %1952 = vmatpush1.bf16.msra.mxu0 %v1935
    %1953 = vmatprep.subr.bf16.mxu0 0
    %1954 = vmatpush1.bf16.msra.mxu0 %v1936
    %1955 = vmatprep.subr.bf16.mxu0 0
    %1956 = vmatpush1.bf16.msra.mxu0 %v1937
    %1957 = vmatprep.subr.bf16.mxu0 0
    %1958 = vmatpush1.bf16.msra.mxu0 %v1938
    %1959 = vmatprep.subr.bf16.mxu0 0
    %1960 = vmatpush1.bf16.msra.mxu0 %v1939
    %1961 = vmatprep.subr.bf16.mxu0 0
    %1962 = vmatpush1.bf16.msra.mxu0 %v1940
    %1963 = vmatprep.subr.bf16.mxu0 0
    %1964 = vmatpush1.bf16.msra.mxu0 %v1941
    %1965 = vmatprep.subr.bf16.mxu0 0
    %1966 = vmatpush1.bf16.msra.mxu0 %v1942
    %1967 = vmatprep.subr.bf16.mxu0 0
    %1968 = vmatpush1.bf16.msra.mxu0 0
    %1969 = vmatprep.subr.bf16.mxu0 0
    %1970 = vmatpush1.bf16.msra.mxu0 0
    %1971 = vmatprep.subr.bf16.mxu0 0
    %1972 = vmatpush1.bf16.msra.mxu0 0
    %1973 = vmatprep.subr.bf16.mxu0 0
    %1974 = vmatpush1.bf16.msra.mxu0 0
    %1975 = vmatprep.subr.bf16.mxu0 0
    %1976 = vmatpush1.bf16.msra.mxu0 0
    %1977 = vmatprep.subr.bf16.mxu0 0
    %1978 = vmatpush1.bf16.msra.mxu0 0
    %1979 = vmatprep.subr.bf16.mxu0 0
    %1980 = vmatpush1.bf16.msra.mxu0 0
    %1981 = vmatprep.subr.bf16.mxu0 0
    %1982 = vmatpush1.bf16.msra.mxu0 0
    %1983 = vmatprep.mubr.bf16.mxu0 0
    %1984 = vmatmul.mubr.bf16.gmra.mrb[0].mxu0 %v1864
    %v1985 = vpop.f32.mrb[0].mxu0
    %v1986 = vadd.f32 %v1901, %v1985
    %v1987 = vpop.f32.mrb[0].mxu0
    %v1988 = vpop.f32.mrb[0].mxu0
    %v1989 = vadd.f32 %v1901, %v1988
    %v1990 = vpop.f32.mrb[0].mxu0
    %1991 = vmatprep.mubr.bf16.mxu0 0
    %1992 = vmatmul.mubr.bf16.gmra.mrb[0].mxu0 %v1865
    %v1993 = vpop.f32.mrb[0].mxu0
    %v1994 = vadd.f32 %v1901, %v1993
    %v1995 = vpop.f32.mrb[0].mxu0
    %v1996 = vpop.f32.mrb[0].mxu0
    %v1997 = vadd.f32 %v1901, %v1996
    %v1998 = vpop.f32.mrb[0].mxu0
    %1999 = vmatprep.mubr.bf16.mxu0 0
    %2000 = vmatmul.mubr.bf16.gmra.mrb[0].mxu0 %v1866
    %v2001 = vpop.f32.mrb[0].mxu0
    %v2002 = vadd.f32 %v1901, %v2001
    %v2003 = vpop.f32.mrb[0].mxu0
    %v2004 = vpop.f32.mrb[0].mxu0
    %v2005 = vadd.f32 %v1901, %v2004
    %v2006 = vpop.f32.mrb[0].mxu0
    %2007 = vmatprep.mubr.bf16.mxu0 0
    %2008 = vmatmul.mubr.bf16.gmra.mrb[0].mxu0 %v1867
    %v2009 = vpop.f32.mrb[0].mxu0
    %v2010 = vadd.f32 %v1901, %v2009
    %v2011 = vpop.f32.mrb[0].mxu0
    %v2012 = vpop.f32.mrb[0].mxu0
    %v2013 = vadd.f32 %v1901, %v2012
    %v2014 = vpop.f32.mrb[0].mxu0
    %2015 = vmatprep.mubr.bf16.mxu0 0
    %2016 = vmatmul.mubr.bf16.gmra.mrb[0].mxu0 %v1868
    %v2017 = vpop.f32.mrb[0].mxu0
    %v2018 = vadd.f32 %v1901, %v2017
    %v2019 = vpop.f32.mrb[0].mxu0
    %v2020 = vpop.f32.mrb[0].mxu0
    %v2021 = vadd.f32 %v1901, %v2020
    %v2022 = vpop.f32.mrb[0].mxu0
    %2023 = vmatprep.mubr.bf16.mxu0 0
    %2024 = vmatmul.mubr.bf16.gmra.mrb[0].mxu0 %v1869
    %v2025 = vpop.f32.mrb[0].mxu0
    %v2026 = vadd.f32 %v1901, %v2025
    %v2027 = vpop.f32.mrb[0].mxu0
    %v2028 = vpop.f32.mrb[0].mxu0
    %v2029 = vadd.f32 %v1901, %v2028
    %v2030 = vpop.f32.mrb[0].mxu0
    %2031 = vmatprep.mubr.bf16.mxu0 0
    %2032 = vmatmul.mubr.bf16.gmra.mrb[0].mxu0 %v1870
    %v2033 = vpop.f32.mrb[0].mxu0
    %v2034 = vadd.f32 %v1901, %v2033
    %v2035 = vpop.f32.mrb[0].mxu0
    %v2036 = vpop.f32.mrb[0].mxu0
    %v2037 = vadd.f32 %v1901, %v2036
    %v2038 = vpop.f32.mrb[0].mxu0
    %2039 = vmatprep.mubr.bf16.mxu0 0
    %2040 = vmatmul.mubr.bf16.gmra.mrb[0].mxu0 %v1871
    %v2041 = vpop.f32.mrb[0].mxu0
    %v2042 = vadd.f32 %v1901, %v2041
    %v2043 = vpop.f32.mrb[0].mxu0
    %v2044 = vpop.f32.mrb[0].mxu0
    %v2045 = vadd.f32 %v1901, %v2044
    %v2046 = vpop.f32.mrb[0].mxu0
    %2047 = vmatprep.mubr.bf16.mxu0 0
    %2048 = vmatmul.mubr.bf16.gmra.mrb[0].mxu0 %v1872
    %v2049 = vpop.f32.mrb[0].mxu0
    %v2050 = vadd.f32 %v1901, %v2049
    %v2051 = vpop.f32.mrb[0].mxu0
    %v2052 = vpop.f32.mrb[0].mxu0
    %v2053 = vadd.f32 %v1901, %v2052
    %v2054 = vpop.f32.mrb[0].mxu0
    %2055 = vmatprep.mubr.bf16.mxu0 0
    %2056 = vmatmul.mubr.bf16.gmra.mrb[0].mxu0 %v1873
    %v2057 = vpop.f32.mrb[0].mxu0
    %v2058 = vadd.f32 %v1901, %v2057
    %v2059 = vpop.f32.mrb[0].mxu0
    %v2060 = vpop.f32.mrb[0].mxu0
    %v2061 = vadd.f32 %v1901, %v2060
    %v2062 = vpop.f32.mrb[0].mxu0
    %2063 = vmatprep.mubr.bf16.mxu0 0
    %2064 = vmatmul.mubr.bf16.gmra.mrb[0].mxu0 %v1874
    %v2065 = vpop.f32.mrb[0].mxu0
    %v2066 = vadd.f32 %v1901, %v2065
    %v2067 = vpop.f32.mrb[0].mxu0
    %v2068 = vpop.f32.mrb[0].mxu0
    %v2069 = vadd.f32 %v1901, %v2068
    %v2070 = vpop.f32.mrb[0].mxu0
    %2071 = vmatprep.mubr.bf16.mxu0 0
    %2072 = vmatmul.mubr.bf16.gmra.mrb[0].mxu0 %v1875
    %v2073 = vpop.f32.mrb[0].mxu0
    %v2074 = vadd.f32 %v1901, %v2073
    %v2075 = vpop.f32.mrb[0].mxu0
    %v2076 = vpop.f32.mrb[0].mxu0
    %v2077 = vadd.f32 %v1901, %v2076
    %v2078 = vpop.f32.mrb[0].mxu0
    %2079 = vmatprep.mubr.bf16.mxu0 0
    %2080 = vmatmul.mubr.bf16.gmra.mrb[0].mxu0 %v1876
    %v2081 = vpop.f32.mrb[0].mxu0
    %v2082 = vadd.f32 %v1901, %v2081
    %v2083 = vpop.f32.mrb[0].mxu0
    %v2084 = vpop.f32.mrb[0].mxu0
    %v2085 = vadd.f32 %v1901, %v2084
    %v2086 = vpop.f32.mrb[0].mxu0
    %2087 = vmatprep.mubr.bf16.mxu0 0
    %2088 = vmatmul.mubr.bf16.gmra.mrb[0].mxu0 %v1877
    %v2089 = vpop.f32.mrb[0].mxu0
    %v2090 = vadd.f32 %v1901, %v2089
    %v2091 = vpop.f32.mrb[0].mxu0
    %v2092 = vpop.f32.mrb[0].mxu0
    %v2093 = vadd.f32 %v1901, %v2092
    %v2094 = vpop.f32.mrb[0].mxu0
    %2095 = vmatprep.mubr.bf16.mxu0 0
    %2096 = vmatmul.mubr.bf16.gmra.mrb[0].mxu0 %v1878
    %v2097 = vpop.f32.mrb[0].mxu0
    %v2098 = vadd.f32 %v1901, %v2097
    %v2099 = vpop.f32.mrb[0].mxu0
    %v2100 = vpop.f32.mrb[0].mxu0
    %v2101 = vadd.f32 %v1901, %v2100
    %v2102 = vpop.f32.mrb[0].mxu0
    %2103 = vmatprep.mubr.bf16.mxu0 0
    %2104 = vmatmul.mubr.bf16.gmra.mrb[0].mxu0 %v1879
    %v2105 = vpop.f32.mrb[0].mxu0
    %v2106 = vadd.f32 %v1901, %v2105
    %v2107 = vpop.f32.mrb[0].mxu0
    %v2108 = vpop.f32.mrb[0].mxu0
    %v2109 = vadd.f32 %v1901, %v2108
    %v2110 = vpop.f32.mrb[0].mxu0
    %2111 = vdwg.mxu0
    %v2112 = vmax.f32 %v1986, 0.0
    %v2113 = vmax.f32 %v1989, 0.0
    %v2114 = vmax.f32 %v1994, 0.0
    %v2115 = vmax.f32 %v1997, 0.0
    %v2116 = vmax.f32 %v2002, 0.0
    %v2117 = vmax.f32 %v2005, 0.0
    %v2118 = vmax.f32 %v2010, 0.0
    %v2119 = vmax.f32 %v2013, 0.0
    %v2120 = vmax.f32 %v2018, 0.0
    %v2121 = vmax.f32 %v2021, 0.0
    %v2122 = vmax.f32 %v2026, 0.0
    %v2123 = vmax.f32 %v2029, 0.0
    %v2124 = vmax.f32 %v2034, 0.0
    %v2125 = vmax.f32 %v2037, 0.0
    %v2126 = vmax.f32 %v2042, 0.0
    %v2127 = vmax.f32 %v2045, 0.0
    %v2128 = vmax.f32 %v2050, 0.0
    %v2129 = vmax.f32 %v2053, 0.0
    %v2130 = vmax.f32 %v2058, 0.0
    %v2131 = vmax.f32 %v2061, 0.0
    %v2132 = vmax.f32 %v2066, 0.0
    %v2133 = vmax.f32 %v2069, 0.0
    %v2134 = vmax.f32 %v2074, 0.0
    %v2135 = vmax.f32 %v2077, 0.0
    %v2136 = vmax.f32 %v2082, 0.0
    %v2137 = vmax.f32 %v2085, 0.0
    %v2138 = vmax.f32 %v2090, 0.0
    %v2139 = vmax.f32 %v2093, 0.0
    %v2140 = vmax.f32 %v2098, 0.0
    %v2141 = vmax.f32 %v2101, 0.0
    %v2142 = vmax.f32 %v2106, 0.0
    %v2143 = vmax.f32 %v2109, 0.0
    %v2144 = vld [vmem:[%s11] sm:$0xff]
    %v2145 = vld [vmem:[%s11 + $0x8] sm:$0xff]
    %v2146 = vld [vmem:[%s11 + $0x10] sm:$0xff]
    %v2147 = vld [vmem:[%s11 + $0x18] sm:$0xff]
    %v2148 = vld [vmem:[%s11 + $0x20] sm:$0xff]
    %v2149 = vld [vmem:[%s11 + $0x28] sm:$0xff]
    %v2150 = vld [vmem:[%s11 + $0x30] sm:$0xff]
    %v2151 = vld [vmem:[%s11 + $0x38] sm:$0xff]
    %v2152 = vld [vmem:[%s11 + $0x40] sm:$0xff]
    %v2153 = vld [vmem:[%s11 + $0x48] sm:$0xff]
    %v2154 = vld [vmem:[%s11 + $0x50] sm:$0xff]
    %v2155 = vld [vmem:[%s11 + $0x58] sm:$0xff]
    %v2156 = vld [vmem:[%s11 + $0x60] sm:$0xff]
    %v2157 = vld [vmem:[%s11 + $0x68] sm:$0xff]
    %v2158 = vld [vmem:[%s11 + $0x70] sm:$0xff]
    %v2159 = vld [vmem:[%s11 + $0x78] sm:$0xff]
    %v2160 = vld [vmem:[%s11 + $0x80] sm:$0xff]
    %v2161 = vld [vmem:[%s11 + $0x88] sm:$0xff]
    %v2162 = vld [vmem:[%s11 + $0x90] sm:$0xff]
    %v2163 = vld [vmem:[%s11 + $0x98] sm:$0xff]
    %v2164 = vld [vmem:[%s11 + $0xa0] sm:$0xff]
    %v2165 = vld [vmem:[%s11 + $0xa8] sm:$0xff]
    %v2166 = vld [vmem:[%s11 + $0xb0] sm:$0xff]
    %v2167 = vld [vmem:[%s11 + $0xb8] sm:$0xff]
    %v2168 = vld [vmem:[%s11 + $0xc0] sm:$0xff]
    %v2169 = vld [vmem:[%s11 + $0xc8] sm:$0xff]
    %v2170 = vld [vmem:[%s11 + $0xd0] sm:$0xff]
    %v2171 = vld [vmem:[%s11 + $0xd8] sm:$0xff]
    %v2172 = vld [vmem:[%s11 + $0xe0] sm:$0xff]
    %v2173 = vld [vmem:[%s11 + $0xe8] sm:$0xff]
    %v2174 = vld [vmem:[%s11 + $0xf0] sm:$0xff]
    %v2175 = vld [vmem:[%s11 + $0xf8] sm:$0xff]
    %v2176 = vld [vmem:[%s11 + $0x100] sm:$0xff]
    %v2177 = vld [vmem:[%s11 + $0x108] sm:$0xff]
    %v2178 = vld [vmem:[%s11 + $0x110] sm:$0xff]
    %v2179 = vld [vmem:[%s11 + $0x118] sm:$0xff]
    %v2180 = vld [vmem:[%s11 + $0x120] sm:$0xff]
    %v2181 = vld [vmem:[%s11 + $0x128] sm:$0xff]
    %v2182 = vld [vmem:[%s11 + $0x130] sm:$0xff]
    %v2183 = vld [vmem:[%s11 + $0x138] sm:$0xff]
    %v2184 = vld [vmem:[%s11 + $0x140] sm:$0xff]
    %v2185 = vld [vmem:[%s11 + $0x148] sm:$0xff]
    %v2186 = vld [vmem:[%s11 + $0x150] sm:$0xff]
    %v2187 = vld [vmem:[%s11 + $0x158] sm:$0xff]
    %v2188 = vld [vmem:[%s11 + $0x160] sm:$0xff]
    %v2189 = vld [vmem:[%s11 + $0x168] sm:$0xff]
    %v2190 = vld [vmem:[%s11 + $0x170] sm:$0xff]
    %v2191 = vld [vmem:[%s11 + $0x178] sm:$0xff]
    %v2192 = vpack.c.bf16 %v2113, %v2112
    %v2193 = vpack.c.bf16 %v2115, %v2114
    %v2194 = vpack.c.bf16 %v2117, %v2116
    %v2195 = vpack.c.bf16 %v2119, %v2118
    %v2196 = vpack.c.bf16 %v2121, %v2120
    %v2197 = vpack.c.bf16 %v2123, %v2122
    %v2198 = vpack.c.bf16 %v2125, %v2124
    %v2199 = vpack.c.bf16 %v2127, %v2126
    %v2200 = vpack.c.bf16 %v2129, %v2128
    %v2201 = vpack.c.bf16 %v2131, %v2130
    %v2202 = vpack.c.bf16 %v2133, %v2132
    %v2203 = vpack.c.bf16 %v2135, %v2134
    %v2204 = vpack.c.bf16 %v2137, %v2136
    %v2205 = vpack.c.bf16 %v2139, %v2138
    %v2206 = vpack.c.bf16 %v2141, %v2140
    %v2207 = vpack.c.bf16 %v2143, %v2142
    %v2256 = vunpack.c.l.b16 %v2144
    %v2257 = vunpack.c.h.b16 %v2144
    %v2258 = vunpack.c.l.b16 %v2145
    %v2259 = vunpack.c.h.b16 %v2145
    %v2260 = vunpack.c.l.b16 %v2146
    %v2261 = vunpack.c.h.b16 %v2146
    %v2262 = vunpack.c.l.b16 %v2147
    %v2263 = vunpack.c.h.b16 %v2147
    %v2264 = vunpack.c.l.b16 %v2148
    %v2265 = vunpack.c.h.b16 %v2148
    %v2266 = vunpack.c.l.b16 %v2149
    %v2267 = vunpack.c.h.b16 %v2149
    %v2268 = vunpack.c.l.b16 %v2150
    %v2269 = vunpack.c.h.b16 %v2150
    %v2270 = vunpack.c.l.b16 %v2151
    %v2271 = vunpack.c.h.b16 %v2151
    %v2272 = vunpack.c.l.b16 %v2152
    %v2273 = vunpack.c.h.b16 %v2152
    %v2274 = vunpack.c.l.b16 %v2153
    %v2275 = vunpack.c.h.b16 %v2153
    %v2276 = vunpack.c.l.b16 %v2154
    %v2277 = vunpack.c.h.b16 %v2154
    %v2278 = vunpack.c.l.b16 %v2155
    %v2279 = vunpack.c.h.b16 %v2155
    %v2280 = vunpack.c.l.b16 %v2156
    %v2281 = vunpack.c.h.b16 %v2156
    %v2282 = vunpack.c.l.b16 %v2157
    %v2283 = vunpack.c.h.b16 %v2157
    %v2284 = vunpack.c.l.b16 %v2158
    %v2285 = vunpack.c.h.b16 %v2158
    %v2286 = vunpack.c.l.b16 %v2159
    %v2287 = vunpack.c.h.b16 %v2159
    %v2288 = vunpack.c.l.b16 %v2160
    %v2289 = vunpack.c.h.b16 %v2160
    %v2290 = vunpack.c.l.b16 %v2161
    %v2291 = vunpack.c.h.b16 %v2161
    %v2292 = vunpack.c.l.b16 %v2162
    %v2293 = vunpack.c.h.b16 %v2162
    %v2294 = vunpack.c.l.b16 %v2163
    %v2295 = vunpack.c.h.b16 %v2163
    %v2296 = vunpack.c.l.b16 %v2164
    %v2297 = vunpack.c.h.b16 %v2164
    %v2298 = vunpack.c.l.b16 %v2165
    %v2299 = vunpack.c.h.b16 %v2165
    %v2300 = vunpack.c.l.b16 %v2166
    %v2301 = vunpack.c.h.b16 %v2166
    %v2302 = vunpack.c.l.b16 %v2167
    %v2303 = vunpack.c.h.b16 %v2167
    %v2304 = vunpack.c.l.b16 %v2168
    %v2305 = vunpack.c.h.b16 %v2168
    %v2306 = vunpack.c.l.b16 %v2169
    %v2307 = vunpack.c.h.b16 %v2169
    %v2308 = vunpack.c.l.b16 %v2170
    %v2309 = vunpack.c.h.b16 %v2170
    %v2310 = vunpack.c.l.b16 %v2171
    %v2311 = vunpack.c.h.b16 %v2171
    %v2312 = vunpack.c.l.b16 %v2172
    %v2313 = vunpack.c.h.b16 %v2172
    %v2314 = vunpack.c.l.b16 %v2173
    %v2315 = vunpack.c.h.b16 %v2173
    %v2316 = vunpack.c.l.b16 %v2174
    %v2317 = vunpack.c.h.b16 %v2174
    %v2318 = vunpack.c.l.b16 %v2175
    %v2319 = vunpack.c.h.b16 %v2175
    %v2320 = vunpack.c.l.b16 %v2176
    %v2321 = vunpack.c.h.b16 %v2176
    %v2322 = vunpack.c.l.b16 %v2177
    %v2323 = vunpack.c.h.b16 %v2177
    %v2324 = vunpack.c.l.b16 %v2178
    %v2325 = vunpack.c.h.b16 %v2178
    %v2326 = vunpack.c.l.b16 %v2179
    %v2327 = vunpack.c.h.b16 %v2179
    %v2328 = vunpack.c.l.b16 %v2180
    %v2329 = vunpack.c.h.b16 %v2180
    %v2330 = vunpack.c.l.b16 %v2181
    %v2331 = vunpack.c.h.b16 %v2181
    %v2332 = vunpack.c.l.b16 %v2182
    %v2333 = vunpack.c.h.b16 %v2182
    %v2334 = vunpack.c.l.b16 %v2183
    %v2335 = vunpack.c.h.b16 %v2183
    %v2336 = vunpack.c.l.b16 %v2184
    %v2337 = vunpack.c.h.b16 %v2184
    %v2338 = vunpack.c.l.b16 %v2185
    %v2339 = vunpack.c.h.b16 %v2185
    %v2340 = vunpack.c.l.b16 %v2186
    %v2341 = vunpack.c.h.b16 %v2186
    %v2342 = vunpack.c.l.b16 %v2187
    %v2343 = vunpack.c.h.b16 %v2187
    %v2344 = vunpack.c.l.b16 %v2188
    %v2345 = vunpack.c.h.b16 %v2188
    %v2346 = vunpack.c.l.b16 %v2189
    %v2347 = vunpack.c.h.b16 %v2189
    %v2348 = vunpack.c.l.b16 %v2190
    %v2349 = vunpack.c.h.b16 %v2190
    %v2350 = vunpack.c.l.b16 %v2191
    %v2351 = vunpack.c.h.b16 %v2191
    %v2352 = vpack.c.b16 %v2258, %v2256
    %v2353 = vpack.c.b16 %v2259, %v2257
    %v2354 = vpack.c.b16 %v2262, %v2260
    %v2355 = vpack.c.b16 %v2263, %v2261
    %v2356 = vpack.c.b16 %v2266, %v2264
    %v2357 = vpack.c.b16 %v2267, %v2265
    %v2358 = vpack.c.b16 %v2270, %v2268
    %v2359 = vpack.c.b16 %v2271, %v2269
    %v2360 = vpack.c.b16 %v2274, %v2272
    %v2361 = vpack.c.b16 %v2275, %v2273
    %v2362 = vpack.c.b16 %v2278, %v2276
    %v2363 = vpack.c.b16 %v2279, %v2277
    %v2364 = vpack.c.b16 %v2282, %v2280
    %v2365 = vpack.c.b16 %v2283, %v2281
    %v2366 = vpack.c.b16 %v2286, %v2284
    %v2367 = vpack.c.b16 %v2287, %v2285
    %v2368 = vpack.c.b16 %v2290, %v2288
    %v2369 = vpack.c.b16 %v2291, %v2289
    %v2370 = vpack.c.b16 %v2294, %v2292
    %v2371 = vpack.c.b16 %v2295, %v2293
    %v2372 = vpack.c.b16 %v2298, %v2296
    %v2373 = vpack.c.b16 %v2299, %v2297
    %v2374 = vpack.c.b16 %v2302, %v2300
    %v2375 = vpack.c.b16 %v2303, %v2301
    %v2376 = vpack.c.b16 %v2306, %v2304
    %v2377 = vpack.c.b16 %v2307, %v2305
    %v2378 = vpack.c.b16 %v2310, %v2308
    %v2379 = vpack.c.b16 %v2311, %v2309
    %v2380 = vpack.c.b16 %v2314, %v2312
    %v2381 = vpack.c.b16 %v2315, %v2313
    %v2382 = vpack.c.b16 %v2318, %v2316
    %v2383 = vpack.c.b16 %v2319, %v2317
    %v2384 = vpack.c.b16 %v2322, %v2320
    %v2385 = vpack.c.b16 %v2323, %v2321
    %v2386 = vpack.c.b16 %v2326, %v2324
    %v2387 = vpack.c.b16 %v2327, %v2325
    %v2388 = vpack.c.b16 %v2330, %v2328
    %v2389 = vpack.c.b16 %v2331, %v2329
    %v2390 = vpack.c.b16 %v2334, %v2332
    %v2391 = vpack.c.b16 %v2335, %v2333
    %v2392 = vpack.c.b16 %v2338, %v2336
    %v2393 = vpack.c.b16 %v2339, %v2337
    %v2394 = vpack.c.b16 %v2342, %v2340
    %v2395 = vpack.c.b16 %v2343, %v2341
    %v2396 = vpack.c.b16 %v2346, %v2344
    %v2397 = vpack.c.b16 %v2347, %v2345
    %v2398 = vpack.c.b16 %v2350, %v2348
    %v2399 = vpack.c.b16 %v2351, %v2349
    %2448 = vmatprep.subr.bf16.mxu0 0
    %2449 = vmatpush1.bf16.msra.mxu0 %v2192
    %2450 = vmatprep.subr.bf16.mxu0 0
    %2451 = vmatpush1.bf16.msra.mxu0 %v2193
    %2452 = vmatprep.subr.bf16.mxu0 0
    %2453 = vmatpush1.bf16.msra.mxu0 %v2194
    %2454 = vmatprep.subr.bf16.mxu0 0
    %2455 = vmatpush1.bf16.msra.mxu0 %v2195
    %2456 = vmatprep.subr.bf16.mxu0 0
    %2457 = vmatpush1.bf16.msra.mxu0 %v2196
    %2458 = vmatprep.subr.bf16.mxu0 0
    %2459 = vmatpush1.bf16.msra.mxu0 %v2197
    %2460 = vmatprep.subr.bf16.mxu0 0
    %2461 = vmatpush1.bf16.msra.mxu0 %v2198
    %2462 = vmatprep.subr.bf16.mxu0 0
    %2463 = vmatpush1.bf16.msra.mxu0 %v2199
    %2464 = vmatprep.subr.bf16.mxu0 0
    %2465 = vmatpush1.bf16.msra.mxu0 %v2200
    %2466 = vmatprep.subr.bf16.mxu0 0
    %2467 = vmatpush1.bf16.msra.mxu0 %v2201
    %2468 = vmatprep.subr.bf16.mxu0 0
    %2469 = vmatpush1.bf16.msra.mxu0 %v2202
    %2470 = vmatprep.subr.bf16.mxu0 0
    %2471 = vmatpush1.bf16.msra.mxu0 %v2203
    %2472 = vmatprep.subr.bf16.mxu0 0
    %2473 = vmatpush1.bf16.msra.mxu0 %v2204
    %2474 = vmatprep.subr.bf16.mxu0 0
    %2475 = vmatpush1.bf16.msra.mxu0 %v2205
    %2476 = vmatprep.subr.bf16.mxu0 0
    %2477 = vmatpush1.bf16.msra.mxu0 %v2206
    %2478 = vmatprep.subr.bf16.mxu0 0
    %2479 = vmatpush1.bf16.msra.mxu0 %v2207
    %2480 = vmatprep.mubr.bf16.mxu0 %v2353
    %2481 = vmatmul.mubr.bf16.gmra.mrb[0].mxu0 %v2352
    %v2482 = vpop.f32.mrb[0].mxu0
    %v2483 = vadd.f32 0.0, %v2482
    %v2484 = vpop.f32.mrb[0].mxu0
    %v2485 = vpop.f32.mrb[0].mxu0
    %v2486 = vadd.f32 0.0, %v2485
    %v2487 = vpop.f32.mrb[0].mxu0
    %2488 = vmatprep.mubr.bf16.mxu0 %v2355
    %2489 = vmatmul.mubr.bf16.gmra.mrb[0].mxu0 %v2354
    %v2490 = vpop.f32.mrb[0].mxu0
    %v2491 = vadd.f32 0.0, %v2490
    %v2492 = vpop.f32.mrb[0].mxu0
    %v2493 = vpop.f32.mrb[0].mxu0
    %v2494 = vadd.f32 0.0, %v2493
    %v2495 = vpop.f32.mrb[0].mxu0
    %2496 = vmatprep.mubr.bf16.mxu0 %v2357
    %2497 = vmatmul.mubr.bf16.gmra.mrb[0].mxu0 %v2356
    %v2498 = vpop.f32.mrb[0].mxu0
    %v2499 = vadd.f32 0.0, %v2498
    %v2500 = vpop.f32.mrb[0].mxu0
    %v2501 = vpop.f32.mrb[0].mxu0
    %v2502 = vadd.f32 0.0, %v2501
    %v2503 = vpop.f32.mrb[0].mxu0
    %2504 = vmatprep.mubr.bf16.mxu0 %v2359
    %2505 = vmatmul.mubr.bf16.gmra.mrb[0].mxu0 %v2358
    %v2506 = vpop.f32.mrb[0].mxu0
    %v2507 = vadd.f32 0.0, %v2506
    %v2508 = vpop.f32.mrb[0].mxu0
    %v2509 = vpop.f32.mrb[0].mxu0
    %v2510 = vadd.f32 0.0, %v2509
    %v2511 = vpop.f32.mrb[0].mxu0
    %2512 = vmatprep.mubr.bf16.mxu0 %v2361
    %2513 = vmatmul.mubr.bf16.gmra.mrb[0].mxu0 %v2360
    %v2514 = vpop.f32.mrb[0].mxu0
    %v2515 = vadd.f32 0.0, %v2514
    %v2516 = vpop.f32.mrb[0].mxu0
    %v2517 = vpop.f32.mrb[0].mxu0
    %v2518 = vadd.f32 0.0, %v2517
    %v2519 = vpop.f32.mrb[0].mxu0
    %2520 = vmatprep.mubr.bf16.mxu0 %v2363
    %2521 = vmatmul.mubr.bf16.gmra.mrb[0].mxu0 %v2362
    %v2522 = vpop.f32.mrb[0].mxu0
    %v2523 = vadd.f32 0.0, %v2522
    %v2524 = vpop.f32.mrb[0].mxu0
    %v2525 = vpop.f32.mrb[0].mxu0
    %v2526 = vadd.f32 0.0, %v2525
    %v2527 = vpop.f32.mrb[0].mxu0
    %2528 = vmatprep.mubr.bf16.mxu0 %v2365
    %2529 = vmatmul.mubr.bf16.gmra.mrb[0].mxu0 %v2364
    %v2530 = vpop.f32.mrb[0].mxu0
    %v2531 = vadd.f32 0.0, %v2530
    %v2532 = vpop.f32.mrb[0].mxu0
    %v2533 = vpop.f32.mrb[0].mxu0
    %v2534 = vadd.f32 0.0, %v2533
    %v2535 = vpop.f32.mrb[0].mxu0
    %2536 = vmatprep.mubr.bf16.mxu0 %v2367
    %2537 = vmatmul.mubr.bf16.gmra.mrb[0].mxu0 %v2366
    %v2538 = vpop.f32.mrb[0].mxu0
    %v2539 = vadd.f32 0.0, %v2538
    %v2540 = vpop.f32.mrb[0].mxu0
    %v2541 = vpop.f32.mrb[0].mxu0
    %v2542 = vadd.f32 0.0, %v2541
    %v2543 = vpop.f32.mrb[0].mxu0
    %2544 = vmatprep.mubr.bf16.mxu0 %v2369
    %2545 = vmatmul.mubr.bf16.gmra.mrb[0].mxu0 %v2368
    %v2546 = vpop.f32.mrb[0].mxu0
    %v2547 = vadd.f32 0.0, %v2546
    %v2548 = vpop.f32.mrb[0].mxu0
    %v2549 = vpop.f32.mrb[0].mxu0
    %v2550 = vadd.f32 0.0, %v2549
    %v2551 = vpop.f32.mrb[0].mxu0
    %2552 = vmatprep.mubr.bf16.mxu0 %v2371
    %2553 = vmatmul.mubr.bf16.gmra.mrb[0].mxu0 %v2370
    %v2554 = vpop.f32.mrb[0].mxu0
    %v2555 = vadd.f32 0.0, %v2554
    %v2556 = vpop.f32.mrb[0].mxu0
    %v2557 = vpop.f32.mrb[0].mxu0
    %v2558 = vadd.f32 0.0, %v2557
    %v2559 = vpop.f32.mrb[0].mxu0
    %2560 = vmatprep.mubr.bf16.mxu0 %v2373
    %2561 = vmatmul.mubr.bf16.gmra.mrb[0].mxu0 %v2372
    %v2562 = vpop.f32.mrb[0].mxu0
    %v2563 = vadd.f32 0.0, %v2562
    %v2564 = vpop.f32.mrb[0].mxu0
    %v2565 = vpop.f32.mrb[0].mxu0
    %v2566 = vadd.f32 0.0, %v2565
    %v2567 = vpop.f32.mrb[0].mxu0
    %2568 = vmatprep.mubr.bf16.mxu0 %v2375
    %2569 = vmatmul.mubr.bf16.gmra.mrb[0].mxu0 %v2374
    %v2570 = vpop.f32.mrb[0].mxu0
    %v2571 = vadd.f32 0.0, %v2570
    %v2572 = vpop.f32.mrb[0].mxu0
    %v2573 = vpop.f32.mrb[0].mxu0
    %v2574 = vadd.f32 0.0, %v2573
    %v2575 = vpop.f32.mrb[0].mxu0
    %2576 = vmatprep.mubr.bf16.mxu0 %v2377
    %2577 = vmatmul.mubr.bf16.gmra.mrb[0].mxu0 %v2376
    %v2578 = vpop.f32.mrb[0].mxu0
    %v2579 = vadd.f32 0.0, %v2578
    %v2580 = vpop.f32.mrb[0].mxu0
    %v2581 = vpop.f32.mrb[0].mxu0
    %v2582 = vadd.f32 0.0, %v2581
    %v2583 = vpop.f32.mrb[0].mxu0
    %2584 = vmatprep.mubr.bf16.mxu0 %v2379
    %2585 = vmatmul.mubr.bf16.gmra.mrb[0].mxu0 %v2378
    %v2586 = vpop.f32.mrb[0].mxu0
    %v2587 = vadd.f32 0.0, %v2586
    %v2588 = vpop.f32.mrb[0].mxu0
    %v2589 = vpop.f32.mrb[0].mxu0
    %v2590 = vadd.f32 0.0, %v2589
    %v2591 = vpop.f32.mrb[0].mxu0
    %2592 = vmatprep.mubr.bf16.mxu0 %v2381
    %2593 = vmatmul.mubr.bf16.gmra.mrb[0].mxu0 %v2380
    %v2594 = vpop.f32.mrb[0].mxu0
    %v2595 = vadd.f32 0.0, %v2594
    %v2596 = vpop.f32.mrb[0].mxu0
    %v2597 = vpop.f32.mrb[0].mxu0
    %v2598 = vadd.f32 0.0, %v2597
    %v2599 = vpop.f32.mrb[0].mxu0
    %2600 = vmatprep.mubr.bf16.mxu0 %v2383
    %2601 = vmatmul.mubr.bf16.gmra.mrb[0].mxu0 %v2382
    %v2602 = vpop.f32.mrb[0].mxu0
    %v2603 = vadd.f32 0.0, %v2602
    %v2604 = vpop.f32.mrb[0].mxu0
    %v2605 = vpop.f32.mrb[0].mxu0
    %v2606 = vadd.f32 0.0, %v2605
    %v2607 = vpop.f32.mrb[0].mxu0
    %2608 = vmatprep.mubr.bf16.mxu0 %v2385
    %2609 = vmatmul.mubr.bf16.gmra.mrb[0].mxu0 %v2384
    %v2610 = vpop.f32.mrb[0].mxu0
    %v2611 = vadd.f32 0.0, %v2610
    %v2612 = vpop.f32.mrb[0].mxu0
    %v2613 = vpop.f32.mrb[0].mxu0
    %v2614 = vadd.f32 0.0, %v2613
    %v2615 = vpop.f32.mrb[0].mxu0
    %2616 = vmatprep.mubr.bf16.mxu0 %v2387
    %2617 = vmatmul.mubr.bf16.gmra.mrb[0].mxu0 %v2386
    %v2618 = vpop.f32.mrb[0].mxu0
    %v2619 = vadd.f32 0.0, %v2618
    %v2620 = vpop.f32.mrb[0].mxu0
    %v2621 = vpop.f32.mrb[0].mxu0
    %v2622 = vadd.f32 0.0, %v2621
    %v2623 = vpop.f32.mrb[0].mxu0
    %2624 = vmatprep.mubr.bf16.mxu0 %v2389
    %2625 = vmatmul.mubr.bf16.gmra.mrb[0].mxu0 %v2388
    %v2626 = vpop.f32.mrb[0].mxu0
    %v2627 = vadd.f32 0.0, %v2626
    %v2628 = vpop.f32.mrb[0].mxu0
    %v2629 = vpop.f32.mrb[0].mxu0
    %v2630 = vadd.f32 0.0, %v2629
    %v2631 = vpop.f32.mrb[0].mxu0
    %2632 = vmatprep.mubr.bf16.mxu0 %v2391
    %2633 = vmatmul.mubr.bf16.gmra.mrb[0].mxu0 %v2390
    %v2634 = vpop.f32.mrb[0].mxu0
    %v2635 = vadd.f32 0.0, %v2634
    %v2636 = vpop.f32.mrb[0].mxu0
    %v2637 = vpop.f32.mrb[0].mxu0
    %v2638 = vadd.f32 0.0, %v2637
    %v2639 = vpop.f32.mrb[0].mxu0
    %2640 = vmatprep.mubr.bf16.mxu0 %v2393
    %2641 = vmatmul.mubr.bf16.gmra.mrb[0].mxu0 %v2392
    %v2642 = vpop.f32.mrb[0].mxu0
    %v2643 = vadd.f32 0.0, %v2642
    %v2644 = vpop.f32.mrb[0].mxu0
    %v2645 = vpop.f32.mrb[0].mxu0
    %v2646 = vadd.f32 0.0, %v2645
    %v2647 = vpop.f32.mrb[0].mxu0
    %2648 = vmatprep.mubr.bf16.mxu0 %v2395
    %2649 = vmatmul.mubr.bf16.gmra.mrb[0].mxu0 %v2394
    %v2650 = vpop.f32.mrb[0].mxu0
    %v2651 = vadd.f32 0.0, %v2650
    %v2652 = vpop.f32.mrb[0].mxu0
    %v2653 = vpop.f32.mrb[0].mxu0
    %v2654 = vadd.f32 0.0, %v2653
    %v2655 = vpop.f32.mrb[0].mxu0
    %2656 = vmatprep.mubr.bf16.mxu0 %v2397
    %2657 = vmatmul.mubr.bf16.gmra.mrb[0].mxu0 %v2396
    %v2658 = vpop.f32.mrb[0].mxu0
    %v2659 = vadd.f32 0.0, %v2658
    %v2660 = vpop.f32.mrb[0].mxu0
    %v2661 = vpop.f32.mrb[0].mxu0
    %v2662 = vadd.f32 0.0, %v2661
    %v2663 = vpop.f32.mrb[0].mxu0
    %2664 = vmatprep.mubr.bf16.mxu0 %v2399
    %2665 = vmatmul.mubr.bf16.gmra.mrb[0].mxu0 %v2398
    %v2666 = vpop.f32.mrb[0].mxu0
    %v2667 = vadd.f32 0.0, %v2666
    %v2668 = vpop.f32.mrb[0].mxu0
    %v2669 = vpop.f32.mrb[0].mxu0
    %v2670 = vadd.f32 0.0, %v2669
    %v2671 = vpop.f32.mrb[0].mxu0
    %2672 = vdwg.mxu0
    %s2673 = scalar_lea.vmem [#allocation8], 8
    %v2674 = vld [vmem:[%s2673] sm:$0xff]
    %v2675 = vlaneseq
    %v2676 = vshrl.u32 %v2675, 7
    %v2677 = vsub.s32 0, %v2676
    %v2678 = vrot.slane %v2674, %v2677
    %v2679 = vmul.f32 %v2678, %v2483
    %v2680 = vmul.f32 %v2678, %v2486
    %v2681 = vmul.f32 %v2678, %v2491
    %v2682 = vmul.f32 %v2678, %v2494
    %v2683 = vmul.f32 %v2678, %v2499
    %v2684 = vmul.f32 %v2678, %v2502
    %v2685 = vmul.f32 %v2678, %v2507
    %v2686 = vmul.f32 %v2678, %v2510
    %v2687 = vmul.f32 %v2678, %v2515
    %v2688 = vmul.f32 %v2678, %v2518
    %v2689 = vmul.f32 %v2678, %v2523
    %v2690 = vmul.f32 %v2678, %v2526
    %v2691 = vmul.f32 %v2678, %v2531
    %v2692 = vmul.f32 %v2678, %v2534
    %v2693 = vmul.f32 %v2678, %v2539
    %v2694 = vmul.f32 %v2678, %v2542
    %v2695 = vlaneseq
    %v2696 = vshrl.u32 %v2695, 7
    %v2697 = vsub.s32 1, %v2696
    %v2698 = vrot.slane %v2674, %v2697
    %v2699 = vmul.f32 %v2698, %v2547
    %v2700 = vmul.f32 %v2698, %v2550
    %v2701 = vmul.f32 %v2698, %v2555
    %v2702 = vmul.f32 %v2698, %v2558
    %v2703 = vmul.f32 %v2698, %v2563
    %v2704 = vmul.f32 %v2698, %v2566
    %v2705 = vmul.f32 %v2698, %v2571
    %v2706 = vmul.f32 %v2698, %v2574
    %v2707 = vmul.f32 %v2698, %v2579
    %v2708 = vmul.f32 %v2698, %v2582
    %v2709 = vmul.f32 %v2698, %v2587
    %v2710 = vmul.f32 %v2698, %v2590
    %v2711 = vmul.f32 %v2698, %v2595
    %v2712 = vmul.f32 %v2698, %v2598
    %v2713 = vmul.f32 %v2698, %v2603
    %v2714 = vmul.f32 %v2698, %v2606
    %v2715 = vadd.f32 %v2679, %v2699
    %v2716 = vadd.f32 %v2680, %v2700
    %v2717 = vadd.f32 %v2681, %v2701
    %v2718 = vadd.f32 %v2682, %v2702
    %v2719 = vadd.f32 %v2683, %v2703
    %v2720 = vadd.f32 %v2684, %v2704
    %v2721 = vadd.f32 %v2685, %v2705
    %v2722 = vadd.f32 %v2686, %v2706
    %v2723 = vadd.f32 %v2687, %v2707
    %v2724 = vadd.f32 %v2688, %v2708
    %v2725 = vadd.f32 %v2689, %v2709
    %v2726 = vadd.f32 %v2690, %v2710
    %v2727 = vadd.f32 %v2691, %v2711
    %v2728 = vadd.f32 %v2692, %v2712
    %v2729 = vadd.f32 %v2693, %v2713
    %v2730 = vadd.f32 %v2694, %v2714
    %v2731 = vlaneseq
    %v2732 = vshrl.u32 %v2731, 7
    %v2733 = vsub.s32 2, %v2732
    %v2734 = vrot.slane %v2674, %v2733
    %v2735 = vmul.f32 %v2734, %v2611
    %v2736 = vmul.f32 %v2734, %v2614
    %v2737 = vmul.f32 %v2734, %v2619
    %v2738 = vmul.f32 %v2734, %v2622
    %v2739 = vmul.f32 %v2734, %v2627
    %v2740 = vmul.f32 %v2734, %v2630
    %v2741 = vmul.f32 %v2734, %v2635
    %v2742 = vmul.f32 %v2734, %v2638
    %v2743 = vmul.f32 %v2734, %v2643
    %v2744 = vmul.f32 %v2734, %v2646
    %v2745 = vmul.f32 %v2734, %v2651
    %v2746 = vmul.f32 %v2734, %v2654
    %v2747 = vmul.f32 %v2734, %v2659
    %v2748 = vmul.f32 %v2734, %v2662
    %v2749 = vmul.f32 %v2734, %v2667
    %v2750 = vmul.f32 %v2734, %v2670
    %v2751 = vadd.f32 %v2715, %v2735
    %v2752 = vadd.f32 %v2716, %v2736
    %v2753 = vadd.f32 %v2717, %v2737
    %v2754 = vadd.f32 %v2718, %v2738
    %v2755 = vadd.f32 %v2719, %v2739
    %v2756 = vadd.f32 %v2720, %v2740
    %v2757 = vadd.f32 %v2721, %v2741
    %v2758 = vadd.f32 %v2722, %v2742
    %v2759 = vadd.f32 %v2723, %v2743
    %v2760 = vadd.f32 %v2724, %v2744
    %v2761 = vadd.f32 %v2725, %v2745
    %v2762 = vadd.f32 %v2726, %v2746
    %v2763 = vadd.f32 %v2727, %v2747
    %v2764 = vadd.f32 %v2728, %v2748
    %v2765 = vadd.f32 %v2729, %v2749
    %v2766 = vadd.f32 %v2730, %v2750
    %s2767 = scalar_lea.vmem [#allocation10], 1
    %v2768 = vld [vmem:[%s2767] sm:$0x1]
    %v2770 = vlaneseq
    %v2771 = vshrl.u32 %v2770, 7
    %v2772 = vsub.s32 0, %v2771
    %v2773 = vrot.slane %v2768, %v2772
    %v2775 = vadd.f32 %v2751, %v2773
    %v2776 = vadd.f32 %v2752, %v2773
    %v2777 = vadd.f32 %v2753, %v2773
    %v2778 = vadd.f32 %v2754, %v2773
    %v2779 = vadd.f32 %v2755, %v2773
    %v2780 = vadd.f32 %v2756, %v2773
    %v2781 = vadd.f32 %v2757, %v2773
    %v2782 = vadd.f32 %v2758, %v2773
    %v2783 = vadd.f32 %v2759, %v2773
    %v2784 = vadd.f32 %v2760, %v2773
    %v2785 = vadd.f32 %v2761, %v2773
    %v2786 = vadd.f32 %v2762, %v2773
    %v2787 = vadd.f32 %v2763, %v2773
    %v2788 = vadd.f32 %v2764, %v2773
    %v2789 = vadd.f32 %v2765, %v2773
    %v2790 = vadd.f32 %v2766, %v2773
    %v2791 = vmax.f32 %v2775, 0.0
    %v2792 = vmax.f32 %v2776, 0.0
    %v2793 = vmax.f32 %v2777, 0.0
    %v2794 = vmax.f32 %v2778, 0.0
    %v2795 = vmax.f32 %v2779, 0.0
    %v2796 = vmax.f32 %v2780, 0.0
    %v2797 = vmax.f32 %v2781, 0.0
    %v2798 = vmax.f32 %v2782, 0.0
    %v2799 = vmax.f32 %v2783, 0.0
    %v2800 = vmax.f32 %v2784, 0.0
    %v2801 = vmax.f32 %v2785, 0.0
    %v2802 = vmax.f32 %v2786, 0.0
    %v2803 = vmax.f32 %v2787, 0.0
    %v2804 = vmax.f32 %v2788, 0.0
    %v2805 = vmax.f32 %v2789, 0.0
    %v2806 = vmax.f32 %v2790, 0.0
    %v2807 = vpack.c.bf16 %v2792, %v2791
    %v2808 = vpack.c.bf16 %v2794, %v2793
    %v2809 = vpack.c.bf16 %v2796, %v2795
    %v2810 = vpack.c.bf16 %v2798, %v2797
    %v2811 = vpack.c.bf16 %v2800, %v2799
    %v2812 = vpack.c.bf16 %v2802, %v2801
    %v2813 = vpack.c.bf16 %v2804, %v2803
    %v2814 = vpack.c.bf16 %v2806, %v2805
    %s2815 = scalar_lea.vmem [#allocation11], 64
    %v2816 = vld [vmem:[%s2815] sm:$0xf]
    %v2817 = vld [vmem:[%s2815 + $0x4] sm:$0xf]
    %v2818 = vld [vmem:[%s2815 + $0x8] sm:$0xf]
    %v2819 = vld [vmem:[%s2815 + $0xc] sm:$0xf]
    %v2820 = vld [vmem:[%s2815 + $0x10] sm:$0xf]
    %v2821 = vld [vmem:[%s2815 + $0x14] sm:$0xf]
    %v2822 = vld [vmem:[%s2815 + $0x18] sm:$0xf]
    %v2823 = vld [vmem:[%s2815 + $0x1c] sm:$0xf]
    %v2824 = vld [vmem:[%s2815 + $0x20] sm:$0xf]
    %v2825 = vld [vmem:[%s2815 + $0x24] sm:$0xf]
    %v2826 = vld [vmem:[%s2815 + $0x28] sm:$0xf]
    %v2827 = vld [vmem:[%s2815 + $0x2c] sm:$0xf]
    %v2828 = vld [vmem:[%s2815 + $0x30] sm:$0xf]
    %v2829 = vld [vmem:[%s2815 + $0x34] sm:$0xf]
    %v2830 = vld [vmem:[%s2815 + $0x38] sm:$0xf]
    %v2831 = vld [vmem:[%s2815 + $0x3c] sm:$0xf]
    %s2832 = scalar_lea.vmem [#allocation13], 1
    %v2833 = vld [vmem:[%s2832] sm:$0x1]
    %v2835 = vlaneseq
    %v2836 = vshrl.u32 %v2835, 7
    %v2837 = vsub.s32 0, %v2836
    %v2838 = vrot.slane %v2833, %v2837
    %v2856 = vunpack.c.l.b16 %v2816
    %v2857 = vunpack.c.l.b16 %v2817
    %v2858 = vunpack.c.l.b16 %v2818
    %v2859 = vunpack.c.l.b16 %v2819
    %v2860 = vunpack.c.l.b16 %v2820
    %v2861 = vunpack.c.l.b16 %v2821
    %v2862 = vunpack.c.l.b16 %v2822
    %v2863 = vunpack.c.l.b16 %v2823
    %v2864 = vunpack.c.l.b16 %v2824
    %v2865 = vunpack.c.l.b16 %v2825
    %v2866 = vunpack.c.l.b16 %v2826
    %v2867 = vunpack.c.l.b16 %v2827
    %v2868 = vunpack.c.l.b16 %v2828
    %v2869 = vunpack.c.l.b16 %v2829
    %v2870 = vunpack.c.l.b16 %v2830
    %v2871 = vunpack.c.l.b16 %v2831
    %v2872 = vpack.c.b16 %v2857, %v2856
    %v2873 = vpack.c.b16 %v2859, %v2858
    %v2874 = vpack.c.b16 %v2861, %v2860
    %v2875 = vpack.c.b16 %v2863, %v2862
    %v2876 = vpack.c.b16 %v2865, %v2864
    %v2877 = vpack.c.b16 %v2867, %v2866
    %v2878 = vpack.c.b16 %v2869, %v2868
    %v2879 = vpack.c.b16 %v2871, %v2870
    %2888 = vmatprep.subr.bf16.mxu0 0
    %2889 = vmatpush1.bf16.msra.mxu0 %v2872
    %2890 = vmatprep.subr.bf16.mxu0 0
    %2891 = vmatpush1.bf16.msra.mxu0 %v2873
    %2892 = vmatprep.subr.bf16.mxu0 0
    %2893 = vmatpush1.bf16.msra.mxu0 %v2874
    %2894 = vmatprep.subr.bf16.mxu0 0
    %2895 = vmatpush1.bf16.msra.mxu0 %v2875
    %2896 = vmatprep.subr.bf16.mxu0 0
    %2897 = vmatpush1.bf16.msra.mxu0 %v2876
    %2898 = vmatprep.subr.bf16.mxu0 0
    %2899 = vmatpush1.bf16.msra.mxu0 %v2877
    %2900 = vmatprep.subr.bf16.mxu0 0
    %2901 = vmatpush1.bf16.msra.mxu0 %v2878
    %2902 = vmatprep.subr.bf16.mxu0 0
    %2903 = vmatpush1.bf16.msra.mxu0 %v2879
    %2904 = vmatprep.subr.bf16.mxu0 0
    %2905 = vmatpush1.bf16.msra.mxu0 0
    %2906 = vmatprep.subr.bf16.mxu0 0
    %2907 = vmatpush1.bf16.msra.mxu0 0
    %2908 = vmatprep.subr.bf16.mxu0 0
    %2909 = vmatpush1.bf16.msra.mxu0 0
    %2910 = vmatprep.subr.bf16.mxu0 0
    %2911 = vmatpush1.bf16.msra.mxu0 0
    %2912 = vmatprep.subr.bf16.mxu0 0
    %2913 = vmatpush1.bf16.msra.mxu0 0
    %2914 = vmatprep.subr.bf16.mxu0 0
    %2915 = vmatpush1.bf16.msra.mxu0 0
    %2916 = vmatprep.subr.bf16.mxu0 0
    %2917 = vmatpush1.bf16.msra.mxu0 0
    %2918 = vmatprep.subr.bf16.mxu0 0
    %2919 = vmatpush1.bf16.msra.mxu0 0
    %2920 = vmatprep.mubr.bf16.mxu0 0
    %2921 = vmatmul.mubr.bf16.gmra.mrb[0].mxu0 %v2807
    %v2922 = vpop.f32.mrb[0].mxu0
    %v2923 = vadd.f32 %v2838, %v2922
    %v2924 = vpop.f32.mrb[0].mxu0
    %v2925 = vpop.f32.mrb[0].mxu0
    %v2926 = vadd.f32 %v2838, %v2925
    %v2927 = vpop.f32.mrb[0].mxu0
    %2928 = vmatprep.mubr.bf16.mxu0 0
    %2929 = vmatmul.mubr.bf16.gmra.mrb[0].mxu0 %v2808
    %v2930 = vpop.f32.mrb[0].mxu0
    %v2931 = vadd.f32 %v2838, %v2930
    %v2932 = vpop.f32.mrb[0].mxu0
    %v2933 = vpop.f32.mrb[0].mxu0
    %v2934 = vadd.f32 %v2838, %v2933
    %v2935 = vpop.f32.mrb[0].mxu0
    %2936 = vmatprep.mubr.bf16.mxu0 0
    %2937 = vmatmul.mubr.bf16.gmra.mrb[0].mxu0 %v2809
    %v2938 = vpop.f32.mrb[0].mxu0
    %v2939 = vadd.f32 %v2838, %v2938
    %v2940 = vpop.f32.mrb[0].mxu0
    %v2941 = vpop.f32.mrb[0].mxu0
    %v2942 = vadd.f32 %v2838, %v2941
    %v2943 = vpop.f32.mrb[0].mxu0
    %2944 = vmatprep.mubr.bf16.mxu0 0
    %2945 = vmatmul.mubr.bf16.gmra.mrb[0].mxu0 %v2810
    %v2946 = vpop.f32.mrb[0].mxu0
    %v2947 = vadd.f32 %v2838, %v2946
    %v2948 = vpop.f32.mrb[0].mxu0
    %v2949 = vpop.f32.mrb[0].mxu0
    %v2950 = vadd.f32 %v2838, %v2949
    %v2951 = vpop.f32.mrb[0].mxu0
    %2952 = vmatprep.mubr.bf16.mxu0 0
    %2953 = vmatmul.mubr.bf16.gmra.mrb[0].mxu0 %v2811
    %v2954 = vpop.f32.mrb[0].mxu0
    %v2955 = vadd.f32 %v2838, %v2954
    %v2956 = vpop.f32.mrb[0].mxu0
    %v2957 = vpop.f32.mrb[0].mxu0
    %v2958 = vadd.f32 %v2838, %v2957
    %v2959 = vpop.f32.mrb[0].mxu0
    %2960 = vmatprep.mubr.bf16.mxu0 0
    %2961 = vmatmul.mubr.bf16.gmra.mrb[0].mxu0 %v2812
    %v2962 = vpop.f32.mrb[0].mxu0
    %v2963 = vadd.f32 %v2838, %v2962
    %v2964 = vpop.f32.mrb[0].mxu0
    %v2965 = vpop.f32.mrb[0].mxu0
    %v2966 = vadd.f32 %v2838, %v2965
    %v2967 = vpop.f32.mrb[0].mxu0
    %2968 = vmatprep.mubr.bf16.mxu0 0
    %2969 = vmatmul.mubr.bf16.gmra.mrb[0].mxu0 %v2813
    %v2970 = vpop.f32.mrb[0].mxu0
    %v2971 = vadd.f32 %v2838, %v2970
    %v2972 = vpop.f32.mrb[0].mxu0
    %v2973 = vpop.f32.mrb[0].mxu0
    %v2974 = vadd.f32 %v2838, %v2973
    %v2975 = vpop.f32.mrb[0].mxu0
    %2976 = vmatprep.mubr.bf16.mxu0 0
    %2977 = vmatmul.mubr.bf16.gmra.mrb[0].mxu0 %v2814
    %v2978 = vpop.f32.mrb[0].mxu0
    %v2979 = vadd.f32 %v2838, %v2978
    %v2980 = vpop.f32.mrb[0].mxu0
    %v2981 = vpop.f32.mrb[0].mxu0
    %v2982 = vadd.f32 %v2838, %v2981
    %v2983 = vpop.f32.mrb[0].mxu0
    %2984 = vdwg.mxu0
    %v2985 = vmax.f32 %v2923, 0.0
    %v2986 = vmax.f32 %v2926, 0.0
    %v2987 = vmax.f32 %v2931, 0.0
    %v2988 = vmax.f32 %v2934, 0.0
    %v2989 = vmax.f32 %v2939, 0.0
    %v2990 = vmax.f32 %v2942, 0.0
    %v2991 = vmax.f32 %v2947, 0.0
    %v2992 = vmax.f32 %v2950, 0.0
    %v2993 = vmax.f32 %v2955, 0.0
    %v2994 = vmax.f32 %v2958, 0.0
    %v2995 = vmax.f32 %v2963, 0.0
    %v2996 = vmax.f32 %v2966, 0.0
    %v2997 = vmax.f32 %v2971, 0.0
    %v2998 = vmax.f32 %v2974, 0.0
    %v2999 = vmax.f32 %v2979, 0.0
    %v3000 = vmax.f32 %v2982, 0.0
    %v3001 = vld [vmem:[%s12] sm:$0xf]
    %v3002 = vld [vmem:[%s12 + $0x4] sm:$0xf]
    %v3003 = vld [vmem:[%s12 + $0x8] sm:$0xf]
    %v3004 = vld [vmem:[%s12 + $0xc] sm:$0xf]
    %v3005 = vld [vmem:[%s12 + $0x10] sm:$0xf]
    %v3006 = vld [vmem:[%s12 + $0x14] sm:$0xf]
    %v3007 = vld [vmem:[%s12 + $0x18] sm:$0xf]
    %v3008 = vld [vmem:[%s12 + $0x1c] sm:$0xf]
    %v3009 = vld [vmem:[%s12 + $0x20] sm:$0xf]
    %v3010 = vld [vmem:[%s12 + $0x24] sm:$0xf]
    %v3011 = vld [vmem:[%s12 + $0x28] sm:$0xf]
    %v3012 = vld [vmem:[%s12 + $0x2c] sm:$0xf]
    %v3013 = vld [vmem:[%s12 + $0x30] sm:$0xf]
    %v3014 = vld [vmem:[%s12 + $0x34] sm:$0xf]
    %v3015 = vld [vmem:[%s12 + $0x38] sm:$0xf]
    %v3016 = vld [vmem:[%s12 + $0x3c] sm:$0xf]
    %v3017 = vld [vmem:[%s12 + $0x40] sm:$0xf]
    %v3018 = vld [vmem:[%s12 + $0x44] sm:$0xf]
    %v3019 = vld [vmem:[%s12 + $0x48] sm:$0xf]
    %v3020 = vld [vmem:[%s12 + $0x4c] sm:$0xf]
    %v3021 = vld [vmem:[%s12 + $0x50] sm:$0xf]
    %v3022 = vld [vmem:[%s12 + $0x54] sm:$0xf]
    %v3023 = vld [vmem:[%s12 + $0x58] sm:$0xf]
    %v3024 = vld [vmem:[%s12 + $0x5c] sm:$0xf]
    %v3025 = vld [vmem:[%s12 + $0x60] sm:$0xf]
    %v3026 = vld [vmem:[%s12 + $0x64] sm:$0xf]
    %v3027 = vld [vmem:[%s12 + $0x68] sm:$0xf]
    %v3028 = vld [vmem:[%s12 + $0x6c] sm:$0xf]
    %v3029 = vld [vmem:[%s12 + $0x70] sm:$0xf]
    %v3030 = vld [vmem:[%s12 + $0x74] sm:$0xf]
    %v3031 = vld [vmem:[%s12 + $0x78] sm:$0xf]
    %v3032 = vld [vmem:[%s12 + $0x7c] sm:$0xf]
    %v3033 = vld [vmem:[%s12 + $0x80] sm:$0xf]
    %v3034 = vld [vmem:[%s12 + $0x84] sm:$0xf]
    %v3035 = vld [vmem:[%s12 + $0x88] sm:$0xf]
    %v3036 = vld [vmem:[%s12 + $0x8c] sm:$0xf]
    %v3037 = vld [vmem:[%s12 + $0x90] sm:$0xf]
    %v3038 = vld [vmem:[%s12 + $0x94] sm:$0xf]
    %v3039 = vld [vmem:[%s12 + $0x98] sm:$0xf]
    %v3040 = vld [vmem:[%s12 + $0x9c] sm:$0xf]
    %v3041 = vld [vmem:[%s12 + $0xa0] sm:$0xf]
    %v3042 = vld [vmem:[%s12 + $0xa4] sm:$0xf]
    %v3043 = vld [vmem:[%s12 + $0xa8] sm:$0xf]
    %v3044 = vld [vmem:[%s12 + $0xac] sm:$0xf]
    %v3045 = vld [vmem:[%s12 + $0xb0] sm:$0xf]
    %v3046 = vld [vmem:[%s12 + $0xb4] sm:$0xf]
    %v3047 = vld [vmem:[%s12 + $0xb8] sm:$0xf]
    %v3048 = vld [vmem:[%s12 + $0xbc] sm:$0xf]
    %v3049 = vpack.c.bf16 %v2986, %v2985
    %v3050 = vpack.c.bf16 %v2988, %v2987
    %v3051 = vpack.c.bf16 %v2990, %v2989
    %v3052 = vpack.c.bf16 %v2992, %v2991
    %v3053 = vpack.c.bf16 %v2994, %v2993
    %v3054 = vpack.c.bf16 %v2996, %v2995
    %v3055 = vpack.c.bf16 %v2998, %v2997
    %v3056 = vpack.c.bf16 %v3000, %v2999
    %v3105 = vunpack.c.l.b16 %v3001
    %v3106 = vunpack.c.l.b16 %v3002
    %v3107 = vunpack.c.l.b16 %v3003
    %v3108 = vunpack.c.l.b16 %v3004
    %v3109 = vunpack.c.l.b16 %v3005
    %v3110 = vunpack.c.l.b16 %v3006
    %v3111 = vunpack.c.l.b16 %v3007
    %v3112 = vunpack.c.l.b16 %v3008
    %v3113 = vunpack.c.l.b16 %v3009
    %v3114 = vunpack.c.l.b16 %v3010
    %v3115 = vunpack.c.l.b16 %v3011
    %v3116 = vunpack.c.l.b16 %v3012
    %v3117 = vunpack.c.l.b16 %v3013
    %v3118 = vunpack.c.l.b16 %v3014
    %v3119 = vunpack.c.l.b16 %v3015
    %v3120 = vunpack.c.l.b16 %v3016
    %v3121 = vunpack.c.l.b16 %v3017
    %v3122 = vunpack.c.l.b16 %v3018
    %v3123 = vunpack.c.l.b16 %v3019
    %v3124 = vunpack.c.l.b16 %v3020
    %v3125 = vunpack.c.l.b16 %v3021
    %v3126 = vunpack.c.l.b16 %v3022
    %v3127 = vunpack.c.l.b16 %v3023
    %v3128 = vunpack.c.l.b16 %v3024
    %v3129 = vunpack.c.l.b16 %v3025
    %v3130 = vunpack.c.l.b16 %v3026
    %v3131 = vunpack.c.l.b16 %v3027
    %v3132 = vunpack.c.l.b16 %v3028
    %v3133 = vunpack.c.l.b16 %v3029
    %v3134 = vunpack.c.l.b16 %v3030
    %v3135 = vunpack.c.l.b16 %v3031
    %v3136 = vunpack.c.l.b16 %v3032
    %v3137 = vunpack.c.l.b16 %v3033
    %v3138 = vunpack.c.l.b16 %v3034
    %v3139 = vunpack.c.l.b16 %v3035
    %v3140 = vunpack.c.l.b16 %v3036
    %v3141 = vunpack.c.l.b16 %v3037
    %v3142 = vunpack.c.l.b16 %v3038
    %v3143 = vunpack.c.l.b16 %v3039
    %v3144 = vunpack.c.l.b16 %v3040
    %v3145 = vunpack.c.l.b16 %v3041
    %v3146 = vunpack.c.l.b16 %v3042
    %v3147 = vunpack.c.l.b16 %v3043
    %v3148 = vunpack.c.l.b16 %v3044
    %v3149 = vunpack.c.l.b16 %v3045
    %v3150 = vunpack.c.l.b16 %v3046
    %v3151 = vunpack.c.l.b16 %v3047
    %v3152 = vunpack.c.l.b16 %v3048
    %v3153 = vpack.c.b16 %v3106, %v3105
    %v3154 = vpack.c.b16 %v3108, %v3107
    %v3155 = vpack.c.b16 %v3110, %v3109
    %v3156 = vpack.c.b16 %v3112, %v3111
    %v3157 = vpack.c.b16 %v3114, %v3113
    %v3158 = vpack.c.b16 %v3116, %v3115
    %v3159 = vpack.c.b16 %v3118, %v3117
    %v3160 = vpack.c.b16 %v3120, %v3119
    %v3161 = vpack.c.b16 %v3122, %v3121
    %v3162 = vpack.c.b16 %v3124, %v3123
    %v3163 = vpack.c.b16 %v3126, %v3125
    %v3164 = vpack.c.b16 %v3128, %v3127
    %v3165 = vpack.c.b16 %v3130, %v3129
    %v3166 = vpack.c.b16 %v3132, %v3131
    %v3167 = vpack.c.b16 %v3134, %v3133
    %v3168 = vpack.c.b16 %v3136, %v3135
    %v3169 = vpack.c.b16 %v3138, %v3137
    %v3170 = vpack.c.b16 %v3140, %v3139
    %v3171 = vpack.c.b16 %v3142, %v3141
    %v3172 = vpack.c.b16 %v3144, %v3143
    %v3173 = vpack.c.b16 %v3146, %v3145
    %v3174 = vpack.c.b16 %v3148, %v3147
    %v3175 = vpack.c.b16 %v3150, %v3149
    %v3176 = vpack.c.b16 %v3152, %v3151
    %3201 = vmatprep.subr.bf16.mxu0 0
    %3202 = vmatpush1.bf16.msra.mxu0 %v3049
    %3203 = vmatprep.subr.bf16.mxu0 0
    %3204 = vmatpush1.bf16.msra.mxu0 %v3050
    %3205 = vmatprep.subr.bf16.mxu0 0
    %3206 = vmatpush1.bf16.msra.mxu0 %v3051
    %3207 = vmatprep.subr.bf16.mxu0 0
    %3208 = vmatpush1.bf16.msra.mxu0 %v3052
    %3209 = vmatprep.subr.bf16.mxu0 0
    %3210 = vmatpush1.bf16.msra.mxu0 %v3053
    %3211 = vmatprep.subr.bf16.mxu0 0
    %3212 = vmatpush1.bf16.msra.mxu0 %v3054
    %3213 = vmatprep.subr.bf16.mxu0 0
    %3214 = vmatpush1.bf16.msra.mxu0 %v3055
    %3215 = vmatprep.subr.bf16.mxu0 0
    %3216 = vmatpush1.bf16.msra.mxu0 %v3056
    %3217 = vmatprep.subr.bf16.mxu0 0
    %3218 = vmatpush1.bf16.msra.mxu0 0
    %3219 = vmatprep.subr.bf16.mxu0 0
    %3220 = vmatpush1.bf16.msra.mxu0 0
    %3221 = vmatprep.subr.bf16.mxu0 0
    %3222 = vmatpush1.bf16.msra.mxu0 0
    %3223 = vmatprep.subr.bf16.mxu0 0
    %3224 = vmatpush1.bf16.msra.mxu0 0
    %3225 = vmatprep.subr.bf16.mxu0 0
    %3226 = vmatpush1.bf16.msra.mxu0 0
    %3227 = vmatprep.subr.bf16.mxu0 0
    %3228 = vmatpush1.bf16.msra.mxu0 0
    %3229 = vmatprep.subr.bf16.mxu0 0
    %3230 = vmatpush1.bf16.msra.mxu0 0
    %3231 = vmatprep.subr.bf16.mxu0 0
    %3232 = vmatpush1.bf16.msra.mxu0 0
    %3233 = vmatprep.mubr.bf16.mxu0 0
    %3234 = vmatmul.mubr.bf16.gmra.mrb[0].mxu0 %v3153
    %v3235 = vpop.f32.mrb[0].mxu0
    %v3236 = vadd.f32 0.0, %v3235
    %v3237 = vpop.f32.mrb[0].mxu0
    %v3238 = vpop.f32.mrb[0].mxu0
    %v3239 = vadd.f32 0.0, %v3238
    %v3240 = vpop.f32.mrb[0].mxu0
    %3241 = vmatprep.mubr.bf16.mxu0 0
    %3242 = vmatmul.mubr.bf16.gmra.mrb[0].mxu0 %v3154
    %v3243 = vpop.f32.mrb[0].mxu0
    %v3244 = vadd.f32 0.0, %v3243
    %v3245 = vpop.f32.mrb[0].mxu0
    %v3246 = vpop.f32.mrb[0].mxu0
    %v3247 = vadd.f32 0.0, %v3246
    %v3248 = vpop.f32.mrb[0].mxu0
    %3249 = vmatprep.mubr.bf16.mxu0 0
    %3250 = vmatmul.mubr.bf16.gmra.mrb[0].mxu0 %v3155
    %v3251 = vpop.f32.mrb[0].mxu0
    %v3252 = vadd.f32 0.0, %v3251
    %v3253 = vpop.f32.mrb[0].mxu0
    %v3254 = vpop.f32.mrb[0].mxu0
    %v3255 = vadd.f32 0.0, %v3254
    %v3256 = vpop.f32.mrb[0].mxu0
    %3257 = vmatprep.mubr.bf16.mxu0 0
    %3258 = vmatmul.mubr.bf16.gmra.mrb[0].mxu0 %v3156
    %v3259 = vpop.f32.mrb[0].mxu0
    %v3260 = vadd.f32 0.0, %v3259
    %v3261 = vpop.f32.mrb[0].mxu0
    %v3262 = vpop.f32.mrb[0].mxu0
    %v3263 = vadd.f32 0.0, %v3262
    %v3264 = vpop.f32.mrb[0].mxu0
    %3265 = vmatprep.mubr.bf16.mxu0 0
    %3266 = vmatmul.mubr.bf16.gmra.mrb[0].mxu0 %v3157
    %v3267 = vpop.f32.mrb[0].mxu0
    %v3268 = vadd.f32 0.0, %v3267
    %v3269 = vpop.f32.mrb[0].mxu0
    %v3270 = vpop.f32.mrb[0].mxu0
    %v3271 = vadd.f32 0.0, %v3270
    %v3272 = vpop.f32.mrb[0].mxu0
    %3273 = vmatprep.mubr.bf16.mxu0 0
    %3274 = vmatmul.mubr.bf16.gmra.mrb[0].mxu0 %v3158
    %v3275 = vpop.f32.mrb[0].mxu0
    %v3276 = vadd.f32 0.0, %v3275
    %v3277 = vpop.f32.mrb[0].mxu0
    %v3278 = vpop.f32.mrb[0].mxu0
    %v3279 = vadd.f32 0.0, %v3278
    %v3280 = vpop.f32.mrb[0].mxu0
    %3281 = vmatprep.mubr.bf16.mxu0 0
    %3282 = vmatmul.mubr.bf16.gmra.mrb[0].mxu0 %v3159
    %v3283 = vpop.f32.mrb[0].mxu0
    %v3284 = vadd.f32 0.0, %v3283
    %v3285 = vpop.f32.mrb[0].mxu0
    %v3286 = vpop.f32.mrb[0].mxu0
    %v3287 = vadd.f32 0.0, %v3286
    %v3288 = vpop.f32.mrb[0].mxu0
    %3289 = vmatprep.mubr.bf16.mxu0 0
    %3290 = vmatmul.mubr.bf16.gmra.mrb[0].mxu0 %v3160
    %v3291 = vpop.f32.mrb[0].mxu0
    %v3292 = vadd.f32 0.0, %v3291
    %v3293 = vpop.f32.mrb[0].mxu0
    %v3294 = vpop.f32.mrb[0].mxu0
    %v3295 = vadd.f32 0.0, %v3294
    %v3296 = vpop.f32.mrb[0].mxu0
    %3297 = vmatprep.mubr.bf16.mxu0 0
    %3298 = vmatmul.mubr.bf16.gmra.mrb[0].mxu0 %v3161
    %v3299 = vpop.f32.mrb[0].mxu0
    %v3300 = vadd.f32 0.0, %v3299
    %v3301 = vpop.f32.mrb[0].mxu0
    %v3302 = vpop.f32.mrb[0].mxu0
    %v3303 = vadd.f32 0.0, %v3302
    %v3304 = vpop.f32.mrb[0].mxu0
    %3305 = vmatprep.mubr.bf16.mxu0 0
    %3306 = vmatmul.mubr.bf16.gmra.mrb[0].mxu0 %v3162
    %v3307 = vpop.f32.mrb[0].mxu0
    %v3308 = vadd.f32 0.0, %v3307
    %v3309 = vpop.f32.mrb[0].mxu0
    %v3310 = vpop.f32.mrb[0].mxu0
    %v3311 = vadd.f32 0.0, %v3310
    %v3312 = vpop.f32.mrb[0].mxu0
    %3313 = vmatprep.mubr.bf16.mxu0 0
    %3314 = vmatmul.mubr.bf16.gmra.mrb[0].mxu0 %v3163
    %v3315 = vpop.f32.mrb[0].mxu0
    %v3316 = vadd.f32 0.0, %v3315
    %v3317 = vpop.f32.mrb[0].mxu0
    %v3318 = vpop.f32.mrb[0].mxu0
    %v3319 = vadd.f32 0.0, %v3318
    %v3320 = vpop.f32.mrb[0].mxu0
    %3321 = vmatprep.mubr.bf16.mxu0 0
    %3322 = vmatmul.mubr.bf16.gmra.mrb[0].mxu0 %v3164
    %v3323 = vpop.f32.mrb[0].mxu0
    %v3324 = vadd.f32 0.0, %v3323
    %v3325 = vpop.f32.mrb[0].mxu0
    %v3326 = vpop.f32.mrb[0].mxu0
    %v3327 = vadd.f32 0.0, %v3326
    %v3328 = vpop.f32.mrb[0].mxu0
    %3329 = vmatprep.mubr.bf16.mxu0 0
    %3330 = vmatmul.mubr.bf16.gmra.mrb[0].mxu0 %v3165
    %v3331 = vpop.f32.mrb[0].mxu0
    %v3332 = vadd.f32 0.0, %v3331
    %v3333 = vpop.f32.mrb[0].mxu0
    %v3334 = vpop.f32.mrb[0].mxu0
    %v3335 = vadd.f32 0.0, %v3334
    %v3336 = vpop.f32.mrb[0].mxu0
    %3337 = vmatprep.mubr.bf16.mxu0 0
    %3338 = vmatmul.mubr.bf16.gmra.mrb[0].mxu0 %v3166
    %v3339 = vpop.f32.mrb[0].mxu0
    %v3340 = vadd.f32 0.0, %v3339
    %v3341 = vpop.f32.mrb[0].mxu0
    %v3342 = vpop.f32.mrb[0].mxu0
    %v3343 = vadd.f32 0.0, %v3342
    %v3344 = vpop.f32.mrb[0].mxu0
    %3345 = vmatprep.mubr.bf16.mxu0 0
    %3346 = vmatmul.mubr.bf16.gmra.mrb[0].mxu0 %v3167
    %v3347 = vpop.f32.mrb[0].mxu0
    %v3348 = vadd.f32 0.0, %v3347
    %v3349 = vpop.f32.mrb[0].mxu0
    %v3350 = vpop.f32.mrb[0].mxu0
    %v3351 = vadd.f32 0.0, %v3350
    %v3352 = vpop.f32.mrb[0].mxu0
    %3353 = vmatprep.mubr.bf16.mxu0 0
    %3354 = vmatmul.mubr.bf16.gmra.mrb[0].mxu0 %v3168
    %v3355 = vpop.f32.mrb[0].mxu0
    %v3356 = vadd.f32 0.0, %v3355
    %v3357 = vpop.f32.mrb[0].mxu0
    %v3358 = vpop.f32.mrb[0].mxu0
    %v3359 = vadd.f32 0.0, %v3358
    %v3360 = vpop.f32.mrb[0].mxu0
    %3361 = vmatprep.mubr.bf16.mxu0 0
    %3362 = vmatmul.mubr.bf16.gmra.mrb[0].mxu0 %v3169
    %v3363 = vpop.f32.mrb[0].mxu0
    %v3364 = vadd.f32 0.0, %v3363
    %v3365 = vpop.f32.mrb[0].mxu0
    %v3366 = vpop.f32.mrb[0].mxu0
    %v3367 = vadd.f32 0.0, %v3366
    %v3368 = vpop.f32.mrb[0].mxu0
    %3369 = vmatprep.mubr.bf16.mxu0 0
    %3370 = vmatmul.mubr.bf16.gmra.mrb[0].mxu0 %v3170
    %v3371 = vpop.f32.mrb[0].mxu0
    %v3372 = vadd.f32 0.0, %v3371
    %v3373 = vpop.f32.mrb[0].mxu0
    %v3374 = vpop.f32.mrb[0].mxu0
    %v3375 = vadd.f32 0.0, %v3374
    %v3376 = vpop.f32.mrb[0].mxu0
    %3377 = vmatprep.mubr.bf16.mxu0 0
    %3378 = vmatmul.mubr.bf16.gmra.mrb[0].mxu0 %v3171
    %v3379 = vpop.f32.mrb[0].mxu0
    %v3380 = vadd.f32 0.0, %v3379
    %v3381 = vpop.f32.mrb[0].mxu0
    %v3382 = vpop.f32.mrb[0].mxu0
    %v3383 = vadd.f32 0.0, %v3382
    %v3384 = vpop.f32.mrb[0].mxu0
    %3385 = vmatprep.mubr.bf16.mxu0 0
    %3386 = vmatmul.mubr.bf16.gmra.mrb[0].mxu0 %v3172
    %v3387 = vpop.f32.mrb[0].mxu0
    %v3388 = vadd.f32 0.0, %v3387
    %v3389 = vpop.f32.mrb[0].mxu0
    %v3390 = vpop.f32.mrb[0].mxu0
    %v3391 = vadd.f32 0.0, %v3390
    %v3392 = vpop.f32.mrb[0].mxu0
    %3393 = vmatprep.mubr.bf16.mxu0 0
    %3394 = vmatmul.mubr.bf16.gmra.mrb[0].mxu0 %v3173
    %v3395 = vpop.f32.mrb[0].mxu0
    %v3396 = vadd.f32 0.0, %v3395
    %v3397 = vpop.f32.mrb[0].mxu0
    %v3398 = vpop.f32.mrb[0].mxu0
    %v3399 = vadd.f32 0.0, %v3398
    %v3400 = vpop.f32.mrb[0].mxu0
    %3401 = vmatprep.mubr.bf16.mxu0 0
    %3402 = vmatmul.mubr.bf16.gmra.mrb[0].mxu0 %v3174
    %v3403 = vpop.f32.mrb[0].mxu0
    %v3404 = vadd.f32 0.0, %v3403
    %v3405 = vpop.f32.mrb[0].mxu0
    %v3406 = vpop.f32.mrb[0].mxu0
    %v3407 = vadd.f32 0.0, %v3406
    %v3408 = vpop.f32.mrb[0].mxu0
    %3409 = vmatprep.mubr.bf16.mxu0 0
    %3410 = vmatmul.mubr.bf16.gmra.mrb[0].mxu0 %v3175
    %v3411 = vpop.f32.mrb[0].mxu0
    %v3412 = vadd.f32 0.0, %v3411
    %v3413 = vpop.f32.mrb[0].mxu0
    %v3414 = vpop.f32.mrb[0].mxu0
    %v3415 = vadd.f32 0.0, %v3414
    %v3416 = vpop.f32.mrb[0].mxu0
    %3417 = vmatprep.mubr.bf16.mxu0 0
    %3418 = vmatmul.mubr.bf16.gmra.mrb[0].mxu0 %v3176
    %v3419 = vpop.f32.mrb[0].mxu0
    %v3420 = vadd.f32 0.0, %v3419
    %v3421 = vpop.f32.mrb[0].mxu0
    %v3422 = vpop.f32.mrb[0].mxu0
    %v3423 = vadd.f32 0.0, %v3422
    %v3424 = vpop.f32.mrb[0].mxu0
    %3425 = vdwg.mxu0
    %s3426 = scalar_lea.vmem [#allocation8], 16
    %v3427 = vld [vmem:[%s3426] sm:$0xff]
    %v3428 = vlaneseq
    %v3429 = vshrl.u32 %v3428, 7
    %v3430 = vsub.s32 0, %v3429
    %v3431 = vrot.slane %v3427, %v3430
    %v3432 = vmul.f32 %v3431, %v3236
    %v3433 = vmul.f32 %v3431, %v3239
    %v3434 = vmul.f32 %v3431, %v3244
    %v3435 = vmul.f32 %v3431, %v3247
    %v3436 = vmul.f32 %v3431, %v3252
    %v3437 = vmul.f32 %v3431, %v3255
    %v3438 = vmul.f32 %v3431, %v3260
    %v3439 = vmul.f32 %v3431, %v3263
    %v3440 = vmul.f32 %v3431, %v3268
    %v3441 = vmul.f32 %v3431, %v3271
    %v3442 = vmul.f32 %v3431, %v3276
    %v3443 = vmul.f32 %v3431, %v3279
    %v3444 = vmul.f32 %v3431, %v3284
    %v3445 = vmul.f32 %v3431, %v3287
    %v3446 = vmul.f32 %v3431, %v3292
    %v3447 = vmul.f32 %v3431, %v3295
    %v3448 = vlaneseq
    %v3449 = vshrl.u32 %v3448, 7
    %v3450 = vsub.s32 1, %v3449
    %v3451 = vrot.slane %v3427, %v3450
    %v3452 = vmul.f32 %v3451, %v3300
    %v3453 = vmul.f32 %v3451, %v3303
    %v3454 = vmul.f32 %v3451, %v3308
    %v3455 = vmul.f32 %v3451, %v3311
    %v3456 = vmul.f32 %v3451, %v3316
    %v3457 = vmul.f32 %v3451, %v3319
    %v3458 = vmul.f32 %v3451, %v3324
    %v3459 = vmul.f32 %v3451, %v3327
    %v3460 = vmul.f32 %v3451, %v3332
    %v3461 = vmul.f32 %v3451, %v3335
    %v3462 = vmul.f32 %v3451, %v3340
    %v3463 = vmul.f32 %v3451, %v3343
    %v3464 = vmul.f32 %v3451, %v3348
    %v3465 = vmul.f32 %v3451, %v3351
    %v3466 = vmul.f32 %v3451, %v3356
    %v3467 = vmul.f32 %v3451, %v3359
    %v3468 = vadd.f32 %v3432, %v3452
    %v3469 = vadd.f32 %v3433, %v3453
    %v3470 = vadd.f32 %v3434, %v3454
    %v3471 = vadd.f32 %v3435, %v3455
    %v3472 = vadd.f32 %v3436, %v3456
    %v3473 = vadd.f32 %v3437, %v3457
    %v3474 = vadd.f32 %v3438, %v3458
    %v3475 = vadd.f32 %v3439, %v3459
    %v3476 = vadd.f32 %v3440, %v3460
    %v3477 = vadd.f32 %v3441, %v3461
    %v3478 = vadd.f32 %v3442, %v3462
    %v3479 = vadd.f32 %v3443, %v3463
    %v3480 = vadd.f32 %v3444, %v3464
    %v3481 = vadd.f32 %v3445, %v3465
    %v3482 = vadd.f32 %v3446, %v3466
    %v3483 = vadd.f32 %v3447, %v3467
    %v3484 = vlaneseq
    %v3485 = vshrl.u32 %v3484, 7
    %v3486 = vsub.s32 2, %v3485
    %v3487 = vrot.slane %v3427, %v3486
    %v3488 = vmul.f32 %v3487, %v3364
    %v3489 = vmul.f32 %v3487, %v3367
    %v3490 = vmul.f32 %v3487, %v3372
    %v3491 = vmul.f32 %v3487, %v3375
    %v3492 = vmul.f32 %v3487, %v3380
    %v3493 = vmul.f32 %v3487, %v3383
    %v3494 = vmul.f32 %v3487, %v3388
    %v3495 = vmul.f32 %v3487, %v3391
    %v3496 = vmul.f32 %v3487, %v3396
    %v3497 = vmul.f32 %v3487, %v3399
    %v3498 = vmul.f32 %v3487, %v3404
    %v3499 = vmul.f32 %v3487, %v3407
    %v3500 = vmul.f32 %v3487, %v3412
    %v3501 = vmul.f32 %v3487, %v3415
    %v3502 = vmul.f32 %v3487, %v3420
    %v3503 = vmul.f32 %v3487, %v3423
    %v3504 = vadd.f32 %v3468, %v3488
    %v3505 = vadd.f32 %v3469, %v3489
    %v3506 = vadd.f32 %v3470, %v3490
    %v3507 = vadd.f32 %v3471, %v3491
    %v3508 = vadd.f32 %v3472, %v3492
    %v3509 = vadd.f32 %v3473, %v3493
    %v3510 = vadd.f32 %v3474, %v3494
    %v3511 = vadd.f32 %v3475, %v3495
    %v3512 = vadd.f32 %v3476, %v3496
    %v3513 = vadd.f32 %v3477, %v3497
    %v3514 = vadd.f32 %v3478, %v3498
    %v3515 = vadd.f32 %v3479, %v3499
    %v3516 = vadd.f32 %v3480, %v3500
    %v3517 = vadd.f32 %v3481, %v3501
    %v3518 = vadd.f32 %v3482, %v3502
    %v3519 = vadd.f32 %v3483, %v3503
    %s3520 = scalar_lea.vmem [#allocation10], 2
    %v3521 = vld [vmem:[%s3520] sm:$0x1]
    %v3523 = vlaneseq
    %v3524 = vshrl.u32 %v3523, 7
    %v3525 = vsub.s32 0, %v3524
    %v3526 = vrot.slane %v3521, %v3525
    %v3528 = vadd.f32 %v3504, %v3526
    %v3529 = vadd.f32 %v3505, %v3526
    %v3530 = vadd.f32 %v3506, %v3526
    %v3531 = vadd.f32 %v3507, %v3526
    %v3532 = vadd.f32 %v3508, %v3526
    %v3533 = vadd.f32 %v3509, %v3526
    %v3534 = vadd.f32 %v3510, %v3526
    %v3535 = vadd.f32 %v3511, %v3526
    %v3536 = vadd.f32 %v3512, %v3526
    %v3537 = vadd.f32 %v3513, %v3526
    %v3538 = vadd.f32 %v3514, %v3526
    %v3539 = vadd.f32 %v3515, %v3526
    %v3540 = vadd.f32 %v3516, %v3526
    %v3541 = vadd.f32 %v3517, %v3526
    %v3542 = vadd.f32 %v3518, %v3526
    %v3543 = vadd.f32 %v3519, %v3526
    %v3544 = vmax.f32 %v3528, 0.0
    %v3545 = vmax.f32 %v3529, 0.0
    %v3546 = vmax.f32 %v3530, 0.0
    %v3547 = vmax.f32 %v3531, 0.0
    %v3548 = vmax.f32 %v3532, 0.0
    %v3549 = vmax.f32 %v3533, 0.0
    %v3550 = vmax.f32 %v3534, 0.0
    %v3551 = vmax.f32 %v3535, 0.0
    %v3552 = vmax.f32 %v3536, 0.0
    %v3553 = vmax.f32 %v3537, 0.0
    %v3554 = vmax.f32 %v3538, 0.0
    %v3555 = vmax.f32 %v3539, 0.0
    %v3556 = vmax.f32 %v3540, 0.0
    %v3557 = vmax.f32 %v3541, 0.0
    %v3558 = vmax.f32 %v3542, 0.0
    %v3559 = vmax.f32 %v3543, 0.0
    %v3560 = vpack.c.bf16 %v3545, %v3544
    %v3561 = vpack.c.bf16 %v3547, %v3546
    %v3562 = vpack.c.bf16 %v3549, %v3548
    %v3563 = vpack.c.bf16 %v3551, %v3550
    %v3564 = vpack.c.bf16 %v3553, %v3552
    %v3565 = vpack.c.bf16 %v3555, %v3554
    %v3566 = vpack.c.bf16 %v3557, %v3556
    %v3567 = vpack.c.bf16 %v3559, %v3558
    %s3568 = scalar_lea.vmem [#allocation11], 128
    %v3569 = vld [vmem:[%s3568] sm:$0xf]
    %v3570 = vld [vmem:[%s3568 + $0x4] sm:$0xf]
    %v3571 = vld [vmem:[%s3568 + $0x8] sm:$0xf]
    %v3572 = vld [vmem:[%s3568 + $0xc] sm:$0xf]
    %v3573 = vld [vmem:[%s3568 + $0x10] sm:$0xf]
    %v3574 = vld [vmem:[%s3568 + $0x14] sm:$0xf]
    %v3575 = vld [vmem:[%s3568 + $0x18] sm:$0xf]
    %v3576 = vld [vmem:[%s3568 + $0x1c] sm:$0xf]
    %v3577 = vld [vmem:[%s3568 + $0x20] sm:$0xf]
    %v3578 = vld [vmem:[%s3568 + $0x24] sm:$0xf]
    %v3579 = vld [vmem:[%s3568 + $0x28] sm:$0xf]
    %v3580 = vld [vmem:[%s3568 + $0x2c] sm:$0xf]
    %v3581 = vld [vmem:[%s3568 + $0x30] sm:$0xf]
    %v3582 = vld [vmem:[%s3568 + $0x34] sm:$0xf]
    %v3583 = vld [vmem:[%s3568 + $0x38] sm:$0xf]
    %v3584 = vld [vmem:[%s3568 + $0x3c] sm:$0xf]
    %s3585 = scalar_lea.vmem [#allocation13], 2
    %v3586 = vld [vmem:[%s3585] sm:$0x1]
    %v3588 = vlaneseq
    %v3589 = vshrl.u32 %v3588, 7
    %v3590 = vsub.s32 0, %v3589
    %v3591 = vrot.slane %v3586, %v3590
    %v3609 = vunpack.c.l.b16 %v3569
    %v3610 = vunpack.c.l.b16 %v3570
    %v3611 = vunpack.c.l.b16 %v3571
    %v3612 = vunpack.c.l.b16 %v3572
    %v3613 = vunpack.c.l.b16 %v3573
    %v3614 = vunpack.c.l.b16 %v3574
    %v3615 = vunpack.c.l.b16 %v3575
    %v3616 = vunpack.c.l.b16 %v3576
    %v3617 = vunpack.c.l.b16 %v3577
    %v3618 = vunpack.c.l.b16 %v3578
    %v3619 = vunpack.c.l.b16 %v3579
    %v3620 = vunpack.c.l.b16 %v3580
    %v3621 = vunpack.c.l.b16 %v3581
    %v3622 = vunpack.c.l.b16 %v3582
    %v3623 = vunpack.c.l.b16 %v3583
    %v3624 = vunpack.c.l.b16 %v3584
    %v3625 = vpack.c.b16 %v3610, %v3609
    %v3626 = vpack.c.b16 %v3612, %v3611
    %v3627 = vpack.c.b16 %v3614, %v3613
    %v3628 = vpack.c.b16 %v3616, %v3615
    %v3629 = vpack.c.b16 %v3618, %v3617
    %v3630 = vpack.c.b16 %v3620, %v3619
    %v3631 = vpack.c.b16 %v3622, %v3621
    %v3632 = vpack.c.b16 %v3624, %v3623
    %3641 = vmatprep.subr.bf16.mxu0 0
    %3642 = vmatpush1.bf16.msra.mxu0 %v3625
    %3643 = vmatprep.subr.bf16.mxu0 0
    %3644 = vmatpush1.bf16.msra.mxu0 %v3626
    %3645 = vmatprep.subr.bf16.mxu0 0
    %3646 = vmatpush1.bf16.msra.mxu0 %v3627
    %3647 = vmatprep.subr.bf16.mxu0 0
    %3648 = vmatpush1.bf16.msra.mxu0 %v3628
    %3649 = vmatprep.subr.bf16.mxu0 0
    %3650 = vmatpush1.bf16.msra.mxu0 %v3629
    %3651 = vmatprep.subr.bf16.mxu0 0
    %3652 = vmatpush1.bf16.msra.mxu0 %v3630
    %3653 = vmatprep.subr.bf16.mxu0 0
    %3654 = vmatpush1.bf16.msra.mxu0 %v3631
    %3655 = vmatprep.subr.bf16.mxu0 0
    %3656 = vmatpush1.bf16.msra.mxu0 %v3632
    %3657 = vmatprep.subr.bf16.mxu0 0
    %3658 = vmatpush1.bf16.msra.mxu0 0
    %3659 = vmatprep.subr.bf16.mxu0 0
    %3660 = vmatpush1.bf16.msra.mxu0 0
    %3661 = vmatprep.subr.bf16.mxu0 0
    %3662 = vmatpush1.bf16.msra.mxu0 0
    %3663 = vmatprep.subr.bf16.mxu0 0
    %3664 = vmatpush1.bf16.msra.mxu0 0
    %3665 = vmatprep.subr.bf16.mxu0 0
    %3666 = vmatpush1.bf16.msra.mxu0 0
    %3667 = vmatprep.subr.bf16.mxu0 0
    %3668 = vmatpush1.bf16.msra.mxu0 0
    %3669 = vmatprep.subr.bf16.mxu0 0
    %3670 = vmatpush1.bf16.msra.mxu0 0
    %3671 = vmatprep.subr.bf16.mxu0 0
    %3672 = vmatpush1.bf16.msra.mxu0 0
    %3673 = vmatprep.mubr.bf16.mxu0 0
    %3674 = vmatmul.mubr.bf16.gmra.mrb[0].mxu0 %v3560
    %v3675 = vpop.f32.mrb[0].mxu0
    %v3676 = vadd.f32 %v3591, %v3675
    %v3677 = vpop.f32.mrb[0].mxu0
    %v3678 = vpop.f32.mrb[0].mxu0
    %v3679 = vadd.f32 %v3591, %v3678
    %v3680 = vpop.f32.mrb[0].mxu0
    %3681 = vmatprep.mubr.bf16.mxu0 0
    %3682 = vmatmul.mubr.bf16.gmra.mrb[0].mxu0 %v3561
    %v3683 = vpop.f32.mrb[0].mxu0
    %v3684 = vadd.f32 %v3591, %v3683
    %v3685 = vpop.f32.mrb[0].mxu0
    %v3686 = vpop.f32.mrb[0].mxu0
    %v3687 = vadd.f32 %v3591, %v3686
    %v3688 = vpop.f32.mrb[0].mxu0
    %3689 = vmatprep.mubr.bf16.mxu0 0
    %3690 = vmatmul.mubr.bf16.gmra.mrb[0].mxu0 %v3562
    %v3691 = vpop.f32.mrb[0].mxu0
    %v3692 = vadd.f32 %v3591, %v3691
    %v3693 = vpop.f32.mrb[0].mxu0
    %v3694 = vpop.f32.mrb[0].mxu0
    %v3695 = vadd.f32 %v3591, %v3694
    %v3696 = vpop.f32.mrb[0].mxu0
    %3697 = vmatprep.mubr.bf16.mxu0 0
    %3698 = vmatmul.mubr.bf16.gmra.mrb[0].mxu0 %v3563
    %v3699 = vpop.f32.mrb[0].mxu0
    %v3700 = vadd.f32 %v3591, %v3699
    %v3701 = vpop.f32.mrb[0].mxu0
    %v3702 = vpop.f32.mrb[0].mxu0
    %v3703 = vadd.f32 %v3591, %v3702
    %v3704 = vpop.f32.mrb[0].mxu0
    %3705 = vmatprep.mubr.bf16.mxu0 0
    %3706 = vmatmul.mubr.bf16.gmra.mrb[0].mxu0 %v3564
    %v3707 = vpop.f32.mrb[0].mxu0
    %v3708 = vadd.f32 %v3591, %v3707
    %v3709 = vpop.f32.mrb[0].mxu0
    %v3710 = vpop.f32.mrb[0].mxu0
    %v3711 = vadd.f32 %v3591, %v3710
    %v3712 = vpop.f32.mrb[0].mxu0
    %3713 = vmatprep.mubr.bf16.mxu0 0
    %3714 = vmatmul.mubr.bf16.gmra.mrb[0].mxu0 %v3565
    %v3715 = vpop.f32.mrb[0].mxu0
    %v3716 = vadd.f32 %v3591, %v3715
    %v3717 = vpop.f32.mrb[0].mxu0
    %v3718 = vpop.f32.mrb[0].mxu0
    %v3719 = vadd.f32 %v3591, %v3718
    %v3720 = vpop.f32.mrb[0].mxu0
    %3721 = vmatprep.mubr.bf16.mxu0 0
    %3722 = vmatmul.mubr.bf16.gmra.mrb[0].mxu0 %v3566
    %v3723 = vpop.f32.mrb[0].mxu0
    %v3724 = vadd.f32 %v3591, %v3723
    %v3725 = vpop.f32.mrb[0].mxu0
    %v3726 = vpop.f32.mrb[0].mxu0
    %v3727 = vadd.f32 %v3591, %v3726
    %v3728 = vpop.f32.mrb[0].mxu0
    %3729 = vmatprep.mubr.bf16.mxu0 0
    %3730 = vmatmul.mubr.bf16.gmra.mrb[0].mxu0 %v3567
    %v3731 = vpop.f32.mrb[0].mxu0
    %v3732 = vadd.f32 %v3591, %v3731
    %v3733 = vpop.f32.mrb[0].mxu0
    %v3734 = vpop.f32.mrb[0].mxu0
    %v3735 = vadd.f32 %v3591, %v3734
    %v3736 = vpop.f32.mrb[0].mxu0
    %3737 = vdwg.mxu0
    %v3738 = vmax.f32 %v3676, 0.0
    %v3739 = vmax.f32 %v3679, 0.0
    %v3740 = vmax.f32 %v3684, 0.0
    %v3741 = vmax.f32 %v3687, 0.0
    %v3742 = vmax.f32 %v3692, 0.0
    %v3743 = vmax.f32 %v3695, 0.0
    %v3744 = vmax.f32 %v3700, 0.0
    %v3745 = vmax.f32 %v3703, 0.0
    %v3746 = vmax.f32 %v3708, 0.0
    %v3747 = vmax.f32 %v3711, 0.0
    %v3748 = vmax.f32 %v3716, 0.0
    %v3749 = vmax.f32 %v3719, 0.0
    %v3750 = vmax.f32 %v3724, 0.0
    %v3751 = vmax.f32 %v3727, 0.0
    %v3752 = vmax.f32 %v3732, 0.0
    %v3753 = vmax.f32 %v3735, 0.0
    %v3754 = vld [vmem:[%s13] sm:$0xf]
    %v3755 = vld [vmem:[%s13 + $0x4] sm:$0xf]
    %v3756 = vld [vmem:[%s13 + $0x8] sm:$0xf]
    %v3757 = vld [vmem:[%s13 + $0xc] sm:$0xf]
    %v3758 = vld [vmem:[%s13 + $0x10] sm:$0xf]
    %v3759 = vld [vmem:[%s13 + $0x14] sm:$0xf]
    %v3760 = vld [vmem:[%s13 + $0x18] sm:$0xf]
    %v3761 = vld [vmem:[%s13 + $0x1c] sm:$0xf]
    %v3762 = vld [vmem:[%s13 + $0x20] sm:$0xf]
    %v3763 = vld [vmem:[%s13 + $0x24] sm:$0xf]
    %v3764 = vld [vmem:[%s13 + $0x28] sm:$0xf]
    %v3765 = vld [vmem:[%s13 + $0x2c] sm:$0xf]
    %v3766 = vld [vmem:[%s13 + $0x30] sm:$0xf]
    %v3767 = vld [vmem:[%s13 + $0x34] sm:$0xf]
    %v3768 = vld [vmem:[%s13 + $0x38] sm:$0xf]
    %v3769 = vld [vmem:[%s13 + $0x3c] sm:$0xf]
    %v3770 = vld [vmem:[%s13 + $0x40] sm:$0xf]
    %v3771 = vld [vmem:[%s13 + $0x44] sm:$0xf]
    %v3772 = vld [vmem:[%s13 + $0x48] sm:$0xf]
    %v3773 = vld [vmem:[%s13 + $0x4c] sm:$0xf]
    %v3774 = vld [vmem:[%s13 + $0x50] sm:$0xf]
    %v3775 = vld [vmem:[%s13 + $0x54] sm:$0xf]
    %v3776 = vld [vmem:[%s13 + $0x58] sm:$0xf]
    %v3777 = vld [vmem:[%s13 + $0x5c] sm:$0xf]
    %v3778 = vpack.c.bf16 %v3739, %v3738
    %v3779 = vpack.c.bf16 %v3741, %v3740
    %v3780 = vpack.c.bf16 %v3743, %v3742
    %v3781 = vpack.c.bf16 %v3745, %v3744
    %v3782 = vpack.c.bf16 %v3747, %v3746
    %v3783 = vpack.c.bf16 %v3749, %v3748
    %v3784 = vpack.c.bf16 %v3751, %v3750
    %v3785 = vpack.c.bf16 %v3753, %v3752
    %v3810 = vunpack.c.l.b16 %v3754
    %v3811 = vunpack.c.l.b16 %v3755
    %v3812 = vunpack.c.l.b16 %v3756
    %v3813 = vunpack.c.l.b16 %v3757
    %v3814 = vunpack.c.l.b16 %v3758
    %v3815 = vunpack.c.l.b16 %v3759
    %v3816 = vunpack.c.l.b16 %v3760
    %v3817 = vunpack.c.l.b16 %v3761
    %v3818 = vunpack.c.l.b16 %v3762
    %v3819 = vunpack.c.l.b16 %v3763
    %v3820 = vunpack.c.l.b16 %v3764
    %v3821 = vunpack.c.l.b16 %v3765
    %v3822 = vunpack.c.l.b16 %v3766
    %v3823 = vunpack.c.l.b16 %v3767
    %v3824 = vunpack.c.l.b16 %v3768
    %v3825 = vunpack.c.l.b16 %v3769
    %v3826 = vunpack.c.l.b16 %v3770
    %v3827 = vunpack.c.l.b16 %v3771
    %v3828 = vunpack.c.l.b16 %v3772
    %v3829 = vunpack.c.l.b16 %v3773
    %v3830 = vunpack.c.l.b16 %v3774
    %v3831 = vunpack.c.l.b16 %v3775
    %v3832 = vunpack.c.l.b16 %v3776
    %v3833 = vunpack.c.l.b16 %v3777
    %v3834 = vpack.c.b16 %v3811, %v3810
    %v3835 = vpack.c.b16 %v3813, %v3812
    %v3836 = vpack.c.b16 %v3815, %v3814
    %v3837 = vpack.c.b16 %v3817, %v3816
    %v3838 = vpack.c.b16 %v3819, %v3818
    %v3839 = vpack.c.b16 %v3821, %v3820
    %v3840 = vpack.c.b16 %v3823, %v3822
    %v3841 = vpack.c.b16 %v3825, %v3824
    %v3842 = vpack.c.b16 %v3827, %v3826
    %v3843 = vpack.c.b16 %v3829, %v3828
    %v3844 = vpack.c.b16 %v3831, %v3830
    %v3845 = vpack.c.b16 %v3833, %v3832
    %3858 = vmatprep.subr.bf16.mxu0 0
    %3859 = vmatpush1.bf16.msra.mxu0 %v3778
    %3860 = vmatprep.subr.bf16.mxu0 0
    %3861 = vmatpush1.bf16.msra.mxu0 %v3779
    %3862 = vmatprep.subr.bf16.mxu0 0
    %3863 = vmatpush1.bf16.msra.mxu0 %v3780
    %3864 = vmatprep.subr.bf16.mxu0 0
    %3865 = vmatpush1.bf16.msra.mxu0 %v3781
    %3866 = vmatprep.subr.bf16.mxu0 0
    %3867 = vmatpush1.bf16.msra.mxu0 %v3782
    %3868 = vmatprep.subr.bf16.mxu0 0
    %3869 = vmatpush1.bf16.msra.mxu0 %v3783
    %3870 = vmatprep.subr.bf16.mxu0 0
    %3871 = vmatpush1.bf16.msra.mxu0 %v3784
    %3872 = vmatprep.subr.bf16.mxu0 0
    %3873 = vmatpush1.bf16.msra.mxu0 %v3785
    %3874 = vmatprep.subr.bf16.mxu0 0
    %3875 = vmatpush1.bf16.msra.mxu0 0
    %3876 = vmatprep.subr.bf16.mxu0 0
    %3877 = vmatpush1.bf16.msra.mxu0 0
    %3878 = vmatprep.subr.bf16.mxu0 0
    %3879 = vmatpush1.bf16.msra.mxu0 0
    %3880 = vmatprep.subr.bf16.mxu0 0
    %3881 = vmatpush1.bf16.msra.mxu0 0
    %3882 = vmatprep.subr.bf16.mxu0 0
    %3883 = vmatpush1.bf16.msra.mxu0 0
    %3884 = vmatprep.subr.bf16.mxu0 0
    %3885 = vmatpush1.bf16.msra.mxu0 0
    %3886 = vmatprep.subr.bf16.mxu0 0
    %3887 = vmatpush1.bf16.msra.mxu0 0
    %3888 = vmatprep.subr.bf16.mxu0 0
    %3889 = vmatpush1.bf16.msra.mxu0 0
    %3890 = vmatprep.mubr.bf16.mxu0 0
    %3891 = vmatmul.mubr.bf16.gmra.mrb[0].mxu0 %v3834
    %v3892 = vpop.f32.mrb[0].mxu0
    %v3893 = vadd.f32 0.0, %v3892
    %v3894 = vpop.f32.mrb[0].mxu0
    %v3895 = vpop.f32.mrb[0].mxu0
    %v3896 = vadd.f32 0.0, %v3895
    %v3897 = vpop.f32.mrb[0].mxu0
    %3898 = vmatprep.mubr.bf16.mxu0 0
    %3899 = vmatmul.mubr.bf16.gmra.mrb[0].mxu0 %v3835
    %v3900 = vpop.f32.mrb[0].mxu0
    %v3901 = vadd.f32 0.0, %v3900
    %v3902 = vpop.f32.mrb[0].mxu0
    %v3903 = vpop.f32.mrb[0].mxu0
    %v3904 = vadd.f32 0.0, %v3903
    %v3905 = vpop.f32.mrb[0].mxu0
    %3906 = vmatprep.mubr.bf16.mxu0 0
    %3907 = vmatmul.mubr.bf16.gmra.mrb[0].mxu0 %v3836
    %v3908 = vpop.f32.mrb[0].mxu0
    %v3909 = vadd.f32 0.0, %v3908
    %v3910 = vpop.f32.mrb[0].mxu0
    %v3911 = vpop.f32.mrb[0].mxu0
    %v3912 = vadd.f32 0.0, %v3911
    %v3913 = vpop.f32.mrb[0].mxu0
    %3914 = vmatprep.mubr.bf16.mxu0 0
    %3915 = vmatmul.mubr.bf16.gmra.mrb[0].mxu0 %v3837
    %v3916 = vpop.f32.mrb[0].mxu0
    %v3917 = vadd.f32 0.0, %v3916
    %v3918 = vpop.f32.mrb[0].mxu0
    %v3919 = vpop.f32.mrb[0].mxu0
    %v3920 = vadd.f32 0.0, %v3919
    %v3921 = vpop.f32.mrb[0].mxu0
    %3922 = vmatprep.mubr.bf16.mxu0 0
    %3923 = vmatmul.mubr.bf16.gmra.mrb[0].mxu0 %v3838
    %v3924 = vpop.f32.mrb[0].mxu0
    %v3925 = vadd.f32 0.0, %v3924
    %v3926 = vpop.f32.mrb[0].mxu0
    %v3927 = vpop.f32.mrb[0].mxu0
    %v3928 = vadd.f32 0.0, %v3927
    %v3929 = vpop.f32.mrb[0].mxu0
    %3930 = vmatprep.mubr.bf16.mxu0 0
    %3931 = vmatmul.mubr.bf16.gmra.mrb[0].mxu0 %v3839
    %v3932 = vpop.f32.mrb[0].mxu0
    %v3933 = vadd.f32 0.0, %v3932
    %v3934 = vpop.f32.mrb[0].mxu0
    %v3935 = vpop.f32.mrb[0].mxu0
    %v3936 = vadd.f32 0.0, %v3935
    %v3937 = vpop.f32.mrb[0].mxu0
    %3938 = vmatprep.mubr.bf16.mxu0 0
    %3939 = vmatmul.mubr.bf16.gmra.mrb[0].mxu0 %v3840
    %v3940 = vpop.f32.mrb[0].mxu0
    %v3941 = vadd.f32 0.0, %v3940
    %v3942 = vpop.f32.mrb[0].mxu0
    %v3943 = vpop.f32.mrb[0].mxu0
    %v3944 = vadd.f32 0.0, %v3943
    %v3945 = vpop.f32.mrb[0].mxu0
    %3946 = vmatprep.mubr.bf16.mxu0 0
    %3947 = vmatmul.mubr.bf16.gmra.mrb[0].mxu0 %v3841
    %v3948 = vpop.f32.mrb[0].mxu0
    %v3949 = vadd.f32 0.0, %v3948
    %v3950 = vpop.f32.mrb[0].mxu0
    %v3951 = vpop.f32.mrb[0].mxu0
    %v3952 = vadd.f32 0.0, %v3951
    %v3953 = vpop.f32.mrb[0].mxu0
    %3954 = vmatprep.mubr.bf16.mxu0 0
    %3955 = vmatmul.mubr.bf16.gmra.mrb[0].mxu0 %v3842
    %v3956 = vpop.f32.mrb[0].mxu0
    %v3957 = vadd.f32 0.0, %v3956
    %v3958 = vpop.f32.mrb[0].mxu0
    %v3959 = vpop.f32.mrb[0].mxu0
    %v3960 = vadd.f32 0.0, %v3959
    %v3961 = vpop.f32.mrb[0].mxu0
    %3962 = vmatprep.mubr.bf16.mxu0 0
    %3963 = vmatmul.mubr.bf16.gmra.mrb[0].mxu0 %v3843
    %v3964 = vpop.f32.mrb[0].mxu0
    %v3965 = vadd.f32 0.0, %v3964
    %v3966 = vpop.f32.mrb[0].mxu0
    %v3967 = vpop.f32.mrb[0].mxu0
    %v3968 = vadd.f32 0.0, %v3967
    %v3969 = vpop.f32.mrb[0].mxu0
    %3970 = vmatprep.mubr.bf16.mxu0 0
    %3971 = vmatmul.mubr.bf16.gmra.mrb[0].mxu0 %v3844
    %v3972 = vpop.f32.mrb[0].mxu0
    %v3973 = vadd.f32 0.0, %v3972
    %v3974 = vpop.f32.mrb[0].mxu0
    %v3975 = vpop.f32.mrb[0].mxu0
    %v3976 = vadd.f32 0.0, %v3975
    %v3977 = vpop.f32.mrb[0].mxu0
    %3978 = vmatprep.mubr.bf16.mxu0 0
    %3979 = vmatmul.mubr.bf16.gmra.mrb[0].mxu0 %v3845
    %v3980 = vpop.f32.mrb[0].mxu0
    %v3981 = vadd.f32 0.0, %v3980
    %v3982 = vpop.f32.mrb[0].mxu0
    %v3983 = vpop.f32.mrb[0].mxu0
    %v3984 = vadd.f32 0.0, %v3983
    %v3985 = vpop.f32.mrb[0].mxu0
    %3986 = vdwg.mxu0
    %s3987 = scalar_lea.vmem [#allocation8], 24
    %v3988 = vld [vmem:[%s3987] sm:$0xff]
    %v3989 = vlaneseq
    %v3990 = vshrl.u32 %v3989, 7
    %v3991 = vsub.s32 0, %v3990
    %v3992 = vrot.slane %v3988, %v3991
    %v3993 = vmul.f32 %v3992, %v3893
    %v3994 = vmul.f32 %v3992, %v3896
    %v3995 = vmul.f32 %v3992, %v3901
    %v3996 = vmul.f32 %v3992, %v3904
    %v3997 = vmul.f32 %v3992, %v3909
    %v3998 = vmul.f32 %v3992, %v3912
    %v3999 = vmul.f32 %v3992, %v3917
    %v4000 = vmul.f32 %v3992, %v3920
    %v4001 = vlaneseq
    %v4002 = vshrl.u32 %v4001, 7
    %v4003 = vsub.s32 1, %v4002
    %v4004 = vrot.slane %v3988, %v4003
    %v4005 = vmul.f32 %v4004, %v3925
    %v4006 = vmul.f32 %v4004, %v3928
    %v4007 = vmul.f32 %v4004, %v3933
    %v4008 = vmul.f32 %v4004, %v3936
    %v4009 = vmul.f32 %v4004, %v3941
    %v4010 = vmul.f32 %v4004, %v3944
    %v4011 = vmul.f32 %v4004, %v3949
    %v4012 = vmul.f32 %v4004, %v3952
    %v4013 = vadd.f32 %v3993, %v4005
    %v4014 = vadd.f32 %v3994, %v4006
    %v4015 = vadd.f32 %v3995, %v4007
    %v4016 = vadd.f32 %v3996, %v4008
    %v4017 = vadd.f32 %v3997, %v4009
    %v4018 = vadd.f32 %v3998, %v4010
    %v4019 = vadd.f32 %v3999, %v4011
    %v4020 = vadd.f32 %v4000, %v4012
    %v4021 = vlaneseq
    %v4022 = vshrl.u32 %v4021, 7
    %v4023 = vsub.s32 2, %v4022
    %v4024 = vrot.slane %v3988, %v4023
    %v4025 = vmul.f32 %v4024, %v3957
    %v4026 = vmul.f32 %v4024, %v3960
    %v4027 = vmul.f32 %v4024, %v3965
    %v4028 = vmul.f32 %v4024, %v3968
    %v4029 = vmul.f32 %v4024, %v3973
    %v4030 = vmul.f32 %v4024, %v3976
    %v4031 = vmul.f32 %v4024, %v3981
    %v4032 = vmul.f32 %v4024, %v3984
    %v4033 = vadd.f32 %v4013, %v4025
    %v4034 = vadd.f32 %v4014, %v4026
    %v4035 = vadd.f32 %v4015, %v4027
    %v4036 = vadd.f32 %v4016, %v4028
    %v4037 = vadd.f32 %v4017, %v4029
    %v4038 = vadd.f32 %v4018, %v4030
    %v4039 = vadd.f32 %v4019, %v4031
    %v4040 = vadd.f32 %v4020, %v4032
    %s4041 = scalar_lea.vmem [#allocation10], 3
    %v4042 = vld [vmem:[%s4041] sm:$0x1]
    %v4044 = vlaneseq
    %v4045 = vshrl.u32 %v4044, 7
    %v4046 = vsub.s32 0, %v4045
    %v4047 = vrot.slane %v4042, %v4046
    %v4049 = vadd.f32 %v4033, %v4047
    %v4050 = vadd.f32 %v4034, %v4047
    %v4051 = vadd.f32 %v4035, %v4047
    %v4052 = vadd.f32 %v4036, %v4047
    %v4053 = vadd.f32 %v4037, %v4047
    %v4054 = vadd.f32 %v4038, %v4047
    %v4055 = vadd.f32 %v4039, %v4047
    %v4056 = vadd.f32 %v4040, %v4047
    %v4057 = vmax.f32 %v4049, 0.0
    %v4058 = vmax.f32 %v4050, 0.0
    %v4059 = vmax.f32 %v4051, 0.0
    %v4060 = vmax.f32 %v4052, 0.0
    %v4061 = vmax.f32 %v4053, 0.0
    %v4062 = vmax.f32 %v4054, 0.0
    %v4063 = vmax.f32 %v4055, 0.0
    %v4064 = vmax.f32 %v4056, 0.0
    %v4065 = vpack.c.bf16 %v4058, %v4057
    %v4066 = vpack.c.bf16 %v4060, %v4059
    %v4067 = vpack.c.bf16 %v4062, %v4061
    %v4068 = vpack.c.bf16 %v4064, %v4063
    %s4069 = scalar_lea.vmem [#allocation11], 192
    %v4070 = vld [vmem:[%s4069] sm:$0xf]
    %v4071 = vld [vmem:[%s4069 + $0x4] sm:$0xf]
    %v4072 = vld [vmem:[%s4069 + $0x8] sm:$0xf]
    %v4073 = vld [vmem:[%s4069 + $0xc] sm:$0xf]
    %v4074 = vld [vmem:[%s4069 + $0x10] sm:$0xf]
    %v4075 = vld [vmem:[%s4069 + $0x14] sm:$0xf]
    %v4076 = vld [vmem:[%s4069 + $0x18] sm:$0xf]
    %v4077 = vld [vmem:[%s4069 + $0x1c] sm:$0xf]
    %v4078 = vld [vmem:[%s4069 + $0x20] sm:$0xf]
    %v4079 = vld [vmem:[%s4069 + $0x24] sm:$0xf]
    %v4080 = vld [vmem:[%s4069 + $0x28] sm:$0xf]
    %v4081 = vld [vmem:[%s4069 + $0x2c] sm:$0xf]
    %v4082 = vld [vmem:[%s4069 + $0x30] sm:$0xf]
    %v4083 = vld [vmem:[%s4069 + $0x34] sm:$0xf]
    %v4084 = vld [vmem:[%s4069 + $0x38] sm:$0xf]
    %v4085 = vld [vmem:[%s4069 + $0x3c] sm:$0xf]
    %s4086 = scalar_lea.vmem [#allocation13], 3
    %v4087 = vld [vmem:[%s4086] sm:$0x1]
    %v4089 = vlaneseq
    %v4090 = vshrl.u32 %v4089, 7
    %v4091 = vsub.s32 0, %v4090
    %v4092 = vrot.slane %v4087, %v4091
    %v4110 = vunpack.c.l.b16 %v4070
    %v4111 = vunpack.c.l.b16 %v4071
    %v4112 = vunpack.c.l.b16 %v4072
    %v4113 = vunpack.c.l.b16 %v4073
    %v4114 = vunpack.c.l.b16 %v4074
    %v4115 = vunpack.c.l.b16 %v4075
    %v4116 = vunpack.c.l.b16 %v4076
    %v4117 = vunpack.c.l.b16 %v4077
    %v4118 = vunpack.c.l.b16 %v4078
    %v4119 = vunpack.c.l.b16 %v4079
    %v4120 = vunpack.c.l.b16 %v4080
    %v4121 = vunpack.c.l.b16 %v4081
    %v4122 = vunpack.c.l.b16 %v4082
    %v4123 = vunpack.c.l.b16 %v4083
    %v4124 = vunpack.c.l.b16 %v4084
    %v4125 = vunpack.c.l.b16 %v4085
    %v4126 = vpack.c.b16 %v4111, %v4110
    %v4127 = vpack.c.b16 %v4113, %v4112
    %v4128 = vpack.c.b16 %v4115, %v4114
    %v4129 = vpack.c.b16 %v4117, %v4116
    %v4130 = vpack.c.b16 %v4119, %v4118
    %v4131 = vpack.c.b16 %v4121, %v4120
    %v4132 = vpack.c.b16 %v4123, %v4122
    %v4133 = vpack.c.b16 %v4125, %v4124
    %4142 = vmatprep.subr.bf16.mxu0 0
    %4143 = vmatpush1.bf16.msra.mxu0 %v4126
    %4144 = vmatprep.subr.bf16.mxu0 0
    %4145 = vmatpush1.bf16.msra.mxu0 %v4127
    %4146 = vmatprep.subr.bf16.mxu0 0
    %4147 = vmatpush1.bf16.msra.mxu0 %v4128
    %4148 = vmatprep.subr.bf16.mxu0 0
    %4149 = vmatpush1.bf16.msra.mxu0 %v4129
    %4150 = vmatprep.subr.bf16.mxu0 0
    %4151 = vmatpush1.bf16.msra.mxu0 %v4130
    %4152 = vmatprep.subr.bf16.mxu0 0
    %4153 = vmatpush1.bf16.msra.mxu0 %v4131
    %4154 = vmatprep.subr.bf16.mxu0 0
    %4155 = vmatpush1.bf16.msra.mxu0 %v4132
    %4156 = vmatprep.subr.bf16.mxu0 0
    %4157 = vmatpush1.bf16.msra.mxu0 %v4133
    %4158 = vmatprep.subr.bf16.mxu0 0
    %4159 = vmatpush1.bf16.msra.mxu0 0
    %4160 = vmatprep.subr.bf16.mxu0 0
    %4161 = vmatpush1.bf16.msra.mxu0 0
    %4162 = vmatprep.subr.bf16.mxu0 0
    %4163 = vmatpush1.bf16.msra.mxu0 0
    %4164 = vmatprep.subr.bf16.mxu0 0
    %4165 = vmatpush1.bf16.msra.mxu0 0
    %4166 = vmatprep.subr.bf16.mxu0 0
    %4167 = vmatpush1.bf16.msra.mxu0 0
    %4168 = vmatprep.subr.bf16.mxu0 0
    %4169 = vmatpush1.bf16.msra.mxu0 0
    %4170 = vmatprep.subr.bf16.mxu0 0
    %4171 = vmatpush1.bf16.msra.mxu0 0
    %4172 = vmatprep.subr.bf16.mxu0 0
    %4173 = vmatpush1.bf16.msra.mxu0 0
    %4174 = vmatprep.mubr.bf16.mxu0 0
    %4175 = vmatmul.mubr.bf16.gmra.mrb[0].mxu0 %v4065
    %v4176 = vpop.f32.mrb[0].mxu0
    %v4177 = vadd.f32 %v4092, %v4176
    %v4178 = vpop.f32.mrb[0].mxu0
    %v4179 = vpop.f32.mrb[0].mxu0
    %v4180 = vadd.f32 %v4092, %v4179
    %v4181 = vpop.f32.mrb[0].mxu0
    %4182 = vmatprep.mubr.bf16.mxu0 0
    %4183 = vmatmul.mubr.bf16.gmra.mrb[0].mxu0 %v4066
    %v4184 = vpop.f32.mrb[0].mxu0
    %v4185 = vadd.f32 %v4092, %v4184
    %v4186 = vpop.f32.mrb[0].mxu0
    %v4187 = vpop.f32.mrb[0].mxu0
    %v4188 = vadd.f32 %v4092, %v4187
    %v4189 = vpop.f32.mrb[0].mxu0
    %4190 = vmatprep.mubr.bf16.mxu0 0
    %4191 = vmatmul.mubr.bf16.gmra.mrb[0].mxu0 %v4067
    %v4192 = vpop.f32.mrb[0].mxu0
    %v4193 = vadd.f32 %v4092, %v4192
    %v4194 = vpop.f32.mrb[0].mxu0
    %v4195 = vpop.f32.mrb[0].mxu0
    %v4196 = vadd.f32 %v4092, %v4195
    %v4197 = vpop.f32.mrb[0].mxu0
    %4198 = vmatprep.mubr.bf16.mxu0 0
    %4199 = vmatmul.mubr.bf16.gmra.mrb[0].mxu0 %v4068
    %v4200 = vpop.f32.mrb[0].mxu0
    %v4201 = vadd.f32 %v4092, %v4200
    %v4202 = vpop.f32.mrb[0].mxu0
    %v4203 = vpop.f32.mrb[0].mxu0
    %v4204 = vadd.f32 %v4092, %v4203
    %v4205 = vpop.f32.mrb[0].mxu0
    %4206 = vdwg.mxu0
    %v4207 = vmax.f32 %v4177, 0.0
    %v4208 = vmax.f32 %v4180, 0.0
    %v4209 = vmax.f32 %v4185, 0.0
    %v4210 = vmax.f32 %v4188, 0.0
    %v4211 = vmax.f32 %v4193, 0.0
    %v4212 = vmax.f32 %v4196, 0.0
    %v4213 = vmax.f32 %v4201, 0.0
    %v4214 = vmax.f32 %v4204, 0.0
    %v4215 = vld [vmem:[%s14] sm:$0xf]
    %v4216 = vld [vmem:[%s14 + $0x4] sm:$0xf]
    %v4217 = vld [vmem:[%s14 + $0x8] sm:$0xf]
    %v4218 = vld [vmem:[%s14 + $0xc] sm:$0xf]
    %v4219 = vld [vmem:[%s14 + $0x10] sm:$0xf]
    %v4220 = vld [vmem:[%s14 + $0x14] sm:$0xf]
    %v4221 = vld [vmem:[%s14 + $0x18] sm:$0xf]
    %v4222 = vld [vmem:[%s14 + $0x1c] sm:$0xf]
    %v4223 = vld [vmem:[%s14 + $0x20] sm:$0xf]
    %v4224 = vld [vmem:[%s14 + $0x24] sm:$0xf]
    %v4225 = vld [vmem:[%s14 + $0x28] sm:$0xf]
    %v4226 = vld [vmem:[%s14 + $0x2c] sm:$0xf]
    %v4227 = vld [vmem:[%s14 + $0x30] sm:$0xf]
    %v4228 = vld [vmem:[%s14 + $0x34] sm:$0xf]
    %v4229 = vld [vmem:[%s14 + $0x38] sm:$0xf]
    %v4230 = vld [vmem:[%s14 + $0x3c] sm:$0xf]
    %v4231 = vld [vmem:[%s14 + $0x40] sm:$0xf]
    %v4232 = vld [vmem:[%s14 + $0x44] sm:$0xf]
    %v4233 = vld [vmem:[%s14 + $0x48] sm:$0xf]
    %v4234 = vld [vmem:[%s14 + $0x4c] sm:$0xf]
    %v4235 = vld [vmem:[%s14 + $0x50] sm:$0xf]
    %v4236 = vld [vmem:[%s14 + $0x54] sm:$0xf]
    %v4237 = vld [vmem:[%s14 + $0x58] sm:$0xf]
    %v4238 = vld [vmem:[%s14 + $0x5c] sm:$0xf]
    %v4239 = vpack.c.bf16 %v4208, %v4207
    %v4240 = vpack.c.bf16 %v4210, %v4209
    %v4241 = vpack.c.bf16 %v4212, %v4211
    %v4242 = vpack.c.bf16 %v4214, %v4213
    %v4267 = vunpack.c.l.b16 %v4215
    %v4268 = vunpack.c.l.b16 %v4216
    %v4269 = vunpack.c.l.b16 %v4217
    %v4270 = vunpack.c.l.b16 %v4218
    %v4271 = vunpack.c.l.b16 %v4219
    %v4272 = vunpack.c.l.b16 %v4220
    %v4273 = vunpack.c.l.b16 %v4221
    %v4274 = vunpack.c.l.b16 %v4222
    %v4275 = vunpack.c.l.b16 %v4223
    %v4276 = vunpack.c.l.b16 %v4224
    %v4277 = vunpack.c.l.b16 %v4225
    %v4278 = vunpack.c.l.b16 %v4226
    %v4279 = vunpack.c.l.b16 %v4227
    %v4280 = vunpack.c.l.b16 %v4228
    %v4281 = vunpack.c.l.b16 %v4229
    %v4282 = vunpack.c.l.b16 %v4230
    %v4283 = vunpack.c.l.b16 %v4231
    %v4284 = vunpack.c.l.b16 %v4232
    %v4285 = vunpack.c.l.b16 %v4233
    %v4286 = vunpack.c.l.b16 %v4234
    %v4287 = vunpack.c.l.b16 %v4235
    %v4288 = vunpack.c.l.b16 %v4236
    %v4289 = vunpack.c.l.b16 %v4237
    %v4290 = vunpack.c.l.b16 %v4238
    %v4291 = vpack.c.b16 %v4268, %v4267
    %v4292 = vpack.c.b16 %v4270, %v4269
    %v4293 = vpack.c.b16 %v4272, %v4271
    %v4294 = vpack.c.b16 %v4274, %v4273
    %v4295 = vpack.c.b16 %v4276, %v4275
    %v4296 = vpack.c.b16 %v4278, %v4277
    %v4297 = vpack.c.b16 %v4280, %v4279
    %v4298 = vpack.c.b16 %v4282, %v4281
    %v4299 = vpack.c.b16 %v4284, %v4283
    %v4300 = vpack.c.b16 %v4286, %v4285
    %v4301 = vpack.c.b16 %v4288, %v4287
    %v4302 = vpack.c.b16 %v4290, %v4289
    %vm4303 = vcmask 523264
    %v4305 = vsel %vm4303, %v4291, 0
    %v4308 = vsel %vm4303, %v4292, 0
    %v4311 = vsel %vm4303, %v4293, 0
    %v4314 = vsel %vm4303, %v4294, 0
    %v4317 = vsel %vm4303, %v4295, 0
    %v4320 = vsel %vm4303, %v4296, 0
    %v4323 = vsel %vm4303, %v4297, 0
    %v4326 = vsel %vm4303, %v4298, 0
    %v4329 = vsel %vm4303, %v4299, 0
    %v4332 = vsel %vm4303, %v4300, 0
    %v4335 = vsel %vm4303, %v4301, 0
    %v4338 = vsel %vm4303, %v4302, 0
    %4340 = vmatprep.subr.bf16.mxu0 0
    %4341 = vmatpush1.bf16.msra.mxu0 %v4239
    %4342 = vmatprep.subr.bf16.mxu0 0
    %4343 = vmatpush1.bf16.msra.mxu0 %v4240
    %4344 = vmatprep.subr.bf16.mxu0 0
    %4345 = vmatpush1.bf16.msra.mxu0 %v4241
    %4346 = vmatprep.subr.bf16.mxu0 0
    %4347 = vmatpush1.bf16.msra.mxu0 %v4242
    %4348 = vmatprep.subr.bf16.mxu0 0
    %4349 = vmatpush1.bf16.msra.mxu0 0
    %4350 = vmatprep.subr.bf16.mxu0 0
    %4351 = vmatpush1.bf16.msra.mxu0 0
    %4352 = vmatprep.subr.bf16.mxu0 0
    %4353 = vmatpush1.bf16.msra.mxu0 0
    %4354 = vmatprep.subr.bf16.mxu0 0
    %4355 = vmatpush1.bf16.msra.mxu0 0
    %4356 = vmatprep.subr.bf16.mxu0 0
    %4357 = vmatpush1.bf16.msra.mxu0 0
    %4358 = vmatprep.subr.bf16.mxu0 0
    %4359 = vmatpush1.bf16.msra.mxu0 0
    %4360 = vmatprep.subr.bf16.mxu0 0
    %4361 = vmatpush1.bf16.msra.mxu0 0
    %4362 = vmatprep.subr.bf16.mxu0 0
    %4363 = vmatpush1.bf16.msra.mxu0 0
    %4364 = vmatprep.subr.bf16.mxu0 0
    %4365 = vmatpush1.bf16.msra.mxu0 0
    %4366 = vmatprep.subr.bf16.mxu0 0
    %4367 = vmatpush1.bf16.msra.mxu0 0
    %4368 = vmatprep.subr.bf16.mxu0 0
    %4369 = vmatpush1.bf16.msra.mxu0 0
    %4370 = vmatprep.subr.bf16.mxu0 0
    %4371 = vmatpush1.bf16.msra.mxu0 0
    %4372 = vmatprep.mubr.bf16.mxu0 0
    %4373 = vmatmul.mubr.bf16.gmra.mrb[0].mxu0 %v4305
    %v4374 = vpop.f32.mrb[0].mxu0
    %v4375 = vadd.f32 0.0, %v4374
    %v4376 = vpop.f32.mrb[0].mxu0
    %v4377 = vpop.f32.mrb[0].mxu0
    %v4378 = vadd.f32 0.0, %v4377
    %v4379 = vpop.f32.mrb[0].mxu0
    %4380 = vmatprep.mubr.bf16.mxu0 0
    %4381 = vmatmul.mubr.bf16.gmra.mrb[0].mxu0 %v4308
    %v4382 = vpop.f32.mrb[0].mxu0
    %v4383 = vadd.f32 0.0, %v4382
    %v4384 = vpop.f32.mrb[0].mxu0
    %v4385 = vpop.f32.mrb[0].mxu0
    %v4386 = vadd.f32 0.0, %v4385
    %v4387 = vpop.f32.mrb[0].mxu0
    %4388 = vmatprep.mubr.bf16.mxu0 0
    %4389 = vmatmul.mubr.bf16.gmra.mrb[0].mxu0 %v4311
    %v4390 = vpop.f32.mrb[0].mxu0
    %v4391 = vadd.f32 0.0, %v4390
    %v4392 = vpop.f32.mrb[0].mxu0
    %v4393 = vpop.f32.mrb[0].mxu0
    %v4394 = vadd.f32 0.0, %v4393
    %v4395 = vpop.f32.mrb[0].mxu0
    %4396 = vmatprep.mubr.bf16.mxu0 0
    %4397 = vmatmul.mubr.bf16.gmra.mrb[0].mxu0 %v4314
    %v4398 = vpop.f32.mrb[0].mxu0
    %v4399 = vadd.f32 0.0, %v4398
    %v4400 = vpop.f32.mrb[0].mxu0
    %v4401 = vpop.f32.mrb[0].mxu0
    %v4402 = vadd.f32 0.0, %v4401
    %v4403 = vpop.f32.mrb[0].mxu0
    %4404 = vmatprep.mubr.bf16.mxu0 0
    %4405 = vmatmul.mubr.bf16.gmra.mrb[0].mxu0 %v4317
    %v4406 = vpop.f32.mrb[0].mxu0
    %v4407 = vadd.f32 0.0, %v4406
    %v4408 = vpop.f32.mrb[0].mxu0
    %v4409 = vpop.f32.mrb[0].mxu0
    %v4410 = vadd.f32 0.0, %v4409
    %v4411 = vpop.f32.mrb[0].mxu0
    %4412 = vmatprep.mubr.bf16.mxu0 0
    %4413 = vmatmul.mubr.bf16.gmra.mrb[0].mxu0 %v4320
    %v4414 = vpop.f32.mrb[0].mxu0
    %v4415 = vadd.f32 0.0, %v4414
    %v4416 = vpop.f32.mrb[0].mxu0
    %v4417 = vpop.f32.mrb[0].mxu0
    %v4418 = vadd.f32 0.0, %v4417
    %v4419 = vpop.f32.mrb[0].mxu0
    %4420 = vmatprep.mubr.bf16.mxu0 0
    %4421 = vmatmul.mubr.bf16.gmra.mrb[0].mxu0 %v4323
    %v4422 = vpop.f32.mrb[0].mxu0
    %v4423 = vadd.f32 0.0, %v4422
    %v4424 = vpop.f32.mrb[0].mxu0
    %v4425 = vpop.f32.mrb[0].mxu0
    %v4426 = vadd.f32 0.0, %v4425
    %v4427 = vpop.f32.mrb[0].mxu0
    %4428 = vmatprep.mubr.bf16.mxu0 0
    %4429 = vmatmul.mubr.bf16.gmra.mrb[0].mxu0 %v4326
    %v4430 = vpop.f32.mrb[0].mxu0
    %v4431 = vadd.f32 0.0, %v4430
    %v4432 = vpop.f32.mrb[0].mxu0
    %v4433 = vpop.f32.mrb[0].mxu0
    %v4434 = vadd.f32 0.0, %v4433
    %v4435 = vpop.f32.mrb[0].mxu0
    %4436 = vmatprep.mubr.bf16.mxu0 0
    %4437 = vmatmul.mubr.bf16.gmra.mrb[0].mxu0 %v4329
    %v4438 = vpop.f32.mrb[0].mxu0
    %v4439 = vadd.f32 0.0, %v4438
    %v4440 = vpop.f32.mrb[0].mxu0
    %v4441 = vpop.f32.mrb[0].mxu0
    %v4442 = vadd.f32 0.0, %v4441
    %v4443 = vpop.f32.mrb[0].mxu0
    %4444 = vmatprep.mubr.bf16.mxu0 0
    %4445 = vmatmul.mubr.bf16.gmra.mrb[0].mxu0 %v4332
    %v4446 = vpop.f32.mrb[0].mxu0
    %v4447 = vadd.f32 0.0, %v4446
    %v4448 = vpop.f32.mrb[0].mxu0
    %v4449 = vpop.f32.mrb[0].mxu0
    %v4450 = vadd.f32 0.0, %v4449
    %v4451 = vpop.f32.mrb[0].mxu0
    %4452 = vmatprep.mubr.bf16.mxu0 0
    %4453 = vmatmul.mubr.bf16.gmra.mrb[0].mxu0 %v4335
    %v4454 = vpop.f32.mrb[0].mxu0
    %v4455 = vadd.f32 0.0, %v4454
    %v4456 = vpop.f32.mrb[0].mxu0
    %v4457 = vpop.f32.mrb[0].mxu0
    %v4458 = vadd.f32 0.0, %v4457
    %v4459 = vpop.f32.mrb[0].mxu0
    %4460 = vmatprep.mubr.bf16.mxu0 0
    %4461 = vmatmul.mubr.bf16.gmra.mrb[0].mxu0 %v4338
    %v4462 = vpop.f32.mrb[0].mxu0
    %v4463 = vadd.f32 0.0, %v4462
    %v4464 = vpop.f32.mrb[0].mxu0
    %v4465 = vpop.f32.mrb[0].mxu0
    %v4466 = vadd.f32 0.0, %v4465
    %v4467 = vpop.f32.mrb[0].mxu0
    %4468 = vdwg.mxu0
    %s4469 = scalar_lea.vmem [#allocation8], 32
    %v4470 = vld [vmem:[%s4469] sm:$0xff]
    %v4471 = vlaneseq
    %v4472 = vshrl.u32 %v4471, 7
    %v4473 = vsub.s32 0, %v4472
    %v4474 = vrot.slane %v4470, %v4473
    %v4475 = vmul.f32 %v4474, %v4375
    %v4476 = vmul.f32 %v4474, %v4378
    %v4477 = vmul.f32 %v4474, %v4383
    %v4478 = vmul.f32 %v4474, %v4386
    %v4479 = vmul.f32 %v4474, %v4391
    %v4480 = vmul.f32 %v4474, %v4394
    %v4481 = vmul.f32 %v4474, %v4399
    %v4482 = vmul.f32 %v4474, %v4402
    %v4483 = vlaneseq
    %v4484 = vshrl.u32 %v4483, 7
    %v4485 = vsub.s32 1, %v4484
    %v4486 = vrot.slane %v4470, %v4485
    %v4487 = vmul.f32 %v4486, %v4407
    %v4488 = vmul.f32 %v4486, %v4410
    %v4489 = vmul.f32 %v4486, %v4415
    %v4490 = vmul.f32 %v4486, %v4418
    %v4491 = vmul.f32 %v4486, %v4423
    %v4492 = vmul.f32 %v4486, %v4426
    %v4493 = vmul.f32 %v4486, %v4431
    %v4494 = vmul.f32 %v4486, %v4434
    %v4495 = vadd.f32 %v4475, %v4487
    %v4496 = vadd.f32 %v4476, %v4488
    %v4497 = vadd.f32 %v4477, %v4489
    %v4498 = vadd.f32 %v4478, %v4490
    %v4499 = vadd.f32 %v4479, %v4491
    %v4500 = vadd.f32 %v4480, %v4492
    %v4501 = vadd.f32 %v4481, %v4493
    %v4502 = vadd.f32 %v4482, %v4494
    %v4503 = vlaneseq
    %v4504 = vshrl.u32 %v4503, 7
    %v4505 = vsub.s32 2, %v4504
    %v4506 = vrot.slane %v4470, %v4505
    %v4507 = vmul.f32 %v4506, %v4439
    %v4508 = vmul.f32 %v4506, %v4442
    %v4509 = vmul.f32 %v4506, %v4447
    %v4510 = vmul.f32 %v4506, %v4450
    %v4511 = vmul.f32 %v4506, %v4455
    %v4512 = vmul.f32 %v4506, %v4458
    %v4513 = vmul.f32 %v4506, %v4463
    %v4514 = vmul.f32 %v4506, %v4466
    %v4515 = vadd.f32 %v4495, %v4507
    %v4516 = vadd.f32 %v4496, %v4508
    %v4517 = vadd.f32 %v4497, %v4509
    %v4518 = vadd.f32 %v4498, %v4510
    %v4519 = vadd.f32 %v4499, %v4511
    %v4520 = vadd.f32 %v4500, %v4512
    %v4521 = vadd.f32 %v4501, %v4513
    %v4522 = vadd.f32 %v4502, %v4514
    %s4523 = scalar_lea.vmem [#allocation10], 4
    %v4524 = vld [vmem:[%s4523] sm:$0x1]
    %v4526 = vlaneseq
    %v4527 = vshrl.u32 %v4526, 7
    %v4528 = vsub.s32 0, %v4527
    %v4529 = vrot.slane %v4524, %v4528
    %v4531 = vadd.f32 %v4515, %v4529
    %v4532 = vadd.f32 %v4516, %v4529
    %v4533 = vadd.f32 %v4517, %v4529
    %v4534 = vadd.f32 %v4518, %v4529
    %v4535 = vadd.f32 %v4519, %v4529
    %v4536 = vadd.f32 %v4520, %v4529
    %v4537 = vadd.f32 %v4521, %v4529
    %v4538 = vadd.f32 %v4522, %v4529
    %v4539 = vmax.f32 %v4531, 0.0
    %v4540 = vmax.f32 %v4532, 0.0
    %v4541 = vmax.f32 %v4533, 0.0
    %v4542 = vmax.f32 %v4534, 0.0
    %v4543 = vmax.f32 %v4535, 0.0
    %v4544 = vmax.f32 %v4536, 0.0
    %v4545 = vmax.f32 %v4537, 0.0
    %v4546 = vmax.f32 %v4538, 0.0
    %v4547 = vpack.c.bf16 %v4540, %v4539
    %v4548 = vpack.c.bf16 %v4542, %v4541
    %v4549 = vpack.c.bf16 %v4544, %v4543
    %v4550 = vpack.c.bf16 %v4546, %v4545
    %s4551 = scalar_lea.vmem [#allocation11], 256
    %v4552 = vld [vmem:[%s4551] sm:$0xf]
    %v4553 = vld [vmem:[%s4551 + $0x4] sm:$0xf]
    %v4554 = vld [vmem:[%s4551 + $0x8] sm:$0xf]
    %v4555 = vld [vmem:[%s4551 + $0xc] sm:$0xf]
    %v4556 = vld [vmem:[%s4551 + $0x10] sm:$0xf]
    %v4557 = vld [vmem:[%s4551 + $0x14] sm:$0xf]
    %v4558 = vld [vmem:[%s4551 + $0x18] sm:$0xf]
    %v4559 = vld [vmem:[%s4551 + $0x1c] sm:$0xf]
    %v4560 = vld [vmem:[%s4551 + $0x20] sm:$0xf]
    %v4561 = vld [vmem:[%s4551 + $0x24] sm:$0xf]
    %v4562 = vld [vmem:[%s4551 + $0x28] sm:$0xf]
    %v4563 = vld [vmem:[%s4551 + $0x2c] sm:$0xf]
    %v4564 = vld [vmem:[%s4551 + $0x30] sm:$0xf]
    %v4565 = vld [vmem:[%s4551 + $0x34] sm:$0xf]
    %v4566 = vld [vmem:[%s4551 + $0x38] sm:$0xf]
    %v4567 = vld [vmem:[%s4551 + $0x3c] sm:$0xf]
    %s4568 = scalar_lea.vmem [#allocation13], 4
    %v4569 = vld [vmem:[%s4568] sm:$0x1]
    %v4571 = vlaneseq
    %v4572 = vshrl.u32 %v4571, 7
    %v4573 = vsub.s32 0, %v4572
    %v4574 = vrot.slane %v4569, %v4573
    %v4592 = vunpack.c.l.b16 %v4552
    %v4593 = vunpack.c.l.b16 %v4553
    %v4594 = vunpack.c.l.b16 %v4554
    %v4595 = vunpack.c.l.b16 %v4555
    %v4596 = vunpack.c.l.b16 %v4556
    %v4597 = vunpack.c.l.b16 %v4557
    %v4598 = vunpack.c.l.b16 %v4558
    %v4599 = vunpack.c.l.b16 %v4559
    %v4600 = vunpack.c.l.b16 %v4560
    %v4601 = vunpack.c.l.b16 %v4561
    %v4602 = vunpack.c.l.b16 %v4562
    %v4603 = vunpack.c.l.b16 %v4563
    %v4604 = vunpack.c.l.b16 %v4564
    %v4605 = vunpack.c.l.b16 %v4565
    %v4606 = vunpack.c.l.b16 %v4566
    %v4607 = vunpack.c.l.b16 %v4567
    %v4608 = vpack.c.b16 %v4593, %v4592
    %v4609 = vpack.c.b16 %v4595, %v4594
    %v4610 = vpack.c.b16 %v4597, %v4596
    %v4611 = vpack.c.b16 %v4599, %v4598
    %v4612 = vpack.c.b16 %v4601, %v4600
    %v4613 = vpack.c.b16 %v4603, %v4602
    %v4614 = vpack.c.b16 %v4605, %v4604
    %v4615 = vpack.c.b16 %v4607, %v4606
    %4624 = vmatprep.subr.bf16.mxu0 0
    %4625 = vmatpush1.bf16.msra.mxu0 %v4608
    %4626 = vmatprep.subr.bf16.mxu0 0
    %4627 = vmatpush1.bf16.msra.mxu0 %v4609
    %4628 = vmatprep.subr.bf16.mxu0 0
    %4629 = vmatpush1.bf16.msra.mxu0 %v4610
    %4630 = vmatprep.subr.bf16.mxu0 0
    %4631 = vmatpush1.bf16.msra.mxu0 %v4611
    %4632 = vmatprep.subr.bf16.mxu0 0
    %4633 = vmatpush1.bf16.msra.mxu0 %v4612
    %4634 = vmatprep.subr.bf16.mxu0 0
    %4635 = vmatpush1.bf16.msra.mxu0 %v4613
    %4636 = vmatprep.subr.bf16.mxu0 0
    %4637 = vmatpush1.bf16.msra.mxu0 %v4614
    %4638 = vmatprep.subr.bf16.mxu0 0
    %4639 = vmatpush1.bf16.msra.mxu0 %v4615
    %4640 = vmatprep.subr.bf16.mxu0 0
    %4641 = vmatpush1.bf16.msra.mxu0 0
    %4642 = vmatprep.subr.bf16.mxu0 0
    %4643 = vmatpush1.bf16.msra.mxu0 0
    %4644 = vmatprep.subr.bf16.mxu0 0
    %4645 = vmatpush1.bf16.msra.mxu0 0
    %4646 = vmatprep.subr.bf16.mxu0 0
    %4647 = vmatpush1.bf16.msra.mxu0 0
    %4648 = vmatprep.subr.bf16.mxu0 0
    %4649 = vmatpush1.bf16.msra.mxu0 0
    %4650 = vmatprep.subr.bf16.mxu0 0
    %4651 = vmatpush1.bf16.msra.mxu0 0
    %4652 = vmatprep.subr.bf16.mxu0 0
    %4653 = vmatpush1.bf16.msra.mxu0 0
    %4654 = vmatprep.subr.bf16.mxu0 0
    %4655 = vmatpush1.bf16.msra.mxu0 0
    %4656 = vmatprep.mubr.bf16.mxu0 0
    %4657 = vmatmul.mubr.bf16.gmra.mrb[0].mxu0 %v4547
    %v4658 = vpop.f32.mrb[0].mxu0
    %v4659 = vadd.f32 %v4574, %v4658
    %v4660 = vpop.f32.mrb[0].mxu0
    %v4661 = vpop.f32.mrb[0].mxu0
    %v4662 = vadd.f32 %v4574, %v4661
    %v4663 = vpop.f32.mrb[0].mxu0
    %4664 = vmatprep.mubr.bf16.mxu0 0
    %4665 = vmatmul.mubr.bf16.gmra.mrb[0].mxu0 %v4548
    %v4666 = vpop.f32.mrb[0].mxu0
    %v4667 = vadd.f32 %v4574, %v4666
    %v4668 = vpop.f32.mrb[0].mxu0
    %v4669 = vpop.f32.mrb[0].mxu0
    %v4670 = vadd.f32 %v4574, %v4669
    %v4671 = vpop.f32.mrb[0].mxu0
    %4672 = vmatprep.mubr.bf16.mxu0 0
    %4673 = vmatmul.mubr.bf16.gmra.mrb[0].mxu0 %v4549
    %v4674 = vpop.f32.mrb[0].mxu0
    %v4675 = vadd.f32 %v4574, %v4674
    %v4676 = vpop.f32.mrb[0].mxu0
    %v4677 = vpop.f32.mrb[0].mxu0
    %v4678 = vadd.f32 %v4574, %v4677
    %v4679 = vpop.f32.mrb[0].mxu0
    %4680 = vmatprep.mubr.bf16.mxu0 0
    %4681 = vmatmul.mubr.bf16.gmra.mrb[0].mxu0 %v4550
    %v4682 = vpop.f32.mrb[0].mxu0
    %v4683 = vadd.f32 %v4574, %v4682
    %v4684 = vpop.f32.mrb[0].mxu0
    %v4685 = vpop.f32.mrb[0].mxu0
    %v4686 = vadd.f32 %v4574, %v4685
    %v4687 = vpop.f32.mrb[0].mxu0
    %4688 = vdwg.mxu0
    %v4689 = vmax.f32 %v4659, 0.0
    %v4690 = vmax.f32 %v4662, 0.0
    %v4691 = vmax.f32 %v4667, 0.0
    %v4692 = vmax.f32 %v4670, 0.0
    %v4693 = vmax.f32 %v4675, 0.0
    %v4694 = vmax.f32 %v4678, 0.0
    %v4695 = vmax.f32 %v4683, 0.0
    %v4696 = vmax.f32 %v4686, 0.0
    %v4697 = vld [vmem:[%s15] sm:$0xf]
    %v4698 = vld [vmem:[%s15 + $0x4] sm:$0xf]
    %v4699 = vld [vmem:[%s15 + $0x8] sm:$0xf]
    %v4700 = vld [vmem:[%s15 + $0xc] sm:$0xf]
    %v4701 = vld [vmem:[%s15 + $0x10] sm:$0xf]
    %v4702 = vld [vmem:[%s15 + $0x14] sm:$0xf]
    %v4703 = vld [vmem:[%s15 + $0x18] sm:$0xf]
    %v4704 = vld [vmem:[%s15 + $0x1c] sm:$0xf]
    %v4705 = vld [vmem:[%s15 + $0x20] sm:$0xf]
    %v4706 = vld [vmem:[%s15 + $0x24] sm:$0xf]
    %v4707 = vld [vmem:[%s15 + $0x28] sm:$0xf]
    %v4708 = vld [vmem:[%s15 + $0x2c] sm:$0xf]
    %v4709 = vpack.c.bf16 %v4690, %v4689
    %v4710 = vpack.c.bf16 %v4692, %v4691
    %v4711 = vpack.c.bf16 %v4694, %v4693
    %v4712 = vpack.c.bf16 %v4696, %v4695
    %v4725 = vunpack.c.l.b16 %v4697
    %v4726 = vunpack.c.l.b16 %v4698
    %v4727 = vunpack.c.l.b16 %v4699
    %v4728 = vunpack.c.l.b16 %v4700
    %v4729 = vunpack.c.l.b16 %v4701
    %v4730 = vunpack.c.l.b16 %v4702
    %v4731 = vunpack.c.l.b16 %v4703
    %v4732 = vunpack.c.l.b16 %v4704
    %v4733 = vunpack.c.l.b16 %v4705
    %v4734 = vunpack.c.l.b16 %v4706
    %v4735 = vunpack.c.l.b16 %v4707
    %v4736 = vunpack.c.l.b16 %v4708
    %v4737 = vpack.c.b16 %v4726, %v4725
    %v4738 = vpack.c.b16 %v4728, %v4727
    %v4739 = vpack.c.b16 %v4730, %v4729
    %v4740 = vpack.c.b16 %v4732, %v4731
    %v4741 = vpack.c.b16 %v4734, %v4733
    %v4742 = vpack.c.b16 %v4736, %v4735
    %v4744 = vsel %vm4303, %v4737, 0
    %v4747 = vsel %vm4303, %v4738, 0
    %v4750 = vsel %vm4303, %v4739, 0
    %v4753 = vsel %vm4303, %v4740, 0
    %v4756 = vsel %vm4303, %v4741, 0
    %v4759 = vsel %vm4303, %v4742, 0
    %4761 = vmatprep.subr.bf16.mxu0 0
    %4762 = vmatpush1.bf16.msra.mxu0 %v4709
    %4763 = vmatprep.subr.bf16.mxu0 0
    %4764 = vmatpush1.bf16.msra.mxu0 %v4710
    %4765 = vmatprep.subr.bf16.mxu0 0
    %4766 = vmatpush1.bf16.msra.mxu0 %v4711
    %4767 = vmatprep.subr.bf16.mxu0 0
    %4768 = vmatpush1.bf16.msra.mxu0 %v4712
    %4769 = vmatprep.subr.bf16.mxu0 0
    %4770 = vmatpush1.bf16.msra.mxu0 0
    %4771 = vmatprep.subr.bf16.mxu0 0
    %4772 = vmatpush1.bf16.msra.mxu0 0
    %4773 = vmatprep.subr.bf16.mxu0 0
    %4774 = vmatpush1.bf16.msra.mxu0 0
    %4775 = vmatprep.subr.bf16.mxu0 0
    %4776 = vmatpush1.bf16.msra.mxu0 0
    %4777 = vmatprep.subr.bf16.mxu0 0
    %4778 = vmatpush1.bf16.msra.mxu0 0
    %4779 = vmatprep.subr.bf16.mxu0 0
    %4780 = vmatpush1.bf16.msra.mxu0 0
    %4781 = vmatprep.subr.bf16.mxu0 0
    %4782 = vmatpush1.bf16.msra.mxu0 0
    %4783 = vmatprep.subr.bf16.mxu0 0
    %4784 = vmatpush1.bf16.msra.mxu0 0
    %4785 = vmatprep.subr.bf16.mxu0 0
    %4786 = vmatpush1.bf16.msra.mxu0 0
    %4787 = vmatprep.subr.bf16.mxu0 0
    %4788 = vmatpush1.bf16.msra.mxu0 0
    %4789 = vmatprep.subr.bf16.mxu0 0
    %4790 = vmatpush1.bf16.msra.mxu0 0
    %4791 = vmatprep.subr.bf16.mxu0 0
    %4792 = vmatpush1.bf16.msra.mxu0 0
    %4793 = vmatprep.mubr.bf16.mxu0 0
    %4794 = vmatmul.mubr.bf16.gmra.mrb[0].mxu0 %v4744
    %v4795 = vpop.f32.mrb[0].mxu0
    %v4796 = vadd.f32 0.0, %v4795
    %v4797 = vpop.f32.mrb[0].mxu0
    %v4798 = vpop.f32.mrb[0].mxu0
    %v4799 = vadd.f32 0.0, %v4798
    %v4800 = vpop.f32.mrb[0].mxu0
    %4801 = vmatprep.mubr.bf16.mxu0 0
    %4802 = vmatmul.mubr.bf16.gmra.mrb[0].mxu0 %v4747
    %v4803 = vpop.f32.mrb[0].mxu0
    %v4804 = vadd.f32 0.0, %v4803
    %v4805 = vpop.f32.mrb[0].mxu0
    %v4806 = vpop.f32.mrb[0].mxu0
    %v4807 = vadd.f32 0.0, %v4806
    %v4808 = vpop.f32.mrb[0].mxu0
    %4809 = vmatprep.mubr.bf16.mxu0 0
    %4810 = vmatmul.mubr.bf16.gmra.mrb[0].mxu0 %v4750
    %v4811 = vpop.f32.mrb[0].mxu0
    %v4812 = vadd.f32 0.0, %v4811
    %v4813 = vpop.f32.mrb[0].mxu0
    %v4814 = vpop.f32.mrb[0].mxu0
    %v4815 = vadd.f32 0.0, %v4814
    %v4816 = vpop.f32.mrb[0].mxu0
    %4817 = vmatprep.mubr.bf16.mxu0 0
    %4818 = vmatmul.mubr.bf16.gmra.mrb[0].mxu0 %v4753
    %v4819 = vpop.f32.mrb[0].mxu0
    %v4820 = vadd.f32 0.0, %v4819
    %v4821 = vpop.f32.mrb[0].mxu0
    %v4822 = vpop.f32.mrb[0].mxu0
    %v4823 = vadd.f32 0.0, %v4822
    %v4824 = vpop.f32.mrb[0].mxu0
    %4825 = vmatprep.mubr.bf16.mxu0 0
    %4826 = vmatmul.mubr.bf16.gmra.mrb[0].mxu0 %v4756
    %v4827 = vpop.f32.mrb[0].mxu0
    %v4828 = vadd.f32 0.0, %v4827
    %v4829 = vpop.f32.mrb[0].mxu0
    %v4830 = vpop.f32.mrb[0].mxu0
    %v4831 = vadd.f32 0.0, %v4830
    %v4832 = vpop.f32.mrb[0].mxu0
    %4833 = vmatprep.mubr.bf16.mxu0 0
    %4834 = vmatmul.mubr.bf16.gmra.mrb[0].mxu0 %v4759
    %v4835 = vpop.f32.mrb[0].mxu0
    %v4836 = vadd.f32 0.0, %v4835
    %v4837 = vpop.f32.mrb[0].mxu0
    %v4838 = vpop.f32.mrb[0].mxu0
    %v4839 = vadd.f32 0.0, %v4838
    %v4840 = vpop.f32.mrb[0].mxu0
    %4841 = vdwg.mxu0
    %s4842 = scalar_lea.vmem [#allocation8], 40
    %v4843 = vld [vmem:[%s4842] sm:$0xff]
    %v4844 = vlaneseq
    %v4845 = vshrl.u32 %v4844, 7
    %v4846 = vsub.s32 0, %v4845
    %v4847 = vrot.slane %v4843, %v4846
    %v4848 = vmul.f32 %v4847, %v4796
    %v4849 = vmul.f32 %v4847, %v4799
    %v4850 = vmul.f32 %v4847, %v4804
    %v4851 = vmul.f32 %v4847, %v4807
    %v4852 = vlaneseq
    %v4853 = vshrl.u32 %v4852, 7
    %v4854 = vsub.s32 1, %v4853
    %v4855 = vrot.slane %v4843, %v4854
    %v4856 = vmul.f32 %v4855, %v4812
    %v4857 = vmul.f32 %v4855, %v4815
    %v4858 = vmul.f32 %v4855, %v4820
    %v4859 = vmul.f32 %v4855, %v4823
    %v4860 = vadd.f32 %v4848, %v4856
    %v4861 = vadd.f32 %v4849, %v4857
    %v4862 = vadd.f32 %v4850, %v4858
    %v4863 = vadd.f32 %v4851, %v4859
    %v4864 = vlaneseq
    %v4865 = vshrl.u32 %v4864, 7
    %v4866 = vsub.s32 2, %v4865
    %v4867 = vrot.slane %v4843, %v4866
    %v4868 = vmul.f32 %v4867, %v4828
    %v4869 = vmul.f32 %v4867, %v4831
    %v4870 = vmul.f32 %v4867, %v4836
    %v4871 = vmul.f32 %v4867, %v4839
    %v4872 = vadd.f32 %v4860, %v4868
    %v4873 = vadd.f32 %v4861, %v4869
    %v4874 = vadd.f32 %v4862, %v4870
    %v4875 = vadd.f32 %v4863, %v4871
    %s4876 = scalar_lea.vmem [#allocation10], 5
    %v4877 = vld [vmem:[%s4876] sm:$0x1]
    %v4879 = vlaneseq
    %v4880 = vshrl.u32 %v4879, 7
    %v4881 = vsub.s32 0, %v4880
    %v4882 = vrot.slane %v4877, %v4881
    %v4884 = vadd.f32 %v4872, %v4882
    %v4885 = vadd.f32 %v4873, %v4882
    %v4886 = vadd.f32 %v4874, %v4882
    %v4887 = vadd.f32 %v4875, %v4882
    %v4888 = vmax.f32 %v4884, 0.0
    %v4889 = vmax.f32 %v4885, 0.0
    %v4890 = vmax.f32 %v4886, 0.0
    %v4891 = vmax.f32 %v4887, 0.0
    %v4892 = vpack.c.bf16 %v4889, %v4888
    %v4893 = vpack.c.bf16 %v4891, %v4890
    %s4894 = scalar_lea.vmem [#allocation11], 320
    %v4895 = vld [vmem:[%s4894] sm:$0xf]
    %v4896 = vld [vmem:[%s4894 + $0x4] sm:$0xf]
    %v4897 = vld [vmem:[%s4894 + $0x8] sm:$0xf]
    %v4898 = vld [vmem:[%s4894 + $0xc] sm:$0xf]
    %v4899 = vld [vmem:[%s4894 + $0x10] sm:$0xf]
    %v4900 = vld [vmem:[%s4894 + $0x14] sm:$0xf]
    %v4901 = vld [vmem:[%s4894 + $0x18] sm:$0xf]
    %v4902 = vld [vmem:[%s4894 + $0x1c] sm:$0xf]
    %v4903 = vld [vmem:[%s4894 + $0x20] sm:$0xf]
    %v4904 = vld [vmem:[%s4894 + $0x24] sm:$0xf]
    %v4905 = vld [vmem:[%s4894 + $0x28] sm:$0xf]
    %v4906 = vld [vmem:[%s4894 + $0x2c] sm:$0xf]
    %v4907 = vld [vmem:[%s4894 + $0x30] sm:$0xf]
    %v4908 = vld [vmem:[%s4894 + $0x34] sm:$0xf]
    %v4909 = vld [vmem:[%s4894 + $0x38] sm:$0xf]
    %v4910 = vld [vmem:[%s4894 + $0x3c] sm:$0xf]
    %s4911 = scalar_lea.vmem [#allocation13], 5
    %v4912 = vld [vmem:[%s4911] sm:$0x1]
    %v4914 = vlaneseq
    %v4915 = vshrl.u32 %v4914, 7
    %v4916 = vsub.s32 0, %v4915
    %v4917 = vrot.slane %v4912, %v4916
    %v4935 = vunpack.c.l.b16 %v4895
    %v4936 = vunpack.c.l.b16 %v4896
    %v4937 = vunpack.c.l.b16 %v4897
    %v4938 = vunpack.c.l.b16 %v4898
    %v4939 = vunpack.c.l.b16 %v4899
    %v4940 = vunpack.c.l.b16 %v4900
    %v4941 = vunpack.c.l.b16 %v4901
    %v4942 = vunpack.c.l.b16 %v4902
    %v4943 = vunpack.c.l.b16 %v4903
    %v4944 = vunpack.c.l.b16 %v4904
    %v4945 = vunpack.c.l.b16 %v4905
    %v4946 = vunpack.c.l.b16 %v4906
    %v4947 = vunpack.c.l.b16 %v4907
    %v4948 = vunpack.c.l.b16 %v4908
    %v4949 = vunpack.c.l.b16 %v4909
    %v4950 = vunpack.c.l.b16 %v4910
    %v4951 = vpack.c.b16 %v4936, %v4935
    %v4952 = vpack.c.b16 %v4938, %v4937
    %v4953 = vpack.c.b16 %v4940, %v4939
    %v4954 = vpack.c.b16 %v4942, %v4941
    %v4955 = vpack.c.b16 %v4944, %v4943
    %v4956 = vpack.c.b16 %v4946, %v4945
    %v4957 = vpack.c.b16 %v4948, %v4947
    %v4958 = vpack.c.b16 %v4950, %v4949
    %4967 = vmatprep.subr.bf16.mxu0 0
    %4968 = vmatpush1.bf16.msra.mxu0 %v4951
    %4969 = vmatprep.subr.bf16.mxu0 0
    %4970 = vmatpush1.bf16.msra.mxu0 %v4952
    %4971 = vmatprep.subr.bf16.mxu0 0
    %4972 = vmatpush1.bf16.msra.mxu0 %v4953
    %4973 = vmatprep.subr.bf16.mxu0 0
    %4974 = vmatpush1.bf16.msra.mxu0 %v4954
    %4975 = vmatprep.subr.bf16.mxu0 0
    %4976 = vmatpush1.bf16.msra.mxu0 %v4955
    %4977 = vmatprep.subr.bf16.mxu0 0
    %4978 = vmatpush1.bf16.msra.mxu0 %v4956
    %4979 = vmatprep.subr.bf16.mxu0 0
    %4980 = vmatpush1.bf16.msra.mxu0 %v4957
    %4981 = vmatprep.subr.bf16.mxu0 0
    %4982 = vmatpush1.bf16.msra.mxu0 %v4958
    %4983 = vmatprep.subr.bf16.mxu0 0
    %4984 = vmatpush1.bf16.msra.mxu0 0
    %4985 = vmatprep.subr.bf16.mxu0 0
    %4986 = vmatpush1.bf16.msra.mxu0 0
    %4987 = vmatprep.subr.bf16.mxu0 0
    %4988 = vmatpush1.bf16.msra.mxu0 0
    %4989 = vmatprep.subr.bf16.mxu0 0
    %4990 = vmatpush1.bf16.msra.mxu0 0
    %4991 = vmatprep.subr.bf16.mxu0 0
    %4992 = vmatpush1.bf16.msra.mxu0 0
    %4993 = vmatprep.subr.bf16.mxu0 0
    %4994 = vmatpush1.bf16.msra.mxu0 0
    %4995 = vmatprep.subr.bf16.mxu0 0
    %4996 = vmatpush1.bf16.msra.mxu0 0
    %4997 = vmatprep.subr.bf16.mxu0 0
    %4998 = vmatpush1.bf16.msra.mxu0 0
    %4999 = vmatprep.mubr.bf16.mxu0 0
    %5000 = vmatmul.mubr.bf16.gmra.mrb[0].mxu0 %v4892
    %v5001 = vpop.f32.mrb[0].mxu0
    %v5002 = vadd.f32 %v4917, %v5001
    %v5003 = vpop.f32.mrb[0].mxu0
    %v5004 = vpop.f32.mrb[0].mxu0
    %v5005 = vadd.f32 %v4917, %v5004
    %v5006 = vpop.f32.mrb[0].mxu0
    %5007 = vmatprep.mubr.bf16.mxu0 0
    %5008 = vmatmul.mubr.bf16.gmra.mrb[0].mxu0 %v4893
    %v5009 = vpop.f32.mrb[0].mxu0
    %v5010 = vadd.f32 %v4917, %v5009
    %v5011 = vpop.f32.mrb[0].mxu0
    %v5012 = vpop.f32.mrb[0].mxu0
    %v5013 = vadd.f32 %v4917, %v5012
    %v5014 = vpop.f32.mrb[0].mxu0
    %5015 = vdwg.mxu0
    %v5016 = vmax.f32 %v5002, 0.0
    %v5017 = vmax.f32 %v5005, 0.0
    %v5018 = vmax.f32 %v5010, 0.0
    %v5019 = vmax.f32 %v5013, 0.0
    %v5020 = vld [vmem:[%s16] sm:$0xf]
    %v5021 = vld [vmem:[%s16 + $0x4] sm:$0xf]
    %v5022 = vld [vmem:[%s16 + $0x8] sm:$0xf]
    %v5023 = vld [vmem:[%s16 + $0xc] sm:$0xf]
    %v5024 = vld [vmem:[%s16 + $0x10] sm:$0xf]
    %v5025 = vld [vmem:[%s16 + $0x14] sm:$0xf]
    %v5026 = vld [vmem:[%s16 + $0x18] sm:$0xf]
    %v5027 = vld [vmem:[%s16 + $0x1c] sm:$0xf]
    %v5028 = vld [vmem:[%s16 + $0x20] sm:$0xf]
    %v5029 = vld [vmem:[%s16 + $0x24] sm:$0xf]
    %v5030 = vld [vmem:[%s16 + $0x28] sm:$0xf]
    %v5031 = vld [vmem:[%s16 + $0x2c] sm:$0xf]
    %v5032 = vpack.c.bf16 %v5017, %v5016
    %v5033 = vpack.c.bf16 %v5019, %v5018
    %v5046 = vunpack.c.l.b16 %v5020
    %v5047 = vunpack.c.l.b16 %v5021
    %v5048 = vunpack.c.l.b16 %v5022
    %v5049 = vunpack.c.l.b16 %v5023
    %v5050 = vunpack.c.l.b16 %v5024
    %v5051 = vunpack.c.l.b16 %v5025
    %v5052 = vunpack.c.l.b16 %v5026
    %v5053 = vunpack.c.l.b16 %v5027
    %v5054 = vunpack.c.l.b16 %v5028
    %v5055 = vunpack.c.l.b16 %v5029
    %v5056 = vunpack.c.l.b16 %v5030
    %v5057 = vunpack.c.l.b16 %v5031
    %v5058 = vpack.c.b16 %v5047, %v5046
    %v5059 = vpack.c.b16 %v5049, %v5048
    %v5060 = vpack.c.b16 %v5051, %v5050
    %v5061 = vpack.c.b16 %v5053, %v5052
    %v5062 = vpack.c.b16 %v5055, %v5054
    %v5063 = vpack.c.b16 %v5057, %v5056
    %vm5064 = vcmask 261120
    %v5066 = vsel %vm5064, %v5058, 0
    %v5069 = vsel %vm5064, %v5059, 0
    %v5072 = vsel %vm5064, %v5060, 0
    %v5075 = vsel %vm5064, %v5061, 0
    %v5078 = vsel %vm5064, %v5062, 0
    %v5081 = vsel %vm5064, %v5063, 0
    %5083 = vmatprep.subr.bf16.mxu0 0
    %5084 = vmatpush1.bf16.msra.mxu0 %v5032
    %5085 = vmatprep.subr.bf16.mxu0 0
    %5086 = vmatpush1.bf16.msra.mxu0 %v5033
    %5087 = vmatprep.subr.bf16.mxu0 0
    %5088 = vmatpush1.bf16.msra.mxu0 0
    %5089 = vmatprep.subr.bf16.mxu0 0
    %5090 = vmatpush1.bf16.msra.mxu0 0
    %5091 = vmatprep.subr.bf16.mxu0 0
    %5092 = vmatpush1.bf16.msra.mxu0 0
    %5093 = vmatprep.subr.bf16.mxu0 0
    %5094 = vmatpush1.bf16.msra.mxu0 0
    %5095 = vmatprep.subr.bf16.mxu0 0
    %5096 = vmatpush1.bf16.msra.mxu0 0
    %5097 = vmatprep.subr.bf16.mxu0 0
    %5098 = vmatpush1.bf16.msra.mxu0 0
    %5099 = vmatprep.subr.bf16.mxu0 0
    %5100 = vmatpush1.bf16.msra.mxu0 0
    %5101 = vmatprep.subr.bf16.mxu0 0
    %5102 = vmatpush1.bf16.msra.mxu0 0
    %5103 = vmatprep.subr.bf16.mxu0 0
    %5104 = vmatpush1.bf16.msra.mxu0 0
    %5105 = vmatprep.subr.bf16.mxu0 0
    %5106 = vmatpush1.bf16.msra.mxu0 0
    %5107 = vmatprep.subr.bf16.mxu0 0
    %5108 = vmatpush1.bf16.msra.mxu0 0
    %5109 = vmatprep.subr.bf16.mxu0 0
    %5110 = vmatpush1.bf16.msra.mxu0 0
    %5111 = vmatprep.subr.bf16.mxu0 0
    %5112 = vmatpush1.bf16.msra.mxu0 0
    %5113 = vmatprep.subr.bf16.mxu0 0
    %5114 = vmatpush1.bf16.msra.mxu0 0
    %5115 = vmatprep.mubr.bf16.mxu0 0
    %5116 = vmatmul.mubr.bf16.gmra.mrb[0].mxu0 %v5066
    %v5117 = vpop.f32.mrb[0].mxu0
    %v5118 = vadd.f32 0.0, %v5117
    %v5119 = vpop.f32.mrb[0].mxu0
    %v5120 = vpop.f32.mrb[0].mxu0
    %v5121 = vadd.f32 0.0, %v5120
    %v5122 = vpop.f32.mrb[0].mxu0
    %5123 = vmatprep.mubr.bf16.mxu0 0
    %5124 = vmatmul.mubr.bf16.gmra.mrb[0].mxu0 %v5069
    %v5125 = vpop.f32.mrb[0].mxu0
    %v5126 = vadd.f32 0.0, %v5125
    %v5127 = vpop.f32.mrb[0].mxu0
    %v5128 = vpop.f32.mrb[0].mxu0
    %v5129 = vadd.f32 0.0, %v5128
    %v5130 = vpop.f32.mrb[0].mxu0
    %5131 = vmatprep.mubr.bf16.mxu0 0
    %5132 = vmatmul.mubr.bf16.gmra.mrb[0].mxu0 %v5072
    %v5133 = vpop.f32.mrb[0].mxu0
    %v5134 = vadd.f32 0.0, %v5133
    %v5135 = vpop.f32.mrb[0].mxu0
    %v5136 = vpop.f32.mrb[0].mxu0
    %v5137 = vadd.f32 0.0, %v5136
    %v5138 = vpop.f32.mrb[0].mxu0
    %5139 = vmatprep.mubr.bf16.mxu0 0
    %5140 = vmatmul.mubr.bf16.gmra.mrb[0].mxu0 %v5075
    %v5141 = vpop.f32.mrb[0].mxu0
    %v5142 = vadd.f32 0.0, %v5141
    %v5143 = vpop.f32.mrb[0].mxu0
    %v5144 = vpop.f32.mrb[0].mxu0
    %v5145 = vadd.f32 0.0, %v5144
    %v5146 = vpop.f32.mrb[0].mxu0
    %5147 = vmatprep.mubr.bf16.mxu0 0
    %5148 = vmatmul.mubr.bf16.gmra.mrb[0].mxu0 %v5078
    %v5149 = vpop.f32.mrb[0].mxu0
    %v5150 = vadd.f32 0.0, %v5149
    %v5151 = vpop.f32.mrb[0].mxu0
    %v5152 = vpop.f32.mrb[0].mxu0
    %v5153 = vadd.f32 0.0, %v5152
    %v5154 = vpop.f32.mrb[0].mxu0
    %5155 = vmatprep.mubr.bf16.mxu0 0
    %5156 = vmatmul.mubr.bf16.gmra.mrb[0].mxu0 %v5081
    %v5157 = vpop.f32.mrb[0].mxu0
    %v5158 = vadd.f32 0.0, %v5157
    %v5159 = vpop.f32.mrb[0].mxu0
    %v5160 = vpop.f32.mrb[0].mxu0
    %v5161 = vadd.f32 0.0, %v5160
    %v5162 = vpop.f32.mrb[0].mxu0
    %5163 = vdwg.mxu0
    %s5164 = scalar_lea.vmem [#allocation8], 48
    %v5165 = vld [vmem:[%s5164] sm:$0xff]
    %v5166 = vlaneseq
    %v5167 = vshrl.u32 %v5166, 7
    %v5168 = vsub.s32 0, %v5167
    %v5169 = vrot.slane %v5165, %v5168
    %v5170 = vmul.f32 %v5169, %v5118
    %v5171 = vmul.f32 %v5169, %v5121
    %v5172 = vmul.f32 %v5169, %v5126
    %v5173 = vmul.f32 %v5169, %v5129
    %v5174 = vlaneseq
    %v5175 = vshrl.u32 %v5174, 7
    %v5176 = vsub.s32 1, %v5175
    %v5177 = vrot.slane %v5165, %v5176
    %v5178 = vmul.f32 %v5177, %v5134
    %v5179 = vmul.f32 %v5177, %v5137
    %v5180 = vmul.f32 %v5177, %v5142
    %v5181 = vmul.f32 %v5177, %v5145
    %v5182 = vadd.f32 %v5170, %v5178
    %v5183 = vadd.f32 %v5171, %v5179
    %v5184 = vadd.f32 %v5172, %v5180
    %v5185 = vadd.f32 %v5173, %v5181
    %v5186 = vlaneseq
    %v5187 = vshrl.u32 %v5186, 7
    %v5188 = vsub.s32 2, %v5187
    %v5189 = vrot.slane %v5165, %v5188
    %v5190 = vmul.f32 %v5189, %v5150
    %v5191 = vmul.f32 %v5189, %v5153
    %v5192 = vmul.f32 %v5189, %v5158
    %v5193 = vmul.f32 %v5189, %v5161
    %v5194 = vadd.f32 %v5182, %v5190
    %v5195 = vadd.f32 %v5183, %v5191
    %v5196 = vadd.f32 %v5184, %v5192
    %v5197 = vadd.f32 %v5185, %v5193
    %s5198 = scalar_lea.vmem [#allocation10], 6
    %v5199 = vld [vmem:[%s5198] sm:$0x1]
    %v5201 = vlaneseq
    %v5202 = vshrl.u32 %v5201, 7
    %v5203 = vsub.s32 0, %v5202
    %v5204 = vrot.slane %v5199, %v5203
    %v5206 = vadd.f32 %v5194, %v5204
    %v5207 = vadd.f32 %v5195, %v5204
    %v5208 = vadd.f32 %v5196, %v5204
    %v5209 = vadd.f32 %v5197, %v5204
    %v5210 = vmax.f32 %v5206, 0.0
    %v5211 = vmax.f32 %v5207, 0.0
    %v5212 = vmax.f32 %v5208, 0.0
    %v5213 = vmax.f32 %v5209, 0.0
    %v5214 = vpack.c.bf16 %v5211, %v5210
    %v5215 = vpack.c.bf16 %v5213, %v5212
    %s5216 = scalar_lea.vmem [#allocation11], 384
    %v5217 = vld [vmem:[%s5216] sm:$0xf]
    %v5218 = vld [vmem:[%s5216 + $0x4] sm:$0xf]
    %v5219 = vld [vmem:[%s5216 + $0x8] sm:$0xf]
    %v5220 = vld [vmem:[%s5216 + $0xc] sm:$0xf]
    %v5221 = vld [vmem:[%s5216 + $0x10] sm:$0xf]
    %v5222 = vld [vmem:[%s5216 + $0x14] sm:$0xf]
    %v5223 = vld [vmem:[%s5216 + $0x18] sm:$0xf]
    %v5224 = vld [vmem:[%s5216 + $0x1c] sm:$0xf]
    %v5225 = vld [vmem:[%s5216 + $0x20] sm:$0xf]
    %v5226 = vld [vmem:[%s5216 + $0x24] sm:$0xf]
    %v5227 = vld [vmem:[%s5216 + $0x28] sm:$0xf]
    %v5228 = vld [vmem:[%s5216 + $0x2c] sm:$0xf]
    %v5229 = vld [vmem:[%s5216 + $0x30] sm:$0xf]
    %v5230 = vld [vmem:[%s5216 + $0x34] sm:$0xf]
    %v5231 = vld [vmem:[%s5216 + $0x38] sm:$0xf]
    %v5232 = vld [vmem:[%s5216 + $0x3c] sm:$0xf]
    %s5233 = scalar_lea.vmem [#allocation13], 6
    %v5234 = vld [vmem:[%s5233] sm:$0x1]
    %v5236 = vlaneseq
    %v5237 = vshrl.u32 %v5236, 7
    %v5238 = vsub.s32 0, %v5237
    %v5239 = vrot.slane %v5234, %v5238
    %v5257 = vunpack.c.l.b16 %v5217
    %v5258 = vunpack.c.l.b16 %v5218
    %v5259 = vunpack.c.l.b16 %v5219
    %v5260 = vunpack.c.l.b16 %v5220
    %v5261 = vunpack.c.l.b16 %v5221
    %v5262 = vunpack.c.l.b16 %v5222
    %v5263 = vunpack.c.l.b16 %v5223
    %v5264 = vunpack.c.l.b16 %v5224
    %v5265 = vunpack.c.l.b16 %v5225
    %v5266 = vunpack.c.l.b16 %v5226
    %v5267 = vunpack.c.l.b16 %v5227
    %v5268 = vunpack.c.l.b16 %v5228
    %v5269 = vunpack.c.l.b16 %v5229
    %v5270 = vunpack.c.l.b16 %v5230
    %v5271 = vunpack.c.l.b16 %v5231
    %v5272 = vunpack.c.l.b16 %v5232
    %v5273 = vpack.c.b16 %v5258, %v5257
    %v5274 = vpack.c.b16 %v5260, %v5259
    %v5275 = vpack.c.b16 %v5262, %v5261
    %v5276 = vpack.c.b16 %v5264, %v5263
    %v5277 = vpack.c.b16 %v5266, %v5265
    %v5278 = vpack.c.b16 %v5268, %v5267
    %v5279 = vpack.c.b16 %v5270, %v5269
    %v5280 = vpack.c.b16 %v5272, %v5271
    %5289 = vmatprep.subr.bf16.mxu0 0
    %5290 = vmatpush1.bf16.msra.mxu0 %v5273
    %5291 = vmatprep.subr.bf16.mxu0 0
    %5292 = vmatpush1.bf16.msra.mxu0 %v5274
    %5293 = vmatprep.subr.bf16.mxu0 0
    %5294 = vmatpush1.bf16.msra.mxu0 %v5275
    %5295 = vmatprep.subr.bf16.mxu0 0
    %5296 = vmatpush1.bf16.msra.mxu0 %v5276
    %5297 = vmatprep.subr.bf16.mxu0 0
    %5298 = vmatpush1.bf16.msra.mxu0 %v5277
    %5299 = vmatprep.subr.bf16.mxu0 0
    %5300 = vmatpush1.bf16.msra.mxu0 %v5278
    %5301 = vmatprep.subr.bf16.mxu0 0
    %5302 = vmatpush1.bf16.msra.mxu0 %v5279
    %5303 = vmatprep.subr.bf16.mxu0 0
    %5304 = vmatpush1.bf16.msra.mxu0 %v5280
    %5305 = vmatprep.subr.bf16.mxu0 0
    %5306 = vmatpush1.bf16.msra.mxu0 0
    %5307 = vmatprep.subr.bf16.mxu0 0
    %5308 = vmatpush1.bf16.msra.mxu0 0
    %5309 = vmatprep.subr.bf16.mxu0 0
    %5310 = vmatpush1.bf16.msra.mxu0 0
    %5311 = vmatprep.subr.bf16.mxu0 0
    %5312 = vmatpush1.bf16.msra.mxu0 0
    %5313 = vmatprep.subr.bf16.mxu0 0
    %5314 = vmatpush1.bf16.msra.mxu0 0
    %5315 = vmatprep.subr.bf16.mxu0 0
    %5316 = vmatpush1.bf16.msra.mxu0 0
    %5317 = vmatprep.subr.bf16.mxu0 0
    %5318 = vmatpush1.bf16.msra.mxu0 0
    %5319 = vmatprep.subr.bf16.mxu0 0
    %5320 = vmatpush1.bf16.msra.mxu0 0
    %5321 = vmatprep.mubr.bf16.mxu0 0
    %5322 = vmatmul.mubr.bf16.gmra.mrb[0].mxu0 %v5214
    %v5323 = vpop.f32.mrb[0].mxu0
    %v5324 = vadd.f32 %v5239, %v5323
    %v5325 = vpop.f32.mrb[0].mxu0
    %v5326 = vpop.f32.mrb[0].mxu0
    %v5327 = vadd.f32 %v5239, %v5326
    %v5328 = vpop.f32.mrb[0].mxu0
    %5329 = vmatprep.mubr.bf16.mxu0 0
    %5330 = vmatmul.mubr.bf16.gmra.mrb[0].mxu0 %v5215
    %v5331 = vpop.f32.mrb[0].mxu0
    %v5332 = vadd.f32 %v5239, %v5331
    %v5333 = vpop.f32.mrb[0].mxu0
    %v5334 = vpop.f32.mrb[0].mxu0
    %v5335 = vadd.f32 %v5239, %v5334
    %v5336 = vpop.f32.mrb[0].mxu0
    %5337 = vdwg.mxu0
    %v5338 = vmax.f32 %v5324, 0.0
    %v5339 = vmax.f32 %v5327, 0.0
    %v5340 = vmax.f32 %v5332, 0.0
    %v5341 = vmax.f32 %v5335, 0.0
    %v5342 = vld [vmem:[%s17] sm:$0xf]
    %v5343 = vld [vmem:[%s17 + $0x4] sm:$0xf]
    %v5344 = vld [vmem:[%s17 + $0x8] sm:$0xf]
    %v5345 = vld [vmem:[%s17 + $0xc] sm:$0xf]
    %v5346 = vld [vmem:[%s17 + $0x10] sm:$0xf]
    %v5347 = vld [vmem:[%s17 + $0x14] sm:$0xf]
    %v5348 = vld [vmem:[%s17 + $0x18] sm:$0xf]
    %v5349 = vld [vmem:[%s17 + $0x1c] sm:$0xf]
    %v5350 = vld [vmem:[%s17 + $0x20] sm:$0xf]
    %v5351 = vld [vmem:[%s17 + $0x24] sm:$0xf]
    %v5352 = vld [vmem:[%s17 + $0x28] sm:$0xf]
    %v5353 = vld [vmem:[%s17 + $0x2c] sm:$0xf]
    %v5354 = vpack.c.bf16 %v5339, %v5338
    %v5355 = vpack.c.bf16 %v5341, %v5340
    %v5368 = vunpack.c.l.b16 %v5342
    %v5369 = vunpack.c.l.b16 %v5343
    %v5370 = vunpack.c.l.b16 %v5344
    %v5371 = vunpack.c.l.b16 %v5345
    %v5372 = vunpack.c.l.b16 %v5346
    %v5373 = vunpack.c.l.b16 %v5347
    %v5374 = vunpack.c.l.b16 %v5348
    %v5375 = vunpack.c.l.b16 %v5349
    %v5376 = vunpack.c.l.b16 %v5350
    %v5377 = vunpack.c.l.b16 %v5351
    %v5378 = vunpack.c.l.b16 %v5352
    %v5379 = vunpack.c.l.b16 %v5353
    %v5380 = vpack.c.b16 %v5369, %v5368
    %v5381 = vpack.c.b16 %v5371, %v5370
    %v5382 = vpack.c.b16 %v5373, %v5372
    %v5383 = vpack.c.b16 %v5375, %v5374
    %v5384 = vpack.c.b16 %v5377, %v5376
    %v5385 = vpack.c.b16 %v5379, %v5378
    %v5387 = vsel %vm5064, %v5380, 0
    %v5390 = vsel %vm5064, %v5381, 0
    %v5393 = vsel %vm5064, %v5382, 0
    %v5396 = vsel %vm5064, %v5383, 0
    %v5399 = vsel %vm5064, %v5384, 0
    %v5402 = vsel %vm5064, %v5385, 0
    %5404 = vmatprep.subr.bf16.mxu0 0
    %5405 = vmatpush1.bf16.msra.mxu0 %v5354
    %5406 = vmatprep.subr.bf16.mxu0 0
    %5407 = vmatpush1.bf16.msra.mxu0 %v5355
    %5408 = vmatprep.subr.bf16.mxu0 0
    %5409 = vmatpush1.bf16.msra.mxu0 0
    %5410 = vmatprep.subr.bf16.mxu0 0
    %5411 = vmatpush1.bf16.msra.mxu0 0
    %5412 = vmatprep.subr.bf16.mxu0 0
    %5413 = vmatpush1.bf16.msra.mxu0 0
    %5414 = vmatprep.subr.bf16.mxu0 0
    %5415 = vmatpush1.bf16.msra.mxu0 0
    %5416 = vmatprep.subr.bf16.mxu0 0
    %5417 = vmatpush1.bf16.msra.mxu0 0
    %5418 = vmatprep.subr.bf16.mxu0 0
    %5419 = vmatpush1.bf16.msra.mxu0 0
    %5420 = vmatprep.subr.bf16.mxu0 0
    %5421 = vmatpush1.bf16.msra.mxu0 0
    %5422 = vmatprep.subr.bf16.mxu0 0
    %5423 = vmatpush1.bf16.msra.mxu0 0
    %5424 = vmatprep.subr.bf16.mxu0 0
    %5425 = vmatpush1.bf16.msra.mxu0 0
    %5426 = vmatprep.subr.bf16.mxu0 0
    %5427 = vmatpush1.bf16.msra.mxu0 0
    %5428 = vmatprep.subr.bf16.mxu0 0
    %5429 = vmatpush1.bf16.msra.mxu0 0
    %5430 = vmatprep.subr.bf16.mxu0 0
    %5431 = vmatpush1.bf16.msra.mxu0 0
    %5432 = vmatprep.subr.bf16.mxu0 0
    %5433 = vmatpush1.bf16.msra.mxu0 0
    %5434 = vmatprep.subr.bf16.mxu0 0
    %5435 = vmatpush1.bf16.msra.mxu0 0
    %5436 = vmatprep.mubr.bf16.mxu0 0
    %5437 = vmatmul.mubr.bf16.gmra.mrb[0].mxu0 %v5387
    %v5438 = vpop.f32.mrb[0].mxu0
    %v5439 = vadd.f32 0.0, %v5438
    %v5440 = vpop.f32.mrb[0].mxu0
    %v5441 = vpop.f32.mrb[0].mxu0
    %v5442 = vadd.f32 0.0, %v5441
    %v5443 = vpop.f32.mrb[0].mxu0
    %5444 = vmatprep.mubr.bf16.mxu0 0
    %5445 = vmatmul.mubr.bf16.gmra.mrb[0].mxu0 %v5390
    %v5446 = vpop.f32.mrb[0].mxu0
    %v5447 = vadd.f32 0.0, %v5446
    %v5448 = vpop.f32.mrb[0].mxu0
    %v5449 = vpop.f32.mrb[0].mxu0
    %v5450 = vadd.f32 0.0, %v5449
    %v5451 = vpop.f32.mrb[0].mxu0
    %5452 = vmatprep.mubr.bf16.mxu0 0
    %5453 = vmatmul.mubr.bf16.gmra.mrb[0].mxu0 %v5393
    %v5454 = vpop.f32.mrb[0].mxu0
    %v5455 = vadd.f32 0.0, %v5454
    %v5456 = vpop.f32.mrb[0].mxu0
    %v5457 = vpop.f32.mrb[0].mxu0
    %v5458 = vadd.f32 0.0, %v5457
    %v5459 = vpop.f32.mrb[0].mxu0
    %5460 = vmatprep.mubr.bf16.mxu0 0
    %5461 = vmatmul.mubr.bf16.gmra.mrb[0].mxu0 %v5396
    %v5462 = vpop.f32.mrb[0].mxu0
    %v5463 = vadd.f32 0.0, %v5462
    %v5464 = vpop.f32.mrb[0].mxu0
    %v5465 = vpop.f32.mrb[0].mxu0
    %v5466 = vadd.f32 0.0, %v5465
    %v5467 = vpop.f32.mrb[0].mxu0
    %5468 = vmatprep.mubr.bf16.mxu0 0
    %5469 = vmatmul.mubr.bf16.gmra.mrb[0].mxu0 %v5399
    %v5470 = vpop.f32.mrb[0].mxu0
    %v5471 = vadd.f32 0.0, %v5470
    %v5472 = vpop.f32.mrb[0].mxu0
    %v5473 = vpop.f32.mrb[0].mxu0
    %v5474 = vadd.f32 0.0, %v5473
    %v5475 = vpop.f32.mrb[0].mxu0
    %5476 = vmatprep.mubr.bf16.mxu0 0
    %5477 = vmatmul.mubr.bf16.gmra.mrb[0].mxu0 %v5402
    %v5478 = vpop.f32.mrb[0].mxu0
    %v5479 = vadd.f32 0.0, %v5478
    %v5480 = vpop.f32.mrb[0].mxu0
    %v5481 = vpop.f32.mrb[0].mxu0
    %v5482 = vadd.f32 0.0, %v5481
    %v5483 = vpop.f32.mrb[0].mxu0
    %5484 = vdwg.mxu0
    %s5485 = scalar_lea.vmem [#allocation8], 56
    %v5486 = vld [vmem:[%s5485] sm:$0xff]
    %v5487 = vlaneseq
    %v5488 = vshrl.u32 %v5487, 7
    %v5489 = vsub.s32 0, %v5488
    %v5490 = vrot.slane %v5486, %v5489
    %v5491 = vmul.f32 %v5490, %v5439
    %v5492 = vmul.f32 %v5490, %v5442
    %v5493 = vmul.f32 %v5490, %v5447
    %v5494 = vmul.f32 %v5490, %v5450
    %v5495 = vlaneseq
    %v5496 = vshrl.u32 %v5495, 7
    %v5497 = vsub.s32 1, %v5496
    %v5498 = vrot.slane %v5486, %v5497
    %v5499 = vmul.f32 %v5498, %v5455
    %v5500 = vmul.f32 %v5498, %v5458
    %v5501 = vmul.f32 %v5498, %v5463
    %v5502 = vmul.f32 %v5498, %v5466
    %v5503 = vadd.f32 %v5491, %v5499
    %v5504 = vadd.f32 %v5492, %v5500
    %v5505 = vadd.f32 %v5493, %v5501
    %v5506 = vadd.f32 %v5494, %v5502
    %v5507 = vlaneseq
    %v5508 = vshrl.u32 %v5507, 7
    %v5509 = vsub.s32 2, %v5508
    %v5510 = vrot.slane %v5486, %v5509
    %v5511 = vmul.f32 %v5510, %v5471
    %v5512 = vmul.f32 %v5510, %v5474
    %v5513 = vmul.f32 %v5510, %v5479
    %v5514 = vmul.f32 %v5510, %v5482
    %v5515 = vadd.f32 %v5503, %v5511
    %v5516 = vadd.f32 %v5504, %v5512
    %v5517 = vadd.f32 %v5505, %v5513
    %v5518 = vadd.f32 %v5506, %v5514
    %s5519 = scalar_lea.vmem [#allocation10], 7
    %v5520 = vld [vmem:[%s5519] sm:$0x1]
    %v5522 = vlaneseq
    %v5523 = vshrl.u32 %v5522, 7
    %v5524 = vsub.s32 0, %v5523
    %v5525 = vrot.slane %v5520, %v5524
    %v5527 = vadd.f32 %v5515, %v5525
    %v5528 = vadd.f32 %v5516, %v5525
    %v5529 = vadd.f32 %v5517, %v5525
    %v5530 = vadd.f32 %v5518, %v5525
    %v5531 = vmax.f32 %v5527, 0.0
    %v5532 = vmax.f32 %v5528, 0.0
    %v5533 = vmax.f32 %v5529, 0.0
    %v5534 = vmax.f32 %v5530, 0.0
    %v5535 = vpack.c.bf16 %v5532, %v5531
    %v5536 = vpack.c.bf16 %v5534, %v5533
    %s5537 = scalar_lea.vmem [#allocation11], 448
    %v5538 = vld [vmem:[%s5537] sm:$0xf]
    %v5539 = vld [vmem:[%s5537 + $0x4] sm:$0xf]
    %v5540 = vld [vmem:[%s5537 + $0x8] sm:$0xf]
    %v5541 = vld [vmem:[%s5537 + $0xc] sm:$0xf]
    %v5542 = vld [vmem:[%s5537 + $0x10] sm:$0xf]
    %v5543 = vld [vmem:[%s5537 + $0x14] sm:$0xf]
    %v5544 = vld [vmem:[%s5537 + $0x18] sm:$0xf]
    %v5545 = vld [vmem:[%s5537 + $0x1c] sm:$0xf]
    %v5546 = vld [vmem:[%s5537 + $0x20] sm:$0xf]
    %v5547 = vld [vmem:[%s5537 + $0x24] sm:$0xf]
    %v5548 = vld [vmem:[%s5537 + $0x28] sm:$0xf]
    %v5549 = vld [vmem:[%s5537 + $0x2c] sm:$0xf]
    %v5550 = vld [vmem:[%s5537 + $0x30] sm:$0xf]
    %v5551 = vld [vmem:[%s5537 + $0x34] sm:$0xf]
    %v5552 = vld [vmem:[%s5537 + $0x38] sm:$0xf]
    %v5553 = vld [vmem:[%s5537 + $0x3c] sm:$0xf]
    %s5554 = scalar_lea.vmem [#allocation13], 7
    %v5555 = vld [vmem:[%s5554] sm:$0x1]
    %v5557 = vlaneseq
    %v5558 = vshrl.u32 %v5557, 7
    %v5559 = vsub.s32 0, %v5558
    %v5560 = vrot.slane %v5555, %v5559
    %v5578 = vunpack.c.l.b16 %v5538
    %v5579 = vunpack.c.l.b16 %v5539
    %v5580 = vunpack.c.l.b16 %v5540
    %v5581 = vunpack.c.l.b16 %v5541
    %v5582 = vunpack.c.l.b16 %v5542
    %v5583 = vunpack.c.l.b16 %v5543
    %v5584 = vunpack.c.l.b16 %v5544
    %v5585 = vunpack.c.l.b16 %v5545
    %v5586 = vunpack.c.l.b16 %v5546
    %v5587 = vunpack.c.l.b16 %v5547
    %v5588 = vunpack.c.l.b16 %v5548
    %v5589 = vunpack.c.l.b16 %v5549
    %v5590 = vunpack.c.l.b16 %v5550
    %v5591 = vunpack.c.l.b16 %v5551
    %v5592 = vunpack.c.l.b16 %v5552
    %v5593 = vunpack.c.l.b16 %v5553
    %v5594 = vpack.c.b16 %v5579, %v5578
    %v5595 = vpack.c.b16 %v5581, %v5580
    %v5596 = vpack.c.b16 %v5583, %v5582
    %v5597 = vpack.c.b16 %v5585, %v5584
    %v5598 = vpack.c.b16 %v5587, %v5586
    %v5599 = vpack.c.b16 %v5589, %v5588
    %v5600 = vpack.c.b16 %v5591, %v5590
    %v5601 = vpack.c.b16 %v5593, %v5592
    %5610 = vmatprep.subr.bf16.mxu0 0
    %5611 = vmatpush1.bf16.msra.mxu0 %v5594
    %5612 = vmatprep.subr.bf16.mxu0 0
    %5613 = vmatpush1.bf16.msra.mxu0 %v5595
    %5614 = vmatprep.subr.bf16.mxu0 0
    %5615 = vmatpush1.bf16.msra.mxu0 %v5596
    %5616 = vmatprep.subr.bf16.mxu0 0
    %5617 = vmatpush1.bf16.msra.mxu0 %v5597
    %5618 = vmatprep.subr.bf16.mxu0 0
    %5619 = vmatpush1.bf16.msra.mxu0 %v5598
    %5620 = vmatprep.subr.bf16.mxu0 0
    %5621 = vmatpush1.bf16.msra.mxu0 %v5599
    %5622 = vmatprep.subr.bf16.mxu0 0
    %5623 = vmatpush1.bf16.msra.mxu0 %v5600
    %5624 = vmatprep.subr.bf16.mxu0 0
    %5625 = vmatpush1.bf16.msra.mxu0 %v5601
    %5626 = vmatprep.subr.bf16.mxu0 0
    %5627 = vmatpush1.bf16.msra.mxu0 0
    %5628 = vmatprep.subr.bf16.mxu0 0
    %5629 = vmatpush1.bf16.msra.mxu0 0
    %5630 = vmatprep.subr.bf16.mxu0 0
    %5631 = vmatpush1.bf16.msra.mxu0 0
    %5632 = vmatprep.subr.bf16.mxu0 0
    %5633 = vmatpush1.bf16.msra.mxu0 0
    %5634 = vmatprep.subr.bf16.mxu0 0
    %5635 = vmatpush1.bf16.msra.mxu0 0
    %5636 = vmatprep.subr.bf16.mxu0 0
    %5637 = vmatpush1.bf16.msra.mxu0 0
    %5638 = vmatprep.subr.bf16.mxu0 0
    %5639 = vmatpush1.bf16.msra.mxu0 0
    %5640 = vmatprep.subr.bf16.mxu0 0
    %5641 = vmatpush1.bf16.msra.mxu0 0
    %5642 = vmatprep.mubr.bf16.mxu0 0
    %5643 = vmatmul.mubr.bf16.gmra.mrb[0].mxu0 %v5535
    %v5644 = vpop.f32.mrb[0].mxu0
    %v5645 = vadd.f32 %v5560, %v5644
    %v5646 = vpop.f32.mrb[0].mxu0
    %v5647 = vpop.f32.mrb[0].mxu0
    %v5648 = vadd.f32 %v5560, %v5647
    %v5649 = vpop.f32.mrb[0].mxu0
    %5650 = vmatprep.mubr.bf16.mxu0 0
    %5651 = vmatmul.mubr.bf16.gmra.mrb[0].mxu0 %v5536
    %v5652 = vpop.f32.mrb[0].mxu0
    %v5653 = vadd.f32 %v5560, %v5652
    %v5654 = vpop.f32.mrb[0].mxu0
    %v5655 = vpop.f32.mrb[0].mxu0
    %v5656 = vadd.f32 %v5560, %v5655
    %v5657 = vpop.f32.mrb[0].mxu0
    %5658 = vdwg.mxu0
    %v5659 = vmax.f32 %v5645, 0.0
    %v5660 = vmax.f32 %v5648, 0.0
    %v5661 = vmax.f32 %v5653, 0.0
    %v5662 = vmax.f32 %v5656, 0.0
    %v5663 = vld [vmem:[%s18] sm:$0xf]
    %v5664 = vld [vmem:[%s18 + $0x4] sm:$0xf]
    %v5665 = vld [vmem:[%s18 + $0x8] sm:$0xf]
    %v5666 = vld [vmem:[%s18 + $0xc] sm:$0xf]
    %v5667 = vld [vmem:[%s18 + $0x10] sm:$0xf]
    %v5668 = vld [vmem:[%s18 + $0x14] sm:$0xf]
    %v5669 = vld [vmem:[%s18 + $0x18] sm:$0xf]
    %v5670 = vld [vmem:[%s18 + $0x1c] sm:$0xf]
    %v5671 = vld [vmem:[%s18 + $0x20] sm:$0xf]
    %v5672 = vld [vmem:[%s18 + $0x24] sm:$0xf]
    %v5673 = vld [vmem:[%s18 + $0x28] sm:$0xf]
    %v5674 = vld [vmem:[%s18 + $0x2c] sm:$0xf]
    %v5675 = vpack.c.bf16 %v5660, %v5659
    %v5676 = vpack.c.bf16 %v5662, %v5661
    %v5689 = vunpack.c.l.b16 %v5663
    %v5690 = vunpack.c.l.b16 %v5664
    %v5691 = vunpack.c.l.b16 %v5665
    %v5692 = vunpack.c.l.b16 %v5666
    %v5693 = vunpack.c.l.b16 %v5667
    %v5694 = vunpack.c.l.b16 %v5668
    %v5695 = vunpack.c.l.b16 %v5669
    %v5696 = vunpack.c.l.b16 %v5670
    %v5697 = vunpack.c.l.b16 %v5671
    %v5698 = vunpack.c.l.b16 %v5672
    %v5699 = vunpack.c.l.b16 %v5673
    %v5700 = vunpack.c.l.b16 %v5674
    %v5701 = vpack.c.b16 %v5690, %v5689
    %v5702 = vpack.c.b16 %v5692, %v5691
    %v5703 = vpack.c.b16 %v5694, %v5693
    %v5704 = vpack.c.b16 %v5696, %v5695
    %v5705 = vpack.c.b16 %v5698, %v5697
    %v5706 = vpack.c.b16 %v5700, %v5699
    %v5708 = vsel %vm5064, %v5701, 0
    %v5711 = vsel %vm5064, %v5702, 0
    %v5714 = vsel %vm5064, %v5703, 0
    %v5717 = vsel %vm5064, %v5704, 0
    %v5720 = vsel %vm5064, %v5705, 0
    %v5723 = vsel %vm5064, %v5706, 0
    %5725 = vmatprep.subr.bf16.mxu0 0
    %5726 = vmatpush1.bf16.msra.mxu0 %v5675
    %5727 = vmatprep.subr.bf16.mxu0 0
    %5728 = vmatpush1.bf16.msra.mxu0 %v5676
    %5729 = vmatprep.subr.bf16.mxu0 0
    %5730 = vmatpush1.bf16.msra.mxu0 0
    %5731 = vmatprep.subr.bf16.mxu0 0
    %5732 = vmatpush1.bf16.msra.mxu0 0
    %5733 = vmatprep.subr.bf16.mxu0 0
    %5734 = vmatpush1.bf16.msra.mxu0 0
    %5735 = vmatprep.subr.bf16.mxu0 0
    %5736 = vmatpush1.bf16.msra.mxu0 0
    %5737 = vmatprep.subr.bf16.mxu0 0
    %5738 = vmatpush1.bf16.msra.mxu0 0
    %5739 = vmatprep.subr.bf16.mxu0 0
    %5740 = vmatpush1.bf16.msra.mxu0 0
    %5741 = vmatprep.subr.bf16.mxu0 0
    %5742 = vmatpush1.bf16.msra.mxu0 0
    %5743 = vmatprep.subr.bf16.mxu0 0
    %5744 = vmatpush1.bf16.msra.mxu0 0
    %5745 = vmatprep.subr.bf16.mxu0 0
    %5746 = vmatpush1.bf16.msra.mxu0 0
    %5747 = vmatprep.subr.bf16.mxu0 0
    %5748 = vmatpush1.bf16.msra.mxu0 0
    %5749 = vmatprep.subr.bf16.mxu0 0
    %5750 = vmatpush1.bf16.msra.mxu0 0
    %5751 = vmatprep.subr.bf16.mxu0 0
    %5752 = vmatpush1.bf16.msra.mxu0 0
    %5753 = vmatprep.subr.bf16.mxu0 0
    %5754 = vmatpush1.bf16.msra.mxu0 0
    %5755 = vmatprep.subr.bf16.mxu0 0
    %5756 = vmatpush1.bf16.msra.mxu0 0
    %5757 = vmatprep.mubr.bf16.mxu0 0
    %5758 = vmatmul.mubr.bf16.gmra.mrb[0].mxu0 %v5708
    %v5759 = vpop.f32.mrb[0].mxu0
    %v5760 = vadd.f32 0.0, %v5759
    %v5761 = vpop.f32.mrb[0].mxu0
    %v5762 = vpop.f32.mrb[0].mxu0
    %v5763 = vadd.f32 0.0, %v5762
    %v5764 = vpop.f32.mrb[0].mxu0
    %5765 = vmatprep.mubr.bf16.mxu0 0
    %5766 = vmatmul.mubr.bf16.gmra.mrb[0].mxu0 %v5711
    %v5767 = vpop.f32.mrb[0].mxu0
    %v5768 = vadd.f32 0.0, %v5767
    %v5769 = vpop.f32.mrb[0].mxu0
    %v5770 = vpop.f32.mrb[0].mxu0
    %v5771 = vadd.f32 0.0, %v5770
    %v5772 = vpop.f32.mrb[0].mxu0
    %5773 = vmatprep.mubr.bf16.mxu0 0
    %5774 = vmatmul.mubr.bf16.gmra.mrb[0].mxu0 %v5714
    %v5775 = vpop.f32.mrb[0].mxu0
    %v5776 = vadd.f32 0.0, %v5775
    %v5777 = vpop.f32.mrb[0].mxu0
    %v5778 = vpop.f32.mrb[0].mxu0
    %v5779 = vadd.f32 0.0, %v5778
    %v5780 = vpop.f32.mrb[0].mxu0
    %5781 = vmatprep.mubr.bf16.mxu0 0
    %5782 = vmatmul.mubr.bf16.gmra.mrb[0].mxu0 %v5717
    %v5783 = vpop.f32.mrb[0].mxu0
    %v5784 = vadd.f32 0.0, %v5783
    %v5785 = vpop.f32.mrb[0].mxu0
    %v5786 = vpop.f32.mrb[0].mxu0
    %v5787 = vadd.f32 0.0, %v5786
    %v5788 = vpop.f32.mrb[0].mxu0
    %5789 = vmatprep.mubr.bf16.mxu0 0
    %5790 = vmatmul.mubr.bf16.gmra.mrb[0].mxu0 %v5720
    %v5791 = vpop.f32.mrb[0].mxu0
    %v5792 = vadd.f32 0.0, %v5791
    %v5793 = vpop.f32.mrb[0].mxu0
    %v5794 = vpop.f32.mrb[0].mxu0
    %v5795 = vadd.f32 0.0, %v5794
    %v5796 = vpop.f32.mrb[0].mxu0
    %5797 = vmatprep.mubr.bf16.mxu0 0
    %5798 = vmatmul.mubr.bf16.gmra.mrb[0].mxu0 %v5723
    %v5799 = vpop.f32.mrb[0].mxu0
    %v5800 = vadd.f32 0.0, %v5799
    %v5801 = vpop.f32.mrb[0].mxu0
    %v5802 = vpop.f32.mrb[0].mxu0
    %v5803 = vadd.f32 0.0, %v5802
    %v5804 = vpop.f32.mrb[0].mxu0
    %5805 = vdwg.mxu0
    %s5806 = scalar_lea.vmem [#allocation8], 64
    %v5807 = vld [vmem:[%s5806] sm:$0xff]
    %v5808 = vlaneseq
    %v5809 = vshrl.u32 %v5808, 7
    %v5810 = vsub.s32 0, %v5809
    %v5811 = vrot.slane %v5807, %v5810
    %v5812 = vmul.f32 %v5811, %v5760
    %v5813 = vmul.f32 %v5811, %v5763
    %v5814 = vmul.f32 %v5811, %v5768
    %v5815 = vmul.f32 %v5811, %v5771
    %v5816 = vlaneseq
    %v5817 = vshrl.u32 %v5816, 7
    %v5818 = vsub.s32 1, %v5817
    %v5819 = vrot.slane %v5807, %v5818
    %v5820 = vmul.f32 %v5819, %v5776
    %v5821 = vmul.f32 %v5819, %v5779
    %v5822 = vmul.f32 %v5819, %v5784
    %v5823 = vmul.f32 %v5819, %v5787
    %v5824 = vadd.f32 %v5812, %v5820
    %v5825 = vadd.f32 %v5813, %v5821
    %v5826 = vadd.f32 %v5814, %v5822
    %v5827 = vadd.f32 %v5815, %v5823
    %v5828 = vlaneseq
    %v5829 = vshrl.u32 %v5828, 7
    %v5830 = vsub.s32 2, %v5829
    %v5831 = vrot.slane %v5807, %v5830
    %v5832 = vmul.f32 %v5831, %v5792
    %v5833 = vmul.f32 %v5831, %v5795
    %v5834 = vmul.f32 %v5831, %v5800
    %v5835 = vmul.f32 %v5831, %v5803
    %v5836 = vadd.f32 %v5824, %v5832
    %v5837 = vadd.f32 %v5825, %v5833
    %v5838 = vadd.f32 %v5826, %v5834
    %v5839 = vadd.f32 %v5827, %v5835
    %s5840 = scalar_lea.vmem [#allocation10], 8
    %v5841 = vld [vmem:[%s5840] sm:$0x1]
    %v5843 = vlaneseq
    %v5844 = vshrl.u32 %v5843, 7
    %v5845 = vsub.s32 0, %v5844
    %v5846 = vrot.slane %v5841, %v5845
    %v5848 = vadd.f32 %v5836, %v5846
    %v5849 = vadd.f32 %v5837, %v5846
    %v5850 = vadd.f32 %v5838, %v5846
    %v5851 = vadd.f32 %v5839, %v5846
    %v5852 = vmax.f32 %v5848, 0.0
    %v5853 = vmax.f32 %v5849, 0.0
    %v5854 = vmax.f32 %v5850, 0.0
    %v5855 = vmax.f32 %v5851, 0.0
    %v5856 = vpack.c.bf16 %v5853, %v5852
    %v5857 = vpack.c.bf16 %v5855, %v5854
    %s5858 = scalar_lea.vmem [#allocation11], 512
    %v5859 = vld [vmem:[%s5858] sm:$0xf]
    %v5860 = vld [vmem:[%s5858 + $0x4] sm:$0xf]
    %v5861 = vld [vmem:[%s5858 + $0x8] sm:$0xf]
    %v5862 = vld [vmem:[%s5858 + $0xc] sm:$0xf]
    %v5863 = vld [vmem:[%s5858 + $0x10] sm:$0xf]
    %v5864 = vld [vmem:[%s5858 + $0x14] sm:$0xf]
    %v5865 = vld [vmem:[%s5858 + $0x18] sm:$0xf]
    %v5866 = vld [vmem:[%s5858 + $0x1c] sm:$0xf]
    %v5867 = vld [vmem:[%s5858 + $0x20] sm:$0xf]
    %v5868 = vld [vmem:[%s5858 + $0x24] sm:$0xf]
    %v5869 = vld [vmem:[%s5858 + $0x28] sm:$0xf]
    %v5870 = vld [vmem:[%s5858 + $0x2c] sm:$0xf]
    %v5871 = vld [vmem:[%s5858 + $0x30] sm:$0xf]
    %v5872 = vld [vmem:[%s5858 + $0x34] sm:$0xf]
    %v5873 = vld [vmem:[%s5858 + $0x38] sm:$0xf]
    %v5874 = vld [vmem:[%s5858 + $0x3c] sm:$0xf]
    %s5875 = scalar_lea.vmem [#allocation13], 8
    %v5876 = vld [vmem:[%s5875] sm:$0x1]
    %v5878 = vlaneseq
    %v5879 = vshrl.u32 %v5878, 7
    %v5880 = vsub.s32 0, %v5879
    %v5881 = vrot.slane %v5876, %v5880
    %v5899 = vunpack.c.l.b16 %v5859
    %v5900 = vunpack.c.l.b16 %v5860
    %v5901 = vunpack.c.l.b16 %v5861
    %v5902 = vunpack.c.l.b16 %v5862
    %v5903 = vunpack.c.l.b16 %v5863
    %v5904 = vunpack.c.l.b16 %v5864
    %v5905 = vunpack.c.l.b16 %v5865
    %v5906 = vunpack.c.l.b16 %v5866
    %v5907 = vunpack.c.l.b16 %v5867
    %v5908 = vunpack.c.l.b16 %v5868
    %v5909 = vunpack.c.l.b16 %v5869
    %v5910 = vunpack.c.l.b16 %v5870
    %v5911 = vunpack.c.l.b16 %v5871
    %v5912 = vunpack.c.l.b16 %v5872
    %v5913 = vunpack.c.l.b16 %v5873
    %v5914 = vunpack.c.l.b16 %v5874
    %v5915 = vpack.c.b16 %v5900, %v5899
    %v5916 = vpack.c.b16 %v5902, %v5901
    %v5917 = vpack.c.b16 %v5904, %v5903
    %v5918 = vpack.c.b16 %v5906, %v5905
    %v5919 = vpack.c.b16 %v5908, %v5907
    %v5920 = vpack.c.b16 %v5910, %v5909
    %v5921 = vpack.c.b16 %v5912, %v5911
    %v5922 = vpack.c.b16 %v5914, %v5913
    %5931 = vmatprep.subr.bf16.mxu0 0
    %5932 = vmatpush1.bf16.msra.mxu0 %v5915
    %5933 = vmatprep.subr.bf16.mxu0 0
    %5934 = vmatpush1.bf16.msra.mxu0 %v5916
    %5935 = vmatprep.subr.bf16.mxu0 0
    %5936 = vmatpush1.bf16.msra.mxu0 %v5917
    %5937 = vmatprep.subr.bf16.mxu0 0
    %5938 = vmatpush1.bf16.msra.mxu0 %v5918
    %5939 = vmatprep.subr.bf16.mxu0 0
    %5940 = vmatpush1.bf16.msra.mxu0 %v5919
    %5941 = vmatprep.subr.bf16.mxu0 0
    %5942 = vmatpush1.bf16.msra.mxu0 %v5920
    %5943 = vmatprep.subr.bf16.mxu0 0
    %5944 = vmatpush1.bf16.msra.mxu0 %v5921
    %5945 = vmatprep.subr.bf16.mxu0 0
    %5946 = vmatpush1.bf16.msra.mxu0 %v5922
    %5947 = vmatprep.subr.bf16.mxu0 0
    %5948 = vmatpush1.bf16.msra.mxu0 0
    %5949 = vmatprep.subr.bf16.mxu0 0
    %5950 = vmatpush1.bf16.msra.mxu0 0
    %5951 = vmatprep.subr.bf16.mxu0 0
    %5952 = vmatpush1.bf16.msra.mxu0 0
    %5953 = vmatprep.subr.bf16.mxu0 0
    %5954 = vmatpush1.bf16.msra.mxu0 0
    %5955 = vmatprep.subr.bf16.mxu0 0
    %5956 = vmatpush1.bf16.msra.mxu0 0
    %5957 = vmatprep.subr.bf16.mxu0 0
    %5958 = vmatpush1.bf16.msra.mxu0 0
    %5959 = vmatprep.subr.bf16.mxu0 0
    %5960 = vmatpush1.bf16.msra.mxu0 0
    %5961 = vmatprep.subr.bf16.mxu0 0
    %5962 = vmatpush1.bf16.msra.mxu0 0
    %5963 = vmatprep.mubr.bf16.mxu0 0
    %5964 = vmatmul.mubr.bf16.gmra.mrb[0].mxu0 %v5856
    %v5965 = vpop.f32.mrb[0].mxu0
    %v5966 = vadd.f32 %v5881, %v5965
    %v5967 = vpop.f32.mrb[0].mxu0
    %v5968 = vpop.f32.mrb[0].mxu0
    %v5969 = vadd.f32 %v5881, %v5968
    %v5970 = vpop.f32.mrb[0].mxu0
    %5971 = vmatprep.mubr.bf16.mxu0 0
    %5972 = vmatmul.mubr.bf16.gmra.mrb[0].mxu0 %v5857
    %v5973 = vpop.f32.mrb[0].mxu0
    %v5974 = vadd.f32 %v5881, %v5973
    %v5975 = vpop.f32.mrb[0].mxu0
    %v5976 = vpop.f32.mrb[0].mxu0
    %v5977 = vadd.f32 %v5881, %v5976
    %v5978 = vpop.f32.mrb[0].mxu0
    %5979 = vdwg.mxu0
    %v5980 = vmax.f32 %v5966, 0.0
    %v5981 = vmax.f32 %v5969, 0.0
    %v5982 = vmax.f32 %v5974, 0.0
    %v5983 = vmax.f32 %v5977, 0.0
    %v5984 = vld [vmem:[%s19] sm:$0xf]
    %v5985 = vld [vmem:[%s19 + $0x4] sm:$0xf]
    %v5986 = vld [vmem:[%s19 + $0x8] sm:$0xf]
    %v5987 = vld [vmem:[%s19 + $0xc] sm:$0xf]
    %v5988 = vld [vmem:[%s19 + $0x10] sm:$0xf]
    %v5989 = vld [vmem:[%s19 + $0x14] sm:$0xf]
    %v5990 = vld [vmem:[%s19 + $0x18] sm:$0xf]
    %v5991 = vld [vmem:[%s19 + $0x1c] sm:$0xf]
    %v5992 = vld [vmem:[%s19 + $0x20] sm:$0xf]
    %v5993 = vld [vmem:[%s19 + $0x24] sm:$0xf]
    %v5994 = vld [vmem:[%s19 + $0x28] sm:$0xf]
    %v5995 = vld [vmem:[%s19 + $0x2c] sm:$0xf]
    %v5996 = vpack.c.bf16 %v5981, %v5980
    %v5997 = vpack.c.bf16 %v5983, %v5982
    %v6010 = vunpack.c.l.b16 %v5984
    %v6011 = vunpack.c.l.b16 %v5985
    %v6012 = vunpack.c.l.b16 %v5986
    %v6013 = vunpack.c.l.b16 %v5987
    %v6014 = vunpack.c.l.b16 %v5988
    %v6015 = vunpack.c.l.b16 %v5989
    %v6016 = vunpack.c.l.b16 %v5990
    %v6017 = vunpack.c.l.b16 %v5991
    %v6018 = vunpack.c.l.b16 %v5992
    %v6019 = vunpack.c.l.b16 %v5993
    %v6020 = vunpack.c.l.b16 %v5994
    %v6021 = vunpack.c.l.b16 %v5995
    %v6022 = vpack.c.b16 %v6011, %v6010
    %v6023 = vpack.c.b16 %v6013, %v6012
    %v6024 = vpack.c.b16 %v6015, %v6014
    %v6025 = vpack.c.b16 %v6017, %v6016
    %v6026 = vpack.c.b16 %v6019, %v6018
    %v6027 = vpack.c.b16 %v6021, %v6020
    %v6029 = vsel %vm5064, %v6022, 0
    %v6032 = vsel %vm5064, %v6023, 0
    %v6035 = vsel %vm5064, %v6024, 0
    %v6038 = vsel %vm5064, %v6025, 0
    %v6041 = vsel %vm5064, %v6026, 0
    %v6044 = vsel %vm5064, %v6027, 0
    %6046 = vmatprep.subr.bf16.mxu0 0
    %6047 = vmatpush1.bf16.msra.mxu0 %v5996
    %6048 = vmatprep.subr.bf16.mxu0 0
    %6049 = vmatpush1.bf16.msra.mxu0 %v5997
    %6050 = vmatprep.subr.bf16.mxu0 0
    %6051 = vmatpush1.bf16.msra.mxu0 0
    %6052 = vmatprep.subr.bf16.mxu0 0
    %6053 = vmatpush1.bf16.msra.mxu0 0
    %6054 = vmatprep.subr.bf16.mxu0 0
    %6055 = vmatpush1.bf16.msra.mxu0 0
    %6056 = vmatprep.subr.bf16.mxu0 0
    %6057 = vmatpush1.bf16.msra.mxu0 0
    %6058 = vmatprep.subr.bf16.mxu0 0
    %6059 = vmatpush1.bf16.msra.mxu0 0
    %6060 = vmatprep.subr.bf16.mxu0 0
    %6061 = vmatpush1.bf16.msra.mxu0 0
    %6062 = vmatprep.subr.bf16.mxu0 0
    %6063 = vmatpush1.bf16.msra.mxu0 0
    %6064 = vmatprep.subr.bf16.mxu0 0
    %6065 = vmatpush1.bf16.msra.mxu0 0
    %6066 = vmatprep.subr.bf16.mxu0 0
    %6067 = vmatpush1.bf16.msra.mxu0 0
    %6068 = vmatprep.subr.bf16.mxu0 0
    %6069 = vmatpush1.bf16.msra.mxu0 0
    %6070 = vmatprep.subr.bf16.mxu0 0
    %6071 = vmatpush1.bf16.msra.mxu0 0
    %6072 = vmatprep.subr.bf16.mxu0 0
    %6073 = vmatpush1.bf16.msra.mxu0 0
    %6074 = vmatprep.subr.bf16.mxu0 0
    %6075 = vmatpush1.bf16.msra.mxu0 0
    %6076 = vmatprep.subr.bf16.mxu0 0
    %6077 = vmatpush1.bf16.msra.mxu0 0
    %6078 = vmatprep.mubr.bf16.mxu0 0
    %6079 = vmatmul.mubr.bf16.gmra.mrb[0].mxu0 %v6029
    %v6080 = vpop.f32.mrb[0].mxu0
    %v6081 = vadd.f32 0.0, %v6080
    %v6082 = vpop.f32.mrb[0].mxu0
    %v6083 = vpop.f32.mrb[0].mxu0
    %v6084 = vadd.f32 0.0, %v6083
    %v6085 = vpop.f32.mrb[0].mxu0
    %6086 = vmatprep.mubr.bf16.mxu0 0
    %6087 = vmatmul.mubr.bf16.gmra.mrb[0].mxu0 %v6032
    %v6088 = vpop.f32.mrb[0].mxu0
    %v6089 = vadd.f32 0.0, %v6088
    %v6090 = vpop.f32.mrb[0].mxu0
    %v6091 = vpop.f32.mrb[0].mxu0
    %v6092 = vadd.f32 0.0, %v6091
    %v6093 = vpop.f32.mrb[0].mxu0
    %6094 = vmatprep.mubr.bf16.mxu0 0
    %6095 = vmatmul.mubr.bf16.gmra.mrb[0].mxu0 %v6035
    %v6096 = vpop.f32.mrb[0].mxu0
    %v6097 = vadd.f32 0.0, %v6096
    %v6098 = vpop.f32.mrb[0].mxu0
    %v6099 = vpop.f32.mrb[0].mxu0
    %v6100 = vadd.f32 0.0, %v6099
    %v6101 = vpop.f32.mrb[0].mxu0
    %6102 = vmatprep.mubr.bf16.mxu0 0
    %6103 = vmatmul.mubr.bf16.gmra.mrb[0].mxu0 %v6038
    %v6104 = vpop.f32.mrb[0].mxu0
    %v6105 = vadd.f32 0.0, %v6104
    %v6106 = vpop.f32.mrb[0].mxu0
    %v6107 = vpop.f32.mrb[0].mxu0
    %v6108 = vadd.f32 0.0, %v6107
    %v6109 = vpop.f32.mrb[0].mxu0
    %6110 = vmatprep.mubr.bf16.mxu0 0
    %6111 = vmatmul.mubr.bf16.gmra.mrb[0].mxu0 %v6041
    %v6112 = vpop.f32.mrb[0].mxu0
    %v6113 = vadd.f32 0.0, %v6112
    %v6114 = vpop.f32.mrb[0].mxu0
    %v6115 = vpop.f32.mrb[0].mxu0
    %v6116 = vadd.f32 0.0, %v6115
    %v6117 = vpop.f32.mrb[0].mxu0
    %6118 = vmatprep.mubr.bf16.mxu0 0
    %6119 = vmatmul.mubr.bf16.gmra.mrb[0].mxu0 %v6044
    %v6120 = vpop.f32.mrb[0].mxu0
    %v6121 = vadd.f32 0.0, %v6120
    %v6122 = vpop.f32.mrb[0].mxu0
    %v6123 = vpop.f32.mrb[0].mxu0
    %v6124 = vadd.f32 0.0, %v6123
    %v6125 = vpop.f32.mrb[0].mxu0
    %6126 = vdwg.mxu0
    %s6127 = scalar_lea.vmem [#allocation8], 72
    %v6128 = vld [vmem:[%s6127] sm:$0xff]
    %v6129 = vlaneseq
    %v6130 = vshrl.u32 %v6129, 7
    %v6131 = vsub.s32 0, %v6130
    %v6132 = vrot.slane %v6128, %v6131
    %v6133 = vmul.f32 %v6132, %v6081
    %v6134 = vmul.f32 %v6132, %v6084
    %v6135 = vmul.f32 %v6132, %v6089
    %v6136 = vmul.f32 %v6132, %v6092
    %v6137 = vlaneseq
    %v6138 = vshrl.u32 %v6137, 7
    %v6139 = vsub.s32 1, %v6138
    %v6140 = vrot.slane %v6128, %v6139
    %v6141 = vmul.f32 %v6140, %v6097
    %v6142 = vmul.f32 %v6140, %v6100
    %v6143 = vmul.f32 %v6140, %v6105
    %v6144 = vmul.f32 %v6140, %v6108
    %v6145 = vadd.f32 %v6133, %v6141
    %v6146 = vadd.f32 %v6134, %v6142
    %v6147 = vadd.f32 %v6135, %v6143
    %v6148 = vadd.f32 %v6136, %v6144
    %v6149 = vlaneseq
    %v6150 = vshrl.u32 %v6149, 7
    %v6151 = vsub.s32 2, %v6150
    %v6152 = vrot.slane %v6128, %v6151
    %v6153 = vmul.f32 %v6152, %v6113
    %v6154 = vmul.f32 %v6152, %v6116
    %v6155 = vmul.f32 %v6152, %v6121
    %v6156 = vmul.f32 %v6152, %v6124
    %v6157 = vadd.f32 %v6145, %v6153
    %v6158 = vadd.f32 %v6146, %v6154
    %v6159 = vadd.f32 %v6147, %v6155
    %v6160 = vadd.f32 %v6148, %v6156
    %s6161 = scalar_lea.vmem [#allocation10], 9
    %v6162 = vld [vmem:[%s6161] sm:$0x1]
    %v6164 = vlaneseq
    %v6165 = vshrl.u32 %v6164, 7
    %v6166 = vsub.s32 0, %v6165
    %v6167 = vrot.slane %v6162, %v6166
    %v6169 = vadd.f32 %v6157, %v6167
    %v6170 = vadd.f32 %v6158, %v6167
    %v6171 = vadd.f32 %v6159, %v6167
    %v6172 = vadd.f32 %v6160, %v6167
    %v6173 = vmax.f32 %v6169, 0.0
    %v6174 = vmax.f32 %v6170, 0.0
    %v6175 = vmax.f32 %v6171, 0.0
    %v6176 = vmax.f32 %v6172, 0.0
    %v6177 = vpack.c.bf16 %v6174, %v6173
    %v6178 = vpack.c.bf16 %v6176, %v6175
    %s6179 = scalar_lea.vmem [#allocation11], 576
    %v6180 = vld [vmem:[%s6179] sm:$0xf]
    %v6181 = vld [vmem:[%s6179 + $0x4] sm:$0xf]
    %v6182 = vld [vmem:[%s6179 + $0x8] sm:$0xf]
    %v6183 = vld [vmem:[%s6179 + $0xc] sm:$0xf]
    %v6184 = vld [vmem:[%s6179 + $0x10] sm:$0xf]
    %v6185 = vld [vmem:[%s6179 + $0x14] sm:$0xf]
    %v6186 = vld [vmem:[%s6179 + $0x18] sm:$0xf]
    %v6187 = vld [vmem:[%s6179 + $0x1c] sm:$0xf]
    %v6188 = vld [vmem:[%s6179 + $0x20] sm:$0xf]
    %v6189 = vld [vmem:[%s6179 + $0x24] sm:$0xf]
    %v6190 = vld [vmem:[%s6179 + $0x28] sm:$0xf]
    %v6191 = vld [vmem:[%s6179 + $0x2c] sm:$0xf]
    %v6192 = vld [vmem:[%s6179 + $0x30] sm:$0xf]
    %v6193 = vld [vmem:[%s6179 + $0x34] sm:$0xf]
    %v6194 = vld [vmem:[%s6179 + $0x38] sm:$0xf]
    %v6195 = vld [vmem:[%s6179 + $0x3c] sm:$0xf]
    %s6196 = scalar_lea.vmem [#allocation13], 9
    %v6197 = vld [vmem:[%s6196] sm:$0x1]
    %v6199 = vlaneseq
    %v6200 = vshrl.u32 %v6199, 7
    %v6201 = vsub.s32 0, %v6200
    %v6202 = vrot.slane %v6197, %v6201
    %v6220 = vunpack.c.l.b16 %v6180
    %v6221 = vunpack.c.l.b16 %v6181
    %v6222 = vunpack.c.l.b16 %v6182
    %v6223 = vunpack.c.l.b16 %v6183
    %v6224 = vunpack.c.l.b16 %v6184
    %v6225 = vunpack.c.l.b16 %v6185
    %v6226 = vunpack.c.l.b16 %v6186
    %v6227 = vunpack.c.l.b16 %v6187
    %v6228 = vunpack.c.l.b16 %v6188
    %v6229 = vunpack.c.l.b16 %v6189
    %v6230 = vunpack.c.l.b16 %v6190
    %v6231 = vunpack.c.l.b16 %v6191
    %v6232 = vunpack.c.l.b16 %v6192
    %v6233 = vunpack.c.l.b16 %v6193
    %v6234 = vunpack.c.l.b16 %v6194
    %v6235 = vunpack.c.l.b16 %v6195
    %v6236 = vpack.c.b16 %v6221, %v6220
    %v6237 = vpack.c.b16 %v6223, %v6222
    %v6238 = vpack.c.b16 %v6225, %v6224
    %v6239 = vpack.c.b16 %v6227, %v6226
    %v6240 = vpack.c.b16 %v6229, %v6228
    %v6241 = vpack.c.b16 %v6231, %v6230
    %v6242 = vpack.c.b16 %v6233, %v6232
    %v6243 = vpack.c.b16 %v6235, %v6234
    %6252 = vmatprep.subr.bf16.mxu0 0
    %6253 = vmatpush1.bf16.msra.mxu0 %v6236
    %6254 = vmatprep.subr.bf16.mxu0 0
    %6255 = vmatpush1.bf16.msra.mxu0 %v6237
    %6256 = vmatprep.subr.bf16.mxu0 0
    %6257 = vmatpush1.bf16.msra.mxu0 %v6238
    %6258 = vmatprep.subr.bf16.mxu0 0
    %6259 = vmatpush1.bf16.msra.mxu0 %v6239
    %6260 = vmatprep.subr.bf16.mxu0 0
    %6261 = vmatpush1.bf16.msra.mxu0 %v6240
    %6262 = vmatprep.subr.bf16.mxu0 0
    %6263 = vmatpush1.bf16.msra.mxu0 %v6241
    %6264 = vmatprep.subr.bf16.mxu0 0
    %6265 = vmatpush1.bf16.msra.mxu0 %v6242
    %6266 = vmatprep.subr.bf16.mxu0 0
    %6267 = vmatpush1.bf16.msra.mxu0 %v6243
    %6268 = vmatprep.subr.bf16.mxu0 0
    %6269 = vmatpush1.bf16.msra.mxu0 0
    %6270 = vmatprep.subr.bf16.mxu0 0
    %6271 = vmatpush1.bf16.msra.mxu0 0
    %6272 = vmatprep.subr.bf16.mxu0 0
    %6273 = vmatpush1.bf16.msra.mxu0 0
    %6274 = vmatprep.subr.bf16.mxu0 0
    %6275 = vmatpush1.bf16.msra.mxu0 0
    %6276 = vmatprep.subr.bf16.mxu0 0
    %6277 = vmatpush1.bf16.msra.mxu0 0
    %6278 = vmatprep.subr.bf16.mxu0 0
    %6279 = vmatpush1.bf16.msra.mxu0 0
    %6280 = vmatprep.subr.bf16.mxu0 0
    %6281 = vmatpush1.bf16.msra.mxu0 0
    %6282 = vmatprep.subr.bf16.mxu0 0
    %6283 = vmatpush1.bf16.msra.mxu0 0
    %6284 = vmatprep.mubr.bf16.mxu0 0
    %6285 = vmatmul.mubr.bf16.gmra.mrb[0].mxu0 %v6177
    %v6286 = vpop.f32.mrb[0].mxu0
    %v6287 = vadd.f32 %v6202, %v6286
    %v6288 = vpop.f32.mrb[0].mxu0
    %v6289 = vpop.f32.mrb[0].mxu0
    %v6290 = vadd.f32 %v6202, %v6289
    %v6291 = vpop.f32.mrb[0].mxu0
    %6292 = vmatprep.mubr.bf16.mxu0 0
    %6293 = vmatmul.mubr.bf16.gmra.mrb[0].mxu0 %v6178
    %v6294 = vpop.f32.mrb[0].mxu0
    %v6295 = vadd.f32 %v6202, %v6294
    %v6296 = vpop.f32.mrb[0].mxu0
    %v6297 = vpop.f32.mrb[0].mxu0
    %v6298 = vadd.f32 %v6202, %v6297
    %v6299 = vpop.f32.mrb[0].mxu0
    %6300 = vdwg.mxu0
    %v6301 = vmax.f32 %v6287, 0.0
    %v6302 = vmax.f32 %v6290, 0.0
    %v6303 = vmax.f32 %v6295, 0.0
    %v6304 = vmax.f32 %v6298, 0.0
    %v6305 = vld [vmem:[%s20] sm:$0xf]
    %v6306 = vld [vmem:[%s20 + $0x4] sm:$0xf]
    %v6307 = vld [vmem:[%s20 + $0x8] sm:$0xf]
    %v6308 = vld [vmem:[%s20 + $0xc] sm:$0xf]
    %v6309 = vld [vmem:[%s20 + $0x10] sm:$0xf]
    %v6310 = vld [vmem:[%s20 + $0x14] sm:$0xf]
    %v6311 = vld [vmem:[%s20 + $0x18] sm:$0xf]
    %v6312 = vld [vmem:[%s20 + $0x1c] sm:$0xf]
    %v6313 = vld [vmem:[%s20 + $0x20] sm:$0xf]
    %v6314 = vld [vmem:[%s20 + $0x24] sm:$0xf]
    %v6315 = vld [vmem:[%s20 + $0x28] sm:$0xf]
    %v6316 = vld [vmem:[%s20 + $0x2c] sm:$0xf]
    %v6317 = vpack.c.bf16 %v6302, %v6301
    %v6318 = vpack.c.bf16 %v6304, %v6303
    %v6331 = vunpack.c.l.b16 %v6305
    %v6332 = vunpack.c.l.b16 %v6306
    %v6333 = vunpack.c.l.b16 %v6307
    %v6334 = vunpack.c.l.b16 %v6308
    %v6335 = vunpack.c.l.b16 %v6309
    %v6336 = vunpack.c.l.b16 %v6310
    %v6337 = vunpack.c.l.b16 %v6311
    %v6338 = vunpack.c.l.b16 %v6312
    %v6339 = vunpack.c.l.b16 %v6313
    %v6340 = vunpack.c.l.b16 %v6314
    %v6341 = vunpack.c.l.b16 %v6315
    %v6342 = vunpack.c.l.b16 %v6316
    %v6343 = vpack.c.b16 %v6332, %v6331
    %v6344 = vpack.c.b16 %v6334, %v6333
    %v6345 = vpack.c.b16 %v6336, %v6335
    %v6346 = vpack.c.b16 %v6338, %v6337
    %v6347 = vpack.c.b16 %v6340, %v6339
    %v6348 = vpack.c.b16 %v6342, %v6341
    %v6350 = vsel %vm5064, %v6343, 0
    %v6353 = vsel %vm5064, %v6344, 0
    %v6356 = vsel %vm5064, %v6345, 0
    %v6359 = vsel %vm5064, %v6346, 0
    %v6362 = vsel %vm5064, %v6347, 0
    %v6365 = vsel %vm5064, %v6348, 0
    %6367 = vmatprep.subr.bf16.mxu0 0
    %6368 = vmatpush1.bf16.msra.mxu0 %v6317
    %6369 = vmatprep.subr.bf16.mxu0 0
    %6370 = vmatpush1.bf16.msra.mxu0 %v6318
    %6371 = vmatprep.subr.bf16.mxu0 0
    %6372 = vmatpush1.bf16.msra.mxu0 0
    %6373 = vmatprep.subr.bf16.mxu0 0
    %6374 = vmatpush1.bf16.msra.mxu0 0
    %6375 = vmatprep.subr.bf16.mxu0 0
    %6376 = vmatpush1.bf16.msra.mxu0 0
    %6377 = vmatprep.subr.bf16.mxu0 0
    %6378 = vmatpush1.bf16.msra.mxu0 0
    %6379 = vmatprep.subr.bf16.mxu0 0
    %6380 = vmatpush1.bf16.msra.mxu0 0
    %6381 = vmatprep.subr.bf16.mxu0 0
    %6382 = vmatpush1.bf16.msra.mxu0 0
    %6383 = vmatprep.subr.bf16.mxu0 0
    %6384 = vmatpush1.bf16.msra.mxu0 0
    %6385 = vmatprep.subr.bf16.mxu0 0
    %6386 = vmatpush1.bf16.msra.mxu0 0
    %6387 = vmatprep.subr.bf16.mxu0 0
    %6388 = vmatpush1.bf16.msra.mxu0 0
    %6389 = vmatprep.subr.bf16.mxu0 0
    %6390 = vmatpush1.bf16.msra.mxu0 0
    %6391 = vmatprep.subr.bf16.mxu0 0
    %6392 = vmatpush1.bf16.msra.mxu0 0
    %6393 = vmatprep.subr.bf16.mxu0 0
    %6394 = vmatpush1.bf16.msra.mxu0 0
    %6395 = vmatprep.subr.bf16.mxu0 0
    %6396 = vmatpush1.bf16.msra.mxu0 0
    %6397 = vmatprep.subr.bf16.mxu0 0
    %6398 = vmatpush1.bf16.msra.mxu0 0
    %6399 = vmatprep.mubr.bf16.mxu0 0
    %6400 = vmatmul.mubr.bf16.gmra.mrb[0].mxu0 %v6350
    %v6401 = vpop.f32.mrb[0].mxu0
    %v6402 = vadd.f32 0.0, %v6401
    %v6403 = vpop.f32.mrb[0].mxu0
    %v6404 = vpop.f32.mrb[0].mxu0
    %v6405 = vadd.f32 0.0, %v6404
    %v6406 = vpop.f32.mrb[0].mxu0
    %6407 = vmatprep.mubr.bf16.mxu0 0
    %6408 = vmatmul.mubr.bf16.gmra.mrb[0].mxu0 %v6353
    %v6409 = vpop.f32.mrb[0].mxu0
    %v6410 = vadd.f32 0.0, %v6409
    %v6411 = vpop.f32.mrb[0].mxu0
    %v6412 = vpop.f32.mrb[0].mxu0
    %v6413 = vadd.f32 0.0, %v6412
    %v6414 = vpop.f32.mrb[0].mxu0
    %6415 = vmatprep.mubr.bf16.mxu0 0
    %6416 = vmatmul.mubr.bf16.gmra.mrb[0].mxu0 %v6356
    %v6417 = vpop.f32.mrb[0].mxu0
    %v6418 = vadd.f32 0.0, %v6417
    %v6419 = vpop.f32.mrb[0].mxu0
    %v6420 = vpop.f32.mrb[0].mxu0
    %v6421 = vadd.f32 0.0, %v6420
    %v6422 = vpop.f32.mrb[0].mxu0
    %6423 = vmatprep.mubr.bf16.mxu0 0
    %6424 = vmatmul.mubr.bf16.gmra.mrb[0].mxu0 %v6359
    %v6425 = vpop.f32.mrb[0].mxu0
    %v6426 = vadd.f32 0.0, %v6425
    %v6427 = vpop.f32.mrb[0].mxu0
    %v6428 = vpop.f32.mrb[0].mxu0
    %v6429 = vadd.f32 0.0, %v6428
    %v6430 = vpop.f32.mrb[0].mxu0
    %6431 = vmatprep.mubr.bf16.mxu0 0
    %6432 = vmatmul.mubr.bf16.gmra.mrb[0].mxu0 %v6362
    %v6433 = vpop.f32.mrb[0].mxu0
    %v6434 = vadd.f32 0.0, %v6433
    %v6435 = vpop.f32.mrb[0].mxu0
    %v6436 = vpop.f32.mrb[0].mxu0
    %v6437 = vadd.f32 0.0, %v6436
    %v6438 = vpop.f32.mrb[0].mxu0
    %6439 = vmatprep.mubr.bf16.mxu0 0
    %6440 = vmatmul.mubr.bf16.gmra.mrb[0].mxu0 %v6365
    %v6441 = vpop.f32.mrb[0].mxu0
    %v6442 = vadd.f32 0.0, %v6441
    %v6443 = vpop.f32.mrb[0].mxu0
    %v6444 = vpop.f32.mrb[0].mxu0
    %v6445 = vadd.f32 0.0, %v6444
    %v6446 = vpop.f32.mrb[0].mxu0
    %6447 = vdwg.mxu0
    %s6448 = scalar_lea.vmem [#allocation8], 80
    %v6449 = vld [vmem:[%s6448] sm:$0xff]
    %v6450 = vlaneseq
    %v6451 = vshrl.u32 %v6450, 7
    %v6452 = vsub.s32 0, %v6451
    %v6453 = vrot.slane %v6449, %v6452
    %v6454 = vmul.f32 %v6453, %v6402
    %v6455 = vmul.f32 %v6453, %v6405
    %v6456 = vmul.f32 %v6453, %v6410
    %v6457 = vmul.f32 %v6453, %v6413
    %v6458 = vlaneseq
    %v6459 = vshrl.u32 %v6458, 7
    %v6460 = vsub.s32 1, %v6459
    %v6461 = vrot.slane %v6449, %v6460
    %v6462 = vmul.f32 %v6461, %v6418
    %v6463 = vmul.f32 %v6461, %v6421
    %v6464 = vmul.f32 %v6461, %v6426
    %v6465 = vmul.f32 %v6461, %v6429
    %v6466 = vadd.f32 %v6454, %v6462
    %v6467 = vadd.f32 %v6455, %v6463
    %v6468 = vadd.f32 %v6456, %v6464
    %v6469 = vadd.f32 %v6457, %v6465
    %v6470 = vlaneseq
    %v6471 = vshrl.u32 %v6470, 7
    %v6472 = vsub.s32 2, %v6471
    %v6473 = vrot.slane %v6449, %v6472
    %v6474 = vmul.f32 %v6473, %v6434
    %v6475 = vmul.f32 %v6473, %v6437
    %v6476 = vmul.f32 %v6473, %v6442
    %v6477 = vmul.f32 %v6473, %v6445
    %v6478 = vadd.f32 %v6466, %v6474
    %v6479 = vadd.f32 %v6467, %v6475
    %v6480 = vadd.f32 %v6468, %v6476
    %v6481 = vadd.f32 %v6469, %v6477
    %s6482 = scalar_lea.vmem [#allocation10], 10
    %v6483 = vld [vmem:[%s6482] sm:$0x1]
    %v6485 = vlaneseq
    %v6486 = vshrl.u32 %v6485, 7
    %v6487 = vsub.s32 0, %v6486
    %v6488 = vrot.slane %v6483, %v6487
    %v6490 = vadd.f32 %v6478, %v6488
    %v6491 = vadd.f32 %v6479, %v6488
    %v6492 = vadd.f32 %v6480, %v6488
    %v6493 = vadd.f32 %v6481, %v6488
    %v6494 = vmax.f32 %v6490, 0.0
    %v6495 = vmax.f32 %v6491, 0.0
    %v6496 = vmax.f32 %v6492, 0.0
    %v6497 = vmax.f32 %v6493, 0.0
    %v6498 = vpack.c.bf16 %v6495, %v6494
    %v6499 = vpack.c.bf16 %v6497, %v6496
    %s6500 = scalar_lea.vmem [#allocation11], 640
    %v6501 = vld [vmem:[%s6500] sm:$0xf]
    %v6502 = vld [vmem:[%s6500 + $0x4] sm:$0xf]
    %v6503 = vld [vmem:[%s6500 + $0x8] sm:$0xf]
    %v6504 = vld [vmem:[%s6500 + $0xc] sm:$0xf]
    %v6505 = vld [vmem:[%s6500 + $0x10] sm:$0xf]
    %v6506 = vld [vmem:[%s6500 + $0x14] sm:$0xf]
    %v6507 = vld [vmem:[%s6500 + $0x18] sm:$0xf]
    %v6508 = vld [vmem:[%s6500 + $0x1c] sm:$0xf]
    %v6509 = vld [vmem:[%s6500 + $0x20] sm:$0xf]
    %v6510 = vld [vmem:[%s6500 + $0x24] sm:$0xf]
    %v6511 = vld [vmem:[%s6500 + $0x28] sm:$0xf]
    %v6512 = vld [vmem:[%s6500 + $0x2c] sm:$0xf]
    %v6513 = vld [vmem:[%s6500 + $0x30] sm:$0xf]
    %v6514 = vld [vmem:[%s6500 + $0x34] sm:$0xf]
    %v6515 = vld [vmem:[%s6500 + $0x38] sm:$0xf]
    %v6516 = vld [vmem:[%s6500 + $0x3c] sm:$0xf]
    %s6517 = scalar_lea.vmem [#allocation13], 10
    %v6518 = vld [vmem:[%s6517] sm:$0x1]
    %v6520 = vlaneseq
    %v6521 = vshrl.u32 %v6520, 7
    %v6522 = vsub.s32 0, %v6521
    %v6523 = vrot.slane %v6518, %v6522
    %v6541 = vunpack.c.l.b16 %v6501
    %v6542 = vunpack.c.l.b16 %v6502
    %v6543 = vunpack.c.l.b16 %v6503
    %v6544 = vunpack.c.l.b16 %v6504
    %v6545 = vunpack.c.l.b16 %v6505
    %v6546 = vunpack.c.l.b16 %v6506
    %v6547 = vunpack.c.l.b16 %v6507
    %v6548 = vunpack.c.l.b16 %v6508
    %v6549 = vunpack.c.l.b16 %v6509
    %v6550 = vunpack.c.l.b16 %v6510
    %v6551 = vunpack.c.l.b16 %v6511
    %v6552 = vunpack.c.l.b16 %v6512
    %v6553 = vunpack.c.l.b16 %v6513
    %v6554 = vunpack.c.l.b16 %v6514
    %v6555 = vunpack.c.l.b16 %v6515
    %v6556 = vunpack.c.l.b16 %v6516
    %v6557 = vpack.c.b16 %v6542, %v6541
    %v6558 = vpack.c.b16 %v6544, %v6543
    %v6559 = vpack.c.b16 %v6546, %v6545
    %v6560 = vpack.c.b16 %v6548, %v6547
    %v6561 = vpack.c.b16 %v6550, %v6549
    %v6562 = vpack.c.b16 %v6552, %v6551
    %v6563 = vpack.c.b16 %v6554, %v6553
    %v6564 = vpack.c.b16 %v6556, %v6555
    %6573 = vmatprep.subr.bf16.mxu0 0
    %6574 = vmatpush1.bf16.msra.mxu0 %v6557
    %6575 = vmatprep.subr.bf16.mxu0 0
    %6576 = vmatpush1.bf16.msra.mxu0 %v6558
    %6577 = vmatprep.subr.bf16.mxu0 0
    %6578 = vmatpush1.bf16.msra.mxu0 %v6559
    %6579 = vmatprep.subr.bf16.mxu0 0
    %6580 = vmatpush1.bf16.msra.mxu0 %v6560
    %6581 = vmatprep.subr.bf16.mxu0 0
    %6582 = vmatpush1.bf16.msra.mxu0 %v6561
    %6583 = vmatprep.subr.bf16.mxu0 0
    %6584 = vmatpush1.bf16.msra.mxu0 %v6562
    %6585 = vmatprep.subr.bf16.mxu0 0
    %6586 = vmatpush1.bf16.msra.mxu0 %v6563
    %6587 = vmatprep.subr.bf16.mxu0 0
    %6588 = vmatpush1.bf16.msra.mxu0 %v6564
    %6589 = vmatprep.subr.bf16.mxu0 0
    %6590 = vmatpush1.bf16.msra.mxu0 0
    %6591 = vmatprep.subr.bf16.mxu0 0
    %6592 = vmatpush1.bf16.msra.mxu0 0
    %6593 = vmatprep.subr.bf16.mxu0 0
    %6594 = vmatpush1.bf16.msra.mxu0 0
    %6595 = vmatprep.subr.bf16.mxu0 0
    %6596 = vmatpush1.bf16.msra.mxu0 0
    %6597 = vmatprep.subr.bf16.mxu0 0
    %6598 = vmatpush1.bf16.msra.mxu0 0
    %6599 = vmatprep.subr.bf16.mxu0 0
    %6600 = vmatpush1.bf16.msra.mxu0 0
    %6601 = vmatprep.subr.bf16.mxu0 0
    %6602 = vmatpush1.bf16.msra.mxu0 0
    %6603 = vmatprep.subr.bf16.mxu0 0
    %6604 = vmatpush1.bf16.msra.mxu0 0
    %6605 = vmatprep.mubr.bf16.mxu0 0
    %6606 = vmatmul.mubr.bf16.gmra.mrb[0].mxu0 %v6498
    %v6607 = vpop.f32.mrb[0].mxu0
    %v6608 = vadd.f32 %v6523, %v6607
    %v6609 = vpop.f32.mrb[0].mxu0
    %v6610 = vpop.f32.mrb[0].mxu0
    %v6611 = vadd.f32 %v6523, %v6610
    %v6612 = vpop.f32.mrb[0].mxu0
    %6613 = vmatprep.mubr.bf16.mxu0 0
    %6614 = vmatmul.mubr.bf16.gmra.mrb[0].mxu0 %v6499
    %v6615 = vpop.f32.mrb[0].mxu0
    %v6616 = vadd.f32 %v6523, %v6615
    %v6617 = vpop.f32.mrb[0].mxu0
    %v6618 = vpop.f32.mrb[0].mxu0
    %v6619 = vadd.f32 %v6523, %v6618
    %v6620 = vpop.f32.mrb[0].mxu0
    %6621 = vdwg.mxu0
    %v6622 = vmax.f32 %v6608, 0.0
    %v6623 = vmax.f32 %v6611, 0.0
    %v6624 = vmax.f32 %v6616, 0.0
    %v6625 = vmax.f32 %v6619, 0.0
    %v6626 = vld [vmem:[%s21] sm:$0xf]
    %v6627 = vld [vmem:[%s21 + $0x4] sm:$0xf]
    %v6628 = vld [vmem:[%s21 + $0x8] sm:$0xf]
    %v6629 = vld [vmem:[%s21 + $0xc] sm:$0xf]
    %v6630 = vld [vmem:[%s21 + $0x10] sm:$0xf]
    %v6631 = vld [vmem:[%s21 + $0x14] sm:$0xf]
    %v6632 = vpack.c.bf16 %v6623, %v6622
    %v6633 = vpack.c.bf16 %v6625, %v6624
    %v6640 = vunpack.c.l.b16 %v6626
    %v6641 = vunpack.c.l.b16 %v6627
    %v6642 = vunpack.c.l.b16 %v6628
    %v6643 = vunpack.c.l.b16 %v6629
    %v6644 = vunpack.c.l.b16 %v6630
    %v6645 = vunpack.c.l.b16 %v6631
    %v6646 = vpack.c.b16 %v6641, %v6640
    %v6647 = vpack.c.b16 %v6643, %v6642
    %v6648 = vpack.c.b16 %v6645, %v6644
    %v6650 = vsel %vm5064, %v6646, 0
    %v6653 = vsel %vm5064, %v6647, 0
    %v6656 = vsel %vm5064, %v6648, 0
    %6658 = vmatprep.subr.bf16.mxu0 0
    %6659 = vmatpush1.bf16.msra.mxu0 %v6632
    %6660 = vmatprep.subr.bf16.mxu0 0
    %6661 = vmatpush1.bf16.msra.mxu0 %v6633
    %6662 = vmatprep.subr.bf16.mxu0 0
    %6663 = vmatpush1.bf16.msra.mxu0 0
    %6664 = vmatprep.subr.bf16.mxu0 0
    %6665 = vmatpush1.bf16.msra.mxu0 0
    %6666 = vmatprep.subr.bf16.mxu0 0
    %6667 = vmatpush1.bf16.msra.mxu0 0
    %6668 = vmatprep.subr.bf16.mxu0 0
    %6669 = vmatpush1.bf16.msra.mxu0 0
    %6670 = vmatprep.subr.bf16.mxu0 0
    %6671 = vmatpush1.bf16.msra.mxu0 0
    %6672 = vmatprep.subr.bf16.mxu0 0
    %6673 = vmatpush1.bf16.msra.mxu0 0
    %6674 = vmatprep.subr.bf16.mxu0 0
    %6675 = vmatpush1.bf16.msra.mxu0 0
    %6676 = vmatprep.subr.bf16.mxu0 0
    %6677 = vmatpush1.bf16.msra.mxu0 0
    %6678 = vmatprep.subr.bf16.mxu0 0
    %6679 = vmatpush1.bf16.msra.mxu0 0
    %6680 = vmatprep.subr.bf16.mxu0 0
    %6681 = vmatpush1.bf16.msra.mxu0 0
    %6682 = vmatprep.subr.bf16.mxu0 0
    %6683 = vmatpush1.bf16.msra.mxu0 0
    %6684 = vmatprep.subr.bf16.mxu0 0
    %6685 = vmatpush1.bf16.msra.mxu0 0
    %6686 = vmatprep.subr.bf16.mxu0 0
    %6687 = vmatpush1.bf16.msra.mxu0 0
    %6688 = vmatprep.subr.bf16.mxu0 0
    %6689 = vmatpush1.bf16.msra.mxu0 0
    %6690 = vmatprep.mubr.bf16.mxu0 0
    %6691 = vmatmul.mubr.bf16.gmra.mrb[0].mxu0 %v6650
    %v6692 = vpop.f32.mrb[0].mxu0
    %v6693 = vadd.f32 0.0, %v6692
    %v6694 = vpop.f32.mrb[0].mxu0
    %v6695 = vpop.f32.mrb[0].mxu0
    %v6696 = vadd.f32 0.0, %v6695
    %v6697 = vpop.f32.mrb[0].mxu0
    %6698 = vmatprep.mubr.bf16.mxu0 0
    %6699 = vmatmul.mubr.bf16.gmra.mrb[0].mxu0 %v6653
    %v6700 = vpop.f32.mrb[0].mxu0
    %v6701 = vadd.f32 0.0, %v6700
    %v6702 = vpop.f32.mrb[0].mxu0
    %v6703 = vpop.f32.mrb[0].mxu0
    %v6704 = vadd.f32 0.0, %v6703
    %v6705 = vpop.f32.mrb[0].mxu0
    %6706 = vmatprep.mubr.bf16.mxu0 0
    %6707 = vmatmul.mubr.bf16.gmra.mrb[0].mxu0 %v6656
    %v6708 = vpop.f32.mrb[0].mxu0
    %v6709 = vadd.f32 0.0, %v6708
    %v6710 = vpop.f32.mrb[0].mxu0
    %v6711 = vpop.f32.mrb[0].mxu0
    %v6712 = vadd.f32 0.0, %v6711
    %v6713 = vpop.f32.mrb[0].mxu0
    %6714 = vdwg.mxu0
    %s6715 = scalar_lea.vmem [#allocation8], 88
    %v6716 = vld [vmem:[%s6715] sm:$0xff]
    %v6717 = vlaneseq
    %v6718 = vshrl.u32 %v6717, 7
    %v6719 = vsub.s32 0, %v6718
    %v6720 = vrot.slane %v6716, %v6719
    %v6721 = vmul.f32 %v6720, %v6693
    %v6722 = vmul.f32 %v6720, %v6696
    %v6723 = vlaneseq
    %v6724 = vshrl.u32 %v6723, 7
    %v6725 = vsub.s32 1, %v6724
    %v6726 = vrot.slane %v6716, %v6725
    %v6727 = vmul.f32 %v6726, %v6701
    %v6728 = vmul.f32 %v6726, %v6704
    %v6729 = vadd.f32 %v6721, %v6727
    %v6730 = vadd.f32 %v6722, %v6728
    %v6731 = vlaneseq
    %v6732 = vshrl.u32 %v6731, 7
    %v6733 = vsub.s32 2, %v6732
    %v6734 = vrot.slane %v6716, %v6733
    %v6735 = vmul.f32 %v6734, %v6709
    %v6736 = vmul.f32 %v6734, %v6712
    %v6737 = vadd.f32 %v6729, %v6735
    %v6738 = vadd.f32 %v6730, %v6736
    %s6739 = scalar_lea.vmem [#allocation10], 11
    %v6740 = vld [vmem:[%s6739] sm:$0x1]
    %v6742 = vlaneseq
    %v6743 = vshrl.u32 %v6742, 7
    %v6744 = vsub.s32 0, %v6743
    %v6745 = vrot.slane %v6740, %v6744
    %v6747 = vadd.f32 %v6737, %v6745
    %v6748 = vadd.f32 %v6738, %v6745
    %v6749 = vmax.f32 %v6747, 0.0
    %v6750 = vmax.f32 %v6748, 0.0
    %v6751 = vpack.c.bf16 %v6750, %v6749
    %s6752 = scalar_lea.vmem [#allocation11], 704
    %v6753 = vld [vmem:[%s6752] sm:$0xf]
    %v6754 = vld [vmem:[%s6752 + $0x4] sm:$0xf]
    %v6755 = vld [vmem:[%s6752 + $0x8] sm:$0xf]
    %v6756 = vld [vmem:[%s6752 + $0xc] sm:$0xf]
    %v6757 = vld [vmem:[%s6752 + $0x10] sm:$0xf]
    %v6758 = vld [vmem:[%s6752 + $0x14] sm:$0xf]
    %v6759 = vld [vmem:[%s6752 + $0x18] sm:$0xf]
    %v6760 = vld [vmem:[%s6752 + $0x1c] sm:$0xf]
    %v6761 = vld [vmem:[%s6752 + $0x20] sm:$0xf]
    %v6762 = vld [vmem:[%s6752 + $0x24] sm:$0xf]
    %v6763 = vld [vmem:[%s6752 + $0x28] sm:$0xf]
    %v6764 = vld [vmem:[%s6752 + $0x2c] sm:$0xf]
    %v6765 = vld [vmem:[%s6752 + $0x30] sm:$0xf]
    %v6766 = vld [vmem:[%s6752 + $0x34] sm:$0xf]
    %v6767 = vld [vmem:[%s6752 + $0x38] sm:$0xf]
    %v6768 = vld [vmem:[%s6752 + $0x3c] sm:$0xf]
    %s6769 = scalar_lea.vmem [#allocation13], 11
    %v6770 = vld [vmem:[%s6769] sm:$0x1]
    %v6772 = vlaneseq
    %v6773 = vshrl.u32 %v6772, 7
    %v6774 = vsub.s32 0, %v6773
    %v6775 = vrot.slane %v6770, %v6774
    %v6793 = vunpack.c.l.b16 %v6753
    %v6794 = vunpack.c.l.b16 %v6754
    %v6795 = vunpack.c.l.b16 %v6755
    %v6796 = vunpack.c.l.b16 %v6756
    %v6797 = vunpack.c.l.b16 %v6757
    %v6798 = vunpack.c.l.b16 %v6758
    %v6799 = vunpack.c.l.b16 %v6759
    %v6800 = vunpack.c.l.b16 %v6760
    %v6801 = vunpack.c.l.b16 %v6761
    %v6802 = vunpack.c.l.b16 %v6762
    %v6803 = vunpack.c.l.b16 %v6763
    %v6804 = vunpack.c.l.b16 %v6764
    %v6805 = vunpack.c.l.b16 %v6765
    %v6806 = vunpack.c.l.b16 %v6766
    %v6807 = vunpack.c.l.b16 %v6767
    %v6808 = vunpack.c.l.b16 %v6768
    %v6809 = vpack.c.b16 %v6794, %v6793
    %v6810 = vpack.c.b16 %v6796, %v6795
    %v6811 = vpack.c.b16 %v6798, %v6797
    %v6812 = vpack.c.b16 %v6800, %v6799
    %v6813 = vpack.c.b16 %v6802, %v6801
    %v6814 = vpack.c.b16 %v6804, %v6803
    %v6815 = vpack.c.b16 %v6806, %v6805
    %v6816 = vpack.c.b16 %v6808, %v6807
    %6825 = vmatprep.subr.bf16.mxu0 0
    %6826 = vmatpush1.bf16.msra.mxu0 %v6809
    %6827 = vmatprep.subr.bf16.mxu0 0
    %6828 = vmatpush1.bf16.msra.mxu0 %v6810
    %6829 = vmatprep.subr.bf16.mxu0 0
    %6830 = vmatpush1.bf16.msra.mxu0 %v6811
    %6831 = vmatprep.subr.bf16.mxu0 0
    %6832 = vmatpush1.bf16.msra.mxu0 %v6812
    %6833 = vmatprep.subr.bf16.mxu0 0
    %6834 = vmatpush1.bf16.msra.mxu0 %v6813
    %6835 = vmatprep.subr.bf16.mxu0 0
    %6836 = vmatpush1.bf16.msra.mxu0 %v6814
    %6837 = vmatprep.subr.bf16.mxu0 0
    %6838 = vmatpush1.bf16.msra.mxu0 %v6815
    %6839 = vmatprep.subr.bf16.mxu0 0
    %6840 = vmatpush1.bf16.msra.mxu0 %v6816
    %6841 = vmatprep.subr.bf16.mxu0 0
    %6842 = vmatpush1.bf16.msra.mxu0 0
    %6843 = vmatprep.subr.bf16.mxu0 0
    %6844 = vmatpush1.bf16.msra.mxu0 0
    %6845 = vmatprep.subr.bf16.mxu0 0
    %6846 = vmatpush1.bf16.msra.mxu0 0
    %6847 = vmatprep.subr.bf16.mxu0 0
    %6848 = vmatpush1.bf16.msra.mxu0 0
    %6849 = vmatprep.subr.bf16.mxu0 0
    %6850 = vmatpush1.bf16.msra.mxu0 0
    %6851 = vmatprep.subr.bf16.mxu0 0
    %6852 = vmatpush1.bf16.msra.mxu0 0
    %6853 = vmatprep.subr.bf16.mxu0 0
    %6854 = vmatpush1.bf16.msra.mxu0 0
    %6855 = vmatprep.subr.bf16.mxu0 0
    %6856 = vmatpush1.bf16.msra.mxu0 0
    %6857 = vmatprep.mubr.bf16.mxu0 0
    %6858 = vmatmul.mubr.bf16.gmra.mrb[0].mxu0 %v6751
    %v6859 = vpop.f32.mrb[0].mxu0
    %v6860 = vadd.f32 %v6775, %v6859
    %v6861 = vpop.f32.mrb[0].mxu0
    %v6862 = vpop.f32.mrb[0].mxu0
    %v6863 = vadd.f32 %v6775, %v6862
    %v6864 = vpop.f32.mrb[0].mxu0
    %6865 = vdwg.mxu0
    %v6866 = vmax.f32 %v6860, 0.0
    %v6867 = vmax.f32 %v6863, 0.0
    %v6868 = vld [vmem:[%s22] sm:$0xf]
    %v6869 = vld [vmem:[%s22 + $0x4] sm:$0xf]
    %v6870 = vld [vmem:[%s22 + $0x8] sm:$0xf]
    %v6871 = vld [vmem:[%s22 + $0xc] sm:$0xf]
    %v6872 = vld [vmem:[%s22 + $0x10] sm:$0xf]
    %v6873 = vld [vmem:[%s22 + $0x14] sm:$0xf]
    %v6874 = vpack.c.bf16 %v6867, %v6866
    %v6881 = vunpack.c.l.b16 %v6868
    %v6882 = vunpack.c.l.b16 %v6869
    %v6883 = vunpack.c.l.b16 %v6870
    %v6884 = vunpack.c.l.b16 %v6871
    %v6885 = vunpack.c.l.b16 %v6872
    %v6886 = vunpack.c.l.b16 %v6873
    %v6887 = vpack.c.b16 %v6882, %v6881
    %v6888 = vpack.c.b16 %v6884, %v6883
    %v6889 = vpack.c.b16 %v6886, %v6885
    %vm6890 = vcmask 130048
    %v6892 = vsel %vm6890, %v6887, 0
    %v6895 = vsel %vm6890, %v6888, 0
    %v6898 = vsel %vm6890, %v6889, 0
    %6900 = vmatprep.subr.bf16.mxu0 0
    %6901 = vmatpush1.bf16.msra.mxu0 %v6874
    %6902 = vmatprep.subr.bf16.mxu0 0
    %6903 = vmatpush1.bf16.msra.mxu0 0
    %6904 = vmatprep.subr.bf16.mxu0 0
    %6905 = vmatpush1.bf16.msra.mxu0 0
    %6906 = vmatprep.subr.bf16.mxu0 0
    %6907 = vmatpush1.bf16.msra.mxu0 0
    %6908 = vmatprep.subr.bf16.mxu0 0
    %6909 = vmatpush1.bf16.msra.mxu0 0
    %6910 = vmatprep.subr.bf16.mxu0 0
    %6911 = vmatpush1.bf16.msra.mxu0 0
    %6912 = vmatprep.subr.bf16.mxu0 0
    %6913 = vmatpush1.bf16.msra.mxu0 0
    %6914 = vmatprep.subr.bf16.mxu0 0
    %6915 = vmatpush1.bf16.msra.mxu0 0
    %6916 = vmatprep.subr.bf16.mxu0 0
    %6917 = vmatpush1.bf16.msra.mxu0 0
    %6918 = vmatprep.subr.bf16.mxu0 0
    %6919 = vmatpush1.bf16.msra.mxu0 0
    %6920 = vmatprep.subr.bf16.mxu0 0
    %6921 = vmatpush1.bf16.msra.mxu0 0
    %6922 = vmatprep.subr.bf16.mxu0 0
    %6923 = vmatpush1.bf16.msra.mxu0 0
    %6924 = vmatprep.subr.bf16.mxu0 0
    %6925 = vmatpush1.bf16.msra.mxu0 0
    %6926 = vmatprep.subr.bf16.mxu0 0
    %6927 = vmatpush1.bf16.msra.mxu0 0
    %6928 = vmatprep.subr.bf16.mxu0 0
    %6929 = vmatpush1.bf16.msra.mxu0 0
    %6930 = vmatprep.subr.bf16.mxu0 0
    %6931 = vmatpush1.bf16.msra.mxu0 0
    %6932 = vmatprep.mubr.bf16.mxu0 0
    %6933 = vmatmul.mubr.bf16.gmra.mrb[0].mxu0 %v6892
    %v6934 = vpop.f32.mrb[0].mxu0
    %v6935 = vadd.f32 0.0, %v6934
    %v6936 = vpop.f32.mrb[0].mxu0
    %v6937 = vpop.f32.mrb[0].mxu0
    %v6938 = vadd.f32 0.0, %v6937
    %v6939 = vpop.f32.mrb[0].mxu0
    %6940 = vmatprep.mubr.bf16.mxu0 0
    %6941 = vmatmul.mubr.bf16.gmra.mrb[0].mxu0 %v6895
    %v6942 = vpop.f32.mrb[0].mxu0
    %v6943 = vadd.f32 0.0, %v6942
    %v6944 = vpop.f32.mrb[0].mxu0
    %v6945 = vpop.f32.mrb[0].mxu0
    %v6946 = vadd.f32 0.0, %v6945
    %v6947 = vpop.f32.mrb[0].mxu0
    %6948 = vmatprep.mubr.bf16.mxu0 0
    %6949 = vmatmul.mubr.bf16.gmra.mrb[0].mxu0 %v6898
    %v6950 = vpop.f32.mrb[0].mxu0
    %v6951 = vadd.f32 0.0, %v6950
    %v6952 = vpop.f32.mrb[0].mxu0
    %v6953 = vpop.f32.mrb[0].mxu0
    %v6954 = vadd.f32 0.0, %v6953
    %v6955 = vpop.f32.mrb[0].mxu0
    %6956 = vdwg.mxu0
    %s6957 = scalar_lea.vmem [#allocation8], 96
    %v6958 = vld [vmem:[%s6957] sm:$0xff]
    %v6959 = vlaneseq
    %v6960 = vshrl.u32 %v6959, 7
    %v6961 = vsub.s32 0, %v6960
    %v6962 = vrot.slane %v6958, %v6961
    %v6963 = vmul.f32 %v6962, %v6935
    %v6964 = vmul.f32 %v6962, %v6938
    %v6965 = vlaneseq
    %v6966 = vshrl.u32 %v6965, 7
    %v6967 = vsub.s32 1, %v6966
    %v6968 = vrot.slane %v6958, %v6967
    %v6969 = vmul.f32 %v6968, %v6943
    %v6970 = vmul.f32 %v6968, %v6946
    %v6971 = vadd.f32 %v6963, %v6969
    %v6972 = vadd.f32 %v6964, %v6970
    %v6973 = vlaneseq
    %v6974 = vshrl.u32 %v6973, 7
    %v6975 = vsub.s32 2, %v6974
    %v6976 = vrot.slane %v6958, %v6975
    %v6977 = vmul.f32 %v6976, %v6951
    %v6978 = vmul.f32 %v6976, %v6954
    %v6979 = vadd.f32 %v6971, %v6977
    %v6980 = vadd.f32 %v6972, %v6978
    %s6981 = scalar_lea.vmem [#allocation10], 12
    %v6982 = vld [vmem:[%s6981] sm:$0x1]
    %v6984 = vlaneseq
    %v6985 = vshrl.u32 %v6984, 7
    %v6986 = vsub.s32 0, %v6985
    %v6987 = vrot.slane %v6982, %v6986
    %v6989 = vadd.f32 %v6979, %v6987
    %v6990 = vadd.f32 %v6980, %v6987
    %v6991 = vmax.f32 %v6989, 0.0
    %v6992 = vmax.f32 %v6990, 0.0
    %v6993 = vpack.c.bf16 %v6992, %v6991
    %s6994 = scalar_lea.vmem [#allocation11], 768
    %v6995 = vld [vmem:[%s6994] sm:$0xf]
    %v6996 = vld [vmem:[%s6994 + $0x4] sm:$0xf]
    %v6997 = vld [vmem:[%s6994 + $0x8] sm:$0xf]
    %v6998 = vld [vmem:[%s6994 + $0xc] sm:$0xf]
    %v6999 = vld [vmem:[%s6994 + $0x10] sm:$0xf]
    %v7000 = vld [vmem:[%s6994 + $0x14] sm:$0xf]
    %v7001 = vld [vmem:[%s6994 + $0x18] sm:$0xf]
    %v7002 = vld [vmem:[%s6994 + $0x1c] sm:$0xf]
    %v7003 = vld [vmem:[%s6994 + $0x20] sm:$0xf]
    %v7004 = vld [vmem:[%s6994 + $0x24] sm:$0xf]
    %v7005 = vld [vmem:[%s6994 + $0x28] sm:$0xf]
    %v7006 = vld [vmem:[%s6994 + $0x2c] sm:$0xf]
    %v7007 = vld [vmem:[%s6994 + $0x30] sm:$0xf]
    %v7008 = vld [vmem:[%s6994 + $0x34] sm:$0xf]
    %v7009 = vld [vmem:[%s6994 + $0x38] sm:$0xf]
    %v7010 = vld [vmem:[%s6994 + $0x3c] sm:$0xf]
    %s7011 = scalar_lea.vmem [#allocation13], 12
    %v7012 = vld [vmem:[%s7011] sm:$0x1]
    %v7014 = vlaneseq
    %v7015 = vshrl.u32 %v7014, 7
    %v7016 = vsub.s32 0, %v7015
    %v7017 = vrot.slane %v7012, %v7016
    %v7035 = vunpack.c.l.b16 %v6995
    %v7036 = vunpack.c.l.b16 %v6996
    %v7037 = vunpack.c.l.b16 %v6997
    %v7038 = vunpack.c.l.b16 %v6998
    %v7039 = vunpack.c.l.b16 %v6999
    %v7040 = vunpack.c.l.b16 %v7000
    %v7041 = vunpack.c.l.b16 %v7001
    %v7042 = vunpack.c.l.b16 %v7002
    %v7043 = vunpack.c.l.b16 %v7003
    %v7044 = vunpack.c.l.b16 %v7004
    %v7045 = vunpack.c.l.b16 %v7005
    %v7046 = vunpack.c.l.b16 %v7006
    %v7047 = vunpack.c.l.b16 %v7007
    %v7048 = vunpack.c.l.b16 %v7008
    %v7049 = vunpack.c.l.b16 %v7009
    %v7050 = vunpack.c.l.b16 %v7010
    %v7051 = vpack.c.b16 %v7036, %v7035
    %v7052 = vpack.c.b16 %v7038, %v7037
    %v7053 = vpack.c.b16 %v7040, %v7039
    %v7054 = vpack.c.b16 %v7042, %v7041
    %v7055 = vpack.c.b16 %v7044, %v7043
    %v7056 = vpack.c.b16 %v7046, %v7045
    %v7057 = vpack.c.b16 %v7048, %v7047
    %v7058 = vpack.c.b16 %v7050, %v7049
    %7067 = vmatprep.subr.bf16.mxu0 0
    %7068 = vmatpush1.bf16.msra.mxu0 %v7051
    %7069 = vmatprep.subr.bf16.mxu0 0
    %7070 = vmatpush1.bf16.msra.mxu0 %v7052
    %7071 = vmatprep.subr.bf16.mxu0 0
    %7072 = vmatpush1.bf16.msra.mxu0 %v7053
    %7073 = vmatprep.subr.bf16.mxu0 0
    %7074 = vmatpush1.bf16.msra.mxu0 %v7054
    %7075 = vmatprep.subr.bf16.mxu0 0
    %7076 = vmatpush1.bf16.msra.mxu0 %v7055
    %7077 = vmatprep.subr.bf16.mxu0 0
    %7078 = vmatpush1.bf16.msra.mxu0 %v7056
    %7079 = vmatprep.subr.bf16.mxu0 0
    %7080 = vmatpush1.bf16.msra.mxu0 %v7057
    %7081 = vmatprep.subr.bf16.mxu0 0
    %7082 = vmatpush1.bf16.msra.mxu0 %v7058
    %7083 = vmatprep.subr.bf16.mxu0 0
    %7084 = vmatpush1.bf16.msra.mxu0 0
    %7085 = vmatprep.subr.bf16.mxu0 0
    %7086 = vmatpush1.bf16.msra.mxu0 0
    %7087 = vmatprep.subr.bf16.mxu0 0
    %7088 = vmatpush1.bf16.msra.mxu0 0
    %7089 = vmatprep.subr.bf16.mxu0 0
    %7090 = vmatpush1.bf16.msra.mxu0 0
    %7091 = vmatprep.subr.bf16.mxu0 0
    %7092 = vmatpush1.bf16.msra.mxu0 0
    %7093 = vmatprep.subr.bf16.mxu0 0
    %7094 = vmatpush1.bf16.msra.mxu0 0
    %7095 = vmatprep.subr.bf16.mxu0 0
    %7096 = vmatpush1.bf16.msra.mxu0 0
    %7097 = vmatprep.subr.bf16.mxu0 0
    %7098 = vmatpush1.bf16.msra.mxu0 0
    %7099 = vmatprep.mubr.bf16.mxu0 0
    %7100 = vmatmul.mubr.bf16.gmra.mrb[0].mxu0 %v6993
    %v7101 = vpop.f32.mrb[0].mxu0
    %v7102 = vadd.f32 %v7017, %v7101
    %v7103 = vpop.f32.mrb[0].mxu0
    %v7104 = vpop.f32.mrb[0].mxu0
    %v7105 = vadd.f32 %v7017, %v7104
    %v7106 = vpop.f32.mrb[0].mxu0
    %7107 = vdwg.mxu0
    %v7108 = vmax.f32 %v7102, 0.0
    %v7109 = vmax.f32 %v7105, 0.0
    %v7110 = vld [vmem:[#allocation14] sm:$0xf]
    %v7111 = vpack.c.bf16 %v7109, %v7108
    %v7113 = vsel %vm6890, %v7110, 0
    %7115 = vmatprep.subr.bf16.mxu0 0
    %7116 = vmatpush1.bf16.msra.mxu0 %v7111
    %7117 = vmatprep.subr.bf16.mxu0 0
    %7118 = vmatpush1.bf16.msra.mxu0 0
    %7119 = vmatprep.subr.bf16.mxu0 0
    %7120 = vmatpush1.bf16.msra.mxu0 0
    %7121 = vmatprep.subr.bf16.mxu0 0
    %7122 = vmatpush1.bf16.msra.mxu0 0
    %7123 = vmatprep.subr.bf16.mxu0 0
    %7124 = vmatpush1.bf16.msra.mxu0 0
    %7125 = vmatprep.subr.bf16.mxu0 0
    %7126 = vmatpush1.bf16.msra.mxu0 0
    %7127 = vmatprep.subr.bf16.mxu0 0
    %7128 = vmatpush1.bf16.msra.mxu0 0
    %7129 = vmatprep.subr.bf16.mxu0 0
    %7130 = vmatpush1.bf16.msra.mxu0 0
    %7131 = vmatprep.subr.bf16.mxu0 0
    %7132 = vmatpush1.bf16.msra.mxu0 0
    %7133 = vmatprep.subr.bf16.mxu0 0
    %7134 = vmatpush1.bf16.msra.mxu0 0
    %7135 = vmatprep.subr.bf16.mxu0 0
    %7136 = vmatpush1.bf16.msra.mxu0 0
    %7137 = vmatprep.subr.bf16.mxu0 0
    %7138 = vmatpush1.bf16.msra.mxu0 0
    %7139 = vmatprep.subr.bf16.mxu0 0
    %7140 = vmatpush1.bf16.msra.mxu0 0
    %7141 = vmatprep.subr.bf16.mxu0 0
    %7142 = vmatpush1.bf16.msra.mxu0 0
    %7143 = vmatprep.subr.bf16.mxu0 0
    %7144 = vmatpush1.bf16.msra.mxu0 0
    %7145 = vmatprep.subr.bf16.mxu0 0
    %7146 = vmatpush1.bf16.msra.mxu0 0
    %7147 = vmatprep.mubr.bf16.mxu0 0
    %7148 = vmatmul.mubr.bf16.gmra.mrb[0].mxu0 %v7113
    %v7149 = vpop.f32.mrb[0].mxu0
    %v7150 = vadd.f32 0.0, %v7149
    %v7151 = vpop.f32.mrb[0].mxu0
    %v7152 = vpop.f32.mrb[0].mxu0
    %v7153 = vpop.f32.mrb[0].mxu0
    %7154 = vdwg.mxu0
    %v7155 = vmul.f32 %v7150, 0.5
    %v7156 = vpack.c.bf16 %v7155, %v7155
    %v7157 = vld [vmem:[#allocation16] sm:$0xf]
    %v7158 = vld [vmem:[#allocation16 + $0x4] sm:$0xf]
    %v7159 = vld [vmem:[#allocation16 + $0x8] sm:$0xf]
    %v7160 = vld [vmem:[#allocation16 + $0xc] sm:$0xf]
    %v7161 = vld [vmem:[#allocation16 + $0x10] sm:$0xf]
    %v7162 = vld [vmem:[#allocation16 + $0x14] sm:$0xf]
    %v7163 = vld [vmem:[#allocation16 + $0x18] sm:$0xf]
    %v7164 = vld [vmem:[#allocation16 + $0x1c] sm:$0xf]
    %v7165 = vld [vmem:[#allocation16 + $0x20] sm:$0xf]
    %v7166 = vld [vmem:[#allocation16 + $0x24] sm:$0xf]
    %v7167 = vld [vmem:[#allocation16 + $0x28] sm:$0xf]
    %v7168 = vld [vmem:[#allocation16 + $0x2c] sm:$0xf]
    %v7169 = vld [vmem:[#allocation16 + $0x30] sm:$0xf]
    %v7170 = vld [vmem:[#allocation16 + $0x34] sm:$0xf]
    %v7171 = vld [vmem:[#allocation16 + $0x38] sm:$0xf]
    %v7172 = vld [vmem:[#allocation16 + $0x3c] sm:$0xf]
    %v7173 = vld [vmem:[#allocation17] sm:$0x1]
    %v7175 = vlaneseq
    %v7176 = vshrl.u32 %v7175, 7
    %v7177 = vsub.s32 0, %v7176
    %v7178 = vrot.slane %v7173, %v7177
    %v7196 = vunpack.c.l.b16 %v7157
    %v7197 = vunpack.c.l.b16 %v7158
    %v7198 = vunpack.c.l.b16 %v7159
    %v7199 = vunpack.c.l.b16 %v7160
    %v7200 = vunpack.c.l.b16 %v7161
    %v7201 = vunpack.c.l.b16 %v7162
    %v7202 = vunpack.c.l.b16 %v7163
    %v7203 = vunpack.c.l.b16 %v7164
    %v7204 = vunpack.c.l.b16 %v7165
    %v7205 = vunpack.c.l.b16 %v7166
    %v7206 = vunpack.c.l.b16 %v7167
    %v7207 = vunpack.c.l.b16 %v7168
    %v7208 = vunpack.c.l.b16 %v7169
    %v7209 = vunpack.c.l.b16 %v7170
    %v7210 = vunpack.c.l.b16 %v7171
    %v7211 = vunpack.c.l.b16 %v7172
    %v7212 = vpack.c.b16 %v7197, %v7196
    %v7213 = vpack.c.b16 %v7199, %v7198
    %v7214 = vpack.c.b16 %v7201, %v7200
    %v7215 = vpack.c.b16 %v7203, %v7202
    %v7216 = vpack.c.b16 %v7205, %v7204
    %v7217 = vpack.c.b16 %v7207, %v7206
    %v7218 = vpack.c.b16 %v7209, %v7208
    %v7219 = vpack.c.b16 %v7211, %v7210
    %7228 = vmatprep.subr.bf16.mxu0 0
    %7229 = vmatpush1.bf16.msra.mxu0 %v7212
    %7230 = vmatprep.subr.bf16.mxu0 0
    %7231 = vmatpush1.bf16.msra.mxu0 %v7213
    %7232 = vmatprep.subr.bf16.mxu0 0
    %7233 = vmatpush1.bf16.msra.mxu0 %v7214
    %7234 = vmatprep.subr.bf16.mxu0 0
    %7235 = vmatpush1.bf16.msra.mxu0 %v7215
    %7236 = vmatprep.subr.bf16.mxu0 0
    %7237 = vmatpush1.bf16.msra.mxu0 %v7216
    %7238 = vmatprep.subr.bf16.mxu0 0
    %7239 = vmatpush1.bf16.msra.mxu0 %v7217
    %7240 = vmatprep.subr.bf16.mxu0 0
    %7241 = vmatpush1.bf16.msra.mxu0 %v7218
    %7242 = vmatprep.subr.bf16.mxu0 0
    %7243 = vmatpush1.bf16.msra.mxu0 %v7219
    %7244 = vmatprep.subr.bf16.mxu0 0
    %7245 = vmatpush1.bf16.msra.mxu0 0
    %7246 = vmatprep.subr.bf16.mxu0 0
    %7247 = vmatpush1.bf16.msra.mxu0 0
    %7248 = vmatprep.subr.bf16.mxu0 0
    %7249 = vmatpush1.bf16.msra.mxu0 0
    %7250 = vmatprep.subr.bf16.mxu0 0
    %7251 = vmatpush1.bf16.msra.mxu0 0
    %7252 = vmatprep.subr.bf16.mxu0 0
    %7253 = vmatpush1.bf16.msra.mxu0 0
    %7254 = vmatprep.subr.bf16.mxu0 0
    %7255 = vmatpush1.bf16.msra.mxu0 0
    %7256 = vmatprep.subr.bf16.mxu0 0
    %7257 = vmatpush1.bf16.msra.mxu0 0
    %7258 = vmatprep.subr.bf16.mxu0 0
    %7259 = vmatpush1.bf16.msra.mxu0 0
    %7260 = vmatprep.mubr.bf16.mxu0 0
    %7261 = vmatmul.mubr.bf16.gmra.mrb[0].mxu0 %v7156
    %v7262 = vpop.f32.mrb[0].mxu0
    %v7263 = vadd.f32 %v7178, %v7262
    %v7264 = vpop.f32.mrb[0].mxu0
    %v7265 = vpop.f32.mrb[0].mxu0
    %v7266 = vpop.f32.mrb[0].mxu0
    %7267 = vdwg.mxu0
    %7268 = vst [vmem:[#allocation20] sm:$0xff] %v7263
    // Predicated region
    $region138: #{tpu_custom_call.1} parent=1 // pred_check
      _
    $region139: #{tpu_custom_call.1} parent=1 // pred_check_branch
      %7270 = sbr.rel (0) target = $region141
    $region140: #{tpu_custom_call.1} parent=1 // pred_region
      %s7272 = ssub.s32 128, 128
      %7273 = vsyncadd [#allocation4], %s7272
      %s7275 = sshll.u32 [#allocation20], 4
      %s7276 = int_to_ptr.vmem [resolvable:$true] %s7275
      %7278 = dma.vmem_to_hbm [thread:$0]  %s7276, 128, %s23, [#allocation4]
    $region141: #{tpu_custom_call.1} parent=1 // pred_fallthru
      _
    // Predicated region
    $region142: #{tpu_custom_call.1} parent=1 // pred_check
      _
    $region143: #{tpu_custom_call.1} parent=1 // pred_check_branch
      %7280 = sbr.rel (0) target = $region145
    $region144: #{tpu_custom_call.1} parent=1 // pred_region
      %7281 = dma.done [#allocation4], 128
    $region145: #{tpu_custom_call.1} parent=1 // pred_fallthru
      _
    %7282 = vsyncpa [#allocation3], 1
    %7283 = vsyncpa [#allocation6], 1
    %7284 = vsyncpa [#allocation9], 1
    %7285 = vsyncpa [#allocation12], 1
    %7286 = vsyncpa [#allocation15], 1
    %7287 = vsyncpa [#allocation18], 1
    %7288 = vsyncpa [#allocation4], 1

</llo_original>
